<compile_context>
chip_gen: v5e
topology: v5e:2x2
jax: 0.10.0
libtpu: 0.0.40
codegen_flags: <defaults>
</compile_context>

<pallas_src>
import functools

import jax
import jax.numpy as jnp
from jax.experimental import pallas as pl
from jax.experimental.pallas import tpu as pltpu


def _round_up(n, m):
    return ((n + m - 1) // m) * m


# -----------------------------------------------------------------------------
# Fused kernel: all layers + head, single grid-less invocation.
# Ref order: x, (wih, whh, bias) per layer, w_out, b_out, out, gx scratch x n_gx
# -----------------------------------------------------------------------------
def _make_fused_kernel(S, Bp, Hp, n_layers, n_gx):
    def kernel(*refs):
        x_ref = refs[0]
        layer_refs = refs[1:1 + 3 * n_layers]
        w_out_ref = refs[1 + 3 * n_layers]
        b_out_ref = refs[2 + 3 * n_layers]
        out_ref = refs[3 + 3 * n_layers]
        gx_refs = refs[4 + 3 * n_layers:4 + 3 * n_layers + n_gx]

        # Layer-0 input projection hoisted out of the recurrence: one big,
        # well-filled bf16 MXU matmul over all timesteps, f32 accumulate,
        # bias added once.
        gx_refs[0][...] = (
            jnp.dot(x_ref[...], layer_refs[0][...],
                    preferred_element_type=jnp.float32)
            + layer_refs[2][...]
        )

        h = jnp.zeros((Bp, Hp), jnp.float32)
        for l in range(n_layers):
            whh_ref = layer_refs[3 * l + 1]
            gx_cur = gx_refs[l % n_gx]
            last_layer = l == n_layers - 1
            if not last_layer:
                wih_next_ref = layer_refs[3 * (l + 1) + 0]
                gx_next = gx_refs[(l + 1) % n_gx]
                # Hoist the bias broadcast out of the time loop (JAX does not
                # CSE broadcast_in_dim; 4 vregs live is cheap).
                b_next = jnp.broadcast_to(
                    layer_refs[3 * (l + 1) + 2][...], (Bp, 4 * Hp))

            h = jnp.zeros((Bp, Hp), jnp.float32)
            c = jnp.zeros((Bp, Hp), jnp.float32)
            # Static unroll over the short, fixed sequence length.
            # TODO(synk): switch to lax.fori_loop(..., unroll=2..4) once S > ~16
            #             so live ranges stay bounded.
            for t in range(S):
                row = t * Bp
                # Recurrent matmul: bf16 operands, f32 accumulate; gate math
                # and c/h state stay f32.
                # TODO(synk): if the bundle dump shows W_hh re-pushed each
                #             step, latch it with pltpu.matmul_push_rhs once
                #             per layer + matmul_acc_lhs/matmul_pop per step.
                gates = gx_cur[pl.ds(row, Bp), :] + jnp.dot(
                    h.astype(jnp.bfloat16), whh_ref[...],
                    preferred_element_type=jnp.float32)
                # Each gate lives in its own 128-lane-aligned Hp-wide slot,
                # so these slices are whole-vreg extractions.
                i_g = jax.nn.sigmoid(gates[:, 0 * Hp:1 * Hp])
                f_g = jax.nn.sigmoid(gates[:, 1 * Hp:2 * Hp])
                g_g = jnp.tanh(gates[:, 2 * Hp:3 * Hp])
                o_g = jax.nn.sigmoid(gates[:, 3 * Hp:4 * Hp])
                c = f_g * c + i_g * g_g
                h = o_g * jnp.tanh(c)
                if not last_layer:
                    # Fused next-layer input projection: independent MXU work
                    # that hides under this step's latency-bound dependent
                    # chain; removes the seq_ref round-trip and the separate
                    # per-layer projection phase for layers >= 1.
                    gx_next[pl.ds(row, Bp), :] = (
                        jnp.dot(h.astype(jnp.bfloat16), wih_next_ref[...],
                                preferred_element_type=jnp.float32)
                        + b_next
                    )

        # Fused Linear(H, 1) head on the last timestep's top-layer hidden
        # state; output padded to 128 lanes -> lane-dense (unmasked) store.
        out_ref[...] = (
            jnp.dot(h.astype(jnp.bfloat16), w_out_ref[...],
                    preferred_element_type=jnp.float32)
            + b_out_ref[...]
        )

    return kernel


# -----------------------------------------------------------------------------
# One-time parameter preparation: pad to TPU-friendly shapes, scatter gates
# into 128-lane slots, cast matmul weights to bf16.  Done once at init, NOT
# inside the per-call forward.
# -----------------------------------------------------------------------------
def prepare_params(params):
    lstm = params["lstm"]
    H = lstm[0][1].shape[0]                 # w_hh_t: (H, 4H)
    D = lstm[0][0].shape[0]                 # w_ih_t (layer 0): (D, 4H)
    Hp = _round_up(max(H, 128), 128)        # lane-aligned hidden
    Dp = _round_up(max(D, 128), 128)        # lane-aligned input features

    prepped = {"lstm": []}
    for l, (w_ih_t, w_hh_t, bias) in enumerate(lstm):
        d_in = w_ih_t.shape[0]
        d_in_p = Dp if l == 0 else Hp
        wih_p = jnp.zeros((d_in_p, 4 * Hp), jnp.float32)
        whh_p = jnp.zeros((Hp, 4 * Hp), jnp.float32)
        b_p = jnp.zeros((1, 4 * Hp), jnp.float32)
        # Scatter each PyTorch gate (i, f, g, o) into its own Hp-wide slot.
        # Zero padding keeps padded hidden lanes identically zero over time.
        for g in range(4):
            wih_p = wih_p.at[:d_in, g * Hp:g * Hp + H].set(
                w_ih_t[:, g * H:(g + 1) * H])
            whh_p = whh_p.at[:H, g * Hp:g * Hp + H].set(
                w_hh_t[:, g * H:(g + 1) * H])
            b_p = b_p.at[0, g * Hp:g * Hp + H].set(bias[g * H:(g + 1) * H])
        prepped["lstm"].append((wih_p.astype(jnp.bfloat16),
                                whh_p.astype(jnp.bfloat16),
                                b_p))

    # Head weights in a lane-dense (Hp, 128) / (1, 128) layout.
    w_out_p = jnp.zeros((Hp, 128), jnp.float32).at[:H, 0].set(
        params["w_out_t"][:, 0])
    b_out_p = jnp.zeros((1, 128), jnp.float32).at[0, 0].set(
        params["b_out"][0, 0])
    prepped["w_out"] = w_out_p.astype(jnp.bfloat16)
    prepped["b_out"] = b_out_p
    return prepped


# -----------------------------------------------------------------------------
# Forward: pad x, dispatch the single fused kernel, slice the result.
# -----------------------------------------------------------------------------
def price_net_forward(x, prepped):
    """x: (S, B, D) f32 -> (B,) f32 (0-d if B == 1, like torch .squeeze())."""
    S, B, D = x.shape
    lstm = prepped["lstm"]
    n_layers = len(lstm)
    Dp = lstm[0][0].shape[0]
    Hp = lstm[0][1].shape[0]
    Bp = _round_up(max(B, 8), 8)            # sublane-aligned batch

    # Zero-pad x, flatten (time, batch) -> rows, cast to bf16 for the MXU.
    xp = jnp.zeros((S, Bp, Dp), jnp.float32).at[:, :B, :D].set(x)
    x2d = xp.reshape(S * Bp, Dp).astype(jnp.bfloat16)

    inputs = [x2d]
    for (wih, whh, b) in lstm:
        inputs += [wih, whh, b]
    inputs += [prepped["w_out"], prepped["b_out"]]

    n_gx = 2 if n_layers > 1 else 1
    scratch = [pltpu.VMEM((S * Bp, 4 * Hp), jnp.float32) for _ in range(n_gx)]

    # Explicit, auditable VMEM budget (inputs + output + scratch, 2x headroom).
    vmem_bytes = sum(int(a.size) * a.dtype.itemsize for a in inputs)
    vmem_bytes += Bp * 128 * 4                       # output
    vmem_bytes += n_gx * S * Bp * 4 * Hp * 4         # gate scratch
    vmem_limit = int(max(2 * vmem_bytes, 2 * 1024 * 1024))

    out = pl.pallas_call(
        _make_fused_kernel(S, Bp, Hp, n_layers, n_gx),
        out_shape=jax.ShapeDtypeStruct((Bp, 128), jnp.float32),
        in_specs=[pl.BlockSpec(memory_space=pltpu.MemorySpace.VMEM)]
        * len(inputs),
        out_specs=pl.BlockSpec(memory_space=pltpu.MemorySpace.VMEM),
        scratch_shapes=scratch,
        compiler_params=pltpu.CompilerParams(vmem_limit_bytes=vmem_limit),
    )(*inputs)

    return jnp.squeeze(out[:B, 0])


# -----------------------------------------------------------------------------
# Parameter init (PyTorch-like) and a pure-JAX reference for validation.
# -----------------------------------------------------------------------------
def init_params(key, *, n_input_features, n_hidden, n_layers):
    """Deterministic synthetic init (uniform like PyTorch LSTM default)."""
    params = {"lstm": []}
    bound = 1.0 / jnp.sqrt(jnp.float32(n_hidden))
    for layer in range(n_layers):
        d_in = n_input_features if layer == 0 else n_hidden
        key, k1, k2, k3, k4 = jax.random.split(key, 5)
        w_ih = jax.random.uniform(k1, (4 * n_hidden, d_in), jnp.float32,
                                  -bound, bound)
        w_hh = jax.random.uniform(k2, (4 * n_hidden, n_hidden), jnp.float32,
                                  -bound, bound)
        b_ih = jax.random.uniform(k3, (4 * n_hidden,), jnp.float32,
                                  -bound, bound)
        b_hh = jax.random.uniform(k4, (4 * n_hidden,), jnp.float32,
                                  -bound, bound)
        # pre-transpose; fold the two biases (PyTorch adds both)
        params["lstm"].append((w_ih.T, w_hh.T, b_ih + b_hh))

    key, k5, k6 = jax.random.split(key, 3)
    xav = jnp.sqrt(6.0 / (n_hidden + 1))           # xavier_uniform for (1, H)
    w_out = jax.random.uniform(k5, (1, n_hidden), jnp.float32, -xav, xav)
    b_out = jax.random.uniform(k6, (1,), jnp.float32,
                               -1.0 / jnp.sqrt(jnp.float32(n_hidden)),
                               1.0 / jnp.sqrt(jnp.float32(n_hidden)))
    params["w_out_t"] = w_out.T                    # (H, 1)
    params["b_out"] = b_out.reshape(1, 1)          # (1, 1)
    return params


def _reference_forward(x, params):
    """Pure-JAX f32 reference matching PyTorch LSTM inference semantics."""
    hdot = functools.partial(jnp.dot, precision=jax.lax.Precision.HIGHEST)
    S, B, _ = x.shape
    layer_in = x
    for (w_ih_t, w_hh_t, bias) in params["lstm"]:
        H = w_hh_t.shape[0]
        h = jnp.zeros((B, H), jnp.float32)
        c = jnp.zeros((B, H), jnp.float32)
        outs = []
        for t in range(S):
            gates = hdot(layer_in[t], w_ih_t) + hdot(h, w_hh_t) + bias
            i_g = jax.nn.sigmoid(gates[:, 0 * H:1 * H])
            f_g = jax.nn.sigmoid(gates[:, 1 * H:2 * H])
            g_g = jnp.tanh(gates[:, 2 * H:3 * H])
            o_g = jax.nn.sigmoid(gates[:, 3 * H:4 * H])
            c = f_g * c + i_g * g_g
            h = o_g * jnp.tanh(c)
            outs.append(h)
        layer_in = jnp.stack(outs, axis=0)
    out = hdot(layer_in[-1], params["w_out_t"]) + params["b_out"]
    return jnp.squeeze(out)


if __name__ == "__main__":
    SEQ, BATCH, FEAT, HIDDEN, LAYERS = 8, 4, 16, 32, 2

    key = jax.random.PRNGKey(0)
    key, kx = jax.random.split(key)
    x = jax.random.normal(kx, (SEQ, BATCH, FEAT), dtype=jnp.float32)

    params = init_params(key, n_input_features=FEAT,
                         n_hidden=HIDDEN, n_layers=LAYERS)
    prepped = prepare_params(params)      # one-time padding / bf16 cast

    fwd = jax.jit(price_net_forward)
    out = fwd(x, prepped)
    jax.block_until_ready(out)
    assert out.shape == (BATCH,), out.shape

    ref = _reference_forward(x, params)
    # bf16 matmul operands -> loosened tolerance vs the f32 HIGHEST reference.
    assert jnp.allclose(out, ref, rtol=2e-2, atol=2e-2), (out, ref)

    print("KERNEL_OK")
</pallas_src>

<mosaic_0001>
module attributes {stable_mosaic.version = 11 : i64} {
  func.func @kernel(%arg0: memref<64x128xbf16, #tpu.memory_space<vmem>>, %arg1: memref<128x512xbf16, #tpu.memory_space<vmem>>, %arg2: memref<128x512xbf16, #tpu.memory_space<vmem>>, %arg3: memref<1x512xf32, #tpu.memory_space<vmem>>, %arg4: memref<128x512xbf16, #tpu.memory_space<vmem>>, %arg5: memref<128x512xbf16, #tpu.memory_space<vmem>>, %arg6: memref<1x512xf32, #tpu.memory_space<vmem>>, %arg7: memref<128x128xbf16, #tpu.memory_space<vmem>>, %arg8: memref<1x128xf32, #tpu.memory_space<vmem>>, %arg9: memref<8x128xf32, #tpu.memory_space<vmem>>, %arg10: memref<64x512xf32, #tpu.memory_space<vmem>>, %arg11: memref<64x512xf32, #tpu.memory_space<vmem>>) attributes {dimension_semantics = [], scalar_prefetch = 0 : i64, scratch_operands = 2 : i64, tpu.core_type = #tpu.core_type<tc>} {
    %c0 = arith.constant 0 : index
    %c0_0 = arith.constant 0 : index
    %0 = vector.load %arg0[%c0, %c0_0] : memref<64x128xbf16, #tpu.memory_space<vmem>>, vector<64x128xbf16>
    %c0_1 = arith.constant 0 : index
    %c0_2 = arith.constant 0 : index
    %1 = vector.load %arg1[%c0_1, %c0_2] : memref<128x512xbf16, #tpu.memory_space<vmem>>, vector<128x512xbf16>
    %cst = arith.constant dense<0.000000e+00> : vector<64x512xf32>
    %2 = tpu.matmul %0, %1, %cst {dimension_numbers = #tpu.dot_dimension_numbers<[1], [0], [0], [1], [0, 0, 1, 1], [], []>} : vector<64x128xbf16>, vector<128x512xbf16>, vector<64x512xf32> -> vector<64x512xf32>
    %c0_3 = arith.constant 0 : index
    %c0_4 = arith.constant 0 : index
    %3 = vector.load %arg3[%c0_3, %c0_4] : memref<1x512xf32, #tpu.memory_space<vmem>>, vector<1x512xf32>
    %4 = vector.broadcast %3 : vector<1x512xf32> to vector<64x512xf32>
    %5 = arith.addf %2, %4 : vector<64x512xf32>
    %c0_5 = arith.constant 0 : index
    %c0_6 = arith.constant 0 : index
    %6 = vector.load %arg10[%c0_5, %c0_6] : memref<64x512xf32, #tpu.memory_space<vmem>>, vector<64x512xf32>
    tpu.vector_store %arg10[%c0_5, %c0_6], %5 {strides = array<i32>} : memref<64x512xf32, #tpu.memory_space<vmem>>, vector<64x512xf32>,
    %c0_7 = arith.constant 0 : index
    %c0_8 = arith.constant 0 : index
    %7 = vector.load %arg6[%c0_7, %c0_8] : memref<1x512xf32, #tpu.memory_space<vmem>>, vector<1x512xf32>
    %8 = vector.shape_cast %7 : vector<1x512xf32> to vector<1x512xf32>
    %9 = vector.broadcast %8 : vector<1x512xf32> to vector<8x512xf32>
    %cst_9 = arith.constant 0.000000e+00 : f32
    %10 = vector.broadcast %cst_9 : f32 to vector<8x128xf32>
    %cst_10 = arith.constant 0.000000e+00 : f32
    %11 = vector.broadcast %cst_10 : f32 to vector<8x128xf32>
    %c0_11 = arith.constant 0 : index
    %c0_12 = arith.constant 0 : index
    %12 = vector.load %arg10[%c0_11, %c0_12] : memref<64x512xf32, #tpu.memory_space<vmem>>, vector<8x512xf32>
    %13 = arith.truncf %10 : vector<8x128xf32> to vector<8x128xbf16>
    %c0_13 = arith.constant 0 : index
    %c0_14 = arith.constant 0 : index
    %14 = vector.load %arg2[%c0_13, %c0_14] : memref<128x512xbf16, #tpu.memory_space<vmem>>, vector<128x512xbf16>
    %cst_15 = arith.constant dense<0.000000e+00> : vector<8x512xf32>
    %15 = tpu.matmul %13, %14, %cst_15 {dimension_numbers = #tpu.dot_dimension_numbers<[1], [0], [0], [1], [0, 0, 1, 1], [], []>} : vector<8x128xbf16>, vector<128x512xbf16>, vector<8x512xf32> -> vector<8x512xf32>
    %16 = arith.addf %12, %15 : vector<8x512xf32>
    %17 = vector.extract_strided_slice %16 {offsets = [0, 0], sizes = [8, 128], strides = [1, 1]} : vector<8x512xf32> to vector<8x128xf32>
    %18 = arith.negf %17 : vector<8x128xf32>
    %19 = math.exp %18 : vector<8x128xf32>
    %cst_16 = arith.constant 1.000000e+00 : f32
    %20 = vector.broadcast %cst_16 : f32 to vector<8x128xf32>
    %21 = arith.addf %20, %19 : vector<8x128xf32>
    %22 = arith.divf %20, %21 : vector<8x128xf32>
    %23 = vector.extract_strided_slice %16 {offsets = [0, 128], sizes = [8, 128], strides = [1, 1]} : vector<8x512xf32> to vector<8x128xf32>
    %24 = arith.negf %23 : vector<8x128xf32>
    %25 = math.exp %24 : vector<8x128xf32>
    %cst_17 = arith.constant 1.000000e+00 : f32
    %26 = vector.broadcast %cst_17 : f32 to vector<8x128xf32>
    %27 = arith.addf %26, %25 : vector<8x128xf32>
    %28 = arith.divf %26, %27 : vector<8x128xf32>
    %29 = vector.extract_strided_slice %16 {offsets = [0, 256], sizes = [8, 128], strides = [1, 1]} : vector<8x512xf32> to vector<8x128xf32>
    %30 = math.tanh %29 : vector<8x128xf32>
    %31 = vector.extract_strided_slice %16 {offsets = [0, 384], sizes = [8, 128], strides = [1, 1]} : vector<8x512xf32> to vector<8x128xf32>
    %32 = arith.negf %31 : vector<8x128xf32>
    %33 = math.exp %32 : vector<8x128xf32>
    %cst_18 = arith.constant 1.000000e+00 : f32
    %34 = vector.broadcast %cst_18 : f32 to vector<8x128xf32>
    %35 = arith.addf %34, %33 : vector<8x128xf32>
    %36 = arith.divf %34, %35 : vector<8x128xf32>
    %37 = arith.mulf %28, %11 : vector<8x128xf32>
    %38 = arith.mulf %22, %30 : vector<8x128xf32>
    %39 = arith.addf %37, %38 : vector<8x128xf32>
    %40 = math.tanh %39 : vector<8x128xf32>
    %41 = arith.mulf %36, %40 : vector<8x128xf32>
    %42 = arith.truncf %41 : vector<8x128xf32> to vector<8x128xbf16>
    %c0_19 = arith.constant 0 : index
    %c0_20 = arith.constant 0 : index
    %43 = vector.load %arg4[%c0_19, %c0_20] : memref<128x512xbf16, #tpu.memory_space<vmem>>, vector<128x512xbf16>
    %cst_21 = arith.constant dense<0.000000e+00> : vector<8x512xf32>
    %44 = tpu.matmul %42, %43, %cst_21 {dimension_numbers = #tpu.dot_dimension_numbers<[1], [0], [0], [1], [0, 0, 1, 1], [], []>} : vector<8x128xbf16>, vector<128x512xbf16>, vector<8x512xf32> -> vector<8x512xf32>
    %45 = arith.addf %44, %9 : vector<8x512xf32>
    %c0_22 = arith.constant 0 : index
    %c0_23 = arith.constant 0 : index
    %46 = vector.load %arg11[%c0_22, %c0_23] : memref<64x512xf32, #tpu.memory_space<vmem>>, vector<8x512xf32>
    tpu.vector_store %arg11[%c0_22, %c0_23], %45 {strides = array<i32>} : memref<64x512xf32, #tpu.memory_space<vmem>>, vector<8x512xf32>,
    %c8 = arith.constant 8 : index
    %c0_24 = arith.constant 0 : index
    %47 = vector.load %arg10[%c8, %c0_24] : memref<64x512xf32, #tpu.memory_space<vmem>>, vector<8x512xf32>
    %48 = arith.truncf %41 : vector<8x128xf32> to vector<8x128xbf16>
    %c0_25 = arith.constant 0 : index
    %c0_26 = arith.constant 0 : index
    %49 = vector.load %arg2[%c0_25, %c0_26] : memref<128x512xbf16, #tpu.memory_space<vmem>>, vector<128x512xbf16>
    %cst_27 = arith.constant dense<0.000000e+00> : vector<8x512xf32>
    %50 = tpu.matmul %48, %49, %cst_27 {dimension_numbers = #tpu.dot_dimension_numbers<[1], [0], [0], [1], [0, 0, 1, 1], [], []>} : vector<8x128xbf16>, vector<128x512xbf16>, vector<8x512xf32> -> vector<8x512xf32>
    %51 = arith.addf %47, %50 : vector<8x512xf32>
    %52 = vector.extract_strided_slice %51 {offsets = [0, 0], sizes = [8, 128], strides = [1, 1]} : vector<8x512xf32> to vector<8x128xf32>
    %53 = arith.negf %52 : vector<8x128xf32>
    %54 = math.exp %53 : vector<8x128xf32>
    %cst_28 = arith.constant 1.000000e+00 : f32
    %55 = vector.broadcast %cst_28 : f32 to vector<8x128xf32>
    %56 = arith.addf %55, %54 : vector<8x128xf32>
    %57 = arith.divf %55, %56 : vector<8x128xf32>
    %58 = vector.extract_strided_slice %51 {offsets = [0, 128], sizes = [8, 128], strides = [1, 1]} : vector<8x512xf32> to vector<8x128xf32>
    %59 = arith.negf %58 : vector<8x128xf32>
    %60 = math.exp %59 : vector<8x128xf32>
    %cst_29 = arith.constant 1.000000e+00 : f32
    %61 = vector.broadcast %cst_29 : f32 to vector<8x128xf32>
    %62 = arith.addf %61, %60 : vector<8x128xf32>
    %63 = arith.divf %61, %62 : vector<8x128xf32>
    %64 = vector.extract_strided_slice %51 {offsets = [0, 256], sizes = [8, 128], strides = [1, 1]} : vector<8x512xf32> to vector<8x128xf32>
    %65 = math.tanh %64 : vector<8x128xf32>
    %66 = vector.extract_strided_slice %51 {offsets = [0, 384], sizes = [8, 128], strides = [1, 1]} : vector<8x512xf32> to vector<8x128xf32>
    %67 = arith.negf %66 : vector<8x128xf32>
    %68 = math.exp %67 : vector<8x128xf32>
    %cst_30 = arith.constant 1.000000e+00 : f32
    %69 = vector.broadcast %cst_30 : f32 to vector<8x128xf32>
    %70 = arith.addf %69, %68 : vector<8x128xf32>
    %71 = arith.divf %69, %70 : vector<8x128xf32>
    %72 = arith.mulf %63, %39 : vector<8x128xf32>
    %73 = arith.mulf %57, %65 : vector<8x128xf32>
    %74 = arith.addf %72, %73 : vector<8x128xf32>
    %75 = math.tanh %74 : vector<8x128xf32>
    %76 = arith.mulf %71, %75 : vector<8x128xf32>
    %77 = arith.truncf %76 : vector<8x128xf32> to vector<8x128xbf16>
    %c0_31 = arith.constant 0 : index
    %c0_32 = arith.constant 0 : index
    %78 = vector.load %arg4[%c0_31, %c0_32] : memref<128x512xbf16, #tpu.memory_space<vmem>>, vector<128x512xbf16>
    %cst_33 = arith.constant dense<0.000000e+00> : vector<8x512xf32>
    %79 = tpu.matmul %77, %78, %cst_33 {dimension_numbers = #tpu.dot_dimension_numbers<[1], [0], [0], [1], [0, 0, 1, 1], [], []>} : vector<8x128xbf16>, vector<128x512xbf16>, vector<8x512xf32> -> vector<8x512xf32>
    %80 = arith.addf %79, %9 : vector<8x512xf32>
    %c8_34 = arith.constant 8 : index
    %c0_35 = arith.constant 0 : index
    %81 = vector.load %arg11[%c8_34, %c0_35] : memref<64x512xf32, #tpu.memory_space<vmem>>, vector<8x512xf32>
    tpu.vector_store %arg11[%c8_34, %c0_35], %80 {strides = array<i32>} : memref<64x512xf32, #tpu.memory_space<vmem>>, vector<8x512xf32>,
    %c16 = arith.constant 16 : index
    %c0_36 = arith.constant 0 : index
    %82 = vector.load %arg10[%c16, %c0_36] : memref<64x512xf32, #tpu.memory_space<vmem>>, vector<8x512xf32>
    %83 = arith.truncf %76 : vector<8x128xf32> to vector<8x128xbf16>
    %c0_37 = arith.constant 0 : index
    %c0_38 = arith.constant 0 : index
    %84 = vector.load %arg2[%c0_37, %c0_38] : memref<128x512xbf16, #tpu.memory_space<vmem>>, vector<128x512xbf16>
    %cst_39 = arith.constant dense<0.000000e+00> : vector<8x512xf32>
    %85 = tpu.matmul %83, %84, %cst_39 {dimension_numbers = #tpu.dot_dimension_numbers<[1], [0], [0], [1], [0, 0, 1, 1], [], []>} : vector<8x128xbf16>, vector<128x512xbf16>, vector<8x512xf32> -> vector<8x512xf32>
    %86 = arith.addf %82, %85 : vector<8x512xf32>
    %87 = vector.extract_strided_slice %86 {offsets = [0, 0], sizes = [8, 128], strides = [1, 1]} : vector<8x512xf32> to vector<8x128xf32>
    %88 = arith.negf %87 : vector<8x128xf32>
    %89 = math.exp %88 : vector<8x128xf32>
    %cst_40 = arith.constant 1.000000e+00 : f32
    %90 = vector.broadcast %cst_40 : f32 to vector<8x128xf32>
    %91 = arith.addf %90, %89 : vector<8x128xf32>
    %92 = arith.divf %90, %91 : vector<8x128xf32>
    %93 = vector.extract_strided_slice %86 {offsets = [0, 128], sizes = [8, 128], strides = [1, 1]} : vector<8x512xf32> to vector<8x128xf32>
    %94 = arith.negf %93 : vector<8x128xf32>
    %95 = math.exp %94 : vector<8x128xf32>
    %cst_41 = arith.constant 1.000000e+00 : f32
    %96 = vector.broadcast %cst_41 : f32 to vector<8x128xf32>
    %97 = arith.addf %96, %95 : vector<8x128xf32>
    %98 = arith.divf %96, %97 : vector<8x128xf32>
    %99 = vector.extract_strided_slice %86 {offsets = [0, 256], sizes = [8, 128], strides = [1, 1]} : vector<8x512xf32> to vector<8x128xf32>
    %100 = math.tanh %99 : vector<8x128xf32>
    %101 = vector.extract_strided_slice %86 {offsets = [0, 384], sizes = [8, 128], strides = [1, 1]} : vector<8x512xf32> to vector<8x128xf32>
    %102 = arith.negf %101 : vector<8x128xf32>
    %103 = math.exp %102 : vector<8x128xf32>
    %cst_42 = arith.constant 1.000000e+00 : f32
    %104 = vector.broadcast %cst_42 : f32 to vector<8x128xf32>
    %105 = arith.addf %104, %103 : vector<8x128xf32>
    %106 = arith.divf %104, %105 : vector<8x128xf32>
    %107 = arith.mulf %98, %74 : vector<8x128xf32>
    %108 = arith.mulf %92, %100 : vector<8x128xf32>
    %109 = arith.addf %107, %108 : vector<8x128xf32>
    %110 = math.tanh %109 : vector<8x128xf32>
    %111 = arith.mulf %106, %110 : vector<8x128xf32>
    %112 = arith.truncf %111 : vector<8x128xf32> to vector<8x128xbf16>
    %c0_43 = arith.constant 0 : index
    %c0_44 = arith.constant 0 : index
    %113 = vector.load %arg4[%c0_43, %c0_44] : memref<128x512xbf16, #tpu.memory_space<vmem>>, vector<128x512xbf16>
    %cst_45 = arith.constant dense<0.000000e+00> : vector<8x512xf32>
    %114 = tpu.matmul %112, %113, %cst_45 {dimension_numbers = #tpu.dot_dimension_numbers<[1], [0], [0], [1], [0, 0, 1, 1], [], []>} : vector<8x128xbf16>, vector<128x512xbf16>, vector<8x512xf32> -> vector<8x512xf32>
    %115 = arith.addf %114, %9 : vector<8x512xf32>
    %c16_46 = arith.constant 16 : index
    %c0_47 = arith.constant 0 : index
    %116 = vector.load %arg11[%c16_46, %c0_47] : memref<64x512xf32, #tpu.memory_space<vmem>>, vector<8x512xf32>
    tpu.vector_store %arg11[%c16_46, %c0_47], %115 {strides = array<i32>} : memref<64x512xf32, #tpu.memory_space<vmem>>, vector<8x512xf32>,
    %c24 = arith.constant 24 : index
    %c0_48 = arith.constant 0 : index
    %117 = vector.load %arg10[%c24, %c0_48] : memref<64x512xf32, #tpu.memory_space<vmem>>, vector<8x512xf32>
    %118 = arith.truncf %111 : vector<8x128xf32> to vector<8x128xbf16>
    %c0_49 = arith.constant 0 : index
    %c0_50 = arith.constant 0 : index
    %119 = vector.load %arg2[%c0_49, %c0_50] : memref<128x512xbf16, #tpu.memory_space<vmem>>, vector<128x512xbf16>
    %cst_51 = arith.constant dense<0.000000e+00> : vector<8x512xf32>
    %120 = tpu.matmul %118, %119, %cst_51 {dimension_numbers = #tpu.dot_dimension_numbers<[1], [0], [0], [1], [0, 0, 1, 1], [], []>} : vector<8x128xbf16>, vector<128x512xbf16>, vector<8x512xf32> -> vector<8x512xf32>
    %121 = arith.addf %117, %120 : vector<8x512xf32>
    %122 = vector.extract_strided_slice %121 {offsets = [0, 0], sizes = [8, 128], strides = [1, 1]} : vector<8x512xf32> to vector<8x128xf32>
    %123 = arith.negf %122 : vector<8x128xf32>
    %124 = math.exp %123 : vector<8x128xf32>
    %cst_52 = arith.constant 1.000000e+00 : f32
    %125 = vector.broadcast %cst_52 : f32 to vector<8x128xf32>
    %126 = arith.addf %125, %124 : vector<8x128xf32>
    %127 = arith.divf %125, %126 : vector<8x128xf32>
    %128 = vector.extract_strided_slice %121 {offsets = [0, 128], sizes = [8, 128], strides = [1, 1]} : vector<8x512xf32> to vector<8x128xf32>
    %129 = arith.negf %128 : vector<8x128xf32>
    %130 = math.exp %129 : vector<8x128xf32>
    %cst_53 = arith.constant 1.000000e+00 : f32
    %131 = vector.broadcast %cst_53 : f32 to vector<8x128xf32>
    %132 = arith.addf %131, %130 : vector<8x128xf32>
    %133 = arith.divf %131, %132 : vector<8x128xf32>
    %134 = vector.extract_strided_slice %121 {offsets = [0, 256], sizes = [8, 128], strides = [1, 1]} : vector<8x512xf32> to vector<8x128xf32>
    %135 = math.tanh %134 : vector<8x128xf32>
    %136 = vector.extract_strided_slice %121 {offsets = [0, 384], sizes = [8, 128], strides = [1, 1]} : vector<8x512xf32> to vector<8x128xf32>
    %137 = arith.negf %136 : vector<8x128xf32>
    %138 = math.exp %137 : vector<8x128xf32>
    %cst_54 = arith.constant 1.000000e+00 : f32
    %139 = vector.broadcast %cst_54 : f32 to vector<8x128xf32>
    %140 = arith.addf %139, %138 : vector<8x128xf32>
    %141 = arith.divf %139, %140 : vector<8x128xf32>
    %142 = arith.mulf %133, %109 : vector<8x128xf32>
    %143 = arith.mulf %127, %135 : vector<8x128xf32>
    %144 = arith.addf %142, %143 : vector<8x128xf32>
    %145 = math.tanh %144 : vector<8x128xf32>
    %146 = arith.mulf %141, %145 : vector<8x128xf32>
    %147 = arith.truncf %146 : vector<8x128xf32> to vector<8x128xbf16>
    %c0_55 = arith.constant 0 : index
    %c0_56 = arith.constant 0 : index
    %148 = vector.load %arg4[%c0_55, %c0_56] : memref<128x512xbf16, #tpu.memory_space<vmem>>, vector<128x512xbf16>
    %cst_57 = arith.constant dense<0.000000e+00> : vector<8x512xf32>
    %149 = tpu.matmul %147, %148, %cst_57 {dimension_numbers = #tpu.dot_dimension_numbers<[1], [0], [0], [1], [0, 0, 1, 1], [], []>} : vector<8x128xbf16>, vector<128x512xbf16>, vector<8x512xf32> -> vector<8x512xf32>
    %150 = arith.addf %149, %9 : vector<8x512xf32>
    %c24_58 = arith.constant 24 : index
    %c0_59 = arith.constant 0 : index
    %151 = vector.load %arg11[%c24_58, %c0_59] : memref<64x512xf32, #tpu.memory_space<vmem>>, vector<8x512xf32>
    tpu.vector_store %arg11[%c24_58, %c0_59], %150 {strides = array<i32>} : memref<64x512xf32, #tpu.memory_space<vmem>>, vector<8x512xf32>,
    %c32 = arith.constant 32 : index
    %c0_60 = arith.constant 0 : index
    %152 = vector.load %arg10[%c32, %c0_60] : memref<64x512xf32, #tpu.memory_space<vmem>>, vector<8x512xf32>
    %153 = arith.truncf %146 : vector<8x128xf32> to vector<8x128xbf16>
    %c0_61 = arith.constant 0 : index
    %c0_62 = arith.constant 0 : index
    %154 = vector.load %arg2[%c0_61, %c0_62] : memref<128x512xbf16, #tpu.memory_space<vmem>>, vector<128x512xbf16>
    %cst_63 = arith.constant dense<0.000000e+00> : vector<8x512xf32>
    %155 = tpu.matmul %153, %154, %cst_63 {dimension_numbers = #tpu.dot_dimension_numbers<[1], [0], [0], [1], [0, 0, 1, 1], [], []>} : vector<8x128xbf16>, vector<128x512xbf16>, vector<8x512xf32> -> vector<8x512xf32>
    %156 = arith.addf %152, %155 : vector<8x512xf32>
    %157 = vector.extract_strided_slice %156 {offsets = [0, 0], sizes = [8, 128], strides = [1, 1]} : vector<8x512xf32> to vector<8x128xf32>
    %158 = arith.negf %157 : vector<8x128xf32>
    %159 = math.exp %158 : vector<8x128xf32>
    %cst_64 = arith.constant 1.000000e+00 : f32
    %160 = vector.broadcast %cst_64 : f32 to vector<8x128xf32>
    %161 = arith.addf %160, %159 : vector<8x128xf32>
    %162 = arith.divf %160, %161 : vector<8x128xf32>
    %163 = vector.extract_strided_slice %156 {offsets = [0, 128], sizes = [8, 128], strides = [1, 1]} : vector<8x512xf32> to vector<8x128xf32>
    %164 = arith.negf %163 : vector<8x128xf32>
    %165 = math.exp %164 : vector<8x128xf32>
    %cst_65 = arith.constant 1.000000e+00 : f32
    %166 = vector.broadcast %cst_65 : f32 to vector<8x128xf32>
    %167 = arith.addf %166, %165 : vector<8x128xf32>
    %168 = arith.divf %166, %167 : vector<8x128xf32>
    %169 = vector.extract_strided_slice %156 {offsets = [0, 256], sizes = [8, 128], strides = [1, 1]} : vector<8x512xf32> to vector<8x128xf32>
    %170 = math.tanh %169 : vector<8x128xf32>
    %171 = vector.extract_strided_slice %156 {offsets = [0, 384], sizes = [8, 128], strides = [1, 1]} : vector<8x512xf32> to vector<8x128xf32>
    %172 = arith.negf %171 : vector<8x128xf32>
    %173 = math.exp %172 : vector<8x128xf32>
    %cst_66 = arith.constant 1.000000e+00 : f32
    %174 = vector.broadcast %cst_66 : f32 to vector<8x128xf32>
    %175 = arith.addf %174, %173 : vector<8x128xf32>
    %176 = arith.divf %174, %175 : vector<8x128xf32>
    %177 = arith.mulf %168, %144 : vector<8x128xf32>
    %178 = arith.mulf %162, %170 : vector<8x128xf32>
    %179 = arith.addf %177, %178 : vector<8x128xf32>
    %180 = math.tanh %179 : vector<8x128xf32>
    %181 = arith.mulf %176, %180 : vector<8x128xf32>
    %182 = arith.truncf %181 : vector<8x128xf32> to vector<8x128xbf16>
    %c0_67 = arith.constant 0 : index
    %c0_68 = arith.constant 0 : index
    %183 = vector.load %arg4[%c0_67, %c0_68] : memref<128x512xbf16, #tpu.memory_space<vmem>>, vector<128x512xbf16>
    %cst_69 = arith.constant dense<0.000000e+00> : vector<8x512xf32>
    %184 = tpu.matmul %182, %183, %cst_69 {dimension_numbers = #tpu.dot_dimension_numbers<[1], [0], [0], [1], [0, 0, 1, 1], [], []>} : vector<8x128xbf16>, vector<128x512xbf16>, vector<8x512xf32> -> vector<8x512xf32>
    %185 = arith.addf %184, %9 : vector<8x512xf32>
    %c32_70 = arith.constant 32 : index
    %c0_71 = arith.constant 0 : index
    %186 = vector.load %arg11[%c32_70, %c0_71] : memref<64x512xf32, #tpu.memory_space<vmem>>, vector<8x512xf32>
    tpu.vector_store %arg11[%c32_70, %c0_71], %185 {strides = array<i32>} : memref<64x512xf32, #tpu.memory_space<vmem>>, vector<8x512xf32>,
    %c40 = arith.constant 40 : index
    %c0_72 = arith.constant 0 : index
    %187 = vector.load %arg10[%c40, %c0_72] : memref<64x512xf32, #tpu.memory_space<vmem>>, vector<8x512xf32>
    %188 = arith.truncf %181 : vector<8x128xf32> to vector<8x128xbf16>
    %c0_73 = arith.constant 0 : index
    %c0_74 = arith.constant 0 : index
    %189 = vector.load %arg2[%c0_73, %c0_74] : memref<128x512xbf16, #tpu.memory_space<vmem>>, vector<128x512xbf16>
    %cst_75 = arith.constant dense<0.000000e+00> : vector<8x512xf32>
    %190 = tpu.matmul %188, %189, %cst_75 {dimension_numbers = #tpu.dot_dimension_numbers<[1], [0], [0], [1], [0, 0, 1, 1], [], []>} : vector<8x128xbf16>, vector<128x512xbf16>, vector<8x512xf32> -> vector<8x512xf32>
    %191 = arith.addf %187, %190 : vector<8x512xf32>
    %192 = vector.extract_strided_slice %191 {offsets = [0, 0], sizes = [8, 128], strides = [1, 1]} : vector<8x512xf32> to vector<8x128xf32>
    %193 = arith.negf %192 : vector<8x128xf32>
    %194 = math.exp %193 : vector<8x128xf32>
    %cst_76 = arith.constant 1.000000e+00 : f32
    %195 = vector.broadcast %cst_76 : f32 to vector<8x128xf32>
    %196 = arith.addf %195, %194 : vector<8x128xf32>
    %197 = arith.divf %195, %196 : vector<8x128xf32>
    %198 = vector.extract_strided_slice %191 {offsets = [0, 128], sizes = [8, 128], strides = [1, 1]} : vector<8x512xf32> to vector<8x128xf32>
    %199 = arith.negf %198 : vector<8x128xf32>
    %200 = math.exp %199 : vector<8x128xf32>
    %cst_77 = arith.constant 1.000000e+00 : f32
    %201 = vector.broadcast %cst_77 : f32 to vector<8x128xf32>
    %202 = arith.addf %201, %200 : vector<8x128xf32>
    %203 = arith.divf %201, %202 : vector<8x128xf32>
    %204 = vector.extract_strided_slice %191 {offsets = [0, 256], sizes = [8, 128], strides = [1, 1]} : vector<8x512xf32> to vector<8x128xf32>
    %205 = math.tanh %204 : vector<8x128xf32>
    %206 = vector.extract_strided_slice %191 {offsets = [0, 384], sizes = [8, 128], strides = [1, 1]} : vector<8x512xf32> to vector<8x128xf32>
    %207 = arith.negf %206 : vector<8x128xf32>
    %208 = math.exp %207 : vector<8x128xf32>
    %cst_78 = arith.constant 1.000000e+00 : f32
    %209 = vector.broadcast %cst_78 : f32 to vector<8x128xf32>
    %210 = arith.addf %209, %208 : vector<8x128xf32>
    %211 = arith.divf %209, %210 : vector<8x128xf32>
    %212 = arith.mulf %203, %179 : vector<8x128xf32>
    %213 = arith.mulf %197, %205 : vector<8x128xf32>
    %214 = arith.addf %212, %213 : vector<8x128xf32>
    %215 = math.tanh %214 : vector<8x128xf32>
    %216 = arith.mulf %211, %215 : vector<8x128xf32>
    %217 = arith.truncf %216 : vector<8x128xf32> to vector<8x128xbf16>
    %c0_79 = arith.constant 0 : index
    %c0_80 = arith.constant 0 : index
    %218 = vector.load %arg4[%c0_79, %c0_80] : memref<128x512xbf16, #tpu.memory_space<vmem>>, vector<128x512xbf16>
    %cst_81 = arith.constant dense<0.000000e+00> : vector<8x512xf32>
    %219 = tpu.matmul %217, %218, %cst_81 {dimension_numbers = #tpu.dot_dimension_numbers<[1], [0], [0], [1], [0, 0, 1, 1], [], []>} : vector<8x128xbf16>, vector<128x512xbf16>, vector<8x512xf32> -> vector<8x512xf32>
    %220 = arith.addf %219, %9 : vector<8x512xf32>
    %c40_82 = arith.constant 40 : index
    %c0_83 = arith.constant 0 : index
    %221 = vector.load %arg11[%c40_82, %c0_83] : memref<64x512xf32, #tpu.memory_space<vmem>>, vector<8x512xf32>
    tpu.vector_store %arg11[%c40_82, %c0_83], %220 {strides = array<i32>} : memref<64x512xf32, #tpu.memory_space<vmem>>, vector<8x512xf32>,
    %c48 = arith.constant 48 : index
    %c0_84 = arith.constant 0 : index
    %222 = vector.load %arg10[%c48, %c0_84] : memref<64x512xf32, #tpu.memory_space<vmem>>, vector<8x512xf32>
    %223 = arith.truncf %216 : vector<8x128xf32> to vector<8x128xbf16>
    %c0_85 = arith.constant 0 : index
    %c0_86 = arith.constant 0 : index
    %224 = vector.load %arg2[%c0_85, %c0_86] : memref<128x512xbf16, #tpu.memory_space<vmem>>, vector<128x512xbf16>
    %cst_87 = arith.constant dense<0.000000e+00> : vector<8x512xf32>
    %225 = tpu.matmul %223, %224, %cst_87 {dimension_numbers = #tpu.dot_dimension_numbers<[1], [0], [0], [1], [0, 0, 1, 1], [], []>} : vector<8x128xbf16>, vector<128x512xbf16>, vector<8x512xf32> -> vector<8x512xf32>
    %226 = arith.addf %222, %225 : vector<8x512xf32>
    %227 = vector.extract_strided_slice %226 {offsets = [0, 0], sizes = [8, 128], strides = [1, 1]} : vector<8x512xf32> to vector<8x128xf32>
    %228 = arith.negf %227 : vector<8x128xf32>
    %229 = math.exp %228 : vector<8x128xf32>
    %cst_88 = arith.constant 1.000000e+00 : f32
    %230 = vector.broadcast %cst_88 : f32 to vector<8x128xf32>
    %231 = arith.addf %230, %229 : vector<8x128xf32>
    %232 = arith.divf %230, %231 : vector<8x128xf32>
    %233 = vector.extract_strided_slice %226 {offsets = [0, 128], sizes = [8, 128], strides = [1, 1]} : vector<8x512xf32> to vector<8x128xf32>
    %234 = arith.negf %233 : vector<8x128xf32>
    %235 = math.exp %234 : vector<8x128xf32>
    %cst_89 = arith.constant 1.000000e+00 : f32
    %236 = vector.broadcast %cst_89 : f32 to vector<8x128xf32>
    %237 = arith.addf %236, %235 : vector<8x128xf32>
    %238 = arith.divf %236, %237 : vector<8x128xf32>
    %239 = vector.extract_strided_slice %226 {offsets = [0, 256], sizes = [8, 128], strides = [1, 1]} : vector<8x512xf32> to vector<8x128xf32>
    %240 = math.tanh %239 : vector<8x128xf32>
    %241 = vector.extract_strided_slice %226 {offsets = [0, 384], sizes = [8, 128], strides = [1, 1]} : vector<8x512xf32> to vector<8x128xf32>
    %242 = arith.negf %241 : vector<8x128xf32>
    %243 = math.exp %242 : vector<8x128xf32>
    %cst_90 = arith.constant 1.000000e+00 : f32
    %244 = vector.broadcast %cst_90 : f32 to vector<8x128xf32>
    %245 = arith.addf %244, %243 : vector<8x128xf32>
    %246 = arith.divf %244, %245 : vector<8x128xf32>
    %247 = arith.mulf %238, %214 : vector<8x128xf32>
    %248 = arith.mulf %232, %240 : vector<8x128xf32>
    %249 = arith.addf %247, %248 : vector<8x128xf32>
    %250 = math.tanh %249 : vector<8x128xf32>
    %251 = arith.mulf %246, %250 : vector<8x128xf32>
    %252 = arith.truncf %251 : vector<8x128xf32> to vector<8x128xbf16>
    %c0_91 = arith.constant 0 : index
    %c0_92 = arith.constant 0 : index
    %253 = vector.load %arg4[%c0_91, %c0_92] : memref<128x512xbf16, #tpu.memory_space<vmem>>, vector<128x512xbf16>
    %cst_93 = arith.constant dense<0.000000e+00> : vector<8x512xf32>
    %254 = tpu.matmul %252, %253, %cst_93 {dimension_numbers = #tpu.dot_dimension_numbers<[1], [0], [0], [1], [0, 0, 1, 1], [], []>} : vector<8x128xbf16>, vector<128x512xbf16>, vector<8x512xf32> -> vector<8x512xf32>
    %255 = arith.addf %254, %9 : vector<8x512xf32>
    %c48_94 = arith.constant 48 : index
    %c0_95 = arith.constant 0 : index
    %256 = vector.load %arg11[%c48_94, %c0_95] : memref<64x512xf32, #tpu.memory_space<vmem>>, vector<8x512xf32>
    tpu.vector_store %arg11[%c48_94, %c0_95], %255 {strides = array<i32>} : memref<64x512xf32, #tpu.memory_space<vmem>>, vector<8x512xf32>,
    %c56 = arith.constant 56 : index
    %c0_96 = arith.constant 0 : index
    %257 = vector.load %arg10[%c56, %c0_96] : memref<64x512xf32, #tpu.memory_space<vmem>>, vector<8x512xf32>
    %258 = arith.truncf %251 : vector<8x128xf32> to vector<8x128xbf16>
    %c0_97 = arith.constant 0 : index
    %c0_98 = arith.constant 0 : index
    %259 = vector.load %arg2[%c0_97, %c0_98] : memref<128x512xbf16, #tpu.memory_space<vmem>>, vector<128x512xbf16>
    %cst_99 = arith.constant dense<0.000000e+00> : vector<8x512xf32>
    %260 = tpu.matmul %258, %259, %cst_99 {dimension_numbers = #tpu.dot_dimension_numbers<[1], [0], [0], [1], [0, 0, 1, 1], [], []>} : vector<8x128xbf16>, vector<128x512xbf16>, vector<8x512xf32> -> vector<8x512xf32>
    %261 = arith.addf %257, %260 : vector<8x512xf32>
    %262 = vector.extract_strided_slice %261 {offsets = [0, 0], sizes = [8, 128], strides = [1, 1]} : vector<8x512xf32> to vector<8x128xf32>
    %263 = arith.negf %262 : vector<8x128xf32>
    %264 = math.exp %263 : vector<8x128xf32>
    %cst_100 = arith.constant 1.000000e+00 : f32
    %265 = vector.broadcast %cst_100 : f32 to vector<8x128xf32>
    %266 = arith.addf %265, %264 : vector<8x128xf32>
    %267 = arith.divf %265, %266 : vector<8x128xf32>
    %268 = vector.extract_strided_slice %261 {offsets = [0, 128], sizes = [8, 128], strides = [1, 1]} : vector<8x512xf32> to vector<8x128xf32>
    %269 = arith.negf %268 : vector<8x128xf32>
    %270 = math.exp %269 : vector<8x128xf32>
    %cst_101 = arith.constant 1.000000e+00 : f32
    %271 = vector.broadcast %cst_101 : f32 to vector<8x128xf32>
    %272 = arith.addf %271, %270 : vector<8x128xf32>
    %273 = arith.divf %271, %272 : vector<8x128xf32>
    %274 = vector.extract_strided_slice %261 {offsets = [0, 256], sizes = [8, 128], strides = [1, 1]} : vector<8x512xf32> to vector<8x128xf32>
    %275 = math.tanh %274 : vector<8x128xf32>
    %276 = vector.extract_strided_slice %261 {offsets = [0, 384], sizes = [8, 128], strides = [1, 1]} : vector<8x512xf32> to vector<8x128xf32>
    %277 = arith.negf %276 : vector<8x128xf32>
    %278 = math.exp %277 : vector<8x128xf32>
    %cst_102 = arith.constant 1.000000e+00 : f32
    %279 = vector.broadcast %cst_102 : f32 to vector<8x128xf32>
    %280 = arith.addf %279, %278 : vector<8x128xf32>
    %281 = arith.divf %279, %280 : vector<8x128xf32>
    %282 = arith.mulf %273, %249 : vector<8x128xf32>
    %283 = arith.mulf %267, %275 : vector<8x128xf32>
    %284 = arith.addf %282, %283 : vector<8x128xf32>
    %285 = math.tanh %284 : vector<8x128xf32>
    %286 = arith.mulf %281, %285 : vector<8x128xf32>
    %287 = arith.truncf %286 : vector<8x128xf32> to vector<8x128xbf16>
    %c0_103 = arith.constant 0 : index
    %c0_104 = arith.constant 0 : index
    %288 = vector.load %arg4[%c0_103, %c0_104] : memref<128x512xbf16, #tpu.memory_space<vmem>>, vector<128x512xbf16>
    %cst_105 = arith.constant dense<0.000000e+00> : vector<8x512xf32>
    %289 = tpu.matmul %287, %288, %cst_105 {dimension_numbers = #tpu.dot_dimension_numbers<[1], [0], [0], [1], [0, 0, 1, 1], [], []>} : vector<8x128xbf16>, vector<128x512xbf16>, vector<8x512xf32> -> vector<8x512xf32>
    %290 = arith.addf %289, %9 : vector<8x512xf32>
    %c56_106 = arith.constant 56 : index
    %c0_107 = arith.constant 0 : index
    %291 = vector.load %arg11[%c56_106, %c0_107] : memref<64x512xf32, #tpu.memory_space<vmem>>, vector<8x512xf32>
    tpu.vector_store %arg11[%c56_106, %c0_107], %290 {strides = array<i32>} : memref<64x512xf32, #tpu.memory_space<vmem>>, vector<8x512xf32>,
    %cst_108 = arith.constant 0.000000e+00 : f32
    %292 = vector.broadcast %cst_108 : f32 to vector<8x128xf32>
    %cst_109 = arith.constant 0.000000e+00 : f32
    %293 = vector.broadcast %cst_109 : f32 to vector<8x128xf32>
    %c0_110 = arith.constant 0 : index
    %c0_111 = arith.constant 0 : index
    %294 = vector.load %arg11[%c0_110, %c0_111] : memref<64x512xf32, #tpu.memory_space<vmem>>, vector<8x512xf32>
    %295 = arith.truncf %292 : vector<8x128xf32> to vector<8x128xbf16>
    %c0_112 = arith.constant 0 : index
    %c0_113 = arith.constant 0 : index
    %296 = vector.load %arg5[%c0_112, %c0_113] : memref<128x512xbf16, #tpu.memory_space<vmem>>, vector<128x512xbf16>
    %cst_114 = arith.constant dense<0.000000e+00> : vector<8x512xf32>
    %297 = tpu.matmul %295, %296, %cst_114 {dimension_numbers = #tpu.dot_dimension_numbers<[1], [0], [0], [1], [0, 0, 1, 1], [], []>} : vector<8x128xbf16>, vector<128x512xbf16>, vector<8x512xf32> -> vector<8x512xf32>
    %298 = arith.addf %294, %297 : vector<8x512xf32>
    %299 = vector.extract_strided_slice %298 {offsets = [0, 0], sizes = [8, 128], strides = [1, 1]} : vector<8x512xf32> to vector<8x128xf32>
    %300 = arith.negf %299 : vector<8x128xf32>
    %301 = math.exp %300 : vector<8x128xf32>
    %cst_115 = arith.constant 1.000000e+00 : f32
    %302 = vector.broadcast %cst_115 : f32 to vector<8x128xf32>
    %303 = arith.addf %302, %301 : vector<8x128xf32>
    %304 = arith.divf %302, %303 : vector<8x128xf32>
    %305 = vector.extract_strided_slice %298 {offsets = [0, 128], sizes = [8, 128], strides = [1, 1]} : vector<8x512xf32> to vector<8x128xf32>
    %306 = arith.negf %305 : vector<8x128xf32>
    %307 = math.exp %306 : vector<8x128xf32>
    %cst_116 = arith.constant 1.000000e+00 : f32
    %308 = vector.broadcast %cst_116 : f32 to vector<8x128xf32>
    %309 = arith.addf %308, %307 : vector<8x128xf32>
    %310 = arith.divf %308, %309 : vector<8x128xf32>
    %311 = vector.extract_strided_slice %298 {offsets = [0, 256], sizes = [8, 128], strides = [1, 1]} : vector<8x512xf32> to vector<8x128xf32>
    %312 = math.tanh %311 : vector<8x128xf32>
    %313 = vector.extract_strided_slice %298 {offsets = [0, 384], sizes = [8, 128], strides = [1, 1]} : vector<8x512xf32> to vector<8x128xf32>
    %314 = arith.negf %313 : vector<8x128xf32>
    %315 = math.exp %314 : vector<8x128xf32>
    %cst_117 = arith.constant 1.000000e+00 : f32
    %316 = vector.broadcast %cst_117 : f32 to vector<8x128xf32>
    %317 = arith.addf %316, %315 : vector<8x128xf32>
    %318 = arith.divf %316, %317 : vector<8x128xf32>
    %319 = arith.mulf %310, %293 : vector<8x128xf32>
    %320 = arith.mulf %304, %312 : vector<8x128xf32>
    %321 = arith.addf %319, %320 : vector<8x128xf32>
    %322 = math.tanh %321 : vector<8x128xf32>
    %323 = arith.mulf %318, %322 : vector<8x128xf32>
    %c8_118 = arith.constant 8 : index
    %c0_119 = arith.constant 0 : index
    %324 = vector.load %arg11[%c8_118, %c0_119] : memref<64x512xf32, #tpu.memory_space<vmem>>, vector<8x512xf32>
    %325 = arith.truncf %323 : vector<8x128xf32> to vector<8x128xbf16>
    %c0_120 = arith.constant 0 : index
    %c0_121 = arith.constant 0 : index
    %326 = vector.load %arg5[%c0_120, %c0_121] : memref<128x512xbf16, #tpu.memory_space<vmem>>, vector<128x512xbf16>
    %cst_122 = arith.constant dense<0.000000e+00> : vector<8x512xf32>
    %327 = tpu.matmul %325, %326, %cst_122 {dimension_numbers = #tpu.dot_dimension_numbers<[1], [0], [0], [1], [0, 0, 1, 1], [], []>} : vector<8x128xbf16>, vector<128x512xbf16>, vector<8x512xf32> -> vector<8x512xf32>
    %328 = arith.addf %324, %327 : vector<8x512xf32>
    %329 = vector.extract_strided_slice %328 {offsets = [0, 0], sizes = [8, 128], strides = [1, 1]} : vector<8x512xf32> to vector<8x128xf32>
    %330 = arith.negf %329 : vector<8x128xf32>
    %331 = math.exp %330 : vector<8x128xf32>
    %cst_123 = arith.constant 1.000000e+00 : f32
    %332 = vector.broadcast %cst_123 : f32 to vector<8x128xf32>
    %333 = arith.addf %332, %331 : vector<8x128xf32>
    %334 = arith.divf %332, %333 : vector<8x128xf32>
    %335 = vector.extract_strided_slice %328 {offsets = [0, 128], sizes = [8, 128], strides = [1, 1]} : vector<8x512xf32> to vector<8x128xf32>
    %336 = arith.negf %335 : vector<8x128xf32>
    %337 = math.exp %336 : vector<8x128xf32>
    %cst_124 = arith.constant 1.000000e+00 : f32
    %338 = vector.broadcast %cst_124 : f32 to vector<8x128xf32>
    %339 = arith.addf %338, %337 : vector<8x128xf32>
    %340 = arith.divf %338, %339 : vector<8x128xf32>
    %341 = vector.extract_strided_slice %328 {offsets = [0, 256], sizes = [8, 128], strides = [1, 1]} : vector<8x512xf32> to vector<8x128xf32>
    %342 = math.tanh %341 : vector<8x128xf32>
    %343 = vector.extract_strided_slice %328 {offsets = [0, 384], sizes = [8, 128], strides = [1, 1]} : vector<8x512xf32> to vector<8x128xf32>
    %344 = arith.negf %343 : vector<8x128xf32>
    %345 = math.exp %344 : vector<8x128xf32>
    %cst_125 = arith.constant 1.000000e+00 : f32
    %346 = vector.broadcast %cst_125 : f32 to vector<8x128xf32>
    %347 = arith.addf %346, %345 : vector<8x128xf32>
    %348 = arith.divf %346, %347 : vector<8x128xf32>
    %349 = arith.mulf %340, %321 : vector<8x128xf32>
    %350 = arith.mulf %334, %342 : vector<8x128xf32>
    %351 = arith.addf %349, %350 : vector<8x128xf32>
    %352 = math.tanh %351 : vector<8x128xf32>
    %353 = arith.mulf %348, %352 : vector<8x128xf32>
    %c16_126 = arith.constant 16 : index
    %c0_127 = arith.constant 0 : index
    %354 = vector.load %arg11[%c16_126, %c0_127] : memref<64x512xf32, #tpu.memory_space<vmem>>, vector<8x512xf32>
    %355 = arith.truncf %353 : vector<8x128xf32> to vector<8x128xbf16>
    %c0_128 = arith.constant 0 : index
    %c0_129 = arith.constant 0 : index
    %356 = vector.load %arg5[%c0_128, %c0_129] : memref<128x512xbf16, #tpu.memory_space<vmem>>, vector<128x512xbf16>
    %cst_130 = arith.constant dense<0.000000e+00> : vector<8x512xf32>
    %357 = tpu.matmul %355, %356, %cst_130 {dimension_numbers = #tpu.dot_dimension_numbers<[1], [0], [0], [1], [0, 0, 1, 1], [], []>} : vector<8x128xbf16>, vector<128x512xbf16>, vector<8x512xf32> -> vector<8x512xf32>
    %358 = arith.addf %354, %357 : vector<8x512xf32>
    %359 = vector.extract_strided_slice %358 {offsets = [0, 0], sizes = [8, 128], strides = [1, 1]} : vector<8x512xf32> to vector<8x128xf32>
    %360 = arith.negf %359 : vector<8x128xf32>
    %361 = math.exp %360 : vector<8x128xf32>
    %cst_131 = arith.constant 1.000000e+00 : f32
    %362 = vector.broadcast %cst_131 : f32 to vector<8x128xf32>
    %363 = arith.addf %362, %361 : vector<8x128xf32>
    %364 = arith.divf %362, %363 : vector<8x128xf32>
    %365 = vector.extract_strided_slice %358 {offsets = [0, 128], sizes = [8, 128], strides = [1, 1]} : vector<8x512xf32> to vector<8x128xf32>
    %366 = arith.negf %365 : vector<8x128xf32>
    %367 = math.exp %366 : vector<8x128xf32>
    %cst_132 = arith.constant 1.000000e+00 : f32
    %368 = vector.broadcast %cst_132 : f32 to vector<8x128xf32>
    %369 = arith.addf %368, %367 : vector<8x128xf32>
    %370 = arith.divf %368, %369 : vector<8x128xf32>
    %371 = vector.extract_strided_slice %358 {offsets = [0, 256], sizes = [8, 128], strides = [1, 1]} : vector<8x512xf32> to vector<8x128xf32>
    %372 = math.tanh %371 : vector<8x128xf32>
    %373 = vector.extract_strided_slice %358 {offsets = [0, 384], sizes = [8, 128], strides = [1, 1]} : vector<8x512xf32> to vector<8x128xf32>
    %374 = arith.negf %373 : vector<8x128xf32>
    %375 = math.exp %374 : vector<8x128xf32>
    %cst_133 = arith.constant 1.000000e+00 : f32
    %376 = vector.broadcast %cst_133 : f32 to vector<8x128xf32>
    %377 = arith.addf %376, %375 : vector<8x128xf32>
    %378 = arith.divf %376, %377 : vector<8x128xf32>
    %379 = arith.mulf %370, %351 : vector<8x128xf32>
    %380 = arith.mulf %364, %372 : vector<8x128xf32>
    %381 = arith.addf %379, %380 : vector<8x128xf32>
    %382 = math.tanh %381 : vector<8x128xf32>
    %383 = arith.mulf %378, %382 : vector<8x128xf32>
    %c24_134 = arith.constant 24 : index
    %c0_135 = arith.constant 0 : index
    %384 = vector.load %arg11[%c24_134, %c0_135] : memref<64x512xf32, #tpu.memory_space<vmem>>, vector<8x512xf32>
    %385 = arith.truncf %383 : vector<8x128xf32> to vector<8x128xbf16>
    %c0_136 = arith.constant 0 : index
    %c0_137 = arith.constant 0 : index
    %386 = vector.load %arg5[%c0_136, %c0_137] : memref<128x512xbf16, #tpu.memory_space<vmem>>, vector<128x512xbf16>
    %cst_138 = arith.constant dense<0.000000e+00> : vector<8x512xf32>
    %387 = tpu.matmul %385, %386, %cst_138 {dimension_numbers = #tpu.dot_dimension_numbers<[1], [0], [0], [1], [0, 0, 1, 1], [], []>} : vector<8x128xbf16>, vector<128x512xbf16>, vector<8x512xf32> -> vector<8x512xf32>
    %388 = arith.addf %384, %387 : vector<8x512xf32>
    %389 = vector.extract_strided_slice %388 {offsets = [0, 0], sizes = [8, 128], strides = [1, 1]} : vector<8x512xf32> to vector<8x128xf32>
    %390 = arith.negf %389 : vector<8x128xf32>
    %391 = math.exp %390 : vector<8x128xf32>
    %cst_139 = arith.constant 1.000000e+00 : f32
    %392 = vector.broadcast %cst_139 : f32 to vector<8x128xf32>
    %393 = arith.addf %392, %391 : vector<8x128xf32>
    %394 = arith.divf %392, %393 : vector<8x128xf32>
    %395 = vector.extract_strided_slice %388 {offsets = [0, 128], sizes = [8, 128], strides = [1, 1]} : vector<8x512xf32> to vector<8x128xf32>
    %396 = arith.negf %395 : vector<8x128xf32>
    %397 = math.exp %396 : vector<8x128xf32>
    %cst_140 = arith.constant 1.000000e+00 : f32
    %398 = vector.broadcast %cst_140 : f32 to vector<8x128xf32>
    %399 = arith.addf %398, %397 : vector<8x128xf32>
    %400 = arith.divf %398, %399 : vector<8x128xf32>
    %401 = vector.extract_strided_slice %388 {offsets = [0, 256], sizes = [8, 128], strides = [1, 1]} : vector<8x512xf32> to vector<8x128xf32>
    %402 = math.tanh %401 : vector<8x128xf32>
    %403 = vector.extract_strided_slice %388 {offsets = [0, 384], sizes = [8, 128], strides = [1, 1]} : vector<8x512xf32> to vector<8x128xf32>
    %404 = arith.negf %403 : vector<8x128xf32>
    %405 = math.exp %404 : vector<8x128xf32>
    %cst_141 = arith.constant 1.000000e+00 : f32
    %406 = vector.broadcast %cst_141 : f32 to vector<8x128xf32>
    %407 = arith.addf %406, %405 : vector<8x128xf32>
    %408 = arith.divf %406, %407 : vector<8x128xf32>
    %409 = arith.mulf %400, %381 : vector<8x128xf32>
    %410 = arith.mulf %394, %402 : vector<8x128xf32>
    %411 = arith.addf %409, %410 : vector<8x128xf32>
    %412 = math.tanh %411 : vector<8x128xf32>
    %413 = arith.mulf %408, %412 : vector<8x128xf32>
    %c32_142 = arith.constant 32 : index
    %c0_143 = arith.constant 0 : index
    %414 = vector.load %arg11[%c32_142, %c0_143] : memref<64x512xf32, #tpu.memory_space<vmem>>, vector<8x512xf32>
    %415 = arith.truncf %413 : vector<8x128xf32> to vector<8x128xbf16>
    %c0_144 = arith.constant 0 : index
    %c0_145 = arith.constant 0 : index
    %416 = vector.load %arg5[%c0_144, %c0_145] : memref<128x512xbf16, #tpu.memory_space<vmem>>, vector<128x512xbf16>
    %cst_146 = arith.constant dense<0.000000e+00> : vector<8x512xf32>
    %417 = tpu.matmul %415, %416, %cst_146 {dimension_numbers = #tpu.dot_dimension_numbers<[1], [0], [0], [1], [0, 0, 1, 1], [], []>} : vector<8x128xbf16>, vector<128x512xbf16>, vector<8x512xf32> -> vector<8x512xf32>
    %418 = arith.addf %414, %417 : vector<8x512xf32>
    %419 = vector.extract_strided_slice %418 {offsets = [0, 0], sizes = [8, 128], strides = [1, 1]} : vector<8x512xf32> to vector<8x128xf32>
    %420 = arith.negf %419 : vector<8x128xf32>
    %421 = math.exp %420 : vector<8x128xf32>
    %cst_147 = arith.constant 1.000000e+00 : f32
    %422 = vector.broadcast %cst_147 : f32 to vector<8x128xf32>
    %423 = arith.addf %422, %421 : vector<8x128xf32>
    %424 = arith.divf %422, %423 : vector<8x128xf32>
    %425 = vector.extract_strided_slice %418 {offsets = [0, 128], sizes = [8, 128], strides = [1, 1]} : vector<8x512xf32> to vector<8x128xf32>
    %426 = arith.negf %425 : vector<8x128xf32>
    %427 = math.exp %426 : vector<8x128xf32>
    %cst_148 = arith.constant 1.000000e+00 : f32
    %428 = vector.broadcast %cst_148 : f32 to vector<8x128xf32>
    %429 = arith.addf %428, %427 : vector<8x128xf32>
    %430 = arith.divf %428, %429 : vector<8x128xf32>
    %431 = vector.extract_strided_slice %418 {offsets = [0, 256], sizes = [8, 128], strides = [1, 1]} : vector<8x512xf32> to vector<8x128xf32>
    %432 = math.tanh %431 : vector<8x128xf32>
    %433 = vector.extract_strided_slice %418 {offsets = [0, 384], sizes = [8, 128], strides = [1, 1]} : vector<8x512xf32> to vector<8x128xf32>
    %434 = arith.negf %433 : vector<8x128xf32>
    %435 = math.exp %434 : vector<8x128xf32>
    %cst_149 = arith.constant 1.000000e+00 : f32
    %436 = vector.broadcast %cst_149 : f32 to vector<8x128xf32>
    %437 = arith.addf %436, %435 : vector<8x128xf32>
    %438 = arith.divf %436, %437 : vector<8x128xf32>
    %439 = arith.mulf %430, %411 : vector<8x128xf32>
    %440 = arith.mulf %424, %432 : vector<8x128xf32>
    %441 = arith.addf %439, %440 : vector<8x128xf32>
    %442 = math.tanh %441 : vector<8x128xf32>
    %443 = arith.mulf %438, %442 : vector<8x128xf32>
    %c40_150 = arith.constant 40 : index
    %c0_151 = arith.constant 0 : index
    %444 = vector.load %arg11[%c40_150, %c0_151] : memref<64x512xf32, #tpu.memory_space<vmem>>, vector<8x512xf32>
    %445 = arith.truncf %443 : vector<8x128xf32> to vector<8x128xbf16>
    %c0_152 = arith.constant 0 : index
    %c0_153 = arith.constant 0 : index
    %446 = vector.load %arg5[%c0_152, %c0_153] : memref<128x512xbf16, #tpu.memory_space<vmem>>, vector<128x512xbf16>
    %cst_154 = arith.constant dense<0.000000e+00> : vector<8x512xf32>
    %447 = tpu.matmul %445, %446, %cst_154 {dimension_numbers = #tpu.dot_dimension_numbers<[1], [0], [0], [1], [0, 0, 1, 1], [], []>} : vector<8x128xbf16>, vector<128x512xbf16>, vector<8x512xf32> -> vector<8x512xf32>
    %448 = arith.addf %444, %447 : vector<8x512xf32>
    %449 = vector.extract_strided_slice %448 {offsets = [0, 0], sizes = [8, 128], strides = [1, 1]} : vector<8x512xf32> to vector<8x128xf32>
    %450 = arith.negf %449 : vector<8x128xf32>
    %451 = math.exp %450 : vector<8x128xf32>
    %cst_155 = arith.constant 1.000000e+00 : f32
    %452 = vector.broadcast %cst_155 : f32 to vector<8x128xf32>
    %453 = arith.addf %452, %451 : vector<8x128xf32>
    %454 = arith.divf %452, %453 : vector<8x128xf32>
    %455 = vector.extract_strided_slice %448 {offsets = [0, 128], sizes = [8, 128], strides = [1, 1]} : vector<8x512xf32> to vector<8x128xf32>
    %456 = arith.negf %455 : vector<8x128xf32>
    %457 = math.exp %456 : vector<8x128xf32>
    %cst_156 = arith.constant 1.000000e+00 : f32
    %458 = vector.broadcast %cst_156 : f32 to vector<8x128xf32>
    %459 = arith.addf %458, %457 : vector<8x128xf32>
    %460 = arith.divf %458, %459 : vector<8x128xf32>
    %461 = vector.extract_strided_slice %448 {offsets = [0, 256], sizes = [8, 128], strides = [1, 1]} : vector<8x512xf32> to vector<8x128xf32>
    %462 = math.tanh %461 : vector<8x128xf32>
    %463 = vector.extract_strided_slice %448 {offsets = [0, 384], sizes = [8, 128], strides = [1, 1]} : vector<8x512xf32> to vector<8x128xf32>
    %464 = arith.negf %463 : vector<8x128xf32>
    %465 = math.exp %464 : vector<8x128xf32>
    %cst_157 = arith.constant 1.000000e+00 : f32
    %466 = vector.broadcast %cst_157 : f32 to vector<8x128xf32>
    %467 = arith.addf %466, %465 : vector<8x128xf32>
    %468 = arith.divf %466, %467 : vector<8x128xf32>
    %469 = arith.mulf %460, %441 : vector<8x128xf32>
    %470 = arith.mulf %454, %462 : vector<8x128xf32>
    %471 = arith.addf %469, %470 : vector<8x128xf32>
    %472 = math.tanh %471 : vector<8x128xf32>
    %473 = arith.mulf %468, %472 : vector<8x128xf32>
    %c48_158 = arith.constant 48 : index
    %c0_159 = arith.constant 0 : index
    %474 = vector.load %arg11[%c48_158, %c0_159] : memref<64x512xf32, #tpu.memory_space<vmem>>, vector<8x512xf32>
    %475 = arith.truncf %473 : vector<8x128xf32> to vector<8x128xbf16>
    %c0_160 = arith.constant 0 : index
    %c0_161 = arith.constant 0 : index
    %476 = vector.load %arg5[%c0_160, %c0_161] : memref<128x512xbf16, #tpu.memory_space<vmem>>, vector<128x512xbf16>
    %cst_162 = arith.constant dense<0.000000e+00> : vector<8x512xf32>
    %477 = tpu.matmul %475, %476, %cst_162 {dimension_numbers = #tpu.dot_dimension_numbers<[1], [0], [0], [1], [0, 0, 1, 1], [], []>} : vector<8x128xbf16>, vector<128x512xbf16>, vector<8x512xf32> -> vector<8x512xf32>
    %478 = arith.addf %474, %477 : vector<8x512xf32>
    %479 = vector.extract_strided_slice %478 {offsets = [0, 0], sizes = [8, 128], strides = [1, 1]} : vector<8x512xf32> to vector<8x128xf32>
    %480 = arith.negf %479 : vector<8x128xf32>
    %481 = math.exp %480 : vector<8x128xf32>
    %cst_163 = arith.constant 1.000000e+00 : f32
    %482 = vector.broadcast %cst_163 : f32 to vector<8x128xf32>
    %483 = arith.addf %482, %481 : vector<8x128xf32>
    %484 = arith.divf %482, %483 : vector<8x128xf32>
    %485 = vector.extract_strided_slice %478 {offsets = [0, 128], sizes = [8, 128], strides = [1, 1]} : vector<8x512xf32> to vector<8x128xf32>
    %486 = arith.negf %485 : vector<8x128xf32>
    %487 = math.exp %486 : vector<8x128xf32>
    %cst_164 = arith.constant 1.000000e+00 : f32
    %488 = vector.broadcast %cst_164 : f32 to vector<8x128xf32>
    %489 = arith.addf %488, %487 : vector<8x128xf32>
    %490 = arith.divf %488, %489 : vector<8x128xf32>
    %491 = vector.extract_strided_slice %478 {offsets = [0, 256], sizes = [8, 128], strides = [1, 1]} : vector<8x512xf32> to vector<8x128xf32>
    %492 = math.tanh %491 : vector<8x128xf32>
    %493 = vector.extract_strided_slice %478 {offsets = [0, 384], sizes = [8, 128], strides = [1, 1]} : vector<8x512xf32> to vector<8x128xf32>
    %494 = arith.negf %493 : vector<8x128xf32>
    %495 = math.exp %494 : vector<8x128xf32>
    %cst_165 = arith.constant 1.000000e+00 : f32
    %496 = vector.broadcast %cst_165 : f32 to vector<8x128xf32>
    %497 = arith.addf %496, %495 : vector<8x128xf32>
    %498 = arith.divf %496, %497 : vector<8x128xf32>
    %499 = arith.mulf %490, %471 : vector<8x128xf32>
    %500 = arith.mulf %484, %492 : vector<8x128xf32>
    %501 = arith.addf %499, %500 : vector<8x128xf32>
    %502 = math.tanh %501 : vector<8x128xf32>
    %503 = arith.mulf %498, %502 : vector<8x128xf32>
    %c56_166 = arith.constant 56 : index
    %c0_167 = arith.constant 0 : index
    %504 = vector.load %arg11[%c56_166, %c0_167] : memref<64x512xf32, #tpu.memory_space<vmem>>, vector<8x512xf32>
    %505 = arith.truncf %503 : vector<8x128xf32> to vector<8x128xbf16>
    %c0_168 = arith.constant 0 : index
    %c0_169 = arith.constant 0 : index
    %506 = vector.load %arg5[%c0_168, %c0_169] : memref<128x512xbf16, #tpu.memory_space<vmem>>, vector<128x512xbf16>
    %cst_170 = arith.constant dense<0.000000e+00> : vector<8x512xf32>
    %507 = tpu.matmul %505, %506, %cst_170 {dimension_numbers = #tpu.dot_dimension_numbers<[1], [0], [0], [1], [0, 0, 1, 1], [], []>} : vector<8x128xbf16>, vector<128x512xbf16>, vector<8x512xf32> -> vector<8x512xf32>
    %508 = arith.addf %504, %507 : vector<8x512xf32>
    %509 = vector.extract_strided_slice %508 {offsets = [0, 0], sizes = [8, 128], strides = [1, 1]} : vector<8x512xf32> to vector<8x128xf32>
    %510 = arith.negf %509 : vector<8x128xf32>
    %511 = math.exp %510 : vector<8x128xf32>
    %cst_171 = arith.constant 1.000000e+00 : f32
    %512 = vector.broadcast %cst_171 : f32 to vector<8x128xf32>
    %513 = arith.addf %512, %511 : vector<8x128xf32>
    %514 = arith.divf %512, %513 : vector<8x128xf32>
    %515 = vector.extract_strided_slice %508 {offsets = [0, 128], sizes = [8, 128], strides = [1, 1]} : vector<8x512xf32> to vector<8x128xf32>
    %516 = arith.negf %515 : vector<8x128xf32>
    %517 = math.exp %516 : vector<8x128xf32>
    %cst_172 = arith.constant 1.000000e+00 : f32
    %518 = vector.broadcast %cst_172 : f32 to vector<8x128xf32>
    %519 = arith.addf %518, %517 : vector<8x128xf32>
    %520 = arith.divf %518, %519 : vector<8x128xf32>
    %521 = vector.extract_strided_slice %508 {offsets = [0, 256], sizes = [8, 128], strides = [1, 1]} : vector<8x512xf32> to vector<8x128xf32>
    %522 = math.tanh %521 : vector<8x128xf32>
    %523 = vector.extract_strided_slice %508 {offsets = [0, 384], sizes = [8, 128], strides = [1, 1]} : vector<8x512xf32> to vector<8x128xf32>
    %524 = arith.negf %523 : vector<8x128xf32>
    %525 = math.exp %524 : vector<8x128xf32>
    %cst_173 = arith.constant 1.000000e+00 : f32
    %526 = vector.broadcast %cst_173 : f32 to vector<8x128xf32>
    %527 = arith.addf %526, %525 : vector<8x128xf32>
    %528 = arith.divf %526, %527 : vector<8x128xf32>
    %529 = arith.mulf %520, %501 : vector<8x128xf32>
    %530 = arith.mulf %514, %522 : vector<8x128xf32>
    %531 = arith.addf %529, %530 : vector<8x128xf32>
    %532 = math.tanh %531 : vector<8x128xf32>
    %533 = arith.mulf %528, %532 : vector<8x128xf32>
    %534 = arith.truncf %533 : vector<8x128xf32> to vector<8x128xbf16>
    %c0_174 = arith.constant 0 : index
    %c0_175 = arith.constant 0 : index
    %535 = vector.load %arg7[%c0_174, %c0_175] : memref<128x128xbf16, #tpu.memory_space<vmem>>, vector<128x128xbf16>
    %cst_176 = arith.constant dense<0.000000e+00> : vector<8x128xf32>
    %536 = tpu.matmul %534, %535, %cst_176 {dimension_numbers = #tpu.dot_dimension_numbers<[1], [0], [0], [1], [0, 0, 1, 1], [], []>} : vector<8x128xbf16>, vector<128x128xbf16>, vector<8x128xf32> -> vector<8x128xf32>
    %c0_177 = arith.constant 0 : index
    %c0_178 = arith.constant 0 : index
    %537 = vector.load %arg8[%c0_177, %c0_178] : memref<1x128xf32, #tpu.memory_space<vmem>>, vector<1x128xf32>
    %538 = vector.broadcast %537 : vector<1x128xf32> to vector<8x128xf32>
    %539 = arith.addf %536, %538 : vector<8x128xf32>
    %c0_179 = arith.constant 0 : index
    %c0_180 = arith.constant 0 : index
    %540 = vector.load %arg9[%c0_179, %c0_180] : memref<8x128xf32, #tpu.memory_space<vmem>>, vector<8x128xf32>
    tpu.vector_store %arg9[%c0_179, %c0_180], %539 {strides = array<i32>} : memref<8x128xf32, #tpu.memory_space<vmem>>, vector<8x128xf32>,
    return
  }
}

</mosaic_0001>

<llo_original>
// kernel: price_net_forward.1
$region0: #{price_net_forward.1}
  #allocation0 [shape = 'u32[]', space=smem, size = 0x4, offset = 0x4, fixed_abs, tag = 'smem constant byte address 0x4 - core index']
  #allocation1 [shape = 'u32[72,128]{1,0:T(1,128)}', space=vmem, size = 0x9000, scoped, tag = 'internal scratch']
  #allocation2 [shape = 'f32[64,512]{1,0:T(8,128)}', space=vmem, size = 0x20000, scoped, tag = 'scratch operand']
  #allocation3 [shape = 'f32[64,512]{1,0:T(8,128)}', space=vmem, size = 0x20000, scoped, tag = 'scratch operand']
  %s0 = inlined_call_operand.vmem [shape: bf16[64,128], index: 0, kind: input, shape index: {}]
  %s1 = inlined_call_operand.hbm [shape: bf16[128,512], index: 1, kind: input, shape index: {}]
  %s2 = inlined_call_operand.hbm [shape: bf16[128,512], index: 2, kind: input, shape index: {}]
  %s3 = inlined_call_operand.vmem [shape: f32[1,512], index: 3, kind: input, shape index: {}]
  %s4 = inlined_call_operand.hbm [shape: bf16[128,512], index: 4, kind: input, shape index: {}]
  %s5 = inlined_call_operand.hbm [shape: bf16[128,512], index: 5, kind: input, shape index: {}]
  %s6 = inlined_call_operand.vmem [shape: f32[1,512], index: 6, kind: input, shape index: {}]
  %s7 = inlined_call_operand.vmem [shape: bf16[128,128], index: 7, kind: input, shape index: {}]
  %s8 = inlined_call_operand.vmem [shape: f32[1,128], index: 8, kind: input, shape index: {}]
  %s9 = inlined_call_operand.vmem [shape: f32[8,128], index: 9, kind: output, shape index: {}]
  %s10 = sld [smem:[#allocation0]]
  $region62: #{price_net_forward.1} parent=0
    _
  %s12 = ssub.s32 1, %s10
  %s13 = scalar_select 0, %s12, %s10
  $region1: #{price_net_forward.1} parent=0
    #allocation4 [shape = 'u8[131072]{0}', space=vmem, size = 0x20000, scoped, tag = 'input window, operand 1, single buffered']
    #allocation5 [shape = 's32[1]{0}', space=sflag, size = 0x4, scoped, tag = 'scoped memory for price_net_forward.1']
    #allocation6 [shape = 'u8[131072]{0}', space=vmem, size = 0x20000, scoped, tag = 'input window, operand 2, single buffered']
    #allocation7 [shape = 's32[1]{0}', space=sflag, size = 0x4, scoped, tag = 'scoped memory for price_net_forward.1']
    #allocation8 [shape = 'u8[131072]{0}', space=vmem, size = 0x20000, scoped, tag = 'input window, operand 4, single buffered']
    #allocation9 [shape = 'u8[131072]{0}', space=vmem, size = 0x20000, scoped, tag = 'input window, operand 5, single buffered']
    #allocation10 [shape = 's32[1]{0}', space=sflag, size = 0x4, scoped, tag = 'scoped memory for price_net_forward.1']
    %14 = vsyncpa [#allocation5], 0
    %15 = vsyncpa [#allocation7], 0
    %16 = vsyncpa [#allocation10], 0
    // Predicated region
    $region2: #{price_net_forward.1} parent=1 // pred_check
      _
    $region3: #{price_net_forward.1} parent=1 // pred_check_branch
      %18 = sbr.rel (0) target = $region5
    $region4: #{price_net_forward.1} parent=1 // pred_region
      _
    $region5: #{price_net_forward.1} parent=1 // pred_fallthru
      _
    // Predicated region
    $region6: #{price_net_forward.1} parent=1 // pred_check
      _
    $region7: #{price_net_forward.1} parent=1 // pred_check_branch
      %20 = sbr.rel (0) target = $region9
    $region8: #{price_net_forward.1} parent=1 // pred_region
      %22 = vsyncadd [#allocation5], 0
      %s23 = sshll.u32 %s1, 4
      %s24 = int_to_ptr.hbm [resolvable:$true] %s23
      %s25 = sshll.u32 [#allocation4], 4
      %s26 = int_to_ptr.vmem [resolvable:$true] %s25
      %31 = dma.hbm_to_vmem [thread:$0]  %s24, 4096, %s26, [#allocation5], 256, 256, 16
    $region9: #{price_net_forward.1} parent=1 // pred_fallthru
      _
    // Predicated region
    $region10: #{price_net_forward.1} parent=1 // pred_check
      _
    $region11: #{price_net_forward.1} parent=1 // pred_check_branch
      %33 = sbr.rel (0) target = $region13
    $region12: #{price_net_forward.1} parent=1 // pred_region
      %35 = vsyncadd [#allocation7], 0
      %s36 = sshll.u32 %s2, 4
      %s37 = int_to_ptr.hbm [resolvable:$true] %s36
      %s38 = sshll.u32 [#allocation6], 4
      %s39 = int_to_ptr.vmem [resolvable:$true] %s38
      %44 = dma.hbm_to_vmem [thread:$0]  %s37, 4096, %s39, [#allocation7], 256, 256, 16
    $region13: #{price_net_forward.1} parent=1 // pred_fallthru
      _
    // Predicated region
    $region14: #{price_net_forward.1} parent=1 // pred_check
      _
    $region15: #{price_net_forward.1} parent=1 // pred_check_branch
      %46 = sbr.rel (0) target = $region17
    $region16: #{price_net_forward.1} parent=1 // pred_region
      _
    $region17: #{price_net_forward.1} parent=1 // pred_fallthru
      _
    // Predicated region
    $region18: #{price_net_forward.1} parent=1 // pred_check
      _
    $region19: #{price_net_forward.1} parent=1 // pred_check_branch
      %48 = sbr.rel (0) target = $region21
    $region20: #{price_net_forward.1} parent=1 // pred_region
      %50 = vsyncadd [#allocation7], 0
      %s51 = sshll.u32 %s4, 4
      %s52 = int_to_ptr.hbm [resolvable:$true] %s51
      %s53 = sshll.u32 [#allocation8], 4
      %s54 = int_to_ptr.vmem [resolvable:$true] %s53
      %59 = dma.hbm_to_vmem [thread:$0]  %s52, 4096, %s54, [#allocation7], 256, 256, 16
    $region21: #{price_net_forward.1} parent=1 // pred_fallthru
      _
    // Predicated region
    $region22: #{price_net_forward.1} parent=1 // pred_check
      _
    $region23: #{price_net_forward.1} parent=1 // pred_check_branch
      %61 = sbr.rel (0) target = $region25
    $region24: #{price_net_forward.1} parent=1 // pred_region
      %63 = vsyncadd [#allocation10], 0
      %s64 = sshll.u32 %s5, 4
      %s65 = int_to_ptr.hbm [resolvable:$true] %s64
      %s66 = sshll.u32 [#allocation9], 4
      %s67 = int_to_ptr.vmem [resolvable:$true] %s66
      %72 = dma.hbm_to_vmem [thread:$0]  %s65, 4096, %s67, [#allocation10], 256, 256, 16
    $region25: #{price_net_forward.1} parent=1 // pred_fallthru
      _
    // Predicated region
    $region26: #{price_net_forward.1} parent=1 // pred_check
      _
    $region27: #{price_net_forward.1} parent=1 // pred_check_branch
      %74 = sbr.rel (0) target = $region29
    $region28: #{price_net_forward.1} parent=1 // pred_region
      _
    $region29: #{price_net_forward.1} parent=1 // pred_fallthru
      _
    // Predicated region
    $region30: #{price_net_forward.1} parent=1 // pred_check
      _
    $region31: #{price_net_forward.1} parent=1 // pred_check_branch
      %76 = sbr.rel (0) target = $region33
    $region32: #{price_net_forward.1} parent=1 // pred_region
      _
    $region33: #{price_net_forward.1} parent=1 // pred_fallthru
      _
    // Predicated region
    $region34: #{price_net_forward.1} parent=1 // pred_check
      _
    $region35: #{price_net_forward.1} parent=1 // pred_check_branch
      %78 = sbr.rel (0) target = $region37
    $region36: #{price_net_forward.1} parent=1 // pred_region
      _
    $region37: #{price_net_forward.1} parent=1 // pred_fallthru
      _
    // Predicated region
    $region38: #{price_net_forward.1} parent=1 // pred_check
      _
    $region39: #{price_net_forward.1} parent=1 // pred_check_branch
      %80 = sbr.rel (0) target = $region41
    $region40: #{price_net_forward.1} parent=1 // pred_region
      %82 = dma.done [#allocation5], 4096
    $region41: #{price_net_forward.1} parent=1 // pred_fallthru
      _
    // Predicated region
    $region42: #{price_net_forward.1} parent=1 // pred_check
      _
    $region43: #{price_net_forward.1} parent=1 // pred_check_branch
      %84 = sbr.rel (0) target = $region45
    $region44: #{price_net_forward.1} parent=1 // pred_region
      %86 = dma.done [#allocation7], 4096
    $region45: #{price_net_forward.1} parent=1 // pred_fallthru
      _
    // Predicated region
    $region46: #{price_net_forward.1} parent=1 // pred_check
      _
    $region47: #{price_net_forward.1} parent=1 // pred_check_branch
      %88 = sbr.rel (0) target = $region49
    $region48: #{price_net_forward.1} parent=1 // pred_region
      %90 = dma.done [#allocation7], 4096
    $region49: #{price_net_forward.1} parent=1 // pred_fallthru
      _
    // Predicated region
    $region50: #{price_net_forward.1} parent=1 // pred_check
      _
    $region51: #{price_net_forward.1} parent=1 // pred_check_branch
      %92 = sbr.rel (0) target = $region53
    $region52: #{price_net_forward.1} parent=1 // pred_region
      %94 = dma.done [#allocation10], 4096
    $region53: #{price_net_forward.1} parent=1 // pred_fallthru
      _
    %v96 = vld [vmem:[%s0] sm:$0xf]
    %v97 = vld [vmem:[%s0 + $0x4] sm:$0xf]
    %v98 = vld [vmem:[%s0 + $0x8] sm:$0xf]
    %v99 = vld [vmem:[%s0 + $0xc] sm:$0xf]
    %v100 = vld [vmem:[%s0 + $0x10] sm:$0xf]
    %v101 = vld [vmem:[%s0 + $0x14] sm:$0xf]
    %v102 = vld [vmem:[%s0 + $0x18] sm:$0xf]
    %v103 = vld [vmem:[%s0 + $0x1c] sm:$0xf]
    %v104 = vld [vmem:[#allocation4] sm:$0xff]
    %v105 = vld [vmem:[#allocation4 + $0x8] sm:$0xff]
    %v106 = vld [vmem:[#allocation4 + $0x10] sm:$0xff]
    %v107 = vld [vmem:[#allocation4 + $0x18] sm:$0xff]
    %v108 = vld [vmem:[#allocation4 + $0x20] sm:$0xff]
    %v109 = vld [vmem:[#allocation4 + $0x28] sm:$0xff]
    %v110 = vld [vmem:[#allocation4 + $0x30] sm:$0xff]
    %v111 = vld [vmem:[#allocation4 + $0x38] sm:$0xff]
    %v112 = vld [vmem:[#allocation4 + $0x40] sm:$0xff]
    %v113 = vld [vmem:[#allocation4 + $0x48] sm:$0xff]
    %v114 = vld [vmem:[#allocation4 + $0x50] sm:$0xff]
    %v115 = vld [vmem:[#allocation4 + $0x58] sm:$0xff]
    %v116 = vld [vmem:[#allocation4 + $0x60] sm:$0xff]
    %v117 = vld [vmem:[#allocation4 + $0x68] sm:$0xff]
    %v118 = vld [vmem:[#allocation4 + $0x70] sm:$0xff]
    %v119 = vld [vmem:[#allocation4 + $0x78] sm:$0xff]
    %v120 = vld [vmem:[#allocation4 + $0x80] sm:$0xff]
    %v121 = vld [vmem:[#allocation4 + $0x88] sm:$0xff]
    %v122 = vld [vmem:[#allocation4 + $0x90] sm:$0xff]
    %v123 = vld [vmem:[#allocation4 + $0x98] sm:$0xff]
    %v124 = vld [vmem:[#allocation4 + $0xa0] sm:$0xff]
    %v125 = vld [vmem:[#allocation4 + $0xa8] sm:$0xff]
    %v126 = vld [vmem:[#allocation4 + $0xb0] sm:$0xff]
    %v127 = vld [vmem:[#allocation4 + $0xb8] sm:$0xff]
    %v128 = vld [vmem:[#allocation4 + $0xc0] sm:$0xff]
    %v129 = vld [vmem:[#allocation4 + $0xc8] sm:$0xff]
    %v130 = vld [vmem:[#allocation4 + $0xd0] sm:$0xff]
    %v131 = vld [vmem:[#allocation4 + $0xd8] sm:$0xff]
    %v132 = vld [vmem:[#allocation4 + $0xe0] sm:$0xff]
    %v133 = vld [vmem:[#allocation4 + $0xe8] sm:$0xff]
    %v134 = vld [vmem:[#allocation4 + $0xf0] sm:$0xff]
    %v135 = vld [vmem:[#allocation4 + $0xf8] sm:$0xff]
    %v136 = vld [vmem:[%s3] sm:$0xf]
    %v138 = vperm.slane %v136, 0
    %v139 = vperm.slane %v136, 1
    %v140 = vperm.slane %v136, 2
    %v141 = vperm.slane %v136, 3
    %v154 = vunpack.c.l.b16 %v96
    %v155 = vunpack.c.l.b16 %v97
    %v156 = vunpack.c.l.b16 %v98
    %v157 = vunpack.c.l.b16 %v99
    %v158 = vunpack.c.l.b16 %v100
    %v159 = vunpack.c.l.b16 %v101
    %v160 = vunpack.c.l.b16 %v102
    %v161 = vunpack.c.l.b16 %v103
    %v162 = vpack.c.b16 %v155, %v154
    %v163 = vpack.c.b16 %v157, %v156
    %v164 = vpack.c.b16 %v159, %v158
    %v165 = vpack.c.b16 %v161, %v160
    %v202 = vunpack.c.l.b16 %v104
    %v203 = vunpack.c.h.b16 %v104
    %v204 = vunpack.c.l.b16 %v105
    %v205 = vunpack.c.h.b16 %v105
    %v206 = vunpack.c.l.b16 %v106
    %v207 = vunpack.c.h.b16 %v106
    %v208 = vunpack.c.l.b16 %v107
    %v209 = vunpack.c.h.b16 %v107
    %v210 = vunpack.c.l.b16 %v108
    %v211 = vunpack.c.h.b16 %v108
    %v212 = vunpack.c.l.b16 %v109
    %v213 = vunpack.c.h.b16 %v109
    %v214 = vunpack.c.l.b16 %v110
    %v215 = vunpack.c.h.b16 %v110
    %v216 = vunpack.c.l.b16 %v111
    %v217 = vunpack.c.h.b16 %v111
    %v218 = vunpack.c.l.b16 %v112
    %v219 = vunpack.c.h.b16 %v112
    %v220 = vunpack.c.l.b16 %v113
    %v221 = vunpack.c.h.b16 %v113
    %v222 = vunpack.c.l.b16 %v114
    %v223 = vunpack.c.h.b16 %v114
    %v224 = vunpack.c.l.b16 %v115
    %v225 = vunpack.c.h.b16 %v115
    %v226 = vunpack.c.l.b16 %v116
    %v227 = vunpack.c.h.b16 %v116
    %v228 = vunpack.c.l.b16 %v117
    %v229 = vunpack.c.h.b16 %v117
    %v230 = vunpack.c.l.b16 %v118
    %v231 = vunpack.c.h.b16 %v118
    %v232 = vunpack.c.l.b16 %v119
    %v233 = vunpack.c.h.b16 %v119
    %v234 = vunpack.c.l.b16 %v120
    %v235 = vunpack.c.h.b16 %v120
    %v236 = vunpack.c.l.b16 %v121
    %v237 = vunpack.c.h.b16 %v121
    %v238 = vunpack.c.l.b16 %v122
    %v239 = vunpack.c.h.b16 %v122
    %v240 = vunpack.c.l.b16 %v123
    %v241 = vunpack.c.h.b16 %v123
    %v242 = vunpack.c.l.b16 %v124
    %v243 = vunpack.c.h.b16 %v124
    %v244 = vunpack.c.l.b16 %v125
    %v245 = vunpack.c.h.b16 %v125
    %v246 = vunpack.c.l.b16 %v126
    %v247 = vunpack.c.h.b16 %v126
    %v248 = vunpack.c.l.b16 %v127
    %v249 = vunpack.c.h.b16 %v127
    %v250 = vunpack.c.l.b16 %v128
    %v251 = vunpack.c.h.b16 %v128
    %v252 = vunpack.c.l.b16 %v129
    %v253 = vunpack.c.h.b16 %v129
    %v254 = vunpack.c.l.b16 %v130
    %v255 = vunpack.c.h.b16 %v130
    %v256 = vunpack.c.l.b16 %v131
    %v257 = vunpack.c.h.b16 %v131
    %v258 = vunpack.c.l.b16 %v132
    %v259 = vunpack.c.h.b16 %v132
    %v260 = vunpack.c.l.b16 %v133
    %v261 = vunpack.c.h.b16 %v133
    %v262 = vunpack.c.l.b16 %v134
    %v263 = vunpack.c.h.b16 %v134
    %v264 = vunpack.c.l.b16 %v135
    %v265 = vunpack.c.h.b16 %v135
    %v266 = vpack.c.b16 %v206, %v202
    %v267 = vpack.c.b16 %v207, %v203
    %v268 = vpack.c.b16 %v208, %v204
    %v269 = vpack.c.b16 %v209, %v205
    %v270 = vpack.c.b16 %v214, %v210
    %v271 = vpack.c.b16 %v215, %v211
    %v272 = vpack.c.b16 %v216, %v212
    %v273 = vpack.c.b16 %v217, %v213
    %v274 = vpack.c.b16 %v222, %v218
    %v275 = vpack.c.b16 %v223, %v219
    %v276 = vpack.c.b16 %v224, %v220
    %v277 = vpack.c.b16 %v225, %v221
    %v278 = vpack.c.b16 %v230, %v226
    %v279 = vpack.c.b16 %v231, %v227
    %v280 = vpack.c.b16 %v232, %v228
    %v281 = vpack.c.b16 %v233, %v229
    %v282 = vpack.c.b16 %v238, %v234
    %v283 = vpack.c.b16 %v239, %v235
    %v284 = vpack.c.b16 %v240, %v236
    %v285 = vpack.c.b16 %v241, %v237
    %v286 = vpack.c.b16 %v246, %v242
    %v287 = vpack.c.b16 %v247, %v243
    %v288 = vpack.c.b16 %v248, %v244
    %v289 = vpack.c.b16 %v249, %v245
    %v290 = vpack.c.b16 %v254, %v250
    %v291 = vpack.c.b16 %v255, %v251
    %v292 = vpack.c.b16 %v256, %v252
    %v293 = vpack.c.b16 %v257, %v253
    %v294 = vpack.c.b16 %v262, %v258
    %v295 = vpack.c.b16 %v263, %v259
    %v296 = vpack.c.b16 %v264, %v260
    %v297 = vpack.c.b16 %v265, %v261
    %330 = vmatpush.bf16.msra.mxu0 %v294
    %331 = vmatpush.bf16.msra.mxu0 %v290
    %332 = vmatpush.bf16.msra.mxu0 %v286
    %333 = vmatpush.bf16.msra.mxu0 %v282
    %334 = vmatpush.bf16.msra.mxu0 %v278
    %335 = vmatpush.bf16.msra.mxu0 %v274
    %336 = vmatpush.bf16.msra.mxu0 %v270
    %337 = vmatpush.bf16.msra.mxu0 %v266
    %338 = vmatmul.bf16.gmra.mxu0 %v162
    %v339 = vpop.f32.mrf.mxu0
    %v340 = vadd.f32 %v138, %v339
    %v341 = vpop.f32.mrf.mxu0
    %v342 = vadd.f32 %v138, %v341
    %343 = vmatmul.bf16.gmra.mxu0 %v163
    %v344 = vpop.f32.mrf.mxu0
    %v345 = vadd.f32 %v138, %v344
    %v346 = vpop.f32.mrf.mxu0
    %v347 = vadd.f32 %v138, %v346
    %348 = vmatmul.bf16.gmra.mxu0 %v164
    %v349 = vpop.f32.mrf.mxu0
    %v350 = vadd.f32 %v138, %v349
    %v351 = vpop.f32.mrf.mxu0
    %v352 = vadd.f32 %v138, %v351
    %353 = vmatmul.bf16.gmra.mxu0 %v165
    %v354 = vpop.f32.mrf.mxu0
    %v355 = vadd.f32 %v138, %v354
    %v356 = vpop.f32.mrf.mxu0
    %v357 = vadd.f32 %v138, %v356
    %358 = vdwg.mxu0
    %359 = vmatpush.bf16.msra.mxu0 %v295
    %360 = vmatpush.bf16.msra.mxu0 %v291
    %361 = vmatpush.bf16.msra.mxu0 %v287
    %362 = vmatpush.bf16.msra.mxu0 %v283
    %363 = vmatpush.bf16.msra.mxu0 %v279
    %364 = vmatpush.bf16.msra.mxu0 %v275
    %365 = vmatpush.bf16.msra.mxu0 %v271
    %366 = vmatpush.bf16.msra.mxu0 %v267
    %367 = vmatmul.bf16.gmra.mxu0 %v162
    %v368 = vpop.f32.mrf.mxu0
    %v369 = vadd.f32 %v139, %v368
    %v370 = vpop.f32.mrf.mxu0
    %v371 = vadd.f32 %v139, %v370
    %372 = vmatmul.bf16.gmra.mxu0 %v163
    %v373 = vpop.f32.mrf.mxu0
    %v374 = vadd.f32 %v139, %v373
    %v375 = vpop.f32.mrf.mxu0
    %v376 = vadd.f32 %v139, %v375
    %377 = vmatmul.bf16.gmra.mxu0 %v164
    %v378 = vpop.f32.mrf.mxu0
    %v379 = vadd.f32 %v139, %v378
    %v380 = vpop.f32.mrf.mxu0
    %v381 = vadd.f32 %v139, %v380
    %382 = vmatmul.bf16.gmra.mxu0 %v165
    %v383 = vpop.f32.mrf.mxu0
    %v384 = vadd.f32 %v139, %v383
    %v385 = vpop.f32.mrf.mxu0
    %v386 = vadd.f32 %v139, %v385
    %387 = vdwg.mxu0
    %388 = vmatpush.bf16.msra.mxu0 %v296
    %389 = vmatpush.bf16.msra.mxu0 %v292
    %390 = vmatpush.bf16.msra.mxu0 %v288
    %391 = vmatpush.bf16.msra.mxu0 %v284
    %392 = vmatpush.bf16.msra.mxu0 %v280
    %393 = vmatpush.bf16.msra.mxu0 %v276
    %394 = vmatpush.bf16.msra.mxu0 %v272
    %395 = vmatpush.bf16.msra.mxu0 %v268
    %396 = vmatmul.bf16.gmra.mxu0 %v162
    %v397 = vpop.f32.mrf.mxu0
    %v398 = vadd.f32 %v140, %v397
    %v399 = vpop.f32.mrf.mxu0
    %v400 = vadd.f32 %v140, %v399
    %401 = vmatmul.bf16.gmra.mxu0 %v163
    %v402 = vpop.f32.mrf.mxu0
    %v403 = vadd.f32 %v140, %v402
    %v404 = vpop.f32.mrf.mxu0
    %v405 = vadd.f32 %v140, %v404
    %406 = vmatmul.bf16.gmra.mxu0 %v164
    %v407 = vpop.f32.mrf.mxu0
    %v408 = vadd.f32 %v140, %v407
    %v409 = vpop.f32.mrf.mxu0
    %v410 = vadd.f32 %v140, %v409
    %411 = vmatmul.bf16.gmra.mxu0 %v165
    %v412 = vpop.f32.mrf.mxu0
    %v413 = vadd.f32 %v140, %v412
    %v414 = vpop.f32.mrf.mxu0
    %v415 = vadd.f32 %v140, %v414
    %416 = vdwg.mxu0
    %417 = vmatpush.bf16.msra.mxu0 %v297
    %418 = vmatpush.bf16.msra.mxu0 %v293
    %419 = vmatpush.bf16.msra.mxu0 %v289
    %420 = vmatpush.bf16.msra.mxu0 %v285
    %421 = vmatpush.bf16.msra.mxu0 %v281
    %422 = vmatpush.bf16.msra.mxu0 %v277
    %423 = vmatpush.bf16.msra.mxu0 %v273
    %424 = vmatpush.bf16.msra.mxu0 %v269
    %425 = vmatmul.bf16.gmra.mxu0 %v162
    %v426 = vpop.f32.mrf.mxu0
    %v427 = vadd.f32 %v141, %v426
    %v428 = vpop.f32.mrf.mxu0
    %v429 = vadd.f32 %v141, %v428
    %430 = vmatmul.bf16.gmra.mxu0 %v163
    %v431 = vpop.f32.mrf.mxu0
    %v432 = vadd.f32 %v141, %v431
    %v433 = vpop.f32.mrf.mxu0
    %v434 = vadd.f32 %v141, %v433
    %435 = vmatmul.bf16.gmra.mxu0 %v164
    %v436 = vpop.f32.mrf.mxu0
    %v437 = vadd.f32 %v141, %v436
    %v438 = vpop.f32.mrf.mxu0
    %v439 = vadd.f32 %v141, %v438
    %440 = vmatmul.bf16.gmra.mxu0 %v165
    %v441 = vpop.f32.mrf.mxu0
    %v442 = vadd.f32 %v141, %v441
    %v443 = vpop.f32.mrf.mxu0
    %v444 = vadd.f32 %v141, %v443
    %445 = vdwg.mxu0
    %446 = vst [vmem:[#allocation2] sm:$0xff] %v340
    %447 = vst [vmem:[#allocation2 + $0x8] sm:$0xff] %v369
    %448 = vst [vmem:[#allocation2 + $0x10] sm:$0xff] %v398
    %449 = vst [vmem:[#allocation2 + $0x18] sm:$0xff] %v427
    %450 = vst [vmem:[#allocation2 + $0x20] sm:$0xff] %v342
    %451 = vst [vmem:[#allocation2 + $0x28] sm:$0xff] %v371
    %452 = vst [vmem:[#allocation2 + $0x30] sm:$0xff] %v400
    %453 = vst [vmem:[#allocation2 + $0x38] sm:$0xff] %v429
    %454 = vst [vmem:[#allocation2 + $0x40] sm:$0xff] %v345
    %455 = vst [vmem:[#allocation2 + $0x48] sm:$0xff] %v374
    %456 = vst [vmem:[#allocation2 + $0x50] sm:$0xff] %v403
    %457 = vst [vmem:[#allocation2 + $0x58] sm:$0xff] %v432
    %458 = vst [vmem:[#allocation2 + $0x60] sm:$0xff] %v347
    %459 = vst [vmem:[#allocation2 + $0x68] sm:$0xff] %v376
    %460 = vst [vmem:[#allocation2 + $0x70] sm:$0xff] %v405
    %461 = vst [vmem:[#allocation2 + $0x78] sm:$0xff] %v434
    %462 = vst [vmem:[#allocation2 + $0x80] sm:$0xff] %v350
    %463 = vst [vmem:[#allocation2 + $0x88] sm:$0xff] %v379
    %464 = vst [vmem:[#allocation2 + $0x90] sm:$0xff] %v408
    %465 = vst [vmem:[#allocation2 + $0x98] sm:$0xff] %v437
    %466 = vst [vmem:[#allocation2 + $0xa0] sm:$0xff] %v352
    %467 = vst [vmem:[#allocation2 + $0xa8] sm:$0xff] %v381
    %468 = vst [vmem:[#allocation2 + $0xb0] sm:$0xff] %v410
    %469 = vst [vmem:[#allocation2 + $0xb8] sm:$0xff] %v439
    %470 = vst [vmem:[#allocation2 + $0xc0] sm:$0xff] %v355
    %471 = vst [vmem:[#allocation2 + $0xc8] sm:$0xff] %v384
    %472 = vst [vmem:[#allocation2 + $0xd0] sm:$0xff] %v413
    %473 = vst [vmem:[#allocation2 + $0xd8] sm:$0xff] %v442
    %474 = vst [vmem:[#allocation2 + $0xe0] sm:$0xff] %v357
    %475 = vst [vmem:[#allocation2 + $0xe8] sm:$0xff] %v386
    %476 = vst [vmem:[#allocation2 + $0xf0] sm:$0xff] %v415
    %477 = vst [vmem:[#allocation2 + $0xf8] sm:$0xff] %v444
    %v478 = vld [vmem:[%s6] sm:$0xf]
    %v480 = vperm.slane %v478, 0
    %v481 = vperm.slane %v478, 1
    %v482 = vperm.slane %v478, 2
    %v483 = vperm.slane %v478, 3
    %v488 = vld [vmem:[#allocation2] sm:$0xff]
    %v489 = vld [vmem:[#allocation2 + $0x8] sm:$0xff]
    %v490 = vld [vmem:[#allocation2 + $0x10] sm:$0xff]
    %v491 = vld [vmem:[#allocation2 + $0x18] sm:$0xff]
    %v492 = vld [vmem:[#allocation6] sm:$0xff]
    %v493 = vld [vmem:[#allocation6 + $0x8] sm:$0xff]
    %v494 = vld [vmem:[#allocation6 + $0x10] sm:$0xff]
    %v495 = vld [vmem:[#allocation6 + $0x18] sm:$0xff]
    %v496 = vld [vmem:[#allocation6 + $0x20] sm:$0xff]
    %v497 = vld [vmem:[#allocation6 + $0x28] sm:$0xff]
    %v498 = vld [vmem:[#allocation6 + $0x30] sm:$0xff]
    %v499 = vld [vmem:[#allocation6 + $0x38] sm:$0xff]
    %v500 = vld [vmem:[#allocation6 + $0x40] sm:$0xff]
    %v501 = vld [vmem:[#allocation6 + $0x48] sm:$0xff]
    %v502 = vld [vmem:[#allocation6 + $0x50] sm:$0xff]
    %v503 = vld [vmem:[#allocation6 + $0x58] sm:$0xff]
    %v504 = vld [vmem:[#allocation6 + $0x60] sm:$0xff]
    %v505 = vld [vmem:[#allocation6 + $0x68] sm:$0xff]
    %v506 = vld [vmem:[#allocation6 + $0x70] sm:$0xff]
    %v507 = vld [vmem:[#allocation6 + $0x78] sm:$0xff]
    %v508 = vld [vmem:[#allocation6 + $0x80] sm:$0xff]
    %v509 = vld [vmem:[#allocation6 + $0x88] sm:$0xff]
    %v510 = vld [vmem:[#allocation6 + $0x90] sm:$0xff]
    %v511 = vld [vmem:[#allocation6 + $0x98] sm:$0xff]
    %v512 = vld [vmem:[#allocation6 + $0xa0] sm:$0xff]
    %v513 = vld [vmem:[#allocation6 + $0xa8] sm:$0xff]
    %v514 = vld [vmem:[#allocation6 + $0xb0] sm:$0xff]
    %v515 = vld [vmem:[#allocation6 + $0xb8] sm:$0xff]
    %v516 = vld [vmem:[#allocation6 + $0xc0] sm:$0xff]
    %v517 = vld [vmem:[#allocation6 + $0xc8] sm:$0xff]
    %v518 = vld [vmem:[#allocation6 + $0xd0] sm:$0xff]
    %v519 = vld [vmem:[#allocation6 + $0xd8] sm:$0xff]
    %v520 = vld [vmem:[#allocation6 + $0xe0] sm:$0xff]
    %v521 = vld [vmem:[#allocation6 + $0xe8] sm:$0xff]
    %v522 = vld [vmem:[#allocation6 + $0xf0] sm:$0xff]
    %v523 = vld [vmem:[#allocation6 + $0xf8] sm:$0xff]
    %v556 = vunpack.c.l.b16 %v492
    %v557 = vunpack.c.h.b16 %v492
    %v558 = vunpack.c.l.b16 %v493
    %v559 = vunpack.c.h.b16 %v493
    %v560 = vunpack.c.l.b16 %v494
    %v561 = vunpack.c.h.b16 %v494
    %v562 = vunpack.c.l.b16 %v495
    %v563 = vunpack.c.h.b16 %v495
    %v564 = vunpack.c.l.b16 %v496
    %v565 = vunpack.c.h.b16 %v496
    %v566 = vunpack.c.l.b16 %v497
    %v567 = vunpack.c.h.b16 %v497
    %v568 = vunpack.c.l.b16 %v498
    %v569 = vunpack.c.h.b16 %v498
    %v570 = vunpack.c.l.b16 %v499
    %v571 = vunpack.c.h.b16 %v499
    %v572 = vunpack.c.l.b16 %v500
    %v573 = vunpack.c.h.b16 %v500
    %v574 = vunpack.c.l.b16 %v501
    %v575 = vunpack.c.h.b16 %v501
    %v576 = vunpack.c.l.b16 %v502
    %v577 = vunpack.c.h.b16 %v502
    %v578 = vunpack.c.l.b16 %v503
    %v579 = vunpack.c.h.b16 %v503
    %v580 = vunpack.c.l.b16 %v504
    %v581 = vunpack.c.h.b16 %v504
    %v582 = vunpack.c.l.b16 %v505
    %v583 = vunpack.c.h.b16 %v505
    %v584 = vunpack.c.l.b16 %v506
    %v585 = vunpack.c.h.b16 %v506
    %v586 = vunpack.c.l.b16 %v507
    %v587 = vunpack.c.h.b16 %v507
    %v588 = vunpack.c.l.b16 %v508
    %v589 = vunpack.c.h.b16 %v508
    %v590 = vunpack.c.l.b16 %v509
    %v591 = vunpack.c.h.b16 %v509
    %v592 = vunpack.c.l.b16 %v510
    %v593 = vunpack.c.h.b16 %v510
    %v594 = vunpack.c.l.b16 %v511
    %v595 = vunpack.c.h.b16 %v511
    %v596 = vunpack.c.l.b16 %v512
    %v597 = vunpack.c.h.b16 %v512
    %v598 = vunpack.c.l.b16 %v513
    %v599 = vunpack.c.h.b16 %v513
    %v600 = vunpack.c.l.b16 %v514
    %v601 = vunpack.c.h.b16 %v514
    %v602 = vunpack.c.l.b16 %v515
    %v603 = vunpack.c.h.b16 %v515
    %v604 = vunpack.c.l.b16 %v516
    %v605 = vunpack.c.h.b16 %v516
    %v606 = vunpack.c.l.b16 %v517
    %v607 = vunpack.c.h.b16 %v517
    %v608 = vunpack.c.l.b16 %v518
    %v609 = vunpack.c.h.b16 %v518
    %v610 = vunpack.c.l.b16 %v519
    %v611 = vunpack.c.h.b16 %v519
    %v612 = vunpack.c.l.b16 %v520
    %v613 = vunpack.c.h.b16 %v520
    %v614 = vunpack.c.l.b16 %v521
    %v615 = vunpack.c.h.b16 %v521
    %v616 = vunpack.c.l.b16 %v522
    %v617 = vunpack.c.h.b16 %v522
    %v618 = vunpack.c.l.b16 %v523
    %v619 = vunpack.c.h.b16 %v523
    %v620 = vpack.c.b16 %v560, %v556
    %v621 = vpack.c.b16 %v561, %v557
    %v622 = vpack.c.b16 %v562, %v558
    %v623 = vpack.c.b16 %v563, %v559
    %v624 = vpack.c.b16 %v568, %v564
    %v625 = vpack.c.b16 %v569, %v565
    %v626 = vpack.c.b16 %v570, %v566
    %v627 = vpack.c.b16 %v571, %v567
    %v628 = vpack.c.b16 %v576, %v572
    %v629 = vpack.c.b16 %v577, %v573
    %v630 = vpack.c.b16 %v578, %v574
    %v631 = vpack.c.b16 %v579, %v575
    %v632 = vpack.c.b16 %v584, %v580
    %v633 = vpack.c.b16 %v585, %v581
    %v634 = vpack.c.b16 %v586, %v582
    %v635 = vpack.c.b16 %v587, %v583
    %v636 = vpack.c.b16 %v592, %v588
    %v637 = vpack.c.b16 %v593, %v589
    %v638 = vpack.c.b16 %v594, %v590
    %v639 = vpack.c.b16 %v595, %v591
    %v640 = vpack.c.b16 %v600, %v596
    %v641 = vpack.c.b16 %v601, %v597
    %v642 = vpack.c.b16 %v602, %v598
    %v643 = vpack.c.b16 %v603, %v599
    %v644 = vpack.c.b16 %v608, %v604
    %v645 = vpack.c.b16 %v609, %v605
    %v646 = vpack.c.b16 %v610, %v606
    %v647 = vpack.c.b16 %v611, %v607
    %v648 = vpack.c.b16 %v616, %v612
    %v649 = vpack.c.b16 %v617, %v613
    %v650 = vpack.c.b16 %v618, %v614
    %v651 = vpack.c.b16 %v619, %v615
    %684 = vmatpush.bf16.msra.mxu0 %v648
    %685 = vmatpush.bf16.msra.mxu0 %v644
    %686 = vmatpush.bf16.msra.mxu0 %v640
    %687 = vmatpush.bf16.msra.mxu0 %v636
    %688 = vmatpush.bf16.msra.mxu0 %v632
    %689 = vmatpush.bf16.msra.mxu0 %v628
    %690 = vmatpush.bf16.msra.mxu0 %v624
    %691 = vmatpush.bf16.msra.mxu0 %v620
    %692 = vmatmul.bf16.gmra.mxu0 0
    %v693 = vpop.f32.mrf.mxu0
    %v694 = vadd.f32 0.0, %v693
    %v695 = vpop.f32.mrf.mxu0
    %696 = vdwg.mxu0
    %697 = vmatpush.bf16.msra.mxu0 %v649
    %698 = vmatpush.bf16.msra.mxu0 %v645
    %699 = vmatpush.bf16.msra.mxu0 %v641
    %700 = vmatpush.bf16.msra.mxu0 %v637
    %701 = vmatpush.bf16.msra.mxu0 %v633
    %702 = vmatpush.bf16.msra.mxu0 %v629
    %703 = vmatpush.bf16.msra.mxu0 %v625
    %704 = vmatpush.bf16.msra.mxu0 %v621
    %705 = vmatmul.bf16.gmra.mxu0 0
    %v706 = vpop.f32.mrf.mxu0
    %v707 = vadd.f32 0.0, %v706
    %v708 = vpop.f32.mrf.mxu0
    %709 = vdwg.mxu0
    %710 = vmatpush.bf16.msra.mxu0 %v650
    %711 = vmatpush.bf16.msra.mxu0 %v646
    %712 = vmatpush.bf16.msra.mxu0 %v642
    %713 = vmatpush.bf16.msra.mxu0 %v638
    %714 = vmatpush.bf16.msra.mxu0 %v634
    %715 = vmatpush.bf16.msra.mxu0 %v630
    %716 = vmatpush.bf16.msra.mxu0 %v626
    %717 = vmatpush.bf16.msra.mxu0 %v622
    %718 = vmatmul.bf16.gmra.mxu0 0
    %v719 = vpop.f32.mrf.mxu0
    %v720 = vadd.f32 0.0, %v719
    %v721 = vpop.f32.mrf.mxu0
    %722 = vdwg.mxu0
    %723 = vmatpush.bf16.msra.mxu0 %v651
    %724 = vmatpush.bf16.msra.mxu0 %v647
    %725 = vmatpush.bf16.msra.mxu0 %v643
    %726 = vmatpush.bf16.msra.mxu0 %v639
    %727 = vmatpush.bf16.msra.mxu0 %v635
    %728 = vmatpush.bf16.msra.mxu0 %v631
    %729 = vmatpush.bf16.msra.mxu0 %v627
    %730 = vmatpush.bf16.msra.mxu0 %v623
    %731 = vmatmul.bf16.gmra.mxu0 0
    %v732 = vpop.f32.mrf.mxu0
    %v733 = vadd.f32 0.0, %v732
    %v734 = vpop.f32.mrf.mxu0
    %735 = vdwg.mxu0
    %v736 = vadd.f32 %v488, %v694
    %v737 = vadd.f32 %v489, %v707
    %v738 = vadd.f32 %v490, %v720
    %v739 = vadd.f32 %v491, %v733
    %v740 = vxor.u32 %v736, 2147483648
    %v741 = vmul.f32 %v740, 1.442695
    %v742 = vpow.pop %v741
    %v743 = vadd.f32 %v742, 1.0
    %v744 = vrcp.pop %v743
    %v745 = vmul.f32 %v743, %v744
    %v746 = vsub.f32 1.0, %v745
    %v747 = vmul.f32 %v744, %v746
    %v748 = vadd.f32 %v744, %v747
    %vm749 = vweird.f32 %v743
    %vm750 = vweird.f32 %v744
    %vm751 = vmor %vm749, %vm750
    %v752 = vsel %vm751, %v744, %v748
    %v753 = vand.u32 2147483647, %v743
    %vm754 = vcmp.eq.f32.partialorder %v753, 8.507059e+37
    %v755 = vand.u32 %v743, 2147483648
    %v756 = vor.u32 1.1754944e-38, %v755
    %v757 = vsel %vm754, %v756, %v752
    %v758 = vmul.f32 1.0, %v757
    %v759 = vxor.u32 %v737, 2147483648
    %v760 = vmul.f32 %v759, 1.442695
    %v761 = vpow.pop %v760
    %v762 = vadd.f32 %v761, 1.0
    %v763 = vrcp.pop %v762
    %v764 = vmul.f32 %v762, %v763
    %v765 = vsub.f32 1.0, %v764
    %v766 = vmul.f32 %v763, %v765
    %v767 = vadd.f32 %v763, %v766
    %vm768 = vweird.f32 %v762
    %vm769 = vweird.f32 %v763
    %vm770 = vmor %vm768, %vm769
    %v771 = vsel %vm770, %v763, %v767
    %v772 = vand.u32 2147483647, %v762
    %vm773 = vcmp.eq.f32.partialorder %v772, 8.507059e+37
    %v774 = vand.u32 %v762, 2147483648
    %v775 = vor.u32 1.1754944e-38, %v774
    %v776 = vsel %vm773, %v775, %v771
    %v777 = vmul.f32 1.0, %v776
    %v778 = vtanh.pop %v738
    %v779 = vxor.u32 %v739, 2147483648
    %v780 = vmul.f32 %v779, 1.442695
    %v781 = vpow.pop %v780
    %v782 = vadd.f32 %v781, 1.0
    %v783 = vrcp.pop %v782
    %v784 = vmul.f32 %v782, %v783
    %v785 = vsub.f32 1.0, %v784
    %v786 = vmul.f32 %v783, %v785
    %v787 = vadd.f32 %v783, %v786
    %vm788 = vweird.f32 %v782
    %vm789 = vweird.f32 %v783
    %vm790 = vmor %vm788, %vm789
    %v791 = vsel %vm790, %v783, %v787
    %v792 = vand.u32 2147483647, %v782
    %vm793 = vcmp.eq.f32.partialorder %v792, 8.507059e+37
    %v794 = vand.u32 %v782, 2147483648
    %v795 = vor.u32 1.1754944e-38, %v794
    %v796 = vsel %vm793, %v795, %v791
    %v797 = vmul.f32 1.0, %v796
    %v798 = vmul.f32 %v777, 0.0
    %v799 = vmul.f32 %v758, %v778
    %v800 = vadd.f32 %v798, %v799
    %v801 = vtanh.pop %v800
    %v802 = vmul.f32 %v797, %v801
    %v803 = vpack.c.bf16 %v802, %v802
    %v804 = vld [vmem:[#allocation8] sm:$0xff]
    %v805 = vld [vmem:[#allocation8 + $0x8] sm:$0xff]
    %v806 = vld [vmem:[#allocation8 + $0x10] sm:$0xff]
    %v807 = vld [vmem:[#allocation8 + $0x18] sm:$0xff]
    %v808 = vld [vmem:[#allocation8 + $0x20] sm:$0xff]
    %v809 = vld [vmem:[#allocation8 + $0x28] sm:$0xff]
    %v810 = vld [vmem:[#allocation8 + $0x30] sm:$0xff]
    %v811 = vld [vmem:[#allocation8 + $0x38] sm:$0xff]
    %v812 = vld [vmem:[#allocation8 + $0x40] sm:$0xff]
    %v813 = vld [vmem:[#allocation8 + $0x48] sm:$0xff]
    %v814 = vld [vmem:[#allocation8 + $0x50] sm:$0xff]
    %v815 = vld [vmem:[#allocation8 + $0x58] sm:$0xff]
    %v816 = vld [vmem:[#allocation8 + $0x60] sm:$0xff]
    %v817 = vld [vmem:[#allocation8 + $0x68] sm:$0xff]
    %v818 = vld [vmem:[#allocation8 + $0x70] sm:$0xff]
    %v819 = vld [vmem:[#allocation8 + $0x78] sm:$0xff]
    %v820 = vld [vmem:[#allocation8 + $0x80] sm:$0xff]
    %v821 = vld [vmem:[#allocation8 + $0x88] sm:$0xff]
    %v822 = vld [vmem:[#allocation8 + $0x90] sm:$0xff]
    %v823 = vld [vmem:[#allocation8 + $0x98] sm:$0xff]
    %v824 = vld [vmem:[#allocation8 + $0xa0] sm:$0xff]
    %v825 = vld [vmem:[#allocation8 + $0xa8] sm:$0xff]
    %v826 = vld [vmem:[#allocation8 + $0xb0] sm:$0xff]
    %v827 = vld [vmem:[#allocation8 + $0xb8] sm:$0xff]
    %v828 = vld [vmem:[#allocation8 + $0xc0] sm:$0xff]
    %v829 = vld [vmem:[#allocation8 + $0xc8] sm:$0xff]
    %v830 = vld [vmem:[#allocation8 + $0xd0] sm:$0xff]
    %v831 = vld [vmem:[#allocation8 + $0xd8] sm:$0xff]
    %v832 = vld [vmem:[#allocation8 + $0xe0] sm:$0xff]
    %v833 = vld [vmem:[#allocation8 + $0xe8] sm:$0xff]
    %v834 = vld [vmem:[#allocation8 + $0xf0] sm:$0xff]
    %v835 = vld [vmem:[#allocation8 + $0xf8] sm:$0xff]
    %v868 = vunpack.c.l.b16 %v804
    %v869 = vunpack.c.h.b16 %v804
    %v870 = vunpack.c.l.b16 %v805
    %v871 = vunpack.c.h.b16 %v805
    %v872 = vunpack.c.l.b16 %v806
    %v873 = vunpack.c.h.b16 %v806
    %v874 = vunpack.c.l.b16 %v807
    %v875 = vunpack.c.h.b16 %v807
    %v876 = vunpack.c.l.b16 %v808
    %v877 = vunpack.c.h.b16 %v808
    %v878 = vunpack.c.l.b16 %v809
    %v879 = vunpack.c.h.b16 %v809
    %v880 = vunpack.c.l.b16 %v810
    %v881 = vunpack.c.h.b16 %v810
    %v882 = vunpack.c.l.b16 %v811
    %v883 = vunpack.c.h.b16 %v811
    %v884 = vunpack.c.l.b16 %v812
    %v885 = vunpack.c.h.b16 %v812
    %v886 = vunpack.c.l.b16 %v813
    %v887 = vunpack.c.h.b16 %v813
    %v888 = vunpack.c.l.b16 %v814
    %v889 = vunpack.c.h.b16 %v814
    %v890 = vunpack.c.l.b16 %v815
    %v891 = vunpack.c.h.b16 %v815
    %v892 = vunpack.c.l.b16 %v816
    %v893 = vunpack.c.h.b16 %v816
    %v894 = vunpack.c.l.b16 %v817
    %v895 = vunpack.c.h.b16 %v817
    %v896 = vunpack.c.l.b16 %v818
    %v897 = vunpack.c.h.b16 %v818
    %v898 = vunpack.c.l.b16 %v819
    %v899 = vunpack.c.h.b16 %v819
    %v900 = vunpack.c.l.b16 %v820
    %v901 = vunpack.c.h.b16 %v820
    %v902 = vunpack.c.l.b16 %v821
    %v903 = vunpack.c.h.b16 %v821
    %v904 = vunpack.c.l.b16 %v822
    %v905 = vunpack.c.h.b16 %v822
    %v906 = vunpack.c.l.b16 %v823
    %v907 = vunpack.c.h.b16 %v823
    %v908 = vunpack.c.l.b16 %v824
    %v909 = vunpack.c.h.b16 %v824
    %v910 = vunpack.c.l.b16 %v825
    %v911 = vunpack.c.h.b16 %v825
    %v912 = vunpack.c.l.b16 %v826
    %v913 = vunpack.c.h.b16 %v826
    %v914 = vunpack.c.l.b16 %v827
    %v915 = vunpack.c.h.b16 %v827
    %v916 = vunpack.c.l.b16 %v828
    %v917 = vunpack.c.h.b16 %v828
    %v918 = vunpack.c.l.b16 %v829
    %v919 = vunpack.c.h.b16 %v829
    %v920 = vunpack.c.l.b16 %v830
    %v921 = vunpack.c.h.b16 %v830
    %v922 = vunpack.c.l.b16 %v831
    %v923 = vunpack.c.h.b16 %v831
    %v924 = vunpack.c.l.b16 %v832
    %v925 = vunpack.c.h.b16 %v832
    %v926 = vunpack.c.l.b16 %v833
    %v927 = vunpack.c.h.b16 %v833
    %v928 = vunpack.c.l.b16 %v834
    %v929 = vunpack.c.h.b16 %v834
    %v930 = vunpack.c.l.b16 %v835
    %v931 = vunpack.c.h.b16 %v835
    %v932 = vpack.c.b16 %v872, %v868
    %v933 = vpack.c.b16 %v873, %v869
    %v934 = vpack.c.b16 %v874, %v870
    %v935 = vpack.c.b16 %v875, %v871
    %v936 = vpack.c.b16 %v880, %v876
    %v937 = vpack.c.b16 %v881, %v877
    %v938 = vpack.c.b16 %v882, %v878
    %v939 = vpack.c.b16 %v883, %v879
    %v940 = vpack.c.b16 %v888, %v884
    %v941 = vpack.c.b16 %v889, %v885
    %v942 = vpack.c.b16 %v890, %v886
    %v943 = vpack.c.b16 %v891, %v887
    %v944 = vpack.c.b16 %v896, %v892
    %v945 = vpack.c.b16 %v897, %v893
    %v946 = vpack.c.b16 %v898, %v894
    %v947 = vpack.c.b16 %v899, %v895
    %v948 = vpack.c.b16 %v904, %v900
    %v949 = vpack.c.b16 %v905, %v901
    %v950 = vpack.c.b16 %v906, %v902
    %v951 = vpack.c.b16 %v907, %v903
    %v952 = vpack.c.b16 %v912, %v908
    %v953 = vpack.c.b16 %v913, %v909
    %v954 = vpack.c.b16 %v914, %v910
    %v955 = vpack.c.b16 %v915, %v911
    %v956 = vpack.c.b16 %v920, %v916
    %v957 = vpack.c.b16 %v921, %v917
    %v958 = vpack.c.b16 %v922, %v918
    %v959 = vpack.c.b16 %v923, %v919
    %v960 = vpack.c.b16 %v928, %v924
    %v961 = vpack.c.b16 %v929, %v925
    %v962 = vpack.c.b16 %v930, %v926
    %v963 = vpack.c.b16 %v931, %v927
    %996 = vmatpush.bf16.msra.mxu0 %v960
    %997 = vmatpush.bf16.msra.mxu0 %v956
    %998 = vmatpush.bf16.msra.mxu0 %v952
    %999 = vmatpush.bf16.msra.mxu0 %v948
    %1000 = vmatpush.bf16.msra.mxu0 %v944
    %1001 = vmatpush.bf16.msra.mxu0 %v940
    %1002 = vmatpush.bf16.msra.mxu0 %v936
    %1003 = vmatpush.bf16.msra.mxu0 %v932
    %1004 = vmatmul.bf16.gmra.mxu0 %v803
    %v1005 = vpop.f32.mrf.mxu0
    %v1006 = vadd.f32 %v480, %v1005
    %v1007 = vpop.f32.mrf.mxu0
    %1008 = vdwg.mxu0
    %1009 = vmatpush.bf16.msra.mxu0 %v961
    %1010 = vmatpush.bf16.msra.mxu0 %v957
    %1011 = vmatpush.bf16.msra.mxu0 %v953
    %1012 = vmatpush.bf16.msra.mxu0 %v949
    %1013 = vmatpush.bf16.msra.mxu0 %v945
    %1014 = vmatpush.bf16.msra.mxu0 %v941
    %1015 = vmatpush.bf16.msra.mxu0 %v937
    %1016 = vmatpush.bf16.msra.mxu0 %v933
    %1017 = vmatmul.bf16.gmra.mxu0 %v803
    %v1018 = vpop.f32.mrf.mxu0
    %v1019 = vadd.f32 %v481, %v1018
    %v1020 = vpop.f32.mrf.mxu0
    %1021 = vdwg.mxu0
    %1022 = vmatpush.bf16.msra.mxu0 %v962
    %1023 = vmatpush.bf16.msra.mxu0 %v958
    %1024 = vmatpush.bf16.msra.mxu0 %v954
    %1025 = vmatpush.bf16.msra.mxu0 %v950
    %1026 = vmatpush.bf16.msra.mxu0 %v946
    %1027 = vmatpush.bf16.msra.mxu0 %v942
    %1028 = vmatpush.bf16.msra.mxu0 %v938
    %1029 = vmatpush.bf16.msra.mxu0 %v934
    %1030 = vmatmul.bf16.gmra.mxu0 %v803
    %v1031 = vpop.f32.mrf.mxu0
    %v1032 = vadd.f32 %v482, %v1031
    %v1033 = vpop.f32.mrf.mxu0
    %1034 = vdwg.mxu0
    %1035 = vmatpush.bf16.msra.mxu0 %v963
    %1036 = vmatpush.bf16.msra.mxu0 %v959
    %1037 = vmatpush.bf16.msra.mxu0 %v955
    %1038 = vmatpush.bf16.msra.mxu0 %v951
    %1039 = vmatpush.bf16.msra.mxu0 %v947
    %1040 = vmatpush.bf16.msra.mxu0 %v943
    %1041 = vmatpush.bf16.msra.mxu0 %v939
    %1042 = vmatpush.bf16.msra.mxu0 %v935
    %1043 = vmatmul.bf16.gmra.mxu0 %v803
    %v1044 = vpop.f32.mrf.mxu0
    %v1045 = vadd.f32 %v483, %v1044
    %v1046 = vpop.f32.mrf.mxu0
    %1047 = vdwg.mxu0
    %1048 = vst [vmem:[#allocation3] sm:$0xff] %v1006
    %1049 = vst [vmem:[#allocation3 + $0x8] sm:$0xff] %v1019
    %1050 = vst [vmem:[#allocation3 + $0x10] sm:$0xff] %v1032
    %1051 = vst [vmem:[#allocation3 + $0x18] sm:$0xff] %v1045
    %v1052 = vld [vmem:[#allocation2 + $0x20] sm:$0xff]
    %v1053 = vld [vmem:[#allocation2 + $0x28] sm:$0xff]
    %v1054 = vld [vmem:[#allocation2 + $0x30] sm:$0xff]
    %v1055 = vld [vmem:[#allocation2 + $0x38] sm:$0xff]
    %v1056 = vld [vmem:[#allocation6] sm:$0xff]
    %v1057 = vld [vmem:[#allocation6 + $0x8] sm:$0xff]
    %v1058 = vld [vmem:[#allocation6 + $0x10] sm:$0xff]
    %v1059 = vld [vmem:[#allocation6 + $0x18] sm:$0xff]
    %v1060 = vld [vmem:[#allocation6 + $0x20] sm:$0xff]
    %v1061 = vld [vmem:[#allocation6 + $0x28] sm:$0xff]
    %v1062 = vld [vmem:[#allocation6 + $0x30] sm:$0xff]
    %v1063 = vld [vmem:[#allocation6 + $0x38] sm:$0xff]
    %v1064 = vld [vmem:[#allocation6 + $0x40] sm:$0xff]
    %v1065 = vld [vmem:[#allocation6 + $0x48] sm:$0xff]
    %v1066 = vld [vmem:[#allocation6 + $0x50] sm:$0xff]
    %v1067 = vld [vmem:[#allocation6 + $0x58] sm:$0xff]
    %v1068 = vld [vmem:[#allocation6 + $0x60] sm:$0xff]
    %v1069 = vld [vmem:[#allocation6 + $0x68] sm:$0xff]
    %v1070 = vld [vmem:[#allocation6 + $0x70] sm:$0xff]
    %v1071 = vld [vmem:[#allocation6 + $0x78] sm:$0xff]
    %v1072 = vld [vmem:[#allocation6 + $0x80] sm:$0xff]
    %v1073 = vld [vmem:[#allocation6 + $0x88] sm:$0xff]
    %v1074 = vld [vmem:[#allocation6 + $0x90] sm:$0xff]
    %v1075 = vld [vmem:[#allocation6 + $0x98] sm:$0xff]
    %v1076 = vld [vmem:[#allocation6 + $0xa0] sm:$0xff]
    %v1077 = vld [vmem:[#allocation6 + $0xa8] sm:$0xff]
    %v1078 = vld [vmem:[#allocation6 + $0xb0] sm:$0xff]
    %v1079 = vld [vmem:[#allocation6 + $0xb8] sm:$0xff]
    %v1080 = vld [vmem:[#allocation6 + $0xc0] sm:$0xff]
    %v1081 = vld [vmem:[#allocation6 + $0xc8] sm:$0xff]
    %v1082 = vld [vmem:[#allocation6 + $0xd0] sm:$0xff]
    %v1083 = vld [vmem:[#allocation6 + $0xd8] sm:$0xff]
    %v1084 = vld [vmem:[#allocation6 + $0xe0] sm:$0xff]
    %v1085 = vld [vmem:[#allocation6 + $0xe8] sm:$0xff]
    %v1086 = vld [vmem:[#allocation6 + $0xf0] sm:$0xff]
    %v1087 = vld [vmem:[#allocation6 + $0xf8] sm:$0xff]
    %v1120 = vunpack.c.l.b16 %v1056
    %v1121 = vunpack.c.h.b16 %v1056
    %v1122 = vunpack.c.l.b16 %v1057
    %v1123 = vunpack.c.h.b16 %v1057
    %v1124 = vunpack.c.l.b16 %v1058
    %v1125 = vunpack.c.h.b16 %v1058
    %v1126 = vunpack.c.l.b16 %v1059
    %v1127 = vunpack.c.h.b16 %v1059
    %v1128 = vunpack.c.l.b16 %v1060
    %v1129 = vunpack.c.h.b16 %v1060
    %v1130 = vunpack.c.l.b16 %v1061
    %v1131 = vunpack.c.h.b16 %v1061
    %v1132 = vunpack.c.l.b16 %v1062
    %v1133 = vunpack.c.h.b16 %v1062
    %v1134 = vunpack.c.l.b16 %v1063
    %v1135 = vunpack.c.h.b16 %v1063
    %v1136 = vunpack.c.l.b16 %v1064
    %v1137 = vunpack.c.h.b16 %v1064
    %v1138 = vunpack.c.l.b16 %v1065
    %v1139 = vunpack.c.h.b16 %v1065
    %v1140 = vunpack.c.l.b16 %v1066
    %v1141 = vunpack.c.h.b16 %v1066
    %v1142 = vunpack.c.l.b16 %v1067
    %v1143 = vunpack.c.h.b16 %v1067
    %v1144 = vunpack.c.l.b16 %v1068
    %v1145 = vunpack.c.h.b16 %v1068
    %v1146 = vunpack.c.l.b16 %v1069
    %v1147 = vunpack.c.h.b16 %v1069
    %v1148 = vunpack.c.l.b16 %v1070
    %v1149 = vunpack.c.h.b16 %v1070
    %v1150 = vunpack.c.l.b16 %v1071
    %v1151 = vunpack.c.h.b16 %v1071
    %v1152 = vunpack.c.l.b16 %v1072
    %v1153 = vunpack.c.h.b16 %v1072
    %v1154 = vunpack.c.l.b16 %v1073
    %v1155 = vunpack.c.h.b16 %v1073
    %v1156 = vunpack.c.l.b16 %v1074
    %v1157 = vunpack.c.h.b16 %v1074
    %v1158 = vunpack.c.l.b16 %v1075
    %v1159 = vunpack.c.h.b16 %v1075
    %v1160 = vunpack.c.l.b16 %v1076
    %v1161 = vunpack.c.h.b16 %v1076
    %v1162 = vunpack.c.l.b16 %v1077
    %v1163 = vunpack.c.h.b16 %v1077
    %v1164 = vunpack.c.l.b16 %v1078
    %v1165 = vunpack.c.h.b16 %v1078
    %v1166 = vunpack.c.l.b16 %v1079
    %v1167 = vunpack.c.h.b16 %v1079
    %v1168 = vunpack.c.l.b16 %v1080
    %v1169 = vunpack.c.h.b16 %v1080
    %v1170 = vunpack.c.l.b16 %v1081
    %v1171 = vunpack.c.h.b16 %v1081
    %v1172 = vunpack.c.l.b16 %v1082
    %v1173 = vunpack.c.h.b16 %v1082
    %v1174 = vunpack.c.l.b16 %v1083
    %v1175 = vunpack.c.h.b16 %v1083
    %v1176 = vunpack.c.l.b16 %v1084
    %v1177 = vunpack.c.h.b16 %v1084
    %v1178 = vunpack.c.l.b16 %v1085
    %v1179 = vunpack.c.h.b16 %v1085
    %v1180 = vunpack.c.l.b16 %v1086
    %v1181 = vunpack.c.h.b16 %v1086
    %v1182 = vunpack.c.l.b16 %v1087
    %v1183 = vunpack.c.h.b16 %v1087
    %v1184 = vpack.c.b16 %v1124, %v1120
    %v1185 = vpack.c.b16 %v1125, %v1121
    %v1186 = vpack.c.b16 %v1126, %v1122
    %v1187 = vpack.c.b16 %v1127, %v1123
    %v1188 = vpack.c.b16 %v1132, %v1128
    %v1189 = vpack.c.b16 %v1133, %v1129
    %v1190 = vpack.c.b16 %v1134, %v1130
    %v1191 = vpack.c.b16 %v1135, %v1131
    %v1192 = vpack.c.b16 %v1140, %v1136
    %v1193 = vpack.c.b16 %v1141, %v1137
    %v1194 = vpack.c.b16 %v1142, %v1138
    %v1195 = vpack.c.b16 %v1143, %v1139
    %v1196 = vpack.c.b16 %v1148, %v1144
    %v1197 = vpack.c.b16 %v1149, %v1145
    %v1198 = vpack.c.b16 %v1150, %v1146
    %v1199 = vpack.c.b16 %v1151, %v1147
    %v1200 = vpack.c.b16 %v1156, %v1152
    %v1201 = vpack.c.b16 %v1157, %v1153
    %v1202 = vpack.c.b16 %v1158, %v1154
    %v1203 = vpack.c.b16 %v1159, %v1155
    %v1204 = vpack.c.b16 %v1164, %v1160
    %v1205 = vpack.c.b16 %v1165, %v1161
    %v1206 = vpack.c.b16 %v1166, %v1162
    %v1207 = vpack.c.b16 %v1167, %v1163
    %v1208 = vpack.c.b16 %v1172, %v1168
    %v1209 = vpack.c.b16 %v1173, %v1169
    %v1210 = vpack.c.b16 %v1174, %v1170
    %v1211 = vpack.c.b16 %v1175, %v1171
    %v1212 = vpack.c.b16 %v1180, %v1176
    %v1213 = vpack.c.b16 %v1181, %v1177
    %v1214 = vpack.c.b16 %v1182, %v1178
    %v1215 = vpack.c.b16 %v1183, %v1179
    %1248 = vmatpush.bf16.msra.mxu0 %v1212
    %1249 = vmatpush.bf16.msra.mxu0 %v1208
    %1250 = vmatpush.bf16.msra.mxu0 %v1204
    %1251 = vmatpush.bf16.msra.mxu0 %v1200
    %1252 = vmatpush.bf16.msra.mxu0 %v1196
    %1253 = vmatpush.bf16.msra.mxu0 %v1192
    %1254 = vmatpush.bf16.msra.mxu0 %v1188
    %1255 = vmatpush.bf16.msra.mxu0 %v1184
    %1256 = vmatmul.bf16.gmra.mxu0 %v803
    %v1257 = vpop.f32.mrf.mxu0
    %v1258 = vadd.f32 0.0, %v1257
    %v1259 = vpop.f32.mrf.mxu0
    %1260 = vdwg.mxu0
    %1261 = vmatpush.bf16.msra.mxu0 %v1213
    %1262 = vmatpush.bf16.msra.mxu0 %v1209
    %1263 = vmatpush.bf16.msra.mxu0 %v1205
    %1264 = vmatpush.bf16.msra.mxu0 %v1201
    %1265 = vmatpush.bf16.msra.mxu0 %v1197
    %1266 = vmatpush.bf16.msra.mxu0 %v1193
    %1267 = vmatpush.bf16.msra.mxu0 %v1189
    %1268 = vmatpush.bf16.msra.mxu0 %v1185
    %1269 = vmatmul.bf16.gmra.mxu0 %v803
    %v1270 = vpop.f32.mrf.mxu0
    %v1271 = vadd.f32 0.0, %v1270
    %v1272 = vpop.f32.mrf.mxu0
    %1273 = vdwg.mxu0
    %1274 = vmatpush.bf16.msra.mxu0 %v1214
    %1275 = vmatpush.bf16.msra.mxu0 %v1210
    %1276 = vmatpush.bf16.msra.mxu0 %v1206
    %1277 = vmatpush.bf16.msra.mxu0 %v1202
    %1278 = vmatpush.bf16.msra.mxu0 %v1198
    %1279 = vmatpush.bf16.msra.mxu0 %v1194
    %1280 = vmatpush.bf16.msra.mxu0 %v1190
    %1281 = vmatpush.bf16.msra.mxu0 %v1186
    %1282 = vmatmul.bf16.gmra.mxu0 %v803
    %v1283 = vpop.f32.mrf.mxu0
    %v1284 = vadd.f32 0.0, %v1283
    %v1285 = vpop.f32.mrf.mxu0
    %1286 = vdwg.mxu0
    %1287 = vmatpush.bf16.msra.mxu0 %v1215
    %1288 = vmatpush.bf16.msra.mxu0 %v1211
    %1289 = vmatpush.bf16.msra.mxu0 %v1207
    %1290 = vmatpush.bf16.msra.mxu0 %v1203
    %1291 = vmatpush.bf16.msra.mxu0 %v1199
    %1292 = vmatpush.bf16.msra.mxu0 %v1195
    %1293 = vmatpush.bf16.msra.mxu0 %v1191
    %1294 = vmatpush.bf16.msra.mxu0 %v1187
    %1295 = vmatmul.bf16.gmra.mxu0 %v803
    %v1296 = vpop.f32.mrf.mxu0
    %v1297 = vadd.f32 0.0, %v1296
    %v1298 = vpop.f32.mrf.mxu0
    %1299 = vdwg.mxu0
    %v1300 = vadd.f32 %v1052, %v1258
    %v1301 = vadd.f32 %v1053, %v1271
    %v1302 = vadd.f32 %v1054, %v1284
    %v1303 = vadd.f32 %v1055, %v1297
    %v1304 = vxor.u32 %v1300, 2147483648
    %v1305 = vmul.f32 %v1304, 1.442695
    %v1306 = vpow.pop %v1305
    %v1307 = vadd.f32 %v1306, 1.0
    %v1308 = vrcp.pop %v1307
    %v1309 = vmul.f32 %v1307, %v1308
    %v1310 = vsub.f32 1.0, %v1309
    %v1311 = vmul.f32 %v1308, %v1310
    %v1312 = vadd.f32 %v1308, %v1311
    %vm1313 = vweird.f32 %v1307
    %vm1314 = vweird.f32 %v1308
    %vm1315 = vmor %vm1313, %vm1314
    %v1316 = vsel %vm1315, %v1308, %v1312
    %v1317 = vand.u32 2147483647, %v1307
    %vm1318 = vcmp.eq.f32.partialorder %v1317, 8.507059e+37
    %v1319 = vand.u32 %v1307, 2147483648
    %v1320 = vor.u32 1.1754944e-38, %v1319
    %v1321 = vsel %vm1318, %v1320, %v1316
    %v1322 = vmul.f32 1.0, %v1321
    %v1323 = vxor.u32 %v1301, 2147483648
    %v1324 = vmul.f32 %v1323, 1.442695
    %v1325 = vpow.pop %v1324
    %v1326 = vadd.f32 %v1325, 1.0
    %v1327 = vrcp.pop %v1326
    %v1328 = vmul.f32 %v1326, %v1327
    %v1329 = vsub.f32 1.0, %v1328
    %v1330 = vmul.f32 %v1327, %v1329
    %v1331 = vadd.f32 %v1327, %v1330
    %vm1332 = vweird.f32 %v1326
    %vm1333 = vweird.f32 %v1327
    %vm1334 = vmor %vm1332, %vm1333
    %v1335 = vsel %vm1334, %v1327, %v1331
    %v1336 = vand.u32 2147483647, %v1326
    %vm1337 = vcmp.eq.f32.partialorder %v1336, 8.507059e+37
    %v1338 = vand.u32 %v1326, 2147483648
    %v1339 = vor.u32 1.1754944e-38, %v1338
    %v1340 = vsel %vm1337, %v1339, %v1335
    %v1341 = vmul.f32 1.0, %v1340
    %v1342 = vtanh.pop %v1302
    %v1343 = vxor.u32 %v1303, 2147483648
    %v1344 = vmul.f32 %v1343, 1.442695
    %v1345 = vpow.pop %v1344
    %v1346 = vadd.f32 %v1345, 1.0
    %v1347 = vrcp.pop %v1346
    %v1348 = vmul.f32 %v1346, %v1347
    %v1349 = vsub.f32 1.0, %v1348
    %v1350 = vmul.f32 %v1347, %v1349
    %v1351 = vadd.f32 %v1347, %v1350
    %vm1352 = vweird.f32 %v1346
    %vm1353 = vweird.f32 %v1347
    %vm1354 = vmor %vm1352, %vm1353
    %v1355 = vsel %vm1354, %v1347, %v1351
    %v1356 = vand.u32 2147483647, %v1346
    %vm1357 = vcmp.eq.f32.partialorder %v1356, 8.507059e+37
    %v1358 = vand.u32 %v1346, 2147483648
    %v1359 = vor.u32 1.1754944e-38, %v1358
    %v1360 = vsel %vm1357, %v1359, %v1355
    %v1361 = vmul.f32 1.0, %v1360
    %v1362 = vmul.f32 %v1341, %v800
    %v1363 = vmul.f32 %v1322, %v1342
    %v1364 = vadd.f32 %v1362, %v1363
    %v1365 = vtanh.pop %v1364
    %v1366 = vmul.f32 %v1361, %v1365
    %v1367 = vpack.c.bf16 %v1366, %v1366
    %v1368 = vld [vmem:[#allocation8] sm:$0xff]
    %v1369 = vld [vmem:[#allocation8 + $0x8] sm:$0xff]
    %v1370 = vld [vmem:[#allocation8 + $0x10] sm:$0xff]
    %v1371 = vld [vmem:[#allocation8 + $0x18] sm:$0xff]
    %v1372 = vld [vmem:[#allocation8 + $0x20] sm:$0xff]
    %v1373 = vld [vmem:[#allocation8 + $0x28] sm:$0xff]
    %v1374 = vld [vmem:[#allocation8 + $0x30] sm:$0xff]
    %v1375 = vld [vmem:[#allocation8 + $0x38] sm:$0xff]
    %v1376 = vld [vmem:[#allocation8 + $0x40] sm:$0xff]
    %v1377 = vld [vmem:[#allocation8 + $0x48] sm:$0xff]
    %v1378 = vld [vmem:[#allocation8 + $0x50] sm:$0xff]
    %v1379 = vld [vmem:[#allocation8 + $0x58] sm:$0xff]
    %v1380 = vld [vmem:[#allocation8 + $0x60] sm:$0xff]
    %v1381 = vld [vmem:[#allocation8 + $0x68] sm:$0xff]
    %v1382 = vld [vmem:[#allocation8 + $0x70] sm:$0xff]
    %v1383 = vld [vmem:[#allocation8 + $0x78] sm:$0xff]
    %v1384 = vld [vmem:[#allocation8 + $0x80] sm:$0xff]
    %v1385 = vld [vmem:[#allocation8 + $0x88] sm:$0xff]
    %v1386 = vld [vmem:[#allocation8 + $0x90] sm:$0xff]
    %v1387 = vld [vmem:[#allocation8 + $0x98] sm:$0xff]
    %v1388 = vld [vmem:[#allocation8 + $0xa0] sm:$0xff]
    %v1389 = vld [vmem:[#allocation8 + $0xa8] sm:$0xff]
    %v1390 = vld [vmem:[#allocation8 + $0xb0] sm:$0xff]
    %v1391 = vld [vmem:[#allocation8 + $0xb8] sm:$0xff]
    %v1392 = vld [vmem:[#allocation8 + $0xc0] sm:$0xff]
    %v1393 = vld [vmem:[#allocation8 + $0xc8] sm:$0xff]
    %v1394 = vld [vmem:[#allocation8 + $0xd0] sm:$0xff]
    %v1395 = vld [vmem:[#allocation8 + $0xd8] sm:$0xff]
    %v1396 = vld [vmem:[#allocation8 + $0xe0] sm:$0xff]
    %v1397 = vld [vmem:[#allocation8 + $0xe8] sm:$0xff]
    %v1398 = vld [vmem:[#allocation8 + $0xf0] sm:$0xff]
    %v1399 = vld [vmem:[#allocation8 + $0xf8] sm:$0xff]
    %v1432 = vunpack.c.l.b16 %v1368
    %v1433 = vunpack.c.h.b16 %v1368
    %v1434 = vunpack.c.l.b16 %v1369
    %v1435 = vunpack.c.h.b16 %v1369
    %v1436 = vunpack.c.l.b16 %v1370
    %v1437 = vunpack.c.h.b16 %v1370
    %v1438 = vunpack.c.l.b16 %v1371
    %v1439 = vunpack.c.h.b16 %v1371
    %v1440 = vunpack.c.l.b16 %v1372
    %v1441 = vunpack.c.h.b16 %v1372
    %v1442 = vunpack.c.l.b16 %v1373
    %v1443 = vunpack.c.h.b16 %v1373
    %v1444 = vunpack.c.l.b16 %v1374
    %v1445 = vunpack.c.h.b16 %v1374
    %v1446 = vunpack.c.l.b16 %v1375
    %v1447 = vunpack.c.h.b16 %v1375
    %v1448 = vunpack.c.l.b16 %v1376
    %v1449 = vunpack.c.h.b16 %v1376
    %v1450 = vunpack.c.l.b16 %v1377
    %v1451 = vunpack.c.h.b16 %v1377
    %v1452 = vunpack.c.l.b16 %v1378
    %v1453 = vunpack.c.h.b16 %v1378
    %v1454 = vunpack.c.l.b16 %v1379
    %v1455 = vunpack.c.h.b16 %v1379
    %v1456 = vunpack.c.l.b16 %v1380
    %v1457 = vunpack.c.h.b16 %v1380
    %v1458 = vunpack.c.l.b16 %v1381
    %v1459 = vunpack.c.h.b16 %v1381
    %v1460 = vunpack.c.l.b16 %v1382
    %v1461 = vunpack.c.h.b16 %v1382
    %v1462 = vunpack.c.l.b16 %v1383
    %v1463 = vunpack.c.h.b16 %v1383
    %v1464 = vunpack.c.l.b16 %v1384
    %v1465 = vunpack.c.h.b16 %v1384
    %v1466 = vunpack.c.l.b16 %v1385
    %v1467 = vunpack.c.h.b16 %v1385
    %v1468 = vunpack.c.l.b16 %v1386
    %v1469 = vunpack.c.h.b16 %v1386
    %v1470 = vunpack.c.l.b16 %v1387
    %v1471 = vunpack.c.h.b16 %v1387
    %v1472 = vunpack.c.l.b16 %v1388
    %v1473 = vunpack.c.h.b16 %v1388
    %v1474 = vunpack.c.l.b16 %v1389
    %v1475 = vunpack.c.h.b16 %v1389
    %v1476 = vunpack.c.l.b16 %v1390
    %v1477 = vunpack.c.h.b16 %v1390
    %v1478 = vunpack.c.l.b16 %v1391
    %v1479 = vunpack.c.h.b16 %v1391
    %v1480 = vunpack.c.l.b16 %v1392
    %v1481 = vunpack.c.h.b16 %v1392
    %v1482 = vunpack.c.l.b16 %v1393
    %v1483 = vunpack.c.h.b16 %v1393
    %v1484 = vunpack.c.l.b16 %v1394
    %v1485 = vunpack.c.h.b16 %v1394
    %v1486 = vunpack.c.l.b16 %v1395
    %v1487 = vunpack.c.h.b16 %v1395
    %v1488 = vunpack.c.l.b16 %v1396
    %v1489 = vunpack.c.h.b16 %v1396
    %v1490 = vunpack.c.l.b16 %v1397
    %v1491 = vunpack.c.h.b16 %v1397
    %v1492 = vunpack.c.l.b16 %v1398
    %v1493 = vunpack.c.h.b16 %v1398
    %v1494 = vunpack.c.l.b16 %v1399
    %v1495 = vunpack.c.h.b16 %v1399
    %v1496 = vpack.c.b16 %v1436, %v1432
    %v1497 = vpack.c.b16 %v1437, %v1433
    %v1498 = vpack.c.b16 %v1438, %v1434
    %v1499 = vpack.c.b16 %v1439, %v1435
    %v1500 = vpack.c.b16 %v1444, %v1440
    %v1501 = vpack.c.b16 %v1445, %v1441
    %v1502 = vpack.c.b16 %v1446, %v1442
    %v1503 = vpack.c.b16 %v1447, %v1443
    %v1504 = vpack.c.b16 %v1452, %v1448
    %v1505 = vpack.c.b16 %v1453, %v1449
    %v1506 = vpack.c.b16 %v1454, %v1450
    %v1507 = vpack.c.b16 %v1455, %v1451
    %v1508 = vpack.c.b16 %v1460, %v1456
    %v1509 = vpack.c.b16 %v1461, %v1457
    %v1510 = vpack.c.b16 %v1462, %v1458
    %v1511 = vpack.c.b16 %v1463, %v1459
    %v1512 = vpack.c.b16 %v1468, %v1464
    %v1513 = vpack.c.b16 %v1469, %v1465
    %v1514 = vpack.c.b16 %v1470, %v1466
    %v1515 = vpack.c.b16 %v1471, %v1467
    %v1516 = vpack.c.b16 %v1476, %v1472
    %v1517 = vpack.c.b16 %v1477, %v1473
    %v1518 = vpack.c.b16 %v1478, %v1474
    %v1519 = vpack.c.b16 %v1479, %v1475
    %v1520 = vpack.c.b16 %v1484, %v1480
    %v1521 = vpack.c.b16 %v1485, %v1481
    %v1522 = vpack.c.b16 %v1486, %v1482
    %v1523 = vpack.c.b16 %v1487, %v1483
    %v1524 = vpack.c.b16 %v1492, %v1488
    %v1525 = vpack.c.b16 %v1493, %v1489
    %v1526 = vpack.c.b16 %v1494, %v1490
    %v1527 = vpack.c.b16 %v1495, %v1491
    %1560 = vmatpush.bf16.msra.mxu0 %v1524
    %1561 = vmatpush.bf16.msra.mxu0 %v1520
    %1562 = vmatpush.bf16.msra.mxu0 %v1516
    %1563 = vmatpush.bf16.msra.mxu0 %v1512
    %1564 = vmatpush.bf16.msra.mxu0 %v1508
    %1565 = vmatpush.bf16.msra.mxu0 %v1504
    %1566 = vmatpush.bf16.msra.mxu0 %v1500
    %1567 = vmatpush.bf16.msra.mxu0 %v1496
    %1568 = vmatmul.bf16.gmra.mxu0 %v1367
    %v1569 = vpop.f32.mrf.mxu0
    %v1570 = vadd.f32 %v480, %v1569
    %v1571 = vpop.f32.mrf.mxu0
    %1572 = vdwg.mxu0
    %1573 = vmatpush.bf16.msra.mxu0 %v1525
    %1574 = vmatpush.bf16.msra.mxu0 %v1521
    %1575 = vmatpush.bf16.msra.mxu0 %v1517
    %1576 = vmatpush.bf16.msra.mxu0 %v1513
    %1577 = vmatpush.bf16.msra.mxu0 %v1509
    %1578 = vmatpush.bf16.msra.mxu0 %v1505
    %1579 = vmatpush.bf16.msra.mxu0 %v1501
    %1580 = vmatpush.bf16.msra.mxu0 %v1497
    %1581 = vmatmul.bf16.gmra.mxu0 %v1367
    %v1582 = vpop.f32.mrf.mxu0
    %v1583 = vadd.f32 %v481, %v1582
    %v1584 = vpop.f32.mrf.mxu0
    %1585 = vdwg.mxu0
    %1586 = vmatpush.bf16.msra.mxu0 %v1526
    %1587 = vmatpush.bf16.msra.mxu0 %v1522
    %1588 = vmatpush.bf16.msra.mxu0 %v1518
    %1589 = vmatpush.bf16.msra.mxu0 %v1514
    %1590 = vmatpush.bf16.msra.mxu0 %v1510
    %1591 = vmatpush.bf16.msra.mxu0 %v1506
    %1592 = vmatpush.bf16.msra.mxu0 %v1502
    %1593 = vmatpush.bf16.msra.mxu0 %v1498
    %1594 = vmatmul.bf16.gmra.mxu0 %v1367
    %v1595 = vpop.f32.mrf.mxu0
    %v1596 = vadd.f32 %v482, %v1595
    %v1597 = vpop.f32.mrf.mxu0
    %1598 = vdwg.mxu0
    %1599 = vmatpush.bf16.msra.mxu0 %v1527
    %1600 = vmatpush.bf16.msra.mxu0 %v1523
    %1601 = vmatpush.bf16.msra.mxu0 %v1519
    %1602 = vmatpush.bf16.msra.mxu0 %v1515
    %1603 = vmatpush.bf16.msra.mxu0 %v1511
    %1604 = vmatpush.bf16.msra.mxu0 %v1507
    %1605 = vmatpush.bf16.msra.mxu0 %v1503
    %1606 = vmatpush.bf16.msra.mxu0 %v1499
    %1607 = vmatmul.bf16.gmra.mxu0 %v1367
    %v1608 = vpop.f32.mrf.mxu0
    %v1609 = vadd.f32 %v483, %v1608
    %v1610 = vpop.f32.mrf.mxu0
    %1611 = vdwg.mxu0
    %1612 = vst [vmem:[#allocation3 + $0x20] sm:$0xff] %v1570
    %1613 = vst [vmem:[#allocation3 + $0x28] sm:$0xff] %v1583
    %1614 = vst [vmem:[#allocation3 + $0x30] sm:$0xff] %v1596
    %1615 = vst [vmem:[#allocation3 + $0x38] sm:$0xff] %v1609
    %v1616 = vld [vmem:[#allocation2 + $0x40] sm:$0xff]
    %v1617 = vld [vmem:[#allocation2 + $0x48] sm:$0xff]
    %v1618 = vld [vmem:[#allocation2 + $0x50] sm:$0xff]
    %v1619 = vld [vmem:[#allocation2 + $0x58] sm:$0xff]
    %v1620 = vld [vmem:[#allocation6] sm:$0xff]
    %v1621 = vld [vmem:[#allocation6 + $0x8] sm:$0xff]
    %v1622 = vld [vmem:[#allocation6 + $0x10] sm:$0xff]
    %v1623 = vld [vmem:[#allocation6 + $0x18] sm:$0xff]
    %v1624 = vld [vmem:[#allocation6 + $0x20] sm:$0xff]
    %v1625 = vld [vmem:[#allocation6 + $0x28] sm:$0xff]
    %v1626 = vld [vmem:[#allocation6 + $0x30] sm:$0xff]
    %v1627 = vld [vmem:[#allocation6 + $0x38] sm:$0xff]
    %v1628 = vld [vmem:[#allocation6 + $0x40] sm:$0xff]
    %v1629 = vld [vmem:[#allocation6 + $0x48] sm:$0xff]
    %v1630 = vld [vmem:[#allocation6 + $0x50] sm:$0xff]
    %v1631 = vld [vmem:[#allocation6 + $0x58] sm:$0xff]
    %v1632 = vld [vmem:[#allocation6 + $0x60] sm:$0xff]
    %v1633 = vld [vmem:[#allocation6 + $0x68] sm:$0xff]
    %v1634 = vld [vmem:[#allocation6 + $0x70] sm:$0xff]
    %v1635 = vld [vmem:[#allocation6 + $0x78] sm:$0xff]
    %v1636 = vld [vmem:[#allocation6 + $0x80] sm:$0xff]
    %v1637 = vld [vmem:[#allocation6 + $0x88] sm:$0xff]
    %v1638 = vld [vmem:[#allocation6 + $0x90] sm:$0xff]
    %v1639 = vld [vmem:[#allocation6 + $0x98] sm:$0xff]
    %v1640 = vld [vmem:[#allocation6 + $0xa0] sm:$0xff]
    %v1641 = vld [vmem:[#allocation6 + $0xa8] sm:$0xff]
    %v1642 = vld [vmem:[#allocation6 + $0xb0] sm:$0xff]
    %v1643 = vld [vmem:[#allocation6 + $0xb8] sm:$0xff]
    %v1644 = vld [vmem:[#allocation6 + $0xc0] sm:$0xff]
    %v1645 = vld [vmem:[#allocation6 + $0xc8] sm:$0xff]
    %v1646 = vld [vmem:[#allocation6 + $0xd0] sm:$0xff]
    %v1647 = vld [vmem:[#allocation6 + $0xd8] sm:$0xff]
    %v1648 = vld [vmem:[#allocation6 + $0xe0] sm:$0xff]
    %v1649 = vld [vmem:[#allocation6 + $0xe8] sm:$0xff]
    %v1650 = vld [vmem:[#allocation6 + $0xf0] sm:$0xff]
    %v1651 = vld [vmem:[#allocation6 + $0xf8] sm:$0xff]
    %v1684 = vunpack.c.l.b16 %v1620
    %v1685 = vunpack.c.h.b16 %v1620
    %v1686 = vunpack.c.l.b16 %v1621
    %v1687 = vunpack.c.h.b16 %v1621
    %v1688 = vunpack.c.l.b16 %v1622
    %v1689 = vunpack.c.h.b16 %v1622
    %v1690 = vunpack.c.l.b16 %v1623
    %v1691 = vunpack.c.h.b16 %v1623
    %v1692 = vunpack.c.l.b16 %v1624
    %v1693 = vunpack.c.h.b16 %v1624
    %v1694 = vunpack.c.l.b16 %v1625
    %v1695 = vunpack.c.h.b16 %v1625
    %v1696 = vunpack.c.l.b16 %v1626
    %v1697 = vunpack.c.h.b16 %v1626
    %v1698 = vunpack.c.l.b16 %v1627
    %v1699 = vunpack.c.h.b16 %v1627
    %v1700 = vunpack.c.l.b16 %v1628
    %v1701 = vunpack.c.h.b16 %v1628
    %v1702 = vunpack.c.l.b16 %v1629
    %v1703 = vunpack.c.h.b16 %v1629
    %v1704 = vunpack.c.l.b16 %v1630
    %v1705 = vunpack.c.h.b16 %v1630
    %v1706 = vunpack.c.l.b16 %v1631
    %v1707 = vunpack.c.h.b16 %v1631
    %v1708 = vunpack.c.l.b16 %v1632
    %v1709 = vunpack.c.h.b16 %v1632
    %v1710 = vunpack.c.l.b16 %v1633
    %v1711 = vunpack.c.h.b16 %v1633
    %v1712 = vunpack.c.l.b16 %v1634
    %v1713 = vunpack.c.h.b16 %v1634
    %v1714 = vunpack.c.l.b16 %v1635
    %v1715 = vunpack.c.h.b16 %v1635
    %v1716 = vunpack.c.l.b16 %v1636
    %v1717 = vunpack.c.h.b16 %v1636
    %v1718 = vunpack.c.l.b16 %v1637
    %v1719 = vunpack.c.h.b16 %v1637
    %v1720 = vunpack.c.l.b16 %v1638
    %v1721 = vunpack.c.h.b16 %v1638
    %v1722 = vunpack.c.l.b16 %v1639
    %v1723 = vunpack.c.h.b16 %v1639
    %v1724 = vunpack.c.l.b16 %v1640
    %v1725 = vunpack.c.h.b16 %v1640
    %v1726 = vunpack.c.l.b16 %v1641
    %v1727 = vunpack.c.h.b16 %v1641
    %v1728 = vunpack.c.l.b16 %v1642
    %v1729 = vunpack.c.h.b16 %v1642
    %v1730 = vunpack.c.l.b16 %v1643
    %v1731 = vunpack.c.h.b16 %v1643
    %v1732 = vunpack.c.l.b16 %v1644
    %v1733 = vunpack.c.h.b16 %v1644
    %v1734 = vunpack.c.l.b16 %v1645
    %v1735 = vunpack.c.h.b16 %v1645
    %v1736 = vunpack.c.l.b16 %v1646
    %v1737 = vunpack.c.h.b16 %v1646
    %v1738 = vunpack.c.l.b16 %v1647
    %v1739 = vunpack.c.h.b16 %v1647
    %v1740 = vunpack.c.l.b16 %v1648
    %v1741 = vunpack.c.h.b16 %v1648
    %v1742 = vunpack.c.l.b16 %v1649
    %v1743 = vunpack.c.h.b16 %v1649
    %v1744 = vunpack.c.l.b16 %v1650
    %v1745 = vunpack.c.h.b16 %v1650
    %v1746 = vunpack.c.l.b16 %v1651
    %v1747 = vunpack.c.h.b16 %v1651
    %v1748 = vpack.c.b16 %v1688, %v1684
    %v1749 = vpack.c.b16 %v1689, %v1685
    %v1750 = vpack.c.b16 %v1690, %v1686
    %v1751 = vpack.c.b16 %v1691, %v1687
    %v1752 = vpack.c.b16 %v1696, %v1692
    %v1753 = vpack.c.b16 %v1697, %v1693
    %v1754 = vpack.c.b16 %v1698, %v1694
    %v1755 = vpack.c.b16 %v1699, %v1695
    %v1756 = vpack.c.b16 %v1704, %v1700
    %v1757 = vpack.c.b16 %v1705, %v1701
    %v1758 = vpack.c.b16 %v1706, %v1702
    %v1759 = vpack.c.b16 %v1707, %v1703
    %v1760 = vpack.c.b16 %v1712, %v1708
    %v1761 = vpack.c.b16 %v1713, %v1709
    %v1762 = vpack.c.b16 %v1714, %v1710
    %v1763 = vpack.c.b16 %v1715, %v1711
    %v1764 = vpack.c.b16 %v1720, %v1716
    %v1765 = vpack.c.b16 %v1721, %v1717
    %v1766 = vpack.c.b16 %v1722, %v1718
    %v1767 = vpack.c.b16 %v1723, %v1719
    %v1768 = vpack.c.b16 %v1728, %v1724
    %v1769 = vpack.c.b16 %v1729, %v1725
    %v1770 = vpack.c.b16 %v1730, %v1726
    %v1771 = vpack.c.b16 %v1731, %v1727
    %v1772 = vpack.c.b16 %v1736, %v1732
    %v1773 = vpack.c.b16 %v1737, %v1733
    %v1774 = vpack.c.b16 %v1738, %v1734
    %v1775 = vpack.c.b16 %v1739, %v1735
    %v1776 = vpack.c.b16 %v1744, %v1740
    %v1777 = vpack.c.b16 %v1745, %v1741
    %v1778 = vpack.c.b16 %v1746, %v1742
    %v1779 = vpack.c.b16 %v1747, %v1743
    %1812 = vmatpush.bf16.msra.mxu0 %v1776
    %1813 = vmatpush.bf16.msra.mxu0 %v1772
    %1814 = vmatpush.bf16.msra.mxu0 %v1768
    %1815 = vmatpush.bf16.msra.mxu0 %v1764
    %1816 = vmatpush.bf16.msra.mxu0 %v1760
    %1817 = vmatpush.bf16.msra.mxu0 %v1756
    %1818 = vmatpush.bf16.msra.mxu0 %v1752
    %1819 = vmatpush.bf16.msra.mxu0 %v1748
    %1820 = vmatmul.bf16.gmra.mxu0 %v1367
    %v1821 = vpop.f32.mrf.mxu0
    %v1822 = vadd.f32 0.0, %v1821
    %v1823 = vpop.f32.mrf.mxu0
    %1824 = vdwg.mxu0
    %1825 = vmatpush.bf16.msra.mxu0 %v1777
    %1826 = vmatpush.bf16.msra.mxu0 %v1773
    %1827 = vmatpush.bf16.msra.mxu0 %v1769
    %1828 = vmatpush.bf16.msra.mxu0 %v1765
    %1829 = vmatpush.bf16.msra.mxu0 %v1761
    %1830 = vmatpush.bf16.msra.mxu0 %v1757
    %1831 = vmatpush.bf16.msra.mxu0 %v1753
    %1832 = vmatpush.bf16.msra.mxu0 %v1749
    %1833 = vmatmul.bf16.gmra.mxu0 %v1367
    %v1834 = vpop.f32.mrf.mxu0
    %v1835 = vadd.f32 0.0, %v1834
    %v1836 = vpop.f32.mrf.mxu0
    %1837 = vdwg.mxu0
    %1838 = vmatpush.bf16.msra.mxu0 %v1778
    %1839 = vmatpush.bf16.msra.mxu0 %v1774
    %1840 = vmatpush.bf16.msra.mxu0 %v1770
    %1841 = vmatpush.bf16.msra.mxu0 %v1766
    %1842 = vmatpush.bf16.msra.mxu0 %v1762
    %1843 = vmatpush.bf16.msra.mxu0 %v1758
    %1844 = vmatpush.bf16.msra.mxu0 %v1754
    %1845 = vmatpush.bf16.msra.mxu0 %v1750
    %1846 = vmatmul.bf16.gmra.mxu0 %v1367
    %v1847 = vpop.f32.mrf.mxu0
    %v1848 = vadd.f32 0.0, %v1847
    %v1849 = vpop.f32.mrf.mxu0
    %1850 = vdwg.mxu0
    %1851 = vmatpush.bf16.msra.mxu0 %v1779
    %1852 = vmatpush.bf16.msra.mxu0 %v1775
    %1853 = vmatpush.bf16.msra.mxu0 %v1771
    %1854 = vmatpush.bf16.msra.mxu0 %v1767
    %1855 = vmatpush.bf16.msra.mxu0 %v1763
    %1856 = vmatpush.bf16.msra.mxu0 %v1759
    %1857 = vmatpush.bf16.msra.mxu0 %v1755
    %1858 = vmatpush.bf16.msra.mxu0 %v1751
    %1859 = vmatmul.bf16.gmra.mxu0 %v1367
    %v1860 = vpop.f32.mrf.mxu0
    %v1861 = vadd.f32 0.0, %v1860
    %v1862 = vpop.f32.mrf.mxu0
    %1863 = vdwg.mxu0
    %v1864 = vadd.f32 %v1616, %v1822
    %v1865 = vadd.f32 %v1617, %v1835
    %v1866 = vadd.f32 %v1618, %v1848
    %v1867 = vadd.f32 %v1619, %v1861
    %v1868 = vxor.u32 %v1864, 2147483648
    %v1869 = vmul.f32 %v1868, 1.442695
    %v1870 = vpow.pop %v1869
    %v1871 = vadd.f32 %v1870, 1.0
    %v1872 = vrcp.pop %v1871
    %v1873 = vmul.f32 %v1871, %v1872
    %v1874 = vsub.f32 1.0, %v1873
    %v1875 = vmul.f32 %v1872, %v1874
    %v1876 = vadd.f32 %v1872, %v1875
    %vm1877 = vweird.f32 %v1871
    %vm1878 = vweird.f32 %v1872
    %vm1879 = vmor %vm1877, %vm1878
    %v1880 = vsel %vm1879, %v1872, %v1876
    %v1881 = vand.u32 2147483647, %v1871
    %vm1882 = vcmp.eq.f32.partialorder %v1881, 8.507059e+37
    %v1883 = vand.u32 %v1871, 2147483648
    %v1884 = vor.u32 1.1754944e-38, %v1883
    %v1885 = vsel %vm1882, %v1884, %v1880
    %v1886 = vmul.f32 1.0, %v1885
    %v1887 = vxor.u32 %v1865, 2147483648
    %v1888 = vmul.f32 %v1887, 1.442695
    %v1889 = vpow.pop %v1888
    %v1890 = vadd.f32 %v1889, 1.0
    %v1891 = vrcp.pop %v1890
    %v1892 = vmul.f32 %v1890, %v1891
    %v1893 = vsub.f32 1.0, %v1892
    %v1894 = vmul.f32 %v1891, %v1893
    %v1895 = vadd.f32 %v1891, %v1894
    %vm1896 = vweird.f32 %v1890
    %vm1897 = vweird.f32 %v1891
    %vm1898 = vmor %vm1896, %vm1897
    %v1899 = vsel %vm1898, %v1891, %v1895
    %v1900 = vand.u32 2147483647, %v1890
    %vm1901 = vcmp.eq.f32.partialorder %v1900, 8.507059e+37
    %v1902 = vand.u32 %v1890, 2147483648
    %v1903 = vor.u32 1.1754944e-38, %v1902
    %v1904 = vsel %vm1901, %v1903, %v1899
    %v1905 = vmul.f32 1.0, %v1904
    %v1906 = vtanh.pop %v1866
    %v1907 = vxor.u32 %v1867, 2147483648
    %v1908 = vmul.f32 %v1907, 1.442695
    %v1909 = vpow.pop %v1908
    %v1910 = vadd.f32 %v1909, 1.0
    %v1911 = vrcp.pop %v1910
    %v1912 = vmul.f32 %v1910, %v1911
    %v1913 = vsub.f32 1.0, %v1912
    %v1914 = vmul.f32 %v1911, %v1913
    %v1915 = vadd.f32 %v1911, %v1914
    %vm1916 = vweird.f32 %v1910
    %vm1917 = vweird.f32 %v1911
    %vm1918 = vmor %vm1916, %vm1917
    %v1919 = vsel %vm1918, %v1911, %v1915
    %v1920 = vand.u32 2147483647, %v1910
    %vm1921 = vcmp.eq.f32.partialorder %v1920, 8.507059e+37
    %v1922 = vand.u32 %v1910, 2147483648
    %v1923 = vor.u32 1.1754944e-38, %v1922
    %v1924 = vsel %vm1921, %v1923, %v1919
    %v1925 = vmul.f32 1.0, %v1924
    %v1926 = vmul.f32 %v1905, %v1364
    %v1927 = vmul.f32 %v1886, %v1906
    %v1928 = vadd.f32 %v1926, %v1927
    %v1929 = vtanh.pop %v1928
    %v1930 = vmul.f32 %v1925, %v1929
    %v1931 = vpack.c.bf16 %v1930, %v1930
    %v1932 = vld [vmem:[#allocation8] sm:$0xff]
    %v1933 = vld [vmem:[#allocation8 + $0x8] sm:$0xff]
    %v1934 = vld [vmem:[#allocation8 + $0x10] sm:$0xff]
    %v1935 = vld [vmem:[#allocation8 + $0x18] sm:$0xff]
    %v1936 = vld [vmem:[#allocation8 + $0x20] sm:$0xff]
    %v1937 = vld [vmem:[#allocation8 + $0x28] sm:$0xff]
    %v1938 = vld [vmem:[#allocation8 + $0x30] sm:$0xff]
    %v1939 = vld [vmem:[#allocation8 + $0x38] sm:$0xff]
    %v1940 = vld [vmem:[#allocation8 + $0x40] sm:$0xff]
    %v1941 = vld [vmem:[#allocation8 + $0x48] sm:$0xff]
    %v1942 = vld [vmem:[#allocation8 + $0x50] sm:$0xff]
    %v1943 = vld [vmem:[#allocation8 + $0x58] sm:$0xff]
    %v1944 = vld [vmem:[#allocation8 + $0x60] sm:$0xff]
    %v1945 = vld [vmem:[#allocation8 + $0x68] sm:$0xff]
    %v1946 = vld [vmem:[#allocation8 + $0x70] sm:$0xff]
    %v1947 = vld [vmem:[#allocation8 + $0x78] sm:$0xff]
    %v1948 = vld [vmem:[#allocation8 + $0x80] sm:$0xff]
    %v1949 = vld [vmem:[#allocation8 + $0x88] sm:$0xff]
    %v1950 = vld [vmem:[#allocation8 + $0x90] sm:$0xff]
    %v1951 = vld [vmem:[#allocation8 + $0x98] sm:$0xff]
    %v1952 = vld [vmem:[#allocation8 + $0xa0] sm:$0xff]
    %v1953 = vld [vmem:[#allocation8 + $0xa8] sm:$0xff]
    %v1954 = vld [vmem:[#allocation8 + $0xb0] sm:$0xff]
    %v1955 = vld [vmem:[#allocation8 + $0xb8] sm:$0xff]
    %v1956 = vld [vmem:[#allocation8 + $0xc0] sm:$0xff]
    %v1957 = vld [vmem:[#allocation8 + $0xc8] sm:$0xff]
    %v1958 = vld [vmem:[#allocation8 + $0xd0] sm:$0xff]
    %v1959 = vld [vmem:[#allocation8 + $0xd8] sm:$0xff]
    %v1960 = vld [vmem:[#allocation8 + $0xe0] sm:$0xff]
    %v1961 = vld [vmem:[#allocation8 + $0xe8] sm:$0xff]
    %v1962 = vld [vmem:[#allocation8 + $0xf0] sm:$0xff]
    %v1963 = vld [vmem:[#allocation8 + $0xf8] sm:$0xff]
    %v1996 = vunpack.c.l.b16 %v1932
    %v1997 = vunpack.c.h.b16 %v1932
    %v1998 = vunpack.c.l.b16 %v1933
    %v1999 = vunpack.c.h.b16 %v1933
    %v2000 = vunpack.c.l.b16 %v1934
    %v2001 = vunpack.c.h.b16 %v1934
    %v2002 = vunpack.c.l.b16 %v1935
    %v2003 = vunpack.c.h.b16 %v1935
    %v2004 = vunpack.c.l.b16 %v1936
    %v2005 = vunpack.c.h.b16 %v1936
    %v2006 = vunpack.c.l.b16 %v1937
    %v2007 = vunpack.c.h.b16 %v1937
    %v2008 = vunpack.c.l.b16 %v1938
    %v2009 = vunpack.c.h.b16 %v1938
    %v2010 = vunpack.c.l.b16 %v1939
    %v2011 = vunpack.c.h.b16 %v1939
    %v2012 = vunpack.c.l.b16 %v1940
    %v2013 = vunpack.c.h.b16 %v1940
    %v2014 = vunpack.c.l.b16 %v1941
    %v2015 = vunpack.c.h.b16 %v1941
    %v2016 = vunpack.c.l.b16 %v1942
    %v2017 = vunpack.c.h.b16 %v1942
    %v2018 = vunpack.c.l.b16 %v1943
    %v2019 = vunpack.c.h.b16 %v1943
    %v2020 = vunpack.c.l.b16 %v1944
    %v2021 = vunpack.c.h.b16 %v1944
    %v2022 = vunpack.c.l.b16 %v1945
    %v2023 = vunpack.c.h.b16 %v1945
    %v2024 = vunpack.c.l.b16 %v1946
    %v2025 = vunpack.c.h.b16 %v1946
    %v2026 = vunpack.c.l.b16 %v1947
    %v2027 = vunpack.c.h.b16 %v1947
    %v2028 = vunpack.c.l.b16 %v1948
    %v2029 = vunpack.c.h.b16 %v1948
    %v2030 = vunpack.c.l.b16 %v1949
    %v2031 = vunpack.c.h.b16 %v1949
    %v2032 = vunpack.c.l.b16 %v1950
    %v2033 = vunpack.c.h.b16 %v1950
    %v2034 = vunpack.c.l.b16 %v1951
    %v2035 = vunpack.c.h.b16 %v1951
    %v2036 = vunpack.c.l.b16 %v1952
    %v2037 = vunpack.c.h.b16 %v1952
    %v2038 = vunpack.c.l.b16 %v1953
    %v2039 = vunpack.c.h.b16 %v1953
    %v2040 = vunpack.c.l.b16 %v1954
    %v2041 = vunpack.c.h.b16 %v1954
    %v2042 = vunpack.c.l.b16 %v1955
    %v2043 = vunpack.c.h.b16 %v1955
    %v2044 = vunpack.c.l.b16 %v1956
    %v2045 = vunpack.c.h.b16 %v1956
    %v2046 = vunpack.c.l.b16 %v1957
    %v2047 = vunpack.c.h.b16 %v1957
    %v2048 = vunpack.c.l.b16 %v1958
    %v2049 = vunpack.c.h.b16 %v1958
    %v2050 = vunpack.c.l.b16 %v1959
    %v2051 = vunpack.c.h.b16 %v1959
    %v2052 = vunpack.c.l.b16 %v1960
    %v2053 = vunpack.c.h.b16 %v1960
    %v2054 = vunpack.c.l.b16 %v1961
    %v2055 = vunpack.c.h.b16 %v1961
    %v2056 = vunpack.c.l.b16 %v1962
    %v2057 = vunpack.c.h.b16 %v1962
    %v2058 = vunpack.c.l.b16 %v1963
    %v2059 = vunpack.c.h.b16 %v1963
    %v2060 = vpack.c.b16 %v2000, %v1996
    %v2061 = vpack.c.b16 %v2001, %v1997
    %v2062 = vpack.c.b16 %v2002, %v1998
    %v2063 = vpack.c.b16 %v2003, %v1999
    %v2064 = vpack.c.b16 %v2008, %v2004
    %v2065 = vpack.c.b16 %v2009, %v2005
    %v2066 = vpack.c.b16 %v2010, %v2006
    %v2067 = vpack.c.b16 %v2011, %v2007
    %v2068 = vpack.c.b16 %v2016, %v2012
    %v2069 = vpack.c.b16 %v2017, %v2013
    %v2070 = vpack.c.b16 %v2018, %v2014
    %v2071 = vpack.c.b16 %v2019, %v2015
    %v2072 = vpack.c.b16 %v2024, %v2020
    %v2073 = vpack.c.b16 %v2025, %v2021
    %v2074 = vpack.c.b16 %v2026, %v2022
    %v2075 = vpack.c.b16 %v2027, %v2023
    %v2076 = vpack.c.b16 %v2032, %v2028
    %v2077 = vpack.c.b16 %v2033, %v2029
    %v2078 = vpack.c.b16 %v2034, %v2030
    %v2079 = vpack.c.b16 %v2035, %v2031
    %v2080 = vpack.c.b16 %v2040, %v2036
    %v2081 = vpack.c.b16 %v2041, %v2037
    %v2082 = vpack.c.b16 %v2042, %v2038
    %v2083 = vpack.c.b16 %v2043, %v2039
    %v2084 = vpack.c.b16 %v2048, %v2044
    %v2085 = vpack.c.b16 %v2049, %v2045
    %v2086 = vpack.c.b16 %v2050, %v2046
    %v2087 = vpack.c.b16 %v2051, %v2047
    %v2088 = vpack.c.b16 %v2056, %v2052
    %v2089 = vpack.c.b16 %v2057, %v2053
    %v2090 = vpack.c.b16 %v2058, %v2054
    %v2091 = vpack.c.b16 %v2059, %v2055
    %2124 = vmatpush.bf16.msra.mxu0 %v2088
    %2125 = vmatpush.bf16.msra.mxu0 %v2084
    %2126 = vmatpush.bf16.msra.mxu0 %v2080
    %2127 = vmatpush.bf16.msra.mxu0 %v2076
    %2128 = vmatpush.bf16.msra.mxu0 %v2072
    %2129 = vmatpush.bf16.msra.mxu0 %v2068
    %2130 = vmatpush.bf16.msra.mxu0 %v2064
    %2131 = vmatpush.bf16.msra.mxu0 %v2060
    %2132 = vmatmul.bf16.gmra.mxu0 %v1931
    %v2133 = vpop.f32.mrf.mxu0
    %v2134 = vadd.f32 %v480, %v2133
    %v2135 = vpop.f32.mrf.mxu0
    %2136 = vdwg.mxu0
    %2137 = vmatpush.bf16.msra.mxu0 %v2089
    %2138 = vmatpush.bf16.msra.mxu0 %v2085
    %2139 = vmatpush.bf16.msra.mxu0 %v2081
    %2140 = vmatpush.bf16.msra.mxu0 %v2077
    %2141 = vmatpush.bf16.msra.mxu0 %v2073
    %2142 = vmatpush.bf16.msra.mxu0 %v2069
    %2143 = vmatpush.bf16.msra.mxu0 %v2065
    %2144 = vmatpush.bf16.msra.mxu0 %v2061
    %2145 = vmatmul.bf16.gmra.mxu0 %v1931
    %v2146 = vpop.f32.mrf.mxu0
    %v2147 = vadd.f32 %v481, %v2146
    %v2148 = vpop.f32.mrf.mxu0
    %2149 = vdwg.mxu0
    %2150 = vmatpush.bf16.msra.mxu0 %v2090
    %2151 = vmatpush.bf16.msra.mxu0 %v2086
    %2152 = vmatpush.bf16.msra.mxu0 %v2082
    %2153 = vmatpush.bf16.msra.mxu0 %v2078
    %2154 = vmatpush.bf16.msra.mxu0 %v2074
    %2155 = vmatpush.bf16.msra.mxu0 %v2070
    %2156 = vmatpush.bf16.msra.mxu0 %v2066
    %2157 = vmatpush.bf16.msra.mxu0 %v2062
    %2158 = vmatmul.bf16.gmra.mxu0 %v1931
    %v2159 = vpop.f32.mrf.mxu0
    %v2160 = vadd.f32 %v482, %v2159
    %v2161 = vpop.f32.mrf.mxu0
    %2162 = vdwg.mxu0
    %2163 = vmatpush.bf16.msra.mxu0 %v2091
    %2164 = vmatpush.bf16.msra.mxu0 %v2087
    %2165 = vmatpush.bf16.msra.mxu0 %v2083
    %2166 = vmatpush.bf16.msra.mxu0 %v2079
    %2167 = vmatpush.bf16.msra.mxu0 %v2075
    %2168 = vmatpush.bf16.msra.mxu0 %v2071
    %2169 = vmatpush.bf16.msra.mxu0 %v2067
    %2170 = vmatpush.bf16.msra.mxu0 %v2063
    %2171 = vmatmul.bf16.gmra.mxu0 %v1931
    %v2172 = vpop.f32.mrf.mxu0
    %v2173 = vadd.f32 %v483, %v2172
    %v2174 = vpop.f32.mrf.mxu0
    %2175 = vdwg.mxu0
    %2176 = vst [vmem:[#allocation3 + $0x40] sm:$0xff] %v2134
    %2177 = vst [vmem:[#allocation3 + $0x48] sm:$0xff] %v2147
    %2178 = vst [vmem:[#allocation3 + $0x50] sm:$0xff] %v2160
    %2179 = vst [vmem:[#allocation3 + $0x58] sm:$0xff] %v2173
    %v2180 = vld [vmem:[#allocation2 + $0x60] sm:$0xff]
    %v2181 = vld [vmem:[#allocation2 + $0x68] sm:$0xff]
    %v2182 = vld [vmem:[#allocation2 + $0x70] sm:$0xff]
    %v2183 = vld [vmem:[#allocation2 + $0x78] sm:$0xff]
    %v2184 = vld [vmem:[#allocation6] sm:$0xff]
    %v2185 = vld [vmem:[#allocation6 + $0x8] sm:$0xff]
    %v2186 = vld [vmem:[#allocation6 + $0x10] sm:$0xff]
    %v2187 = vld [vmem:[#allocation6 + $0x18] sm:$0xff]
    %v2188 = vld [vmem:[#allocation6 + $0x20] sm:$0xff]
    %v2189 = vld [vmem:[#allocation6 + $0x28] sm:$0xff]
    %v2190 = vld [vmem:[#allocation6 + $0x30] sm:$0xff]
    %v2191 = vld [vmem:[#allocation6 + $0x38] sm:$0xff]
    %v2192 = vld [vmem:[#allocation6 + $0x40] sm:$0xff]
    %v2193 = vld [vmem:[#allocation6 + $0x48] sm:$0xff]
    %v2194 = vld [vmem:[#allocation6 + $0x50] sm:$0xff]
    %v2195 = vld [vmem:[#allocation6 + $0x58] sm:$0xff]
    %v2196 = vld [vmem:[#allocation6 + $0x60] sm:$0xff]
    %v2197 = vld [vmem:[#allocation6 + $0x68] sm:$0xff]
    %v2198 = vld [vmem:[#allocation6 + $0x70] sm:$0xff]
    %v2199 = vld [vmem:[#allocation6 + $0x78] sm:$0xff]
    %v2200 = vld [vmem:[#allocation6 + $0x80] sm:$0xff]
    %v2201 = vld [vmem:[#allocation6 + $0x88] sm:$0xff]
    %v2202 = vld [vmem:[#allocation6 + $0x90] sm:$0xff]
    %v2203 = vld [vmem:[#allocation6 + $0x98] sm:$0xff]
    %v2204 = vld [vmem:[#allocation6 + $0xa0] sm:$0xff]
    %v2205 = vld [vmem:[#allocation6 + $0xa8] sm:$0xff]
    %v2206 = vld [vmem:[#allocation6 + $0xb0] sm:$0xff]
    %v2207 = vld [vmem:[#allocation6 + $0xb8] sm:$0xff]
    %v2208 = vld [vmem:[#allocation6 + $0xc0] sm:$0xff]
    %v2209 = vld [vmem:[#allocation6 + $0xc8] sm:$0xff]
    %v2210 = vld [vmem:[#allocation6 + $0xd0] sm:$0xff]
    %v2211 = vld [vmem:[#allocation6 + $0xd8] sm:$0xff]
    %v2212 = vld [vmem:[#allocation6 + $0xe0] sm:$0xff]
    %v2213 = vld [vmem:[#allocation6 + $0xe8] sm:$0xff]
    %v2214 = vld [vmem:[#allocation6 + $0xf0] sm:$0xff]
    %v2215 = vld [vmem:[#allocation6 + $0xf8] sm:$0xff]
    %v2248 = vunpack.c.l.b16 %v2184
    %v2249 = vunpack.c.h.b16 %v2184
    %v2250 = vunpack.c.l.b16 %v2185
    %v2251 = vunpack.c.h.b16 %v2185
    %v2252 = vunpack.c.l.b16 %v2186
    %v2253 = vunpack.c.h.b16 %v2186
    %v2254 = vunpack.c.l.b16 %v2187
    %v2255 = vunpack.c.h.b16 %v2187
    %v2256 = vunpack.c.l.b16 %v2188
    %v2257 = vunpack.c.h.b16 %v2188
    %v2258 = vunpack.c.l.b16 %v2189
    %v2259 = vunpack.c.h.b16 %v2189
    %v2260 = vunpack.c.l.b16 %v2190
    %v2261 = vunpack.c.h.b16 %v2190
    %v2262 = vunpack.c.l.b16 %v2191
    %v2263 = vunpack.c.h.b16 %v2191
    %v2264 = vunpack.c.l.b16 %v2192
    %v2265 = vunpack.c.h.b16 %v2192
    %v2266 = vunpack.c.l.b16 %v2193
    %v2267 = vunpack.c.h.b16 %v2193
    %v2268 = vunpack.c.l.b16 %v2194
    %v2269 = vunpack.c.h.b16 %v2194
    %v2270 = vunpack.c.l.b16 %v2195
    %v2271 = vunpack.c.h.b16 %v2195
    %v2272 = vunpack.c.l.b16 %v2196
    %v2273 = vunpack.c.h.b16 %v2196
    %v2274 = vunpack.c.l.b16 %v2197
    %v2275 = vunpack.c.h.b16 %v2197
    %v2276 = vunpack.c.l.b16 %v2198
    %v2277 = vunpack.c.h.b16 %v2198
    %v2278 = vunpack.c.l.b16 %v2199
    %v2279 = vunpack.c.h.b16 %v2199
    %v2280 = vunpack.c.l.b16 %v2200
    %v2281 = vunpack.c.h.b16 %v2200
    %v2282 = vunpack.c.l.b16 %v2201
    %v2283 = vunpack.c.h.b16 %v2201
    %v2284 = vunpack.c.l.b16 %v2202
    %v2285 = vunpack.c.h.b16 %v2202
    %v2286 = vunpack.c.l.b16 %v2203
    %v2287 = vunpack.c.h.b16 %v2203
    %v2288 = vunpack.c.l.b16 %v2204
    %v2289 = vunpack.c.h.b16 %v2204
    %v2290 = vunpack.c.l.b16 %v2205
    %v2291 = vunpack.c.h.b16 %v2205
    %v2292 = vunpack.c.l.b16 %v2206
    %v2293 = vunpack.c.h.b16 %v2206
    %v2294 = vunpack.c.l.b16 %v2207
    %v2295 = vunpack.c.h.b16 %v2207
    %v2296 = vunpack.c.l.b16 %v2208
    %v2297 = vunpack.c.h.b16 %v2208
    %v2298 = vunpack.c.l.b16 %v2209
    %v2299 = vunpack.c.h.b16 %v2209
    %v2300 = vunpack.c.l.b16 %v2210
    %v2301 = vunpack.c.h.b16 %v2210
    %v2302 = vunpack.c.l.b16 %v2211
    %v2303 = vunpack.c.h.b16 %v2211
    %v2304 = vunpack.c.l.b16 %v2212
    %v2305 = vunpack.c.h.b16 %v2212
    %v2306 = vunpack.c.l.b16 %v2213
    %v2307 = vunpack.c.h.b16 %v2213
    %v2308 = vunpack.c.l.b16 %v2214
    %v2309 = vunpack.c.h.b16 %v2214
    %v2310 = vunpack.c.l.b16 %v2215
    %v2311 = vunpack.c.h.b16 %v2215
    %v2312 = vpack.c.b16 %v2252, %v2248
    %v2313 = vpack.c.b16 %v2253, %v2249
    %v2314 = vpack.c.b16 %v2254, %v2250
    %v2315 = vpack.c.b16 %v2255, %v2251
    %v2316 = vpack.c.b16 %v2260, %v2256
    %v2317 = vpack.c.b16 %v2261, %v2257
    %v2318 = vpack.c.b16 %v2262, %v2258
    %v2319 = vpack.c.b16 %v2263, %v2259
    %v2320 = vpack.c.b16 %v2268, %v2264
    %v2321 = vpack.c.b16 %v2269, %v2265
    %v2322 = vpack.c.b16 %v2270, %v2266
    %v2323 = vpack.c.b16 %v2271, %v2267
    %v2324 = vpack.c.b16 %v2276, %v2272
    %v2325 = vpack.c.b16 %v2277, %v2273
    %v2326 = vpack.c.b16 %v2278, %v2274
    %v2327 = vpack.c.b16 %v2279, %v2275
    %v2328 = vpack.c.b16 %v2284, %v2280
    %v2329 = vpack.c.b16 %v2285, %v2281
    %v2330 = vpack.c.b16 %v2286, %v2282
    %v2331 = vpack.c.b16 %v2287, %v2283
    %v2332 = vpack.c.b16 %v2292, %v2288
    %v2333 = vpack.c.b16 %v2293, %v2289
    %v2334 = vpack.c.b16 %v2294, %v2290
    %v2335 = vpack.c.b16 %v2295, %v2291
    %v2336 = vpack.c.b16 %v2300, %v2296
    %v2337 = vpack.c.b16 %v2301, %v2297
    %v2338 = vpack.c.b16 %v2302, %v2298
    %v2339 = vpack.c.b16 %v2303, %v2299
    %v2340 = vpack.c.b16 %v2308, %v2304
    %v2341 = vpack.c.b16 %v2309, %v2305
    %v2342 = vpack.c.b16 %v2310, %v2306
    %v2343 = vpack.c.b16 %v2311, %v2307
    %2376 = vmatpush.bf16.msra.mxu0 %v2340
    %2377 = vmatpush.bf16.msra.mxu0 %v2336
    %2378 = vmatpush.bf16.msra.mxu0 %v2332
    %2379 = vmatpush.bf16.msra.mxu0 %v2328
    %2380 = vmatpush.bf16.msra.mxu0 %v2324
    %2381 = vmatpush.bf16.msra.mxu0 %v2320
    %2382 = vmatpush.bf16.msra.mxu0 %v2316
    %2383 = vmatpush.bf16.msra.mxu0 %v2312
    %2384 = vmatmul.bf16.gmra.mxu0 %v1931
    %v2385 = vpop.f32.mrf.mxu0
    %v2386 = vadd.f32 0.0, %v2385
    %v2387 = vpop.f32.mrf.mxu0
    %2388 = vdwg.mxu0
    %2389 = vmatpush.bf16.msra.mxu0 %v2341
    %2390 = vmatpush.bf16.msra.mxu0 %v2337
    %2391 = vmatpush.bf16.msra.mxu0 %v2333
    %2392 = vmatpush.bf16.msra.mxu0 %v2329
    %2393 = vmatpush.bf16.msra.mxu0 %v2325
    %2394 = vmatpush.bf16.msra.mxu0 %v2321
    %2395 = vmatpush.bf16.msra.mxu0 %v2317
    %2396 = vmatpush.bf16.msra.mxu0 %v2313
    %2397 = vmatmul.bf16.gmra.mxu0 %v1931
    %v2398 = vpop.f32.mrf.mxu0
    %v2399 = vadd.f32 0.0, %v2398
    %v2400 = vpop.f32.mrf.mxu0
    %2401 = vdwg.mxu0
    %2402 = vmatpush.bf16.msra.mxu0 %v2342
    %2403 = vmatpush.bf16.msra.mxu0 %v2338
    %2404 = vmatpush.bf16.msra.mxu0 %v2334
    %2405 = vmatpush.bf16.msra.mxu0 %v2330
    %2406 = vmatpush.bf16.msra.mxu0 %v2326
    %2407 = vmatpush.bf16.msra.mxu0 %v2322
    %2408 = vmatpush.bf16.msra.mxu0 %v2318
    %2409 = vmatpush.bf16.msra.mxu0 %v2314
    %2410 = vmatmul.bf16.gmra.mxu0 %v1931
    %v2411 = vpop.f32.mrf.mxu0
    %v2412 = vadd.f32 0.0, %v2411
    %v2413 = vpop.f32.mrf.mxu0
    %2414 = vdwg.mxu0
    %2415 = vmatpush.bf16.msra.mxu0 %v2343
    %2416 = vmatpush.bf16.msra.mxu0 %v2339
    %2417 = vmatpush.bf16.msra.mxu0 %v2335
    %2418 = vmatpush.bf16.msra.mxu0 %v2331
    %2419 = vmatpush.bf16.msra.mxu0 %v2327
    %2420 = vmatpush.bf16.msra.mxu0 %v2323
    %2421 = vmatpush.bf16.msra.mxu0 %v2319
    %2422 = vmatpush.bf16.msra.mxu0 %v2315
    %2423 = vmatmul.bf16.gmra.mxu0 %v1931
    %v2424 = vpop.f32.mrf.mxu0
    %v2425 = vadd.f32 0.0, %v2424
    %v2426 = vpop.f32.mrf.mxu0
    %2427 = vdwg.mxu0
    %v2428 = vadd.f32 %v2180, %v2386
    %v2429 = vadd.f32 %v2181, %v2399
    %v2430 = vadd.f32 %v2182, %v2412
    %v2431 = vadd.f32 %v2183, %v2425
    %v2432 = vxor.u32 %v2428, 2147483648
    %v2433 = vmul.f32 %v2432, 1.442695
    %v2434 = vpow.pop %v2433
    %v2435 = vadd.f32 %v2434, 1.0
    %v2436 = vrcp.pop %v2435
    %v2437 = vmul.f32 %v2435, %v2436
    %v2438 = vsub.f32 1.0, %v2437
    %v2439 = vmul.f32 %v2436, %v2438
    %v2440 = vadd.f32 %v2436, %v2439
    %vm2441 = vweird.f32 %v2435
    %vm2442 = vweird.f32 %v2436
    %vm2443 = vmor %vm2441, %vm2442
    %v2444 = vsel %vm2443, %v2436, %v2440
    %v2445 = vand.u32 2147483647, %v2435
    %vm2446 = vcmp.eq.f32.partialorder %v2445, 8.507059e+37
    %v2447 = vand.u32 %v2435, 2147483648
    %v2448 = vor.u32 1.1754944e-38, %v2447
    %v2449 = vsel %vm2446, %v2448, %v2444
    %v2450 = vmul.f32 1.0, %v2449
    %v2451 = vxor.u32 %v2429, 2147483648
    %v2452 = vmul.f32 %v2451, 1.442695
    %v2453 = vpow.pop %v2452
    %v2454 = vadd.f32 %v2453, 1.0
    %v2455 = vrcp.pop %v2454
    %v2456 = vmul.f32 %v2454, %v2455
    %v2457 = vsub.f32 1.0, %v2456
    %v2458 = vmul.f32 %v2455, %v2457
    %v2459 = vadd.f32 %v2455, %v2458
    %vm2460 = vweird.f32 %v2454
    %vm2461 = vweird.f32 %v2455
    %vm2462 = vmor %vm2460, %vm2461
    %v2463 = vsel %vm2462, %v2455, %v2459
    %v2464 = vand.u32 2147483647, %v2454
    %vm2465 = vcmp.eq.f32.partialorder %v2464, 8.507059e+37
    %v2466 = vand.u32 %v2454, 2147483648
    %v2467 = vor.u32 1.1754944e-38, %v2466
    %v2468 = vsel %vm2465, %v2467, %v2463
    %v2469 = vmul.f32 1.0, %v2468
    %v2470 = vtanh.pop %v2430
    %v2471 = vxor.u32 %v2431, 2147483648
    %v2472 = vmul.f32 %v2471, 1.442695
    %v2473 = vpow.pop %v2472
    %v2474 = vadd.f32 %v2473, 1.0
    %v2475 = vrcp.pop %v2474
    %v2476 = vmul.f32 %v2474, %v2475
    %v2477 = vsub.f32 1.0, %v2476
    %v2478 = vmul.f32 %v2475, %v2477
    %v2479 = vadd.f32 %v2475, %v2478
    %vm2480 = vweird.f32 %v2474
    %vm2481 = vweird.f32 %v2475
    %vm2482 = vmor %vm2480, %vm2481
    %v2483 = vsel %vm2482, %v2475, %v2479
    %v2484 = vand.u32 2147483647, %v2474
    %vm2485 = vcmp.eq.f32.partialorder %v2484, 8.507059e+37
    %v2486 = vand.u32 %v2474, 2147483648
    %v2487 = vor.u32 1.1754944e-38, %v2486
    %v2488 = vsel %vm2485, %v2487, %v2483
    %v2489 = vmul.f32 1.0, %v2488
    %v2490 = vmul.f32 %v2469, %v1928
    %v2491 = vmul.f32 %v2450, %v2470
    %v2492 = vadd.f32 %v2490, %v2491
    %v2493 = vtanh.pop %v2492
    %v2494 = vmul.f32 %v2489, %v2493
    %v2495 = vpack.c.bf16 %v2494, %v2494
    %v2496 = vld [vmem:[#allocation8] sm:$0xff]
    %v2497 = vld [vmem:[#allocation8 + $0x8] sm:$0xff]
    %v2498 = vld [vmem:[#allocation8 + $0x10] sm:$0xff]
    %v2499 = vld [vmem:[#allocation8 + $0x18] sm:$0xff]
    %v2500 = vld [vmem:[#allocation8 + $0x20] sm:$0xff]
    %v2501 = vld [vmem:[#allocation8 + $0x28] sm:$0xff]
    %v2502 = vld [vmem:[#allocation8 + $0x30] sm:$0xff]
    %v2503 = vld [vmem:[#allocation8 + $0x38] sm:$0xff]
    %v2504 = vld [vmem:[#allocation8 + $0x40] sm:$0xff]
    %v2505 = vld [vmem:[#allocation8 + $0x48] sm:$0xff]
    %v2506 = vld [vmem:[#allocation8 + $0x50] sm:$0xff]
    %v2507 = vld [vmem:[#allocation8 + $0x58] sm:$0xff]
    %v2508 = vld [vmem:[#allocation8 + $0x60] sm:$0xff]
    %v2509 = vld [vmem:[#allocation8 + $0x68] sm:$0xff]
    %v2510 = vld [vmem:[#allocation8 + $0x70] sm:$0xff]
    %v2511 = vld [vmem:[#allocation8 + $0x78] sm:$0xff]
    %v2512 = vld [vmem:[#allocation8 + $0x80] sm:$0xff]
    %v2513 = vld [vmem:[#allocation8 + $0x88] sm:$0xff]
    %v2514 = vld [vmem:[#allocation8 + $0x90] sm:$0xff]
    %v2515 = vld [vmem:[#allocation8 + $0x98] sm:$0xff]
    %v2516 = vld [vmem:[#allocation8 + $0xa0] sm:$0xff]
    %v2517 = vld [vmem:[#allocation8 + $0xa8] sm:$0xff]
    %v2518 = vld [vmem:[#allocation8 + $0xb0] sm:$0xff]
    %v2519 = vld [vmem:[#allocation8 + $0xb8] sm:$0xff]
    %v2520 = vld [vmem:[#allocation8 + $0xc0] sm:$0xff]
    %v2521 = vld [vmem:[#allocation8 + $0xc8] sm:$0xff]
    %v2522 = vld [vmem:[#allocation8 + $0xd0] sm:$0xff]
    %v2523 = vld [vmem:[#allocation8 + $0xd8] sm:$0xff]
    %v2524 = vld [vmem:[#allocation8 + $0xe0] sm:$0xff]
    %v2525 = vld [vmem:[#allocation8 + $0xe8] sm:$0xff]
    %v2526 = vld [vmem:[#allocation8 + $0xf0] sm:$0xff]
    %v2527 = vld [vmem:[#allocation8 + $0xf8] sm:$0xff]
    %v2560 = vunpack.c.l.b16 %v2496
    %v2561 = vunpack.c.h.b16 %v2496
    %v2562 = vunpack.c.l.b16 %v2497
    %v2563 = vunpack.c.h.b16 %v2497
    %v2564 = vunpack.c.l.b16 %v2498
    %v2565 = vunpack.c.h.b16 %v2498
    %v2566 = vunpack.c.l.b16 %v2499
    %v2567 = vunpack.c.h.b16 %v2499
    %v2568 = vunpack.c.l.b16 %v2500
    %v2569 = vunpack.c.h.b16 %v2500
    %v2570 = vunpack.c.l.b16 %v2501
    %v2571 = vunpack.c.h.b16 %v2501
    %v2572 = vunpack.c.l.b16 %v2502
    %v2573 = vunpack.c.h.b16 %v2502
    %v2574 = vunpack.c.l.b16 %v2503
    %v2575 = vunpack.c.h.b16 %v2503
    %v2576 = vunpack.c.l.b16 %v2504
    %v2577 = vunpack.c.h.b16 %v2504
    %v2578 = vunpack.c.l.b16 %v2505
    %v2579 = vunpack.c.h.b16 %v2505
    %v2580 = vunpack.c.l.b16 %v2506
    %v2581 = vunpack.c.h.b16 %v2506
    %v2582 = vunpack.c.l.b16 %v2507
    %v2583 = vunpack.c.h.b16 %v2507
    %v2584 = vunpack.c.l.b16 %v2508
    %v2585 = vunpack.c.h.b16 %v2508
    %v2586 = vunpack.c.l.b16 %v2509
    %v2587 = vunpack.c.h.b16 %v2509
    %v2588 = vunpack.c.l.b16 %v2510
    %v2589 = vunpack.c.h.b16 %v2510
    %v2590 = vunpack.c.l.b16 %v2511
    %v2591 = vunpack.c.h.b16 %v2511
    %v2592 = vunpack.c.l.b16 %v2512
    %v2593 = vunpack.c.h.b16 %v2512
    %v2594 = vunpack.c.l.b16 %v2513
    %v2595 = vunpack.c.h.b16 %v2513
    %v2596 = vunpack.c.l.b16 %v2514
    %v2597 = vunpack.c.h.b16 %v2514
    %v2598 = vunpack.c.l.b16 %v2515
    %v2599 = vunpack.c.h.b16 %v2515
    %v2600 = vunpack.c.l.b16 %v2516
    %v2601 = vunpack.c.h.b16 %v2516
    %v2602 = vunpack.c.l.b16 %v2517
    %v2603 = vunpack.c.h.b16 %v2517
    %v2604 = vunpack.c.l.b16 %v2518
    %v2605 = vunpack.c.h.b16 %v2518
    %v2606 = vunpack.c.l.b16 %v2519
    %v2607 = vunpack.c.h.b16 %v2519
    %v2608 = vunpack.c.l.b16 %v2520
    %v2609 = vunpack.c.h.b16 %v2520
    %v2610 = vunpack.c.l.b16 %v2521
    %v2611 = vunpack.c.h.b16 %v2521
    %v2612 = vunpack.c.l.b16 %v2522
    %v2613 = vunpack.c.h.b16 %v2522
    %v2614 = vunpack.c.l.b16 %v2523
    %v2615 = vunpack.c.h.b16 %v2523
    %v2616 = vunpack.c.l.b16 %v2524
    %v2617 = vunpack.c.h.b16 %v2524
    %v2618 = vunpack.c.l.b16 %v2525
    %v2619 = vunpack.c.h.b16 %v2525
    %v2620 = vunpack.c.l.b16 %v2526
    %v2621 = vunpack.c.h.b16 %v2526
    %v2622 = vunpack.c.l.b16 %v2527
    %v2623 = vunpack.c.h.b16 %v2527
    %v2624 = vpack.c.b16 %v2564, %v2560
    %v2625 = vpack.c.b16 %v2565, %v2561
    %v2626 = vpack.c.b16 %v2566, %v2562
    %v2627 = vpack.c.b16 %v2567, %v2563
    %v2628 = vpack.c.b16 %v2572, %v2568
    %v2629 = vpack.c.b16 %v2573, %v2569
    %v2630 = vpack.c.b16 %v2574, %v2570
    %v2631 = vpack.c.b16 %v2575, %v2571
    %v2632 = vpack.c.b16 %v2580, %v2576
    %v2633 = vpack.c.b16 %v2581, %v2577
    %v2634 = vpack.c.b16 %v2582, %v2578
    %v2635 = vpack.c.b16 %v2583, %v2579
    %v2636 = vpack.c.b16 %v2588, %v2584
    %v2637 = vpack.c.b16 %v2589, %v2585
    %v2638 = vpack.c.b16 %v2590, %v2586
    %v2639 = vpack.c.b16 %v2591, %v2587
    %v2640 = vpack.c.b16 %v2596, %v2592
    %v2641 = vpack.c.b16 %v2597, %v2593
    %v2642 = vpack.c.b16 %v2598, %v2594
    %v2643 = vpack.c.b16 %v2599, %v2595
    %v2644 = vpack.c.b16 %v2604, %v2600
    %v2645 = vpack.c.b16 %v2605, %v2601
    %v2646 = vpack.c.b16 %v2606, %v2602
    %v2647 = vpack.c.b16 %v2607, %v2603
    %v2648 = vpack.c.b16 %v2612, %v2608
    %v2649 = vpack.c.b16 %v2613, %v2609
    %v2650 = vpack.c.b16 %v2614, %v2610
    %v2651 = vpack.c.b16 %v2615, %v2611
    %v2652 = vpack.c.b16 %v2620, %v2616
    %v2653 = vpack.c.b16 %v2621, %v2617
    %v2654 = vpack.c.b16 %v2622, %v2618
    %v2655 = vpack.c.b16 %v2623, %v2619
    %2688 = vmatpush.bf16.msra.mxu0 %v2652
    %2689 = vmatpush.bf16.msra.mxu0 %v2648
    %2690 = vmatpush.bf16.msra.mxu0 %v2644
    %2691 = vmatpush.bf16.msra.mxu0 %v2640
    %2692 = vmatpush.bf16.msra.mxu0 %v2636
    %2693 = vmatpush.bf16.msra.mxu0 %v2632
    %2694 = vmatpush.bf16.msra.mxu0 %v2628
    %2695 = vmatpush.bf16.msra.mxu0 %v2624
    %2696 = vmatmul.bf16.gmra.mxu0 %v2495
    %v2697 = vpop.f32.mrf.mxu0
    %v2698 = vadd.f32 %v480, %v2697
    %v2699 = vpop.f32.mrf.mxu0
    %2700 = vdwg.mxu0
    %2701 = vmatpush.bf16.msra.mxu0 %v2653
    %2702 = vmatpush.bf16.msra.mxu0 %v2649
    %2703 = vmatpush.bf16.msra.mxu0 %v2645
    %2704 = vmatpush.bf16.msra.mxu0 %v2641
    %2705 = vmatpush.bf16.msra.mxu0 %v2637
    %2706 = vmatpush.bf16.msra.mxu0 %v2633
    %2707 = vmatpush.bf16.msra.mxu0 %v2629
    %2708 = vmatpush.bf16.msra.mxu0 %v2625
    %2709 = vmatmul.bf16.gmra.mxu0 %v2495
    %v2710 = vpop.f32.mrf.mxu0
    %v2711 = vadd.f32 %v481, %v2710
    %v2712 = vpop.f32.mrf.mxu0
    %2713 = vdwg.mxu0
    %2714 = vmatpush.bf16.msra.mxu0 %v2654
    %2715 = vmatpush.bf16.msra.mxu0 %v2650
    %2716 = vmatpush.bf16.msra.mxu0 %v2646
    %2717 = vmatpush.bf16.msra.mxu0 %v2642
    %2718 = vmatpush.bf16.msra.mxu0 %v2638
    %2719 = vmatpush.bf16.msra.mxu0 %v2634
    %2720 = vmatpush.bf16.msra.mxu0 %v2630
    %2721 = vmatpush.bf16.msra.mxu0 %v2626
    %2722 = vmatmul.bf16.gmra.mxu0 %v2495
    %v2723 = vpop.f32.mrf.mxu0
    %v2724 = vadd.f32 %v482, %v2723
    %v2725 = vpop.f32.mrf.mxu0
    %2726 = vdwg.mxu0
    %2727 = vmatpush.bf16.msra.mxu0 %v2655
    %2728 = vmatpush.bf16.msra.mxu0 %v2651
    %2729 = vmatpush.bf16.msra.mxu0 %v2647
    %2730 = vmatpush.bf16.msra.mxu0 %v2643
    %2731 = vmatpush.bf16.msra.mxu0 %v2639
    %2732 = vmatpush.bf16.msra.mxu0 %v2635
    %2733 = vmatpush.bf16.msra.mxu0 %v2631
    %2734 = vmatpush.bf16.msra.mxu0 %v2627
    %2735 = vmatmul.bf16.gmra.mxu0 %v2495
    %v2736 = vpop.f32.mrf.mxu0
    %v2737 = vadd.f32 %v483, %v2736
    %v2738 = vpop.f32.mrf.mxu0
    %2739 = vdwg.mxu0
    %2740 = vst [vmem:[#allocation3 + $0x60] sm:$0xff] %v2698
    %2741 = vst [vmem:[#allocation3 + $0x68] sm:$0xff] %v2711
    %2742 = vst [vmem:[#allocation3 + $0x70] sm:$0xff] %v2724
    %2743 = vst [vmem:[#allocation3 + $0x78] sm:$0xff] %v2737
    %v2744 = vld [vmem:[#allocation2 + $0x80] sm:$0xff]
    %v2745 = vld [vmem:[#allocation2 + $0x88] sm:$0xff]
    %v2746 = vld [vmem:[#allocation2 + $0x90] sm:$0xff]
    %v2747 = vld [vmem:[#allocation2 + $0x98] sm:$0xff]
    %v2748 = vld [vmem:[#allocation6] sm:$0xff]
    %v2749 = vld [vmem:[#allocation6 + $0x8] sm:$0xff]
    %v2750 = vld [vmem:[#allocation6 + $0x10] sm:$0xff]
    %v2751 = vld [vmem:[#allocation6 + $0x18] sm:$0xff]
    %v2752 = vld [vmem:[#allocation6 + $0x20] sm:$0xff]
    %v2753 = vld [vmem:[#allocation6 + $0x28] sm:$0xff]
    %v2754 = vld [vmem:[#allocation6 + $0x30] sm:$0xff]
    %v2755 = vld [vmem:[#allocation6 + $0x38] sm:$0xff]
    %v2756 = vld [vmem:[#allocation6 + $0x40] sm:$0xff]
    %v2757 = vld [vmem:[#allocation6 + $0x48] sm:$0xff]
    %v2758 = vld [vmem:[#allocation6 + $0x50] sm:$0xff]
    %v2759 = vld [vmem:[#allocation6 + $0x58] sm:$0xff]
    %v2760 = vld [vmem:[#allocation6 + $0x60] sm:$0xff]
    %v2761 = vld [vmem:[#allocation6 + $0x68] sm:$0xff]
    %v2762 = vld [vmem:[#allocation6 + $0x70] sm:$0xff]
    %v2763 = vld [vmem:[#allocation6 + $0x78] sm:$0xff]
    %v2764 = vld [vmem:[#allocation6 + $0x80] sm:$0xff]
    %v2765 = vld [vmem:[#allocation6 + $0x88] sm:$0xff]
    %v2766 = vld [vmem:[#allocation6 + $0x90] sm:$0xff]
    %v2767 = vld [vmem:[#allocation6 + $0x98] sm:$0xff]
    %v2768 = vld [vmem:[#allocation6 + $0xa0] sm:$0xff]
    %v2769 = vld [vmem:[#allocation6 + $0xa8] sm:$0xff]
    %v2770 = vld [vmem:[#allocation6 + $0xb0] sm:$0xff]
    %v2771 = vld [vmem:[#allocation6 + $0xb8] sm:$0xff]
    %v2772 = vld [vmem:[#allocation6 + $0xc0] sm:$0xff]
    %v2773 = vld [vmem:[#allocation6 + $0xc8] sm:$0xff]
    %v2774 = vld [vmem:[#allocation6 + $0xd0] sm:$0xff]
    %v2775 = vld [vmem:[#allocation6 + $0xd8] sm:$0xff]
    %v2776 = vld [vmem:[#allocation6 + $0xe0] sm:$0xff]
    %v2777 = vld [vmem:[#allocation6 + $0xe8] sm:$0xff]
    %v2778 = vld [vmem:[#allocation6 + $0xf0] sm:$0xff]
    %v2779 = vld [vmem:[#allocation6 + $0xf8] sm:$0xff]
    %v2812 = vunpack.c.l.b16 %v2748
    %v2813 = vunpack.c.h.b16 %v2748
    %v2814 = vunpack.c.l.b16 %v2749
    %v2815 = vunpack.c.h.b16 %v2749
    %v2816 = vunpack.c.l.b16 %v2750
    %v2817 = vunpack.c.h.b16 %v2750
    %v2818 = vunpack.c.l.b16 %v2751
    %v2819 = vunpack.c.h.b16 %v2751
    %v2820 = vunpack.c.l.b16 %v2752
    %v2821 = vunpack.c.h.b16 %v2752
    %v2822 = vunpack.c.l.b16 %v2753
    %v2823 = vunpack.c.h.b16 %v2753
    %v2824 = vunpack.c.l.b16 %v2754
    %v2825 = vunpack.c.h.b16 %v2754
    %v2826 = vunpack.c.l.b16 %v2755
    %v2827 = vunpack.c.h.b16 %v2755
    %v2828 = vunpack.c.l.b16 %v2756
    %v2829 = vunpack.c.h.b16 %v2756
    %v2830 = vunpack.c.l.b16 %v2757
    %v2831 = vunpack.c.h.b16 %v2757
    %v2832 = vunpack.c.l.b16 %v2758
    %v2833 = vunpack.c.h.b16 %v2758
    %v2834 = vunpack.c.l.b16 %v2759
    %v2835 = vunpack.c.h.b16 %v2759
    %v2836 = vunpack.c.l.b16 %v2760
    %v2837 = vunpack.c.h.b16 %v2760
    %v2838 = vunpack.c.l.b16 %v2761
    %v2839 = vunpack.c.h.b16 %v2761
    %v2840 = vunpack.c.l.b16 %v2762
    %v2841 = vunpack.c.h.b16 %v2762
    %v2842 = vunpack.c.l.b16 %v2763
    %v2843 = vunpack.c.h.b16 %v2763
    %v2844 = vunpack.c.l.b16 %v2764
    %v2845 = vunpack.c.h.b16 %v2764
    %v2846 = vunpack.c.l.b16 %v2765
    %v2847 = vunpack.c.h.b16 %v2765
    %v2848 = vunpack.c.l.b16 %v2766
    %v2849 = vunpack.c.h.b16 %v2766
    %v2850 = vunpack.c.l.b16 %v2767
    %v2851 = vunpack.c.h.b16 %v2767
    %v2852 = vunpack.c.l.b16 %v2768
    %v2853 = vunpack.c.h.b16 %v2768
    %v2854 = vunpack.c.l.b16 %v2769
    %v2855 = vunpack.c.h.b16 %v2769
    %v2856 = vunpack.c.l.b16 %v2770
    %v2857 = vunpack.c.h.b16 %v2770
    %v2858 = vunpack.c.l.b16 %v2771
    %v2859 = vunpack.c.h.b16 %v2771
    %v2860 = vunpack.c.l.b16 %v2772
    %v2861 = vunpack.c.h.b16 %v2772
    %v2862 = vunpack.c.l.b16 %v2773
    %v2863 = vunpack.c.h.b16 %v2773
    %v2864 = vunpack.c.l.b16 %v2774
    %v2865 = vunpack.c.h.b16 %v2774
    %v2866 = vunpack.c.l.b16 %v2775
    %v2867 = vunpack.c.h.b16 %v2775
    %v2868 = vunpack.c.l.b16 %v2776
    %v2869 = vunpack.c.h.b16 %v2776
    %v2870 = vunpack.c.l.b16 %v2777
    %v2871 = vunpack.c.h.b16 %v2777
    %v2872 = vunpack.c.l.b16 %v2778
    %v2873 = vunpack.c.h.b16 %v2778
    %v2874 = vunpack.c.l.b16 %v2779
    %v2875 = vunpack.c.h.b16 %v2779
    %v2876 = vpack.c.b16 %v2816, %v2812
    %v2877 = vpack.c.b16 %v2817, %v2813
    %v2878 = vpack.c.b16 %v2818, %v2814
    %v2879 = vpack.c.b16 %v2819, %v2815
    %v2880 = vpack.c.b16 %v2824, %v2820
    %v2881 = vpack.c.b16 %v2825, %v2821
    %v2882 = vpack.c.b16 %v2826, %v2822
    %v2883 = vpack.c.b16 %v2827, %v2823
    %v2884 = vpack.c.b16 %v2832, %v2828
    %v2885 = vpack.c.b16 %v2833, %v2829
    %v2886 = vpack.c.b16 %v2834, %v2830
    %v2887 = vpack.c.b16 %v2835, %v2831
    %v2888 = vpack.c.b16 %v2840, %v2836
    %v2889 = vpack.c.b16 %v2841, %v2837
    %v2890 = vpack.c.b16 %v2842, %v2838
    %v2891 = vpack.c.b16 %v2843, %v2839
    %v2892 = vpack.c.b16 %v2848, %v2844
    %v2893 = vpack.c.b16 %v2849, %v2845
    %v2894 = vpack.c.b16 %v2850, %v2846
    %v2895 = vpack.c.b16 %v2851, %v2847
    %v2896 = vpack.c.b16 %v2856, %v2852
    %v2897 = vpack.c.b16 %v2857, %v2853
    %v2898 = vpack.c.b16 %v2858, %v2854
    %v2899 = vpack.c.b16 %v2859, %v2855
    %v2900 = vpack.c.b16 %v2864, %v2860
    %v2901 = vpack.c.b16 %v2865, %v2861
    %v2902 = vpack.c.b16 %v2866, %v2862
    %v2903 = vpack.c.b16 %v2867, %v2863
    %v2904 = vpack.c.b16 %v2872, %v2868
    %v2905 = vpack.c.b16 %v2873, %v2869
    %v2906 = vpack.c.b16 %v2874, %v2870
    %v2907 = vpack.c.b16 %v2875, %v2871
    %2940 = vmatpush.bf16.msra.mxu0 %v2904
    %2941 = vmatpush.bf16.msra.mxu0 %v2900
    %2942 = vmatpush.bf16.msra.mxu0 %v2896
    %2943 = vmatpush.bf16.msra.mxu0 %v2892
    %2944 = vmatpush.bf16.msra.mxu0 %v2888
    %2945 = vmatpush.bf16.msra.mxu0 %v2884
    %2946 = vmatpush.bf16.msra.mxu0 %v2880
    %2947 = vmatpush.bf16.msra.mxu0 %v2876
    %2948 = vmatmul.bf16.gmra.mxu0 %v2495
    %v2949 = vpop.f32.mrf.mxu0
    %v2950 = vadd.f32 0.0, %v2949
    %v2951 = vpop.f32.mrf.mxu0
    %2952 = vdwg.mxu0
    %2953 = vmatpush.bf16.msra.mxu0 %v2905
    %2954 = vmatpush.bf16.msra.mxu0 %v2901
    %2955 = vmatpush.bf16.msra.mxu0 %v2897
    %2956 = vmatpush.bf16.msra.mxu0 %v2893
    %2957 = vmatpush.bf16.msra.mxu0 %v2889
    %2958 = vmatpush.bf16.msra.mxu0 %v2885
    %2959 = vmatpush.bf16.msra.mxu0 %v2881
    %2960 = vmatpush.bf16.msra.mxu0 %v2877
    %2961 = vmatmul.bf16.gmra.mxu0 %v2495
    %v2962 = vpop.f32.mrf.mxu0
    %v2963 = vadd.f32 0.0, %v2962
    %v2964 = vpop.f32.mrf.mxu0
    %2965 = vdwg.mxu0
    %2966 = vmatpush.bf16.msra.mxu0 %v2906
    %2967 = vmatpush.bf16.msra.mxu0 %v2902
    %2968 = vmatpush.bf16.msra.mxu0 %v2898
    %2969 = vmatpush.bf16.msra.mxu0 %v2894
    %2970 = vmatpush.bf16.msra.mxu0 %v2890
    %2971 = vmatpush.bf16.msra.mxu0 %v2886
    %2972 = vmatpush.bf16.msra.mxu0 %v2882
    %2973 = vmatpush.bf16.msra.mxu0 %v2878
    %2974 = vmatmul.bf16.gmra.mxu0 %v2495
    %v2975 = vpop.f32.mrf.mxu0
    %v2976 = vadd.f32 0.0, %v2975
    %v2977 = vpop.f32.mrf.mxu0
    %2978 = vdwg.mxu0
    %2979 = vmatpush.bf16.msra.mxu0 %v2907
    %2980 = vmatpush.bf16.msra.mxu0 %v2903
    %2981 = vmatpush.bf16.msra.mxu0 %v2899
    %2982 = vmatpush.bf16.msra.mxu0 %v2895
    %2983 = vmatpush.bf16.msra.mxu0 %v2891
    %2984 = vmatpush.bf16.msra.mxu0 %v2887
    %2985 = vmatpush.bf16.msra.mxu0 %v2883
    %2986 = vmatpush.bf16.msra.mxu0 %v2879
    %2987 = vmatmul.bf16.gmra.mxu0 %v2495
    %v2988 = vpop.f32.mrf.mxu0
    %v2989 = vadd.f32 0.0, %v2988
    %v2990 = vpop.f32.mrf.mxu0
    %2991 = vdwg.mxu0
    %v2992 = vadd.f32 %v2744, %v2950
    %v2993 = vadd.f32 %v2745, %v2963
    %v2994 = vadd.f32 %v2746, %v2976
    %v2995 = vadd.f32 %v2747, %v2989
    %v2996 = vxor.u32 %v2992, 2147483648
    %v2997 = vmul.f32 %v2996, 1.442695
    %v2998 = vpow.pop %v2997
    %v2999 = vadd.f32 %v2998, 1.0
    %v3000 = vrcp.pop %v2999
    %v3001 = vmul.f32 %v2999, %v3000
    %v3002 = vsub.f32 1.0, %v3001
    %v3003 = vmul.f32 %v3000, %v3002
    %v3004 = vadd.f32 %v3000, %v3003
    %vm3005 = vweird.f32 %v2999
    %vm3006 = vweird.f32 %v3000
    %vm3007 = vmor %vm3005, %vm3006
    %v3008 = vsel %vm3007, %v3000, %v3004
    %v3009 = vand.u32 2147483647, %v2999
    %vm3010 = vcmp.eq.f32.partialorder %v3009, 8.507059e+37
    %v3011 = vand.u32 %v2999, 2147483648
    %v3012 = vor.u32 1.1754944e-38, %v3011
    %v3013 = vsel %vm3010, %v3012, %v3008
    %v3014 = vmul.f32 1.0, %v3013
    %v3015 = vxor.u32 %v2993, 2147483648
    %v3016 = vmul.f32 %v3015, 1.442695
    %v3017 = vpow.pop %v3016
    %v3018 = vadd.f32 %v3017, 1.0
    %v3019 = vrcp.pop %v3018
    %v3020 = vmul.f32 %v3018, %v3019
    %v3021 = vsub.f32 1.0, %v3020
    %v3022 = vmul.f32 %v3019, %v3021
    %v3023 = vadd.f32 %v3019, %v3022
    %vm3024 = vweird.f32 %v3018
    %vm3025 = vweird.f32 %v3019
    %vm3026 = vmor %vm3024, %vm3025
    %v3027 = vsel %vm3026, %v3019, %v3023
    %v3028 = vand.u32 2147483647, %v3018
    %vm3029 = vcmp.eq.f32.partialorder %v3028, 8.507059e+37
    %v3030 = vand.u32 %v3018, 2147483648
    %v3031 = vor.u32 1.1754944e-38, %v3030
    %v3032 = vsel %vm3029, %v3031, %v3027
    %v3033 = vmul.f32 1.0, %v3032
    %v3034 = vtanh.pop %v2994
    %v3035 = vxor.u32 %v2995, 2147483648
    %v3036 = vmul.f32 %v3035, 1.442695
    %v3037 = vpow.pop %v3036
    %v3038 = vadd.f32 %v3037, 1.0
    %v3039 = vrcp.pop %v3038
    %v3040 = vmul.f32 %v3038, %v3039
    %v3041 = vsub.f32 1.0, %v3040
    %v3042 = vmul.f32 %v3039, %v3041
    %v3043 = vadd.f32 %v3039, %v3042
    %vm3044 = vweird.f32 %v3038
    %vm3045 = vweird.f32 %v3039
    %vm3046 = vmor %vm3044, %vm3045
    %v3047 = vsel %vm3046, %v3039, %v3043
    %v3048 = vand.u32 2147483647, %v3038
    %vm3049 = vcmp.eq.f32.partialorder %v3048, 8.507059e+37
    %v3050 = vand.u32 %v3038, 2147483648
    %v3051 = vor.u32 1.1754944e-38, %v3050
    %v3052 = vsel %vm3049, %v3051, %v3047
    %v3053 = vmul.f32 1.0, %v3052
    %v3054 = vmul.f32 %v3033, %v2492
    %v3055 = vmul.f32 %v3014, %v3034
    %v3056 = vadd.f32 %v3054, %v3055
    %v3057 = vtanh.pop %v3056
    %v3058 = vmul.f32 %v3053, %v3057
    %v3059 = vpack.c.bf16 %v3058, %v3058
    %v3060 = vld [vmem:[#allocation8] sm:$0xff]
    %v3061 = vld [vmem:[#allocation8 + $0x8] sm:$0xff]
    %v3062 = vld [vmem:[#allocation8 + $0x10] sm:$0xff]
    %v3063 = vld [vmem:[#allocation8 + $0x18] sm:$0xff]
    %v3064 = vld [vmem:[#allocation8 + $0x20] sm:$0xff]
    %v3065 = vld [vmem:[#allocation8 + $0x28] sm:$0xff]
    %v3066 = vld [vmem:[#allocation8 + $0x30] sm:$0xff]
    %v3067 = vld [vmem:[#allocation8 + $0x38] sm:$0xff]
    %v3068 = vld [vmem:[#allocation8 + $0x40] sm:$0xff]
    %v3069 = vld [vmem:[#allocation8 + $0x48] sm:$0xff]
    %v3070 = vld [vmem:[#allocation8 + $0x50] sm:$0xff]
    %v3071 = vld [vmem:[#allocation8 + $0x58] sm:$0xff]
    %v3072 = vld [vmem:[#allocation8 + $0x60] sm:$0xff]
    %v3073 = vld [vmem:[#allocation8 + $0x68] sm:$0xff]
    %v3074 = vld [vmem:[#allocation8 + $0x70] sm:$0xff]
    %v3075 = vld [vmem:[#allocation8 + $0x78] sm:$0xff]
    %v3076 = vld [vmem:[#allocation8 + $0x80] sm:$0xff]
    %v3077 = vld [vmem:[#allocation8 + $0x88] sm:$0xff]
    %v3078 = vld [vmem:[#allocation8 + $0x90] sm:$0xff]
    %v3079 = vld [vmem:[#allocation8 + $0x98] sm:$0xff]
    %v3080 = vld [vmem:[#allocation8 + $0xa0] sm:$0xff]
    %v3081 = vld [vmem:[#allocation8 + $0xa8] sm:$0xff]
    %v3082 = vld [vmem:[#allocation8 + $0xb0] sm:$0xff]
    %v3083 = vld [vmem:[#allocation8 + $0xb8] sm:$0xff]
    %v3084 = vld [vmem:[#allocation8 + $0xc0] sm:$0xff]
    %v3085 = vld [vmem:[#allocation8 + $0xc8] sm:$0xff]
    %v3086 = vld [vmem:[#allocation8 + $0xd0] sm:$0xff]
    %v3087 = vld [vmem:[#allocation8 + $0xd8] sm:$0xff]
    %v3088 = vld [vmem:[#allocation8 + $0xe0] sm:$0xff]
    %v3089 = vld [vmem:[#allocation8 + $0xe8] sm:$0xff]
    %v3090 = vld [vmem:[#allocation8 + $0xf0] sm:$0xff]
    %v3091 = vld [vmem:[#allocation8 + $0xf8] sm:$0xff]
    %v3124 = vunpack.c.l.b16 %v3060
    %v3125 = vunpack.c.h.b16 %v3060
    %v3126 = vunpack.c.l.b16 %v3061
    %v3127 = vunpack.c.h.b16 %v3061
    %v3128 = vunpack.c.l.b16 %v3062
    %v3129 = vunpack.c.h.b16 %v3062
    %v3130 = vunpack.c.l.b16 %v3063
    %v3131 = vunpack.c.h.b16 %v3063
    %v3132 = vunpack.c.l.b16 %v3064
    %v3133 = vunpack.c.h.b16 %v3064
    %v3134 = vunpack.c.l.b16 %v3065
    %v3135 = vunpack.c.h.b16 %v3065
    %v3136 = vunpack.c.l.b16 %v3066
    %v3137 = vunpack.c.h.b16 %v3066
    %v3138 = vunpack.c.l.b16 %v3067
    %v3139 = vunpack.c.h.b16 %v3067
    %v3140 = vunpack.c.l.b16 %v3068
    %v3141 = vunpack.c.h.b16 %v3068
    %v3142 = vunpack.c.l.b16 %v3069
    %v3143 = vunpack.c.h.b16 %v3069
    %v3144 = vunpack.c.l.b16 %v3070
    %v3145 = vunpack.c.h.b16 %v3070
    %v3146 = vunpack.c.l.b16 %v3071
    %v3147 = vunpack.c.h.b16 %v3071
    %v3148 = vunpack.c.l.b16 %v3072
    %v3149 = vunpack.c.h.b16 %v3072
    %v3150 = vunpack.c.l.b16 %v3073
    %v3151 = vunpack.c.h.b16 %v3073
    %v3152 = vunpack.c.l.b16 %v3074
    %v3153 = vunpack.c.h.b16 %v3074
    %v3154 = vunpack.c.l.b16 %v3075
    %v3155 = vunpack.c.h.b16 %v3075
    %v3156 = vunpack.c.l.b16 %v3076
    %v3157 = vunpack.c.h.b16 %v3076
    %v3158 = vunpack.c.l.b16 %v3077
    %v3159 = vunpack.c.h.b16 %v3077
    %v3160 = vunpack.c.l.b16 %v3078
    %v3161 = vunpack.c.h.b16 %v3078
    %v3162 = vunpack.c.l.b16 %v3079
    %v3163 = vunpack.c.h.b16 %v3079
    %v3164 = vunpack.c.l.b16 %v3080
    %v3165 = vunpack.c.h.b16 %v3080
    %v3166 = vunpack.c.l.b16 %v3081
    %v3167 = vunpack.c.h.b16 %v3081
    %v3168 = vunpack.c.l.b16 %v3082
    %v3169 = vunpack.c.h.b16 %v3082
    %v3170 = vunpack.c.l.b16 %v3083
    %v3171 = vunpack.c.h.b16 %v3083
    %v3172 = vunpack.c.l.b16 %v3084
    %v3173 = vunpack.c.h.b16 %v3084
    %v3174 = vunpack.c.l.b16 %v3085
    %v3175 = vunpack.c.h.b16 %v3085
    %v3176 = vunpack.c.l.b16 %v3086
    %v3177 = vunpack.c.h.b16 %v3086
    %v3178 = vunpack.c.l.b16 %v3087
    %v3179 = vunpack.c.h.b16 %v3087
    %v3180 = vunpack.c.l.b16 %v3088
    %v3181 = vunpack.c.h.b16 %v3088
    %v3182 = vunpack.c.l.b16 %v3089
    %v3183 = vunpack.c.h.b16 %v3089
    %v3184 = vunpack.c.l.b16 %v3090
    %v3185 = vunpack.c.h.b16 %v3090
    %v3186 = vunpack.c.l.b16 %v3091
    %v3187 = vunpack.c.h.b16 %v3091
    %v3188 = vpack.c.b16 %v3128, %v3124
    %v3189 = vpack.c.b16 %v3129, %v3125
    %v3190 = vpack.c.b16 %v3130, %v3126
    %v3191 = vpack.c.b16 %v3131, %v3127
    %v3192 = vpack.c.b16 %v3136, %v3132
    %v3193 = vpack.c.b16 %v3137, %v3133
    %v3194 = vpack.c.b16 %v3138, %v3134
    %v3195 = vpack.c.b16 %v3139, %v3135
    %v3196 = vpack.c.b16 %v3144, %v3140
    %v3197 = vpack.c.b16 %v3145, %v3141
    %v3198 = vpack.c.b16 %v3146, %v3142
    %v3199 = vpack.c.b16 %v3147, %v3143
    %v3200 = vpack.c.b16 %v3152, %v3148
    %v3201 = vpack.c.b16 %v3153, %v3149
    %v3202 = vpack.c.b16 %v3154, %v3150
    %v3203 = vpack.c.b16 %v3155, %v3151
    %v3204 = vpack.c.b16 %v3160, %v3156
    %v3205 = vpack.c.b16 %v3161, %v3157
    %v3206 = vpack.c.b16 %v3162, %v3158
    %v3207 = vpack.c.b16 %v3163, %v3159
    %v3208 = vpack.c.b16 %v3168, %v3164
    %v3209 = vpack.c.b16 %v3169, %v3165
    %v3210 = vpack.c.b16 %v3170, %v3166
    %v3211 = vpack.c.b16 %v3171, %v3167
    %v3212 = vpack.c.b16 %v3176, %v3172
    %v3213 = vpack.c.b16 %v3177, %v3173
    %v3214 = vpack.c.b16 %v3178, %v3174
    %v3215 = vpack.c.b16 %v3179, %v3175
    %v3216 = vpack.c.b16 %v3184, %v3180
    %v3217 = vpack.c.b16 %v3185, %v3181
    %v3218 = vpack.c.b16 %v3186, %v3182
    %v3219 = vpack.c.b16 %v3187, %v3183
    %3252 = vmatpush.bf16.msra.mxu0 %v3216
    %3253 = vmatpush.bf16.msra.mxu0 %v3212
    %3254 = vmatpush.bf16.msra.mxu0 %v3208
    %3255 = vmatpush.bf16.msra.mxu0 %v3204
    %3256 = vmatpush.bf16.msra.mxu0 %v3200
    %3257 = vmatpush.bf16.msra.mxu0 %v3196
    %3258 = vmatpush.bf16.msra.mxu0 %v3192
    %3259 = vmatpush.bf16.msra.mxu0 %v3188
    %3260 = vmatmul.bf16.gmra.mxu0 %v3059
    %v3261 = vpop.f32.mrf.mxu0
    %v3262 = vadd.f32 %v480, %v3261
    %v3263 = vpop.f32.mrf.mxu0
    %3264 = vdwg.mxu0
    %3265 = vmatpush.bf16.msra.mxu0 %v3217
    %3266 = vmatpush.bf16.msra.mxu0 %v3213
    %3267 = vmatpush.bf16.msra.mxu0 %v3209
    %3268 = vmatpush.bf16.msra.mxu0 %v3205
    %3269 = vmatpush.bf16.msra.mxu0 %v3201
    %3270 = vmatpush.bf16.msra.mxu0 %v3197
    %3271 = vmatpush.bf16.msra.mxu0 %v3193
    %3272 = vmatpush.bf16.msra.mxu0 %v3189
    %3273 = vmatmul.bf16.gmra.mxu0 %v3059
    %v3274 = vpop.f32.mrf.mxu0
    %v3275 = vadd.f32 %v481, %v3274
    %v3276 = vpop.f32.mrf.mxu0
    %3277 = vdwg.mxu0
    %3278 = vmatpush.bf16.msra.mxu0 %v3218
    %3279 = vmatpush.bf16.msra.mxu0 %v3214
    %3280 = vmatpush.bf16.msra.mxu0 %v3210
    %3281 = vmatpush.bf16.msra.mxu0 %v3206
    %3282 = vmatpush.bf16.msra.mxu0 %v3202
    %3283 = vmatpush.bf16.msra.mxu0 %v3198
    %3284 = vmatpush.bf16.msra.mxu0 %v3194
    %3285 = vmatpush.bf16.msra.mxu0 %v3190
    %3286 = vmatmul.bf16.gmra.mxu0 %v3059
    %v3287 = vpop.f32.mrf.mxu0
    %v3288 = vadd.f32 %v482, %v3287
    %v3289 = vpop.f32.mrf.mxu0
    %3290 = vdwg.mxu0
    %3291 = vmatpush.bf16.msra.mxu0 %v3219
    %3292 = vmatpush.bf16.msra.mxu0 %v3215
    %3293 = vmatpush.bf16.msra.mxu0 %v3211
    %3294 = vmatpush.bf16.msra.mxu0 %v3207
    %3295 = vmatpush.bf16.msra.mxu0 %v3203
    %3296 = vmatpush.bf16.msra.mxu0 %v3199
    %3297 = vmatpush.bf16.msra.mxu0 %v3195
    %3298 = vmatpush.bf16.msra.mxu0 %v3191
    %3299 = vmatmul.bf16.gmra.mxu0 %v3059
    %v3300 = vpop.f32.mrf.mxu0
    %v3301 = vadd.f32 %v483, %v3300
    %v3302 = vpop.f32.mrf.mxu0
    %3303 = vdwg.mxu0
    %3304 = vst [vmem:[#allocation3 + $0x80] sm:$0xff] %v3262
    %3305 = vst [vmem:[#allocation3 + $0x88] sm:$0xff] %v3275
    %3306 = vst [vmem:[#allocation3 + $0x90] sm:$0xff] %v3288
    %3307 = vst [vmem:[#allocation3 + $0x98] sm:$0xff] %v3301
    %v3308 = vld [vmem:[#allocation2 + $0xa0] sm:$0xff]
    %v3309 = vld [vmem:[#allocation2 + $0xa8] sm:$0xff]
    %v3310 = vld [vmem:[#allocation2 + $0xb0] sm:$0xff]
    %v3311 = vld [vmem:[#allocation2 + $0xb8] sm:$0xff]
    %v3312 = vld [vmem:[#allocation6] sm:$0xff]
    %v3313 = vld [vmem:[#allocation6 + $0x8] sm:$0xff]
    %v3314 = vld [vmem:[#allocation6 + $0x10] sm:$0xff]
    %v3315 = vld [vmem:[#allocation6 + $0x18] sm:$0xff]
    %v3316 = vld [vmem:[#allocation6 + $0x20] sm:$0xff]
    %v3317 = vld [vmem:[#allocation6 + $0x28] sm:$0xff]
    %v3318 = vld [vmem:[#allocation6 + $0x30] sm:$0xff]
    %v3319 = vld [vmem:[#allocation6 + $0x38] sm:$0xff]
    %v3320 = vld [vmem:[#allocation6 + $0x40] sm:$0xff]
    %v3321 = vld [vmem:[#allocation6 + $0x48] sm:$0xff]
    %v3322 = vld [vmem:[#allocation6 + $0x50] sm:$0xff]
    %v3323 = vld [vmem:[#allocation6 + $0x58] sm:$0xff]
    %v3324 = vld [vmem:[#allocation6 + $0x60] sm:$0xff]
    %v3325 = vld [vmem:[#allocation6 + $0x68] sm:$0xff]
    %v3326 = vld [vmem:[#allocation6 + $0x70] sm:$0xff]
    %v3327 = vld [vmem:[#allocation6 + $0x78] sm:$0xff]
    %v3328 = vld [vmem:[#allocation6 + $0x80] sm:$0xff]
    %v3329 = vld [vmem:[#allocation6 + $0x88] sm:$0xff]
    %v3330 = vld [vmem:[#allocation6 + $0x90] sm:$0xff]
    %v3331 = vld [vmem:[#allocation6 + $0x98] sm:$0xff]
    %v3332 = vld [vmem:[#allocation6 + $0xa0] sm:$0xff]
    %v3333 = vld [vmem:[#allocation6 + $0xa8] sm:$0xff]
    %v3334 = vld [vmem:[#allocation6 + $0xb0] sm:$0xff]
    %v3335 = vld [vmem:[#allocation6 + $0xb8] sm:$0xff]
    %v3336 = vld [vmem:[#allocation6 + $0xc0] sm:$0xff]
    %v3337 = vld [vmem:[#allocation6 + $0xc8] sm:$0xff]
    %v3338 = vld [vmem:[#allocation6 + $0xd0] sm:$0xff]
    %v3339 = vld [vmem:[#allocation6 + $0xd8] sm:$0xff]
    %v3340 = vld [vmem:[#allocation6 + $0xe0] sm:$0xff]
    %v3341 = vld [vmem:[#allocation6 + $0xe8] sm:$0xff]
    %v3342 = vld [vmem:[#allocation6 + $0xf0] sm:$0xff]
    %v3343 = vld [vmem:[#allocation6 + $0xf8] sm:$0xff]
    %v3376 = vunpack.c.l.b16 %v3312
    %v3377 = vunpack.c.h.b16 %v3312
    %v3378 = vunpack.c.l.b16 %v3313
    %v3379 = vunpack.c.h.b16 %v3313
    %v3380 = vunpack.c.l.b16 %v3314
    %v3381 = vunpack.c.h.b16 %v3314
    %v3382 = vunpack.c.l.b16 %v3315
    %v3383 = vunpack.c.h.b16 %v3315
    %v3384 = vunpack.c.l.b16 %v3316
    %v3385 = vunpack.c.h.b16 %v3316
    %v3386 = vunpack.c.l.b16 %v3317
    %v3387 = vunpack.c.h.b16 %v3317
    %v3388 = vunpack.c.l.b16 %v3318
    %v3389 = vunpack.c.h.b16 %v3318
    %v3390 = vunpack.c.l.b16 %v3319
    %v3391 = vunpack.c.h.b16 %v3319
    %v3392 = vunpack.c.l.b16 %v3320
    %v3393 = vunpack.c.h.b16 %v3320
    %v3394 = vunpack.c.l.b16 %v3321
    %v3395 = vunpack.c.h.b16 %v3321
    %v3396 = vunpack.c.l.b16 %v3322
    %v3397 = vunpack.c.h.b16 %v3322
    %v3398 = vunpack.c.l.b16 %v3323
    %v3399 = vunpack.c.h.b16 %v3323
    %v3400 = vunpack.c.l.b16 %v3324
    %v3401 = vunpack.c.h.b16 %v3324
    %v3402 = vunpack.c.l.b16 %v3325
    %v3403 = vunpack.c.h.b16 %v3325
    %v3404 = vunpack.c.l.b16 %v3326
    %v3405 = vunpack.c.h.b16 %v3326
    %v3406 = vunpack.c.l.b16 %v3327
    %v3407 = vunpack.c.h.b16 %v3327
    %v3408 = vunpack.c.l.b16 %v3328
    %v3409 = vunpack.c.h.b16 %v3328
    %v3410 = vunpack.c.l.b16 %v3329
    %v3411 = vunpack.c.h.b16 %v3329
    %v3412 = vunpack.c.l.b16 %v3330
    %v3413 = vunpack.c.h.b16 %v3330
    %v3414 = vunpack.c.l.b16 %v3331
    %v3415 = vunpack.c.h.b16 %v3331
    %v3416 = vunpack.c.l.b16 %v3332
    %v3417 = vunpack.c.h.b16 %v3332
    %v3418 = vunpack.c.l.b16 %v3333
    %v3419 = vunpack.c.h.b16 %v3333
    %v3420 = vunpack.c.l.b16 %v3334
    %v3421 = vunpack.c.h.b16 %v3334
    %v3422 = vunpack.c.l.b16 %v3335
    %v3423 = vunpack.c.h.b16 %v3335
    %v3424 = vunpack.c.l.b16 %v3336
    %v3425 = vunpack.c.h.b16 %v3336
    %v3426 = vunpack.c.l.b16 %v3337
    %v3427 = vunpack.c.h.b16 %v3337
    %v3428 = vunpack.c.l.b16 %v3338
    %v3429 = vunpack.c.h.b16 %v3338
    %v3430 = vunpack.c.l.b16 %v3339
    %v3431 = vunpack.c.h.b16 %v3339
    %v3432 = vunpack.c.l.b16 %v3340
    %v3433 = vunpack.c.h.b16 %v3340
    %v3434 = vunpack.c.l.b16 %v3341
    %v3435 = vunpack.c.h.b16 %v3341
    %v3436 = vunpack.c.l.b16 %v3342
    %v3437 = vunpack.c.h.b16 %v3342
    %v3438 = vunpack.c.l.b16 %v3343
    %v3439 = vunpack.c.h.b16 %v3343
    %v3440 = vpack.c.b16 %v3380, %v3376
    %v3441 = vpack.c.b16 %v3381, %v3377
    %v3442 = vpack.c.b16 %v3382, %v3378
    %v3443 = vpack.c.b16 %v3383, %v3379
    %v3444 = vpack.c.b16 %v3388, %v3384
    %v3445 = vpack.c.b16 %v3389, %v3385
    %v3446 = vpack.c.b16 %v3390, %v3386
    %v3447 = vpack.c.b16 %v3391, %v3387
    %v3448 = vpack.c.b16 %v3396, %v3392
    %v3449 = vpack.c.b16 %v3397, %v3393
    %v3450 = vpack.c.b16 %v3398, %v3394
    %v3451 = vpack.c.b16 %v3399, %v3395
    %v3452 = vpack.c.b16 %v3404, %v3400
    %v3453 = vpack.c.b16 %v3405, %v3401
    %v3454 = vpack.c.b16 %v3406, %v3402
    %v3455 = vpack.c.b16 %v3407, %v3403
    %v3456 = vpack.c.b16 %v3412, %v3408
    %v3457 = vpack.c.b16 %v3413, %v3409
    %v3458 = vpack.c.b16 %v3414, %v3410
    %v3459 = vpack.c.b16 %v3415, %v3411
    %v3460 = vpack.c.b16 %v3420, %v3416
    %v3461 = vpack.c.b16 %v3421, %v3417
    %v3462 = vpack.c.b16 %v3422, %v3418
    %v3463 = vpack.c.b16 %v3423, %v3419
    %v3464 = vpack.c.b16 %v3428, %v3424
    %v3465 = vpack.c.b16 %v3429, %v3425
    %v3466 = vpack.c.b16 %v3430, %v3426
    %v3467 = vpack.c.b16 %v3431, %v3427
    %v3468 = vpack.c.b16 %v3436, %v3432
    %v3469 = vpack.c.b16 %v3437, %v3433
    %v3470 = vpack.c.b16 %v3438, %v3434
    %v3471 = vpack.c.b16 %v3439, %v3435
    %3504 = vmatpush.bf16.msra.mxu0 %v3468
    %3505 = vmatpush.bf16.msra.mxu0 %v3464
    %3506 = vmatpush.bf16.msra.mxu0 %v3460
    %3507 = vmatpush.bf16.msra.mxu0 %v3456
    %3508 = vmatpush.bf16.msra.mxu0 %v3452
    %3509 = vmatpush.bf16.msra.mxu0 %v3448
    %3510 = vmatpush.bf16.msra.mxu0 %v3444
    %3511 = vmatpush.bf16.msra.mxu0 %v3440
    %3512 = vmatmul.bf16.gmra.mxu0 %v3059
    %v3513 = vpop.f32.mrf.mxu0
    %v3514 = vadd.f32 0.0, %v3513
    %v3515 = vpop.f32.mrf.mxu0
    %3516 = vdwg.mxu0
    %3517 = vmatpush.bf16.msra.mxu0 %v3469
    %3518 = vmatpush.bf16.msra.mxu0 %v3465
    %3519 = vmatpush.bf16.msra.mxu0 %v3461
    %3520 = vmatpush.bf16.msra.mxu0 %v3457
    %3521 = vmatpush.bf16.msra.mxu0 %v3453
    %3522 = vmatpush.bf16.msra.mxu0 %v3449
    %3523 = vmatpush.bf16.msra.mxu0 %v3445
    %3524 = vmatpush.bf16.msra.mxu0 %v3441
    %3525 = vmatmul.bf16.gmra.mxu0 %v3059
    %v3526 = vpop.f32.mrf.mxu0
    %v3527 = vadd.f32 0.0, %v3526
    %v3528 = vpop.f32.mrf.mxu0
    %3529 = vdwg.mxu0
    %3530 = vmatpush.bf16.msra.mxu0 %v3470
    %3531 = vmatpush.bf16.msra.mxu0 %v3466
    %3532 = vmatpush.bf16.msra.mxu0 %v3462
    %3533 = vmatpush.bf16.msra.mxu0 %v3458
    %3534 = vmatpush.bf16.msra.mxu0 %v3454
    %3535 = vmatpush.bf16.msra.mxu0 %v3450
    %3536 = vmatpush.bf16.msra.mxu0 %v3446
    %3537 = vmatpush.bf16.msra.mxu0 %v3442
    %3538 = vmatmul.bf16.gmra.mxu0 %v3059
    %v3539 = vpop.f32.mrf.mxu0
    %v3540 = vadd.f32 0.0, %v3539
    %v3541 = vpop.f32.mrf.mxu0
    %3542 = vdwg.mxu0
    %3543 = vmatpush.bf16.msra.mxu0 %v3471
    %3544 = vmatpush.bf16.msra.mxu0 %v3467
    %3545 = vmatpush.bf16.msra.mxu0 %v3463
    %3546 = vmatpush.bf16.msra.mxu0 %v3459
    %3547 = vmatpush.bf16.msra.mxu0 %v3455
    %3548 = vmatpush.bf16.msra.mxu0 %v3451
    %3549 = vmatpush.bf16.msra.mxu0 %v3447
    %3550 = vmatpush.bf16.msra.mxu0 %v3443
    %3551 = vmatmul.bf16.gmra.mxu0 %v3059
    %v3552 = vpop.f32.mrf.mxu0
    %v3553 = vadd.f32 0.0, %v3552
    %v3554 = vpop.f32.mrf.mxu0
    %3555 = vdwg.mxu0
    %v3556 = vadd.f32 %v3308, %v3514
    %v3557 = vadd.f32 %v3309, %v3527
    %v3558 = vadd.f32 %v3310, %v3540
    %v3559 = vadd.f32 %v3311, %v3553
    %v3560 = vxor.u32 %v3556, 2147483648
    %v3561 = vmul.f32 %v3560, 1.442695
    %v3562 = vpow.pop %v3561
    %v3563 = vadd.f32 %v3562, 1.0
    %v3564 = vrcp.pop %v3563
    %v3565 = vmul.f32 %v3563, %v3564
    %v3566 = vsub.f32 1.0, %v3565
    %v3567 = vmul.f32 %v3564, %v3566
    %v3568 = vadd.f32 %v3564, %v3567
    %vm3569 = vweird.f32 %v3563
    %vm3570 = vweird.f32 %v3564
    %vm3571 = vmor %vm3569, %vm3570
    %v3572 = vsel %vm3571, %v3564, %v3568
    %v3573 = vand.u32 2147483647, %v3563
    %vm3574 = vcmp.eq.f32.partialorder %v3573, 8.507059e+37
    %v3575 = vand.u32 %v3563, 2147483648
    %v3576 = vor.u32 1.1754944e-38, %v3575
    %v3577 = vsel %vm3574, %v3576, %v3572
    %v3578 = vmul.f32 1.0, %v3577
    %v3579 = vxor.u32 %v3557, 2147483648
    %v3580 = vmul.f32 %v3579, 1.442695
    %v3581 = vpow.pop %v3580
    %v3582 = vadd.f32 %v3581, 1.0
    %v3583 = vrcp.pop %v3582
    %v3584 = vmul.f32 %v3582, %v3583
    %v3585 = vsub.f32 1.0, %v3584
    %v3586 = vmul.f32 %v3583, %v3585
    %v3587 = vadd.f32 %v3583, %v3586
    %vm3588 = vweird.f32 %v3582
    %vm3589 = vweird.f32 %v3583
    %vm3590 = vmor %vm3588, %vm3589
    %v3591 = vsel %vm3590, %v3583, %v3587
    %v3592 = vand.u32 2147483647, %v3582
    %vm3593 = vcmp.eq.f32.partialorder %v3592, 8.507059e+37
    %v3594 = vand.u32 %v3582, 2147483648
    %v3595 = vor.u32 1.1754944e-38, %v3594
    %v3596 = vsel %vm3593, %v3595, %v3591
    %v3597 = vmul.f32 1.0, %v3596
    %v3598 = vtanh.pop %v3558
    %v3599 = vxor.u32 %v3559, 2147483648
    %v3600 = vmul.f32 %v3599, 1.442695
    %v3601 = vpow.pop %v3600
    %v3602 = vadd.f32 %v3601, 1.0
    %v3603 = vrcp.pop %v3602
    %v3604 = vmul.f32 %v3602, %v3603
    %v3605 = vsub.f32 1.0, %v3604
    %v3606 = vmul.f32 %v3603, %v3605
    %v3607 = vadd.f32 %v3603, %v3606
    %vm3608 = vweird.f32 %v3602
    %vm3609 = vweird.f32 %v3603
    %vm3610 = vmor %vm3608, %vm3609
    %v3611 = vsel %vm3610, %v3603, %v3607
    %v3612 = vand.u32 2147483647, %v3602
    %vm3613 = vcmp.eq.f32.partialorder %v3612, 8.507059e+37
    %v3614 = vand.u32 %v3602, 2147483648
    %v3615 = vor.u32 1.1754944e-38, %v3614
    %v3616 = vsel %vm3613, %v3615, %v3611
    %v3617 = vmul.f32 1.0, %v3616
    %v3618 = vmul.f32 %v3597, %v3056
    %v3619 = vmul.f32 %v3578, %v3598
    %v3620 = vadd.f32 %v3618, %v3619
    %v3621 = vtanh.pop %v3620
    %v3622 = vmul.f32 %v3617, %v3621
    %v3623 = vpack.c.bf16 %v3622, %v3622
    %v3624 = vld [vmem:[#allocation8] sm:$0xff]
    %v3625 = vld [vmem:[#allocation8 + $0x8] sm:$0xff]
    %v3626 = vld [vmem:[#allocation8 + $0x10] sm:$0xff]
    %v3627 = vld [vmem:[#allocation8 + $0x18] sm:$0xff]
    %v3628 = vld [vmem:[#allocation8 + $0x20] sm:$0xff]
    %v3629 = vld [vmem:[#allocation8 + $0x28] sm:$0xff]
    %v3630 = vld [vmem:[#allocation8 + $0x30] sm:$0xff]
    %v3631 = vld [vmem:[#allocation8 + $0x38] sm:$0xff]
    %v3632 = vld [vmem:[#allocation8 + $0x40] sm:$0xff]
    %v3633 = vld [vmem:[#allocation8 + $0x48] sm:$0xff]
    %v3634 = vld [vmem:[#allocation8 + $0x50] sm:$0xff]
    %v3635 = vld [vmem:[#allocation8 + $0x58] sm:$0xff]
    %v3636 = vld [vmem:[#allocation8 + $0x60] sm:$0xff]
    %v3637 = vld [vmem:[#allocation8 + $0x68] sm:$0xff]
    %v3638 = vld [vmem:[#allocation8 + $0x70] sm:$0xff]
    %v3639 = vld [vmem:[#allocation8 + $0x78] sm:$0xff]
    %v3640 = vld [vmem:[#allocation8 + $0x80] sm:$0xff]
    %v3641 = vld [vmem:[#allocation8 + $0x88] sm:$0xff]
    %v3642 = vld [vmem:[#allocation8 + $0x90] sm:$0xff]
    %v3643 = vld [vmem:[#allocation8 + $0x98] sm:$0xff]
    %v3644 = vld [vmem:[#allocation8 + $0xa0] sm:$0xff]
    %v3645 = vld [vmem:[#allocation8 + $0xa8] sm:$0xff]
    %v3646 = vld [vmem:[#allocation8 + $0xb0] sm:$0xff]
    %v3647 = vld [vmem:[#allocation8 + $0xb8] sm:$0xff]
    %v3648 = vld [vmem:[#allocation8 + $0xc0] sm:$0xff]
    %v3649 = vld [vmem:[#allocation8 + $0xc8] sm:$0xff]
    %v3650 = vld [vmem:[#allocation8 + $0xd0] sm:$0xff]
    %v3651 = vld [vmem:[#allocation8 + $0xd8] sm:$0xff]
    %v3652 = vld [vmem:[#allocation8 + $0xe0] sm:$0xff]
    %v3653 = vld [vmem:[#allocation8 + $0xe8] sm:$0xff]
    %v3654 = vld [vmem:[#allocation8 + $0xf0] sm:$0xff]
    %v3655 = vld [vmem:[#allocation8 + $0xf8] sm:$0xff]
    %v3688 = vunpack.c.l.b16 %v3624
    %v3689 = vunpack.c.h.b16 %v3624
    %v3690 = vunpack.c.l.b16 %v3625
    %v3691 = vunpack.c.h.b16 %v3625
    %v3692 = vunpack.c.l.b16 %v3626
    %v3693 = vunpack.c.h.b16 %v3626
    %v3694 = vunpack.c.l.b16 %v3627
    %v3695 = vunpack.c.h.b16 %v3627
    %v3696 = vunpack.c.l.b16 %v3628
    %v3697 = vunpack.c.h.b16 %v3628
    %v3698 = vunpack.c.l.b16 %v3629
    %v3699 = vunpack.c.h.b16 %v3629
    %v3700 = vunpack.c.l.b16 %v3630
    %v3701 = vunpack.c.h.b16 %v3630
    %v3702 = vunpack.c.l.b16 %v3631
    %v3703 = vunpack.c.h.b16 %v3631
    %v3704 = vunpack.c.l.b16 %v3632
    %v3705 = vunpack.c.h.b16 %v3632
    %v3706 = vunpack.c.l.b16 %v3633
    %v3707 = vunpack.c.h.b16 %v3633
    %v3708 = vunpack.c.l.b16 %v3634
    %v3709 = vunpack.c.h.b16 %v3634
    %v3710 = vunpack.c.l.b16 %v3635
    %v3711 = vunpack.c.h.b16 %v3635
    %v3712 = vunpack.c.l.b16 %v3636
    %v3713 = vunpack.c.h.b16 %v3636
    %v3714 = vunpack.c.l.b16 %v3637
    %v3715 = vunpack.c.h.b16 %v3637
    %v3716 = vunpack.c.l.b16 %v3638
    %v3717 = vunpack.c.h.b16 %v3638
    %v3718 = vunpack.c.l.b16 %v3639
    %v3719 = vunpack.c.h.b16 %v3639
    %v3720 = vunpack.c.l.b16 %v3640
    %v3721 = vunpack.c.h.b16 %v3640
    %v3722 = vunpack.c.l.b16 %v3641
    %v3723 = vunpack.c.h.b16 %v3641
    %v3724 = vunpack.c.l.b16 %v3642
    %v3725 = vunpack.c.h.b16 %v3642
    %v3726 = vunpack.c.l.b16 %v3643
    %v3727 = vunpack.c.h.b16 %v3643
    %v3728 = vunpack.c.l.b16 %v3644
    %v3729 = vunpack.c.h.b16 %v3644
    %v3730 = vunpack.c.l.b16 %v3645
    %v3731 = vunpack.c.h.b16 %v3645
    %v3732 = vunpack.c.l.b16 %v3646
    %v3733 = vunpack.c.h.b16 %v3646
    %v3734 = vunpack.c.l.b16 %v3647
    %v3735 = vunpack.c.h.b16 %v3647
    %v3736 = vunpack.c.l.b16 %v3648
    %v3737 = vunpack.c.h.b16 %v3648
    %v3738 = vunpack.c.l.b16 %v3649
    %v3739 = vunpack.c.h.b16 %v3649
    %v3740 = vunpack.c.l.b16 %v3650
    %v3741 = vunpack.c.h.b16 %v3650
    %v3742 = vunpack.c.l.b16 %v3651
    %v3743 = vunpack.c.h.b16 %v3651
    %v3744 = vunpack.c.l.b16 %v3652
    %v3745 = vunpack.c.h.b16 %v3652
    %v3746 = vunpack.c.l.b16 %v3653
    %v3747 = vunpack.c.h.b16 %v3653
    %v3748 = vunpack.c.l.b16 %v3654
    %v3749 = vunpack.c.h.b16 %v3654
    %v3750 = vunpack.c.l.b16 %v3655
    %v3751 = vunpack.c.h.b16 %v3655
    %v3752 = vpack.c.b16 %v3692, %v3688
    %v3753 = vpack.c.b16 %v3693, %v3689
    %v3754 = vpack.c.b16 %v3694, %v3690
    %v3755 = vpack.c.b16 %v3695, %v3691
    %v3756 = vpack.c.b16 %v3700, %v3696
    %v3757 = vpack.c.b16 %v3701, %v3697
    %v3758 = vpack.c.b16 %v3702, %v3698
    %v3759 = vpack.c.b16 %v3703, %v3699
    %v3760 = vpack.c.b16 %v3708, %v3704
    %v3761 = vpack.c.b16 %v3709, %v3705
    %v3762 = vpack.c.b16 %v3710, %v3706
    %v3763 = vpack.c.b16 %v3711, %v3707
    %v3764 = vpack.c.b16 %v3716, %v3712
    %v3765 = vpack.c.b16 %v3717, %v3713
    %v3766 = vpack.c.b16 %v3718, %v3714
    %v3767 = vpack.c.b16 %v3719, %v3715
    %v3768 = vpack.c.b16 %v3724, %v3720
    %v3769 = vpack.c.b16 %v3725, %v3721
    %v3770 = vpack.c.b16 %v3726, %v3722
    %v3771 = vpack.c.b16 %v3727, %v3723
    %v3772 = vpack.c.b16 %v3732, %v3728
    %v3773 = vpack.c.b16 %v3733, %v3729
    %v3774 = vpack.c.b16 %v3734, %v3730
    %v3775 = vpack.c.b16 %v3735, %v3731
    %v3776 = vpack.c.b16 %v3740, %v3736
    %v3777 = vpack.c.b16 %v3741, %v3737
    %v3778 = vpack.c.b16 %v3742, %v3738
    %v3779 = vpack.c.b16 %v3743, %v3739
    %v3780 = vpack.c.b16 %v3748, %v3744
    %v3781 = vpack.c.b16 %v3749, %v3745
    %v3782 = vpack.c.b16 %v3750, %v3746
    %v3783 = vpack.c.b16 %v3751, %v3747
    %3816 = vmatpush.bf16.msra.mxu0 %v3780
    %3817 = vmatpush.bf16.msra.mxu0 %v3776
    %3818 = vmatpush.bf16.msra.mxu0 %v3772
    %3819 = vmatpush.bf16.msra.mxu0 %v3768
    %3820 = vmatpush.bf16.msra.mxu0 %v3764
    %3821 = vmatpush.bf16.msra.mxu0 %v3760
    %3822 = vmatpush.bf16.msra.mxu0 %v3756
    %3823 = vmatpush.bf16.msra.mxu0 %v3752
    %3824 = vmatmul.bf16.gmra.mxu0 %v3623
    %v3825 = vpop.f32.mrf.mxu0
    %v3826 = vadd.f32 %v480, %v3825
    %v3827 = vpop.f32.mrf.mxu0
    %3828 = vdwg.mxu0
    %3829 = vmatpush.bf16.msra.mxu0 %v3781
    %3830 = vmatpush.bf16.msra.mxu0 %v3777
    %3831 = vmatpush.bf16.msra.mxu0 %v3773
    %3832 = vmatpush.bf16.msra.mxu0 %v3769
    %3833 = vmatpush.bf16.msra.mxu0 %v3765
    %3834 = vmatpush.bf16.msra.mxu0 %v3761
    %3835 = vmatpush.bf16.msra.mxu0 %v3757
    %3836 = vmatpush.bf16.msra.mxu0 %v3753
    %3837 = vmatmul.bf16.gmra.mxu0 %v3623
    %v3838 = vpop.f32.mrf.mxu0
    %v3839 = vadd.f32 %v481, %v3838
    %v3840 = vpop.f32.mrf.mxu0
    %3841 = vdwg.mxu0
    %3842 = vmatpush.bf16.msra.mxu0 %v3782
    %3843 = vmatpush.bf16.msra.mxu0 %v3778
    %3844 = vmatpush.bf16.msra.mxu0 %v3774
    %3845 = vmatpush.bf16.msra.mxu0 %v3770
    %3846 = vmatpush.bf16.msra.mxu0 %v3766
    %3847 = vmatpush.bf16.msra.mxu0 %v3762
    %3848 = vmatpush.bf16.msra.mxu0 %v3758
    %3849 = vmatpush.bf16.msra.mxu0 %v3754
    %3850 = vmatmul.bf16.gmra.mxu0 %v3623
    %v3851 = vpop.f32.mrf.mxu0
    %v3852 = vadd.f32 %v482, %v3851
    %v3853 = vpop.f32.mrf.mxu0
    %3854 = vdwg.mxu0
    %3855 = vmatpush.bf16.msra.mxu0 %v3783
    %3856 = vmatpush.bf16.msra.mxu0 %v3779
    %3857 = vmatpush.bf16.msra.mxu0 %v3775
    %3858 = vmatpush.bf16.msra.mxu0 %v3771
    %3859 = vmatpush.bf16.msra.mxu0 %v3767
    %3860 = vmatpush.bf16.msra.mxu0 %v3763
    %3861 = vmatpush.bf16.msra.mxu0 %v3759
    %3862 = vmatpush.bf16.msra.mxu0 %v3755
    %3863 = vmatmul.bf16.gmra.mxu0 %v3623
    %v3864 = vpop.f32.mrf.mxu0
    %v3865 = vadd.f32 %v483, %v3864
    %v3866 = vpop.f32.mrf.mxu0
    %3867 = vdwg.mxu0
    %3868 = vst [vmem:[#allocation3 + $0xa0] sm:$0xff] %v3826
    %3869 = vst [vmem:[#allocation3 + $0xa8] sm:$0xff] %v3839
    %3870 = vst [vmem:[#allocation3 + $0xb0] sm:$0xff] %v3852
    %3871 = vst [vmem:[#allocation3 + $0xb8] sm:$0xff] %v3865
    %v3872 = vld [vmem:[#allocation2 + $0xc0] sm:$0xff]
    %v3873 = vld [vmem:[#allocation2 + $0xc8] sm:$0xff]
    %v3874 = vld [vmem:[#allocation2 + $0xd0] sm:$0xff]
    %v3875 = vld [vmem:[#allocation2 + $0xd8] sm:$0xff]
    %v3876 = vld [vmem:[#allocation6] sm:$0xff]
    %v3877 = vld [vmem:[#allocation6 + $0x8] sm:$0xff]
    %v3878 = vld [vmem:[#allocation6 + $0x10] sm:$0xff]
    %v3879 = vld [vmem:[#allocation6 + $0x18] sm:$0xff]
    %v3880 = vld [vmem:[#allocation6 + $0x20] sm:$0xff]
    %v3881 = vld [vmem:[#allocation6 + $0x28] sm:$0xff]
    %v3882 = vld [vmem:[#allocation6 + $0x30] sm:$0xff]
    %v3883 = vld [vmem:[#allocation6 + $0x38] sm:$0xff]
    %v3884 = vld [vmem:[#allocation6 + $0x40] sm:$0xff]
    %v3885 = vld [vmem:[#allocation6 + $0x48] sm:$0xff]
    %v3886 = vld [vmem:[#allocation6 + $0x50] sm:$0xff]
    %v3887 = vld [vmem:[#allocation6 + $0x58] sm:$0xff]
    %v3888 = vld [vmem:[#allocation6 + $0x60] sm:$0xff]
    %v3889 = vld [vmem:[#allocation6 + $0x68] sm:$0xff]
    %v3890 = vld [vmem:[#allocation6 + $0x70] sm:$0xff]
    %v3891 = vld [vmem:[#allocation6 + $0x78] sm:$0xff]
    %v3892 = vld [vmem:[#allocation6 + $0x80] sm:$0xff]
    %v3893 = vld [vmem:[#allocation6 + $0x88] sm:$0xff]
    %v3894 = vld [vmem:[#allocation6 + $0x90] sm:$0xff]
    %v3895 = vld [vmem:[#allocation6 + $0x98] sm:$0xff]
    %v3896 = vld [vmem:[#allocation6 + $0xa0] sm:$0xff]
    %v3897 = vld [vmem:[#allocation6 + $0xa8] sm:$0xff]
    %v3898 = vld [vmem:[#allocation6 + $0xb0] sm:$0xff]
    %v3899 = vld [vmem:[#allocation6 + $0xb8] sm:$0xff]
    %v3900 = vld [vmem:[#allocation6 + $0xc0] sm:$0xff]
    %v3901 = vld [vmem:[#allocation6 + $0xc8] sm:$0xff]
    %v3902 = vld [vmem:[#allocation6 + $0xd0] sm:$0xff]
    %v3903 = vld [vmem:[#allocation6 + $0xd8] sm:$0xff]
    %v3904 = vld [vmem:[#allocation6 + $0xe0] sm:$0xff]
    %v3905 = vld [vmem:[#allocation6 + $0xe8] sm:$0xff]
    %v3906 = vld [vmem:[#allocation6 + $0xf0] sm:$0xff]
    %v3907 = vld [vmem:[#allocation6 + $0xf8] sm:$0xff]
    %v3940 = vunpack.c.l.b16 %v3876
    %v3941 = vunpack.c.h.b16 %v3876
    %v3942 = vunpack.c.l.b16 %v3877
    %v3943 = vunpack.c.h.b16 %v3877
    %v3944 = vunpack.c.l.b16 %v3878
    %v3945 = vunpack.c.h.b16 %v3878
    %v3946 = vunpack.c.l.b16 %v3879
    %v3947 = vunpack.c.h.b16 %v3879
    %v3948 = vunpack.c.l.b16 %v3880
    %v3949 = vunpack.c.h.b16 %v3880
    %v3950 = vunpack.c.l.b16 %v3881
    %v3951 = vunpack.c.h.b16 %v3881
    %v3952 = vunpack.c.l.b16 %v3882
    %v3953 = vunpack.c.h.b16 %v3882
    %v3954 = vunpack.c.l.b16 %v3883
    %v3955 = vunpack.c.h.b16 %v3883
    %v3956 = vunpack.c.l.b16 %v3884
    %v3957 = vunpack.c.h.b16 %v3884
    %v3958 = vunpack.c.l.b16 %v3885
    %v3959 = vunpack.c.h.b16 %v3885
    %v3960 = vunpack.c.l.b16 %v3886
    %v3961 = vunpack.c.h.b16 %v3886
    %v3962 = vunpack.c.l.b16 %v3887
    %v3963 = vunpack.c.h.b16 %v3887
    %v3964 = vunpack.c.l.b16 %v3888
    %v3965 = vunpack.c.h.b16 %v3888
    %v3966 = vunpack.c.l.b16 %v3889
    %v3967 = vunpack.c.h.b16 %v3889
    %v3968 = vunpack.c.l.b16 %v3890
    %v3969 = vunpack.c.h.b16 %v3890
    %v3970 = vunpack.c.l.b16 %v3891
    %v3971 = vunpack.c.h.b16 %v3891
    %v3972 = vunpack.c.l.b16 %v3892
    %v3973 = vunpack.c.h.b16 %v3892
    %v3974 = vunpack.c.l.b16 %v3893
    %v3975 = vunpack.c.h.b16 %v3893
    %v3976 = vunpack.c.l.b16 %v3894
    %v3977 = vunpack.c.h.b16 %v3894
    %v3978 = vunpack.c.l.b16 %v3895
    %v3979 = vunpack.c.h.b16 %v3895
    %v3980 = vunpack.c.l.b16 %v3896
    %v3981 = vunpack.c.h.b16 %v3896
    %v3982 = vunpack.c.l.b16 %v3897
    %v3983 = vunpack.c.h.b16 %v3897
    %v3984 = vunpack.c.l.b16 %v3898
    %v3985 = vunpack.c.h.b16 %v3898
    %v3986 = vunpack.c.l.b16 %v3899
    %v3987 = vunpack.c.h.b16 %v3899
    %v3988 = vunpack.c.l.b16 %v3900
    %v3989 = vunpack.c.h.b16 %v3900
    %v3990 = vunpack.c.l.b16 %v3901
    %v3991 = vunpack.c.h.b16 %v3901
    %v3992 = vunpack.c.l.b16 %v3902
    %v3993 = vunpack.c.h.b16 %v3902
    %v3994 = vunpack.c.l.b16 %v3903
    %v3995 = vunpack.c.h.b16 %v3903
    %v3996 = vunpack.c.l.b16 %v3904
    %v3997 = vunpack.c.h.b16 %v3904
    %v3998 = vunpack.c.l.b16 %v3905
    %v3999 = vunpack.c.h.b16 %v3905
    %v4000 = vunpack.c.l.b16 %v3906
    %v4001 = vunpack.c.h.b16 %v3906
    %v4002 = vunpack.c.l.b16 %v3907
    %v4003 = vunpack.c.h.b16 %v3907
    %v4004 = vpack.c.b16 %v3944, %v3940
    %v4005 = vpack.c.b16 %v3945, %v3941
    %v4006 = vpack.c.b16 %v3946, %v3942
    %v4007 = vpack.c.b16 %v3947, %v3943
    %v4008 = vpack.c.b16 %v3952, %v3948
    %v4009 = vpack.c.b16 %v3953, %v3949
    %v4010 = vpack.c.b16 %v3954, %v3950
    %v4011 = vpack.c.b16 %v3955, %v3951
    %v4012 = vpack.c.b16 %v3960, %v3956
    %v4013 = vpack.c.b16 %v3961, %v3957
    %v4014 = vpack.c.b16 %v3962, %v3958
    %v4015 = vpack.c.b16 %v3963, %v3959
    %v4016 = vpack.c.b16 %v3968, %v3964
    %v4017 = vpack.c.b16 %v3969, %v3965
    %v4018 = vpack.c.b16 %v3970, %v3966
    %v4019 = vpack.c.b16 %v3971, %v3967
    %v4020 = vpack.c.b16 %v3976, %v3972
    %v4021 = vpack.c.b16 %v3977, %v3973
    %v4022 = vpack.c.b16 %v3978, %v3974
    %v4023 = vpack.c.b16 %v3979, %v3975
    %v4024 = vpack.c.b16 %v3984, %v3980
    %v4025 = vpack.c.b16 %v3985, %v3981
    %v4026 = vpack.c.b16 %v3986, %v3982
    %v4027 = vpack.c.b16 %v3987, %v3983
    %v4028 = vpack.c.b16 %v3992, %v3988
    %v4029 = vpack.c.b16 %v3993, %v3989
    %v4030 = vpack.c.b16 %v3994, %v3990
    %v4031 = vpack.c.b16 %v3995, %v3991
    %v4032 = vpack.c.b16 %v4000, %v3996
    %v4033 = vpack.c.b16 %v4001, %v3997
    %v4034 = vpack.c.b16 %v4002, %v3998
    %v4035 = vpack.c.b16 %v4003, %v3999
    %4068 = vmatpush.bf16.msra.mxu0 %v4032
    %4069 = vmatpush.bf16.msra.mxu0 %v4028
    %4070 = vmatpush.bf16.msra.mxu0 %v4024
    %4071 = vmatpush.bf16.msra.mxu0 %v4020
    %4072 = vmatpush.bf16.msra.mxu0 %v4016
    %4073 = vmatpush.bf16.msra.mxu0 %v4012
    %4074 = vmatpush.bf16.msra.mxu0 %v4008
    %4075 = vmatpush.bf16.msra.mxu0 %v4004
    %4076 = vmatmul.bf16.gmra.mxu0 %v3623
    %v4077 = vpop.f32.mrf.mxu0
    %v4078 = vadd.f32 0.0, %v4077
    %v4079 = vpop.f32.mrf.mxu0
    %4080 = vdwg.mxu0
    %4081 = vmatpush.bf16.msra.mxu0 %v4033
    %4082 = vmatpush.bf16.msra.mxu0 %v4029
    %4083 = vmatpush.bf16.msra.mxu0 %v4025
    %4084 = vmatpush.bf16.msra.mxu0 %v4021
    %4085 = vmatpush.bf16.msra.mxu0 %v4017
    %4086 = vmatpush.bf16.msra.mxu0 %v4013
    %4087 = vmatpush.bf16.msra.mxu0 %v4009
    %4088 = vmatpush.bf16.msra.mxu0 %v4005
    %4089 = vmatmul.bf16.gmra.mxu0 %v3623
    %v4090 = vpop.f32.mrf.mxu0
    %v4091 = vadd.f32 0.0, %v4090
    %v4092 = vpop.f32.mrf.mxu0
    %4093 = vdwg.mxu0
    %4094 = vmatpush.bf16.msra.mxu0 %v4034
    %4095 = vmatpush.bf16.msra.mxu0 %v4030
    %4096 = vmatpush.bf16.msra.mxu0 %v4026
    %4097 = vmatpush.bf16.msra.mxu0 %v4022
    %4098 = vmatpush.bf16.msra.mxu0 %v4018
    %4099 = vmatpush.bf16.msra.mxu0 %v4014
    %4100 = vmatpush.bf16.msra.mxu0 %v4010
    %4101 = vmatpush.bf16.msra.mxu0 %v4006
    %4102 = vmatmul.bf16.gmra.mxu0 %v3623
    %v4103 = vpop.f32.mrf.mxu0
    %v4104 = vadd.f32 0.0, %v4103
    %v4105 = vpop.f32.mrf.mxu0
    %4106 = vdwg.mxu0
    %4107 = vmatpush.bf16.msra.mxu0 %v4035
    %4108 = vmatpush.bf16.msra.mxu0 %v4031
    %4109 = vmatpush.bf16.msra.mxu0 %v4027
    %4110 = vmatpush.bf16.msra.mxu0 %v4023
    %4111 = vmatpush.bf16.msra.mxu0 %v4019
    %4112 = vmatpush.bf16.msra.mxu0 %v4015
    %4113 = vmatpush.bf16.msra.mxu0 %v4011
    %4114 = vmatpush.bf16.msra.mxu0 %v4007
    %4115 = vmatmul.bf16.gmra.mxu0 %v3623
    %v4116 = vpop.f32.mrf.mxu0
    %v4117 = vadd.f32 0.0, %v4116
    %v4118 = vpop.f32.mrf.mxu0
    %4119 = vdwg.mxu0
    %v4120 = vadd.f32 %v3872, %v4078
    %v4121 = vadd.f32 %v3873, %v4091
    %v4122 = vadd.f32 %v3874, %v4104
    %v4123 = vadd.f32 %v3875, %v4117
    %v4124 = vxor.u32 %v4120, 2147483648
    %v4125 = vmul.f32 %v4124, 1.442695
    %v4126 = vpow.pop %v4125
    %v4127 = vadd.f32 %v4126, 1.0
    %v4128 = vrcp.pop %v4127
    %v4129 = vmul.f32 %v4127, %v4128
    %v4130 = vsub.f32 1.0, %v4129
    %v4131 = vmul.f32 %v4128, %v4130
    %v4132 = vadd.f32 %v4128, %v4131
    %vm4133 = vweird.f32 %v4127
    %vm4134 = vweird.f32 %v4128
    %vm4135 = vmor %vm4133, %vm4134
    %v4136 = vsel %vm4135, %v4128, %v4132
    %v4137 = vand.u32 2147483647, %v4127
    %vm4138 = vcmp.eq.f32.partialorder %v4137, 8.507059e+37
    %v4139 = vand.u32 %v4127, 2147483648
    %v4140 = vor.u32 1.1754944e-38, %v4139
    %v4141 = vsel %vm4138, %v4140, %v4136
    %v4142 = vmul.f32 1.0, %v4141
    %v4143 = vxor.u32 %v4121, 2147483648
    %v4144 = vmul.f32 %v4143, 1.442695
    %v4145 = vpow.pop %v4144
    %v4146 = vadd.f32 %v4145, 1.0
    %v4147 = vrcp.pop %v4146
    %v4148 = vmul.f32 %v4146, %v4147
    %v4149 = vsub.f32 1.0, %v4148
    %v4150 = vmul.f32 %v4147, %v4149
    %v4151 = vadd.f32 %v4147, %v4150
    %vm4152 = vweird.f32 %v4146
    %vm4153 = vweird.f32 %v4147
    %vm4154 = vmor %vm4152, %vm4153
    %v4155 = vsel %vm4154, %v4147, %v4151
    %v4156 = vand.u32 2147483647, %v4146
    %vm4157 = vcmp.eq.f32.partialorder %v4156, 8.507059e+37
    %v4158 = vand.u32 %v4146, 2147483648
    %v4159 = vor.u32 1.1754944e-38, %v4158
    %v4160 = vsel %vm4157, %v4159, %v4155
    %v4161 = vmul.f32 1.0, %v4160
    %v4162 = vtanh.pop %v4122
    %v4163 = vxor.u32 %v4123, 2147483648
    %v4164 = vmul.f32 %v4163, 1.442695
    %v4165 = vpow.pop %v4164
    %v4166 = vadd.f32 %v4165, 1.0
    %v4167 = vrcp.pop %v4166
    %v4168 = vmul.f32 %v4166, %v4167
    %v4169 = vsub.f32 1.0, %v4168
    %v4170 = vmul.f32 %v4167, %v4169
    %v4171 = vadd.f32 %v4167, %v4170
    %vm4172 = vweird.f32 %v4166
    %vm4173 = vweird.f32 %v4167
    %vm4174 = vmor %vm4172, %vm4173
    %v4175 = vsel %vm4174, %v4167, %v4171
    %v4176 = vand.u32 2147483647, %v4166
    %vm4177 = vcmp.eq.f32.partialorder %v4176, 8.507059e+37
    %v4178 = vand.u32 %v4166, 2147483648
    %v4179 = vor.u32 1.1754944e-38, %v4178
    %v4180 = vsel %vm4177, %v4179, %v4175
    %v4181 = vmul.f32 1.0, %v4180
    %v4182 = vmul.f32 %v4161, %v3620
    %v4183 = vmul.f32 %v4142, %v4162
    %v4184 = vadd.f32 %v4182, %v4183
    %v4185 = vtanh.pop %v4184
    %v4186 = vmul.f32 %v4181, %v4185
    %v4187 = vpack.c.bf16 %v4186, %v4186
    %v4188 = vld [vmem:[#allocation8] sm:$0xff]
    %v4189 = vld [vmem:[#allocation8 + $0x8] sm:$0xff]
    %v4190 = vld [vmem:[#allocation8 + $0x10] sm:$0xff]
    %v4191 = vld [vmem:[#allocation8 + $0x18] sm:$0xff]
    %v4192 = vld [vmem:[#allocation8 + $0x20] sm:$0xff]
    %v4193 = vld [vmem:[#allocation8 + $0x28] sm:$0xff]
    %v4194 = vld [vmem:[#allocation8 + $0x30] sm:$0xff]
    %v4195 = vld [vmem:[#allocation8 + $0x38] sm:$0xff]
    %v4196 = vld [vmem:[#allocation8 + $0x40] sm:$0xff]
    %v4197 = vld [vmem:[#allocation8 + $0x48] sm:$0xff]
    %v4198 = vld [vmem:[#allocation8 + $0x50] sm:$0xff]
    %v4199 = vld [vmem:[#allocation8 + $0x58] sm:$0xff]
    %v4200 = vld [vmem:[#allocation8 + $0x60] sm:$0xff]
    %v4201 = vld [vmem:[#allocation8 + $0x68] sm:$0xff]
    %v4202 = vld [vmem:[#allocation8 + $0x70] sm:$0xff]
    %v4203 = vld [vmem:[#allocation8 + $0x78] sm:$0xff]
    %v4204 = vld [vmem:[#allocation8 + $0x80] sm:$0xff]
    %v4205 = vld [vmem:[#allocation8 + $0x88] sm:$0xff]
    %v4206 = vld [vmem:[#allocation8 + $0x90] sm:$0xff]
    %v4207 = vld [vmem:[#allocation8 + $0x98] sm:$0xff]
    %v4208 = vld [vmem:[#allocation8 + $0xa0] sm:$0xff]
    %v4209 = vld [vmem:[#allocation8 + $0xa8] sm:$0xff]
    %v4210 = vld [vmem:[#allocation8 + $0xb0] sm:$0xff]
    %v4211 = vld [vmem:[#allocation8 + $0xb8] sm:$0xff]
    %v4212 = vld [vmem:[#allocation8 + $0xc0] sm:$0xff]
    %v4213 = vld [vmem:[#allocation8 + $0xc8] sm:$0xff]
    %v4214 = vld [vmem:[#allocation8 + $0xd0] sm:$0xff]
    %v4215 = vld [vmem:[#allocation8 + $0xd8] sm:$0xff]
    %v4216 = vld [vmem:[#allocation8 + $0xe0] sm:$0xff]
    %v4217 = vld [vmem:[#allocation8 + $0xe8] sm:$0xff]
    %v4218 = vld [vmem:[#allocation8 + $0xf0] sm:$0xff]
    %v4219 = vld [vmem:[#allocation8 + $0xf8] sm:$0xff]
    %v4252 = vunpack.c.l.b16 %v4188
    %v4253 = vunpack.c.h.b16 %v4188
    %v4254 = vunpack.c.l.b16 %v4189
    %v4255 = vunpack.c.h.b16 %v4189
    %v4256 = vunpack.c.l.b16 %v4190
    %v4257 = vunpack.c.h.b16 %v4190
    %v4258 = vunpack.c.l.b16 %v4191
    %v4259 = vunpack.c.h.b16 %v4191
    %v4260 = vunpack.c.l.b16 %v4192
    %v4261 = vunpack.c.h.b16 %v4192
    %v4262 = vunpack.c.l.b16 %v4193
    %v4263 = vunpack.c.h.b16 %v4193
    %v4264 = vunpack.c.l.b16 %v4194
    %v4265 = vunpack.c.h.b16 %v4194
    %v4266 = vunpack.c.l.b16 %v4195
    %v4267 = vunpack.c.h.b16 %v4195
    %v4268 = vunpack.c.l.b16 %v4196
    %v4269 = vunpack.c.h.b16 %v4196
    %v4270 = vunpack.c.l.b16 %v4197
    %v4271 = vunpack.c.h.b16 %v4197
    %v4272 = vunpack.c.l.b16 %v4198
    %v4273 = vunpack.c.h.b16 %v4198
    %v4274 = vunpack.c.l.b16 %v4199
    %v4275 = vunpack.c.h.b16 %v4199
    %v4276 = vunpack.c.l.b16 %v4200
    %v4277 = vunpack.c.h.b16 %v4200
    %v4278 = vunpack.c.l.b16 %v4201
    %v4279 = vunpack.c.h.b16 %v4201
    %v4280 = vunpack.c.l.b16 %v4202
    %v4281 = vunpack.c.h.b16 %v4202
    %v4282 = vunpack.c.l.b16 %v4203
    %v4283 = vunpack.c.h.b16 %v4203
    %v4284 = vunpack.c.l.b16 %v4204
    %v4285 = vunpack.c.h.b16 %v4204
    %v4286 = vunpack.c.l.b16 %v4205
    %v4287 = vunpack.c.h.b16 %v4205
    %v4288 = vunpack.c.l.b16 %v4206
    %v4289 = vunpack.c.h.b16 %v4206
    %v4290 = vunpack.c.l.b16 %v4207
    %v4291 = vunpack.c.h.b16 %v4207
    %v4292 = vunpack.c.l.b16 %v4208
    %v4293 = vunpack.c.h.b16 %v4208
    %v4294 = vunpack.c.l.b16 %v4209
    %v4295 = vunpack.c.h.b16 %v4209
    %v4296 = vunpack.c.l.b16 %v4210
    %v4297 = vunpack.c.h.b16 %v4210
    %v4298 = vunpack.c.l.b16 %v4211
    %v4299 = vunpack.c.h.b16 %v4211
    %v4300 = vunpack.c.l.b16 %v4212
    %v4301 = vunpack.c.h.b16 %v4212
    %v4302 = vunpack.c.l.b16 %v4213
    %v4303 = vunpack.c.h.b16 %v4213
    %v4304 = vunpack.c.l.b16 %v4214
    %v4305 = vunpack.c.h.b16 %v4214
    %v4306 = vunpack.c.l.b16 %v4215
    %v4307 = vunpack.c.h.b16 %v4215
    %v4308 = vunpack.c.l.b16 %v4216
    %v4309 = vunpack.c.h.b16 %v4216
    %v4310 = vunpack.c.l.b16 %v4217
    %v4311 = vunpack.c.h.b16 %v4217
    %v4312 = vunpack.c.l.b16 %v4218
    %v4313 = vunpack.c.h.b16 %v4218
    %v4314 = vunpack.c.l.b16 %v4219
    %v4315 = vunpack.c.h.b16 %v4219
    %v4316 = vpack.c.b16 %v4256, %v4252
    %v4317 = vpack.c.b16 %v4257, %v4253
    %v4318 = vpack.c.b16 %v4258, %v4254
    %v4319 = vpack.c.b16 %v4259, %v4255
    %v4320 = vpack.c.b16 %v4264, %v4260
    %v4321 = vpack.c.b16 %v4265, %v4261
    %v4322 = vpack.c.b16 %v4266, %v4262
    %v4323 = vpack.c.b16 %v4267, %v4263
    %v4324 = vpack.c.b16 %v4272, %v4268
    %v4325 = vpack.c.b16 %v4273, %v4269
    %v4326 = vpack.c.b16 %v4274, %v4270
    %v4327 = vpack.c.b16 %v4275, %v4271
    %v4328 = vpack.c.b16 %v4280, %v4276
    %v4329 = vpack.c.b16 %v4281, %v4277
    %v4330 = vpack.c.b16 %v4282, %v4278
    %v4331 = vpack.c.b16 %v4283, %v4279
    %v4332 = vpack.c.b16 %v4288, %v4284
    %v4333 = vpack.c.b16 %v4289, %v4285
    %v4334 = vpack.c.b16 %v4290, %v4286
    %v4335 = vpack.c.b16 %v4291, %v4287
    %v4336 = vpack.c.b16 %v4296, %v4292
    %v4337 = vpack.c.b16 %v4297, %v4293
    %v4338 = vpack.c.b16 %v4298, %v4294
    %v4339 = vpack.c.b16 %v4299, %v4295
    %v4340 = vpack.c.b16 %v4304, %v4300
    %v4341 = vpack.c.b16 %v4305, %v4301
    %v4342 = vpack.c.b16 %v4306, %v4302
    %v4343 = vpack.c.b16 %v4307, %v4303
    %v4344 = vpack.c.b16 %v4312, %v4308
    %v4345 = vpack.c.b16 %v4313, %v4309
    %v4346 = vpack.c.b16 %v4314, %v4310
    %v4347 = vpack.c.b16 %v4315, %v4311
    %4380 = vmatpush.bf16.msra.mxu0 %v4344
    %4381 = vmatpush.bf16.msra.mxu0 %v4340
    %4382 = vmatpush.bf16.msra.mxu0 %v4336
    %4383 = vmatpush.bf16.msra.mxu0 %v4332
    %4384 = vmatpush.bf16.msra.mxu0 %v4328
    %4385 = vmatpush.bf16.msra.mxu0 %v4324
    %4386 = vmatpush.bf16.msra.mxu0 %v4320
    %4387 = vmatpush.bf16.msra.mxu0 %v4316
    %4388 = vmatmul.bf16.gmra.mxu0 %v4187
    %v4389 = vpop.f32.mrf.mxu0
    %v4390 = vadd.f32 %v480, %v4389
    %v4391 = vpop.f32.mrf.mxu0
    %4392 = vdwg.mxu0
    %4393 = vmatpush.bf16.msra.mxu0 %v4345
    %4394 = vmatpush.bf16.msra.mxu0 %v4341
    %4395 = vmatpush.bf16.msra.mxu0 %v4337
    %4396 = vmatpush.bf16.msra.mxu0 %v4333
    %4397 = vmatpush.bf16.msra.mxu0 %v4329
    %4398 = vmatpush.bf16.msra.mxu0 %v4325
    %4399 = vmatpush.bf16.msra.mxu0 %v4321
    %4400 = vmatpush.bf16.msra.mxu0 %v4317
    %4401 = vmatmul.bf16.gmra.mxu0 %v4187
    %v4402 = vpop.f32.mrf.mxu0
    %v4403 = vadd.f32 %v481, %v4402
    %v4404 = vpop.f32.mrf.mxu0
    %4405 = vdwg.mxu0
    %4406 = vmatpush.bf16.msra.mxu0 %v4346
    %4407 = vmatpush.bf16.msra.mxu0 %v4342
    %4408 = vmatpush.bf16.msra.mxu0 %v4338
    %4409 = vmatpush.bf16.msra.mxu0 %v4334
    %4410 = vmatpush.bf16.msra.mxu0 %v4330
    %4411 = vmatpush.bf16.msra.mxu0 %v4326
    %4412 = vmatpush.bf16.msra.mxu0 %v4322
    %4413 = vmatpush.bf16.msra.mxu0 %v4318
    %4414 = vmatmul.bf16.gmra.mxu0 %v4187
    %v4415 = vpop.f32.mrf.mxu0
    %v4416 = vadd.f32 %v482, %v4415
    %v4417 = vpop.f32.mrf.mxu0
    %4418 = vdwg.mxu0
    %4419 = vmatpush.bf16.msra.mxu0 %v4347
    %4420 = vmatpush.bf16.msra.mxu0 %v4343
    %4421 = vmatpush.bf16.msra.mxu0 %v4339
    %4422 = vmatpush.bf16.msra.mxu0 %v4335
    %4423 = vmatpush.bf16.msra.mxu0 %v4331
    %4424 = vmatpush.bf16.msra.mxu0 %v4327
    %4425 = vmatpush.bf16.msra.mxu0 %v4323
    %4426 = vmatpush.bf16.msra.mxu0 %v4319
    %4427 = vmatmul.bf16.gmra.mxu0 %v4187
    %v4428 = vpop.f32.mrf.mxu0
    %v4429 = vadd.f32 %v483, %v4428
    %v4430 = vpop.f32.mrf.mxu0
    %4431 = vdwg.mxu0
    %4432 = vst [vmem:[#allocation3 + $0xc0] sm:$0xff] %v4390
    %4433 = vst [vmem:[#allocation3 + $0xc8] sm:$0xff] %v4403
    %4434 = vst [vmem:[#allocation3 + $0xd0] sm:$0xff] %v4416
    %4435 = vst [vmem:[#allocation3 + $0xd8] sm:$0xff] %v4429
    %v4436 = vld [vmem:[#allocation2 + $0xe0] sm:$0xff]
    %v4437 = vld [vmem:[#allocation2 + $0xe8] sm:$0xff]
    %v4438 = vld [vmem:[#allocation2 + $0xf0] sm:$0xff]
    %v4439 = vld [vmem:[#allocation2 + $0xf8] sm:$0xff]
    %v4440 = vld [vmem:[#allocation6] sm:$0xff]
    %v4441 = vld [vmem:[#allocation6 + $0x8] sm:$0xff]
    %v4442 = vld [vmem:[#allocation6 + $0x10] sm:$0xff]
    %v4443 = vld [vmem:[#allocation6 + $0x18] sm:$0xff]
    %v4444 = vld [vmem:[#allocation6 + $0x20] sm:$0xff]
    %v4445 = vld [vmem:[#allocation6 + $0x28] sm:$0xff]
    %v4446 = vld [vmem:[#allocation6 + $0x30] sm:$0xff]
    %v4447 = vld [vmem:[#allocation6 + $0x38] sm:$0xff]
    %v4448 = vld [vmem:[#allocation6 + $0x40] sm:$0xff]
    %v4449 = vld [vmem:[#allocation6 + $0x48] sm:$0xff]
    %v4450 = vld [vmem:[#allocation6 + $0x50] sm:$0xff]
    %v4451 = vld [vmem:[#allocation6 + $0x58] sm:$0xff]
    %v4452 = vld [vmem:[#allocation6 + $0x60] sm:$0xff]
    %v4453 = vld [vmem:[#allocation6 + $0x68] sm:$0xff]
    %v4454 = vld [vmem:[#allocation6 + $0x70] sm:$0xff]
    %v4455 = vld [vmem:[#allocation6 + $0x78] sm:$0xff]
    %v4456 = vld [vmem:[#allocation6 + $0x80] sm:$0xff]
    %v4457 = vld [vmem:[#allocation6 + $0x88] sm:$0xff]
    %v4458 = vld [vmem:[#allocation6 + $0x90] sm:$0xff]
    %v4459 = vld [vmem:[#allocation6 + $0x98] sm:$0xff]
    %v4460 = vld [vmem:[#allocation6 + $0xa0] sm:$0xff]
    %v4461 = vld [vmem:[#allocation6 + $0xa8] sm:$0xff]
    %v4462 = vld [vmem:[#allocation6 + $0xb0] sm:$0xff]
    %v4463 = vld [vmem:[#allocation6 + $0xb8] sm:$0xff]
    %v4464 = vld [vmem:[#allocation6 + $0xc0] sm:$0xff]
    %v4465 = vld [vmem:[#allocation6 + $0xc8] sm:$0xff]
    %v4466 = vld [vmem:[#allocation6 + $0xd0] sm:$0xff]
    %v4467 = vld [vmem:[#allocation6 + $0xd8] sm:$0xff]
    %v4468 = vld [vmem:[#allocation6 + $0xe0] sm:$0xff]
    %v4469 = vld [vmem:[#allocation6 + $0xe8] sm:$0xff]
    %v4470 = vld [vmem:[#allocation6 + $0xf0] sm:$0xff]
    %v4471 = vld [vmem:[#allocation6 + $0xf8] sm:$0xff]
    %v4504 = vunpack.c.l.b16 %v4440
    %v4505 = vunpack.c.h.b16 %v4440
    %v4506 = vunpack.c.l.b16 %v4441
    %v4507 = vunpack.c.h.b16 %v4441
    %v4508 = vunpack.c.l.b16 %v4442
    %v4509 = vunpack.c.h.b16 %v4442
    %v4510 = vunpack.c.l.b16 %v4443
    %v4511 = vunpack.c.h.b16 %v4443
    %v4512 = vunpack.c.l.b16 %v4444
    %v4513 = vunpack.c.h.b16 %v4444
    %v4514 = vunpack.c.l.b16 %v4445
    %v4515 = vunpack.c.h.b16 %v4445
    %v4516 = vunpack.c.l.b16 %v4446
    %v4517 = vunpack.c.h.b16 %v4446
    %v4518 = vunpack.c.l.b16 %v4447
    %v4519 = vunpack.c.h.b16 %v4447
    %v4520 = vunpack.c.l.b16 %v4448
    %v4521 = vunpack.c.h.b16 %v4448
    %v4522 = vunpack.c.l.b16 %v4449
    %v4523 = vunpack.c.h.b16 %v4449
    %v4524 = vunpack.c.l.b16 %v4450
    %v4525 = vunpack.c.h.b16 %v4450
    %v4526 = vunpack.c.l.b16 %v4451
    %v4527 = vunpack.c.h.b16 %v4451
    %v4528 = vunpack.c.l.b16 %v4452
    %v4529 = vunpack.c.h.b16 %v4452
    %v4530 = vunpack.c.l.b16 %v4453
    %v4531 = vunpack.c.h.b16 %v4453
    %v4532 = vunpack.c.l.b16 %v4454
    %v4533 = vunpack.c.h.b16 %v4454
    %v4534 = vunpack.c.l.b16 %v4455
    %v4535 = vunpack.c.h.b16 %v4455
    %v4536 = vunpack.c.l.b16 %v4456
    %v4537 = vunpack.c.h.b16 %v4456
    %v4538 = vunpack.c.l.b16 %v4457
    %v4539 = vunpack.c.h.b16 %v4457
    %v4540 = vunpack.c.l.b16 %v4458
    %v4541 = vunpack.c.h.b16 %v4458
    %v4542 = vunpack.c.l.b16 %v4459
    %v4543 = vunpack.c.h.b16 %v4459
    %v4544 = vunpack.c.l.b16 %v4460
    %v4545 = vunpack.c.h.b16 %v4460
    %v4546 = vunpack.c.l.b16 %v4461
    %v4547 = vunpack.c.h.b16 %v4461
    %v4548 = vunpack.c.l.b16 %v4462
    %v4549 = vunpack.c.h.b16 %v4462
    %v4550 = vunpack.c.l.b16 %v4463
    %v4551 = vunpack.c.h.b16 %v4463
    %v4552 = vunpack.c.l.b16 %v4464
    %v4553 = vunpack.c.h.b16 %v4464
    %v4554 = vunpack.c.l.b16 %v4465
    %v4555 = vunpack.c.h.b16 %v4465
    %v4556 = vunpack.c.l.b16 %v4466
    %v4557 = vunpack.c.h.b16 %v4466
    %v4558 = vunpack.c.l.b16 %v4467
    %v4559 = vunpack.c.h.b16 %v4467
    %v4560 = vunpack.c.l.b16 %v4468
    %v4561 = vunpack.c.h.b16 %v4468
    %v4562 = vunpack.c.l.b16 %v4469
    %v4563 = vunpack.c.h.b16 %v4469
    %v4564 = vunpack.c.l.b16 %v4470
    %v4565 = vunpack.c.h.b16 %v4470
    %v4566 = vunpack.c.l.b16 %v4471
    %v4567 = vunpack.c.h.b16 %v4471
    %v4568 = vpack.c.b16 %v4508, %v4504
    %v4569 = vpack.c.b16 %v4509, %v4505
    %v4570 = vpack.c.b16 %v4510, %v4506
    %v4571 = vpack.c.b16 %v4511, %v4507
    %v4572 = vpack.c.b16 %v4516, %v4512
    %v4573 = vpack.c.b16 %v4517, %v4513
    %v4574 = vpack.c.b16 %v4518, %v4514
    %v4575 = vpack.c.b16 %v4519, %v4515
    %v4576 = vpack.c.b16 %v4524, %v4520
    %v4577 = vpack.c.b16 %v4525, %v4521
    %v4578 = vpack.c.b16 %v4526, %v4522
    %v4579 = vpack.c.b16 %v4527, %v4523
    %v4580 = vpack.c.b16 %v4532, %v4528
    %v4581 = vpack.c.b16 %v4533, %v4529
    %v4582 = vpack.c.b16 %v4534, %v4530
    %v4583 = vpack.c.b16 %v4535, %v4531
    %v4584 = vpack.c.b16 %v4540, %v4536
    %v4585 = vpack.c.b16 %v4541, %v4537
    %v4586 = vpack.c.b16 %v4542, %v4538
    %v4587 = vpack.c.b16 %v4543, %v4539
    %v4588 = vpack.c.b16 %v4548, %v4544
    %v4589 = vpack.c.b16 %v4549, %v4545
    %v4590 = vpack.c.b16 %v4550, %v4546
    %v4591 = vpack.c.b16 %v4551, %v4547
    %v4592 = vpack.c.b16 %v4556, %v4552
    %v4593 = vpack.c.b16 %v4557, %v4553
    %v4594 = vpack.c.b16 %v4558, %v4554
    %v4595 = vpack.c.b16 %v4559, %v4555
    %v4596 = vpack.c.b16 %v4564, %v4560
    %v4597 = vpack.c.b16 %v4565, %v4561
    %v4598 = vpack.c.b16 %v4566, %v4562
    %v4599 = vpack.c.b16 %v4567, %v4563
    %4632 = vmatpush.bf16.msra.mxu0 %v4596
    %4633 = vmatpush.bf16.msra.mxu0 %v4592
    %4634 = vmatpush.bf16.msra.mxu0 %v4588
    %4635 = vmatpush.bf16.msra.mxu0 %v4584
    %4636 = vmatpush.bf16.msra.mxu0 %v4580
    %4637 = vmatpush.bf16.msra.mxu0 %v4576
    %4638 = vmatpush.bf16.msra.mxu0 %v4572
    %4639 = vmatpush.bf16.msra.mxu0 %v4568
    %4640 = vmatmul.bf16.gmra.mxu0 %v4187
    %v4641 = vpop.f32.mrf.mxu0
    %v4642 = vadd.f32 0.0, %v4641
    %v4643 = vpop.f32.mrf.mxu0
    %4644 = vdwg.mxu0
    %4645 = vmatpush.bf16.msra.mxu0 %v4597
    %4646 = vmatpush.bf16.msra.mxu0 %v4593
    %4647 = vmatpush.bf16.msra.mxu0 %v4589
    %4648 = vmatpush.bf16.msra.mxu0 %v4585
    %4649 = vmatpush.bf16.msra.mxu0 %v4581
    %4650 = vmatpush.bf16.msra.mxu0 %v4577
    %4651 = vmatpush.bf16.msra.mxu0 %v4573
    %4652 = vmatpush.bf16.msra.mxu0 %v4569
    %4653 = vmatmul.bf16.gmra.mxu0 %v4187
    %v4654 = vpop.f32.mrf.mxu0
    %v4655 = vadd.f32 0.0, %v4654
    %v4656 = vpop.f32.mrf.mxu0
    %4657 = vdwg.mxu0
    %4658 = vmatpush.bf16.msra.mxu0 %v4598
    %4659 = vmatpush.bf16.msra.mxu0 %v4594
    %4660 = vmatpush.bf16.msra.mxu0 %v4590
    %4661 = vmatpush.bf16.msra.mxu0 %v4586
    %4662 = vmatpush.bf16.msra.mxu0 %v4582
    %4663 = vmatpush.bf16.msra.mxu0 %v4578
    %4664 = vmatpush.bf16.msra.mxu0 %v4574
    %4665 = vmatpush.bf16.msra.mxu0 %v4570
    %4666 = vmatmul.bf16.gmra.mxu0 %v4187
    %v4667 = vpop.f32.mrf.mxu0
    %v4668 = vadd.f32 0.0, %v4667
    %v4669 = vpop.f32.mrf.mxu0
    %4670 = vdwg.mxu0
    %4671 = vmatpush.bf16.msra.mxu0 %v4599
    %4672 = vmatpush.bf16.msra.mxu0 %v4595
    %4673 = vmatpush.bf16.msra.mxu0 %v4591
    %4674 = vmatpush.bf16.msra.mxu0 %v4587
    %4675 = vmatpush.bf16.msra.mxu0 %v4583
    %4676 = vmatpush.bf16.msra.mxu0 %v4579
    %4677 = vmatpush.bf16.msra.mxu0 %v4575
    %4678 = vmatpush.bf16.msra.mxu0 %v4571
    %4679 = vmatmul.bf16.gmra.mxu0 %v4187
    %v4680 = vpop.f32.mrf.mxu0
    %v4681 = vadd.f32 0.0, %v4680
    %v4682 = vpop.f32.mrf.mxu0
    %4683 = vdwg.mxu0
    %v4684 = vadd.f32 %v4436, %v4642
    %v4685 = vadd.f32 %v4437, %v4655
    %v4686 = vadd.f32 %v4438, %v4668
    %v4687 = vadd.f32 %v4439, %v4681
    %v4688 = vxor.u32 %v4684, 2147483648
    %v4689 = vmul.f32 %v4688, 1.442695
    %v4690 = vpow.pop %v4689
    %v4691 = vadd.f32 %v4690, 1.0
    %v4692 = vrcp.pop %v4691
    %v4693 = vmul.f32 %v4691, %v4692
    %v4694 = vsub.f32 1.0, %v4693
    %v4695 = vmul.f32 %v4692, %v4694
    %v4696 = vadd.f32 %v4692, %v4695
    %vm4697 = vweird.f32 %v4691
    %vm4698 = vweird.f32 %v4692
    %vm4699 = vmor %vm4697, %vm4698
    %v4700 = vsel %vm4699, %v4692, %v4696
    %v4701 = vand.u32 2147483647, %v4691
    %vm4702 = vcmp.eq.f32.partialorder %v4701, 8.507059e+37
    %v4703 = vand.u32 %v4691, 2147483648
    %v4704 = vor.u32 1.1754944e-38, %v4703
    %v4705 = vsel %vm4702, %v4704, %v4700
    %v4706 = vmul.f32 1.0, %v4705
    %v4707 = vxor.u32 %v4685, 2147483648
    %v4708 = vmul.f32 %v4707, 1.442695
    %v4709 = vpow.pop %v4708
    %v4710 = vadd.f32 %v4709, 1.0
    %v4711 = vrcp.pop %v4710
    %v4712 = vmul.f32 %v4710, %v4711
    %v4713 = vsub.f32 1.0, %v4712
    %v4714 = vmul.f32 %v4711, %v4713
    %v4715 = vadd.f32 %v4711, %v4714
    %vm4716 = vweird.f32 %v4710
    %vm4717 = vweird.f32 %v4711
    %vm4718 = vmor %vm4716, %vm4717
    %v4719 = vsel %vm4718, %v4711, %v4715
    %v4720 = vand.u32 2147483647, %v4710
    %vm4721 = vcmp.eq.f32.partialorder %v4720, 8.507059e+37
    %v4722 = vand.u32 %v4710, 2147483648
    %v4723 = vor.u32 1.1754944e-38, %v4722
    %v4724 = vsel %vm4721, %v4723, %v4719
    %v4725 = vmul.f32 1.0, %v4724
    %v4726 = vtanh.pop %v4686
    %v4727 = vxor.u32 %v4687, 2147483648
    %v4728 = vmul.f32 %v4727, 1.442695
    %v4729 = vpow.pop %v4728
    %v4730 = vadd.f32 %v4729, 1.0
    %v4731 = vrcp.pop %v4730
    %v4732 = vmul.f32 %v4730, %v4731
    %v4733 = vsub.f32 1.0, %v4732
    %v4734 = vmul.f32 %v4731, %v4733
    %v4735 = vadd.f32 %v4731, %v4734
    %vm4736 = vweird.f32 %v4730
    %vm4737 = vweird.f32 %v4731
    %vm4738 = vmor %vm4736, %vm4737
    %v4739 = vsel %vm4738, %v4731, %v4735
    %v4740 = vand.u32 2147483647, %v4730
    %vm4741 = vcmp.eq.f32.partialorder %v4740, 8.507059e+37
    %v4742 = vand.u32 %v4730, 2147483648
    %v4743 = vor.u32 1.1754944e-38, %v4742
    %v4744 = vsel %vm4741, %v4743, %v4739
    %v4745 = vmul.f32 1.0, %v4744
    %v4746 = vmul.f32 %v4725, %v4184
    %v4747 = vmul.f32 %v4706, %v4726
    %v4748 = vadd.f32 %v4746, %v4747
    %v4749 = vtanh.pop %v4748
    %v4750 = vmul.f32 %v4745, %v4749
    %v4751 = vpack.c.bf16 %v4750, %v4750
    %v4752 = vld [vmem:[#allocation8] sm:$0xff]
    %v4753 = vld [vmem:[#allocation8 + $0x8] sm:$0xff]
    %v4754 = vld [vmem:[#allocation8 + $0x10] sm:$0xff]
    %v4755 = vld [vmem:[#allocation8 + $0x18] sm:$0xff]
    %v4756 = vld [vmem:[#allocation8 + $0x20] sm:$0xff]
    %v4757 = vld [vmem:[#allocation8 + $0x28] sm:$0xff]
    %v4758 = vld [vmem:[#allocation8 + $0x30] sm:$0xff]
    %v4759 = vld [vmem:[#allocation8 + $0x38] sm:$0xff]
    %v4760 = vld [vmem:[#allocation8 + $0x40] sm:$0xff]
    %v4761 = vld [vmem:[#allocation8 + $0x48] sm:$0xff]
    %v4762 = vld [vmem:[#allocation8 + $0x50] sm:$0xff]
    %v4763 = vld [vmem:[#allocation8 + $0x58] sm:$0xff]
    %v4764 = vld [vmem:[#allocation8 + $0x60] sm:$0xff]
    %v4765 = vld [vmem:[#allocation8 + $0x68] sm:$0xff]
    %v4766 = vld [vmem:[#allocation8 + $0x70] sm:$0xff]
    %v4767 = vld [vmem:[#allocation8 + $0x78] sm:$0xff]
    %v4768 = vld [vmem:[#allocation8 + $0x80] sm:$0xff]
    %v4769 = vld [vmem:[#allocation8 + $0x88] sm:$0xff]
    %v4770 = vld [vmem:[#allocation8 + $0x90] sm:$0xff]
    %v4771 = vld [vmem:[#allocation8 + $0x98] sm:$0xff]
    %v4772 = vld [vmem:[#allocation8 + $0xa0] sm:$0xff]
    %v4773 = vld [vmem:[#allocation8 + $0xa8] sm:$0xff]
    %v4774 = vld [vmem:[#allocation8 + $0xb0] sm:$0xff]
    %v4775 = vld [vmem:[#allocation8 + $0xb8] sm:$0xff]
    %v4776 = vld [vmem:[#allocation8 + $0xc0] sm:$0xff]
    %v4777 = vld [vmem:[#allocation8 + $0xc8] sm:$0xff]
    %v4778 = vld [vmem:[#allocation8 + $0xd0] sm:$0xff]
    %v4779 = vld [vmem:[#allocation8 + $0xd8] sm:$0xff]
    %v4780 = vld [vmem:[#allocation8 + $0xe0] sm:$0xff]
    %v4781 = vld [vmem:[#allocation8 + $0xe8] sm:$0xff]
    %v4782 = vld [vmem:[#allocation8 + $0xf0] sm:$0xff]
    %v4783 = vld [vmem:[#allocation8 + $0xf8] sm:$0xff]
    %v4816 = vunpack.c.l.b16 %v4752
    %v4817 = vunpack.c.h.b16 %v4752
    %v4818 = vunpack.c.l.b16 %v4753
    %v4819 = vunpack.c.h.b16 %v4753
    %v4820 = vunpack.c.l.b16 %v4754
    %v4821 = vunpack.c.h.b16 %v4754
    %v4822 = vunpack.c.l.b16 %v4755
    %v4823 = vunpack.c.h.b16 %v4755
    %v4824 = vunpack.c.l.b16 %v4756
    %v4825 = vunpack.c.h.b16 %v4756
    %v4826 = vunpack.c.l.b16 %v4757
    %v4827 = vunpack.c.h.b16 %v4757
    %v4828 = vunpack.c.l.b16 %v4758
    %v4829 = vunpack.c.h.b16 %v4758
    %v4830 = vunpack.c.l.b16 %v4759
    %v4831 = vunpack.c.h.b16 %v4759
    %v4832 = vunpack.c.l.b16 %v4760
    %v4833 = vunpack.c.h.b16 %v4760
    %v4834 = vunpack.c.l.b16 %v4761
    %v4835 = vunpack.c.h.b16 %v4761
    %v4836 = vunpack.c.l.b16 %v4762
    %v4837 = vunpack.c.h.b16 %v4762
    %v4838 = vunpack.c.l.b16 %v4763
    %v4839 = vunpack.c.h.b16 %v4763
    %v4840 = vunpack.c.l.b16 %v4764
    %v4841 = vunpack.c.h.b16 %v4764
    %v4842 = vunpack.c.l.b16 %v4765
    %v4843 = vunpack.c.h.b16 %v4765
    %v4844 = vunpack.c.l.b16 %v4766
    %v4845 = vunpack.c.h.b16 %v4766
    %v4846 = vunpack.c.l.b16 %v4767
    %v4847 = vunpack.c.h.b16 %v4767
    %v4848 = vunpack.c.l.b16 %v4768
    %v4849 = vunpack.c.h.b16 %v4768
    %v4850 = vunpack.c.l.b16 %v4769
    %v4851 = vunpack.c.h.b16 %v4769
    %v4852 = vunpack.c.l.b16 %v4770
    %v4853 = vunpack.c.h.b16 %v4770
    %v4854 = vunpack.c.l.b16 %v4771
    %v4855 = vunpack.c.h.b16 %v4771
    %v4856 = vunpack.c.l.b16 %v4772
    %v4857 = vunpack.c.h.b16 %v4772
    %v4858 = vunpack.c.l.b16 %v4773
    %v4859 = vunpack.c.h.b16 %v4773
    %v4860 = vunpack.c.l.b16 %v4774
    %v4861 = vunpack.c.h.b16 %v4774
    %v4862 = vunpack.c.l.b16 %v4775
    %v4863 = vunpack.c.h.b16 %v4775
    %v4864 = vunpack.c.l.b16 %v4776
    %v4865 = vunpack.c.h.b16 %v4776
    %v4866 = vunpack.c.l.b16 %v4777
    %v4867 = vunpack.c.h.b16 %v4777
    %v4868 = vunpack.c.l.b16 %v4778
    %v4869 = vunpack.c.h.b16 %v4778
    %v4870 = vunpack.c.l.b16 %v4779
    %v4871 = vunpack.c.h.b16 %v4779
    %v4872 = vunpack.c.l.b16 %v4780
    %v4873 = vunpack.c.h.b16 %v4780
    %v4874 = vunpack.c.l.b16 %v4781
    %v4875 = vunpack.c.h.b16 %v4781
    %v4876 = vunpack.c.l.b16 %v4782
    %v4877 = vunpack.c.h.b16 %v4782
    %v4878 = vunpack.c.l.b16 %v4783
    %v4879 = vunpack.c.h.b16 %v4783
    %v4880 = vpack.c.b16 %v4820, %v4816
    %v4881 = vpack.c.b16 %v4821, %v4817
    %v4882 = vpack.c.b16 %v4822, %v4818
    %v4883 = vpack.c.b16 %v4823, %v4819
    %v4884 = vpack.c.b16 %v4828, %v4824
    %v4885 = vpack.c.b16 %v4829, %v4825
    %v4886 = vpack.c.b16 %v4830, %v4826
    %v4887 = vpack.c.b16 %v4831, %v4827
    %v4888 = vpack.c.b16 %v4836, %v4832
    %v4889 = vpack.c.b16 %v4837, %v4833
    %v4890 = vpack.c.b16 %v4838, %v4834
    %v4891 = vpack.c.b16 %v4839, %v4835
    %v4892 = vpack.c.b16 %v4844, %v4840
    %v4893 = vpack.c.b16 %v4845, %v4841
    %v4894 = vpack.c.b16 %v4846, %v4842
    %v4895 = vpack.c.b16 %v4847, %v4843
    %v4896 = vpack.c.b16 %v4852, %v4848
    %v4897 = vpack.c.b16 %v4853, %v4849
    %v4898 = vpack.c.b16 %v4854, %v4850
    %v4899 = vpack.c.b16 %v4855, %v4851
    %v4900 = vpack.c.b16 %v4860, %v4856
    %v4901 = vpack.c.b16 %v4861, %v4857
    %v4902 = vpack.c.b16 %v4862, %v4858
    %v4903 = vpack.c.b16 %v4863, %v4859
    %v4904 = vpack.c.b16 %v4868, %v4864
    %v4905 = vpack.c.b16 %v4869, %v4865
    %v4906 = vpack.c.b16 %v4870, %v4866
    %v4907 = vpack.c.b16 %v4871, %v4867
    %v4908 = vpack.c.b16 %v4876, %v4872
    %v4909 = vpack.c.b16 %v4877, %v4873
    %v4910 = vpack.c.b16 %v4878, %v4874
    %v4911 = vpack.c.b16 %v4879, %v4875
    %4944 = vmatpush.bf16.msra.mxu0 %v4908
    %4945 = vmatpush.bf16.msra.mxu0 %v4904
    %4946 = vmatpush.bf16.msra.mxu0 %v4900
    %4947 = vmatpush.bf16.msra.mxu0 %v4896
    %4948 = vmatpush.bf16.msra.mxu0 %v4892
    %4949 = vmatpush.bf16.msra.mxu0 %v4888
    %4950 = vmatpush.bf16.msra.mxu0 %v4884
    %4951 = vmatpush.bf16.msra.mxu0 %v4880
    %4952 = vmatmul.bf16.gmra.mxu0 %v4751
    %v4953 = vpop.f32.mrf.mxu0
    %v4954 = vadd.f32 %v480, %v4953
    %v4955 = vpop.f32.mrf.mxu0
    %4956 = vdwg.mxu0
    %4957 = vmatpush.bf16.msra.mxu0 %v4909
    %4958 = vmatpush.bf16.msra.mxu0 %v4905
    %4959 = vmatpush.bf16.msra.mxu0 %v4901
    %4960 = vmatpush.bf16.msra.mxu0 %v4897
    %4961 = vmatpush.bf16.msra.mxu0 %v4893
    %4962 = vmatpush.bf16.msra.mxu0 %v4889
    %4963 = vmatpush.bf16.msra.mxu0 %v4885
    %4964 = vmatpush.bf16.msra.mxu0 %v4881
    %4965 = vmatmul.bf16.gmra.mxu0 %v4751
    %v4966 = vpop.f32.mrf.mxu0
    %v4967 = vadd.f32 %v481, %v4966
    %v4968 = vpop.f32.mrf.mxu0
    %4969 = vdwg.mxu0
    %4970 = vmatpush.bf16.msra.mxu0 %v4910
    %4971 = vmatpush.bf16.msra.mxu0 %v4906
    %4972 = vmatpush.bf16.msra.mxu0 %v4902
    %4973 = vmatpush.bf16.msra.mxu0 %v4898
    %4974 = vmatpush.bf16.msra.mxu0 %v4894
    %4975 = vmatpush.bf16.msra.mxu0 %v4890
    %4976 = vmatpush.bf16.msra.mxu0 %v4886
    %4977 = vmatpush.bf16.msra.mxu0 %v4882
    %4978 = vmatmul.bf16.gmra.mxu0 %v4751
    %v4979 = vpop.f32.mrf.mxu0
    %v4980 = vadd.f32 %v482, %v4979
    %v4981 = vpop.f32.mrf.mxu0
    %4982 = vdwg.mxu0
    %4983 = vmatpush.bf16.msra.mxu0 %v4911
    %4984 = vmatpush.bf16.msra.mxu0 %v4907
    %4985 = vmatpush.bf16.msra.mxu0 %v4903
    %4986 = vmatpush.bf16.msra.mxu0 %v4899
    %4987 = vmatpush.bf16.msra.mxu0 %v4895
    %4988 = vmatpush.bf16.msra.mxu0 %v4891
    %4989 = vmatpush.bf16.msra.mxu0 %v4887
    %4990 = vmatpush.bf16.msra.mxu0 %v4883
    %4991 = vmatmul.bf16.gmra.mxu0 %v4751
    %v4992 = vpop.f32.mrf.mxu0
    %v4993 = vadd.f32 %v483, %v4992
    %v4994 = vpop.f32.mrf.mxu0
    %4995 = vdwg.mxu0
    %4996 = vst [vmem:[#allocation3 + $0xe0] sm:$0xff] %v4954
    %4997 = vst [vmem:[#allocation3 + $0xe8] sm:$0xff] %v4967
    %4998 = vst [vmem:[#allocation3 + $0xf0] sm:$0xff] %v4980
    %4999 = vst [vmem:[#allocation3 + $0xf8] sm:$0xff] %v4993
    %v5000 = vld [vmem:[#allocation3] sm:$0xff]
    %v5001 = vld [vmem:[#allocation3 + $0x8] sm:$0xff]
    %v5002 = vld [vmem:[#allocation3 + $0x10] sm:$0xff]
    %v5003 = vld [vmem:[#allocation3 + $0x18] sm:$0xff]
    %v5004 = vld [vmem:[#allocation9] sm:$0xff]
    %v5005 = vld [vmem:[#allocation9 + $0x8] sm:$0xff]
    %v5006 = vld [vmem:[#allocation9 + $0x10] sm:$0xff]
    %v5007 = vld [vmem:[#allocation9 + $0x18] sm:$0xff]
    %v5008 = vld [vmem:[#allocation9 + $0x20] sm:$0xff]
    %v5009 = vld [vmem:[#allocation9 + $0x28] sm:$0xff]
    %v5010 = vld [vmem:[#allocation9 + $0x30] sm:$0xff]
    %v5011 = vld [vmem:[#allocation9 + $0x38] sm:$0xff]
    %v5012 = vld [vmem:[#allocation9 + $0x40] sm:$0xff]
    %v5013 = vld [vmem:[#allocation9 + $0x48] sm:$0xff]
    %v5014 = vld [vmem:[#allocation9 + $0x50] sm:$0xff]
    %v5015 = vld [vmem:[#allocation9 + $0x58] sm:$0xff]
    %v5016 = vld [vmem:[#allocation9 + $0x60] sm:$0xff]
    %v5017 = vld [vmem:[#allocation9 + $0x68] sm:$0xff]
    %v5018 = vld [vmem:[#allocation9 + $0x70] sm:$0xff]
    %v5019 = vld [vmem:[#allocation9 + $0x78] sm:$0xff]
    %v5020 = vld [vmem:[#allocation9 + $0x80] sm:$0xff]
    %v5021 = vld [vmem:[#allocation9 + $0x88] sm:$0xff]
    %v5022 = vld [vmem:[#allocation9 + $0x90] sm:$0xff]
    %v5023 = vld [vmem:[#allocation9 + $0x98] sm:$0xff]
    %v5024 = vld [vmem:[#allocation9 + $0xa0] sm:$0xff]
    %v5025 = vld [vmem:[#allocation9 + $0xa8] sm:$0xff]
    %v5026 = vld [vmem:[#allocation9 + $0xb0] sm:$0xff]
    %v5027 = vld [vmem:[#allocation9 + $0xb8] sm:$0xff]
    %v5028 = vld [vmem:[#allocation9 + $0xc0] sm:$0xff]
    %v5029 = vld [vmem:[#allocation9 + $0xc8] sm:$0xff]
    %v5030 = vld [vmem:[#allocation9 + $0xd0] sm:$0xff]
    %v5031 = vld [vmem:[#allocation9 + $0xd8] sm:$0xff]
    %v5032 = vld [vmem:[#allocation9 + $0xe0] sm:$0xff]
    %v5033 = vld [vmem:[#allocation9 + $0xe8] sm:$0xff]
    %v5034 = vld [vmem:[#allocation9 + $0xf0] sm:$0xff]
    %v5035 = vld [vmem:[#allocation9 + $0xf8] sm:$0xff]
    %v5068 = vunpack.c.l.b16 %v5004
    %v5069 = vunpack.c.h.b16 %v5004
    %v5070 = vunpack.c.l.b16 %v5005
    %v5071 = vunpack.c.h.b16 %v5005
    %v5072 = vunpack.c.l.b16 %v5006
    %v5073 = vunpack.c.h.b16 %v5006
    %v5074 = vunpack.c.l.b16 %v5007
    %v5075 = vunpack.c.h.b16 %v5007
    %v5076 = vunpack.c.l.b16 %v5008
    %v5077 = vunpack.c.h.b16 %v5008
    %v5078 = vunpack.c.l.b16 %v5009
    %v5079 = vunpack.c.h.b16 %v5009
    %v5080 = vunpack.c.l.b16 %v5010
    %v5081 = vunpack.c.h.b16 %v5010
    %v5082 = vunpack.c.l.b16 %v5011
    %v5083 = vunpack.c.h.b16 %v5011
    %v5084 = vunpack.c.l.b16 %v5012
    %v5085 = vunpack.c.h.b16 %v5012
    %v5086 = vunpack.c.l.b16 %v5013
    %v5087 = vunpack.c.h.b16 %v5013
    %v5088 = vunpack.c.l.b16 %v5014
    %v5089 = vunpack.c.h.b16 %v5014
    %v5090 = vunpack.c.l.b16 %v5015
    %v5091 = vunpack.c.h.b16 %v5015
    %v5092 = vunpack.c.l.b16 %v5016
    %v5093 = vunpack.c.h.b16 %v5016
    %v5094 = vunpack.c.l.b16 %v5017
    %v5095 = vunpack.c.h.b16 %v5017
    %v5096 = vunpack.c.l.b16 %v5018
    %v5097 = vunpack.c.h.b16 %v5018
    %v5098 = vunpack.c.l.b16 %v5019
    %v5099 = vunpack.c.h.b16 %v5019
    %v5100 = vunpack.c.l.b16 %v5020
    %v5101 = vunpack.c.h.b16 %v5020
    %v5102 = vunpack.c.l.b16 %v5021
    %v5103 = vunpack.c.h.b16 %v5021
    %v5104 = vunpack.c.l.b16 %v5022
    %v5105 = vunpack.c.h.b16 %v5022
    %v5106 = vunpack.c.l.b16 %v5023
    %v5107 = vunpack.c.h.b16 %v5023
    %v5108 = vunpack.c.l.b16 %v5024
    %v5109 = vunpack.c.h.b16 %v5024
    %v5110 = vunpack.c.l.b16 %v5025
    %v5111 = vunpack.c.h.b16 %v5025
    %v5112 = vunpack.c.l.b16 %v5026
    %v5113 = vunpack.c.h.b16 %v5026
    %v5114 = vunpack.c.l.b16 %v5027
    %v5115 = vunpack.c.h.b16 %v5027
    %v5116 = vunpack.c.l.b16 %v5028
    %v5117 = vunpack.c.h.b16 %v5028
    %v5118 = vunpack.c.l.b16 %v5029
    %v5119 = vunpack.c.h.b16 %v5029
    %v5120 = vunpack.c.l.b16 %v5030
    %v5121 = vunpack.c.h.b16 %v5030
    %v5122 = vunpack.c.l.b16 %v5031
    %v5123 = vunpack.c.h.b16 %v5031
    %v5124 = vunpack.c.l.b16 %v5032
    %v5125 = vunpack.c.h.b16 %v5032
    %v5126 = vunpack.c.l.b16 %v5033
    %v5127 = vunpack.c.h.b16 %v5033
    %v5128 = vunpack.c.l.b16 %v5034
    %v5129 = vunpack.c.h.b16 %v5034
    %v5130 = vunpack.c.l.b16 %v5035
    %v5131 = vunpack.c.h.b16 %v5035
    %v5132 = vpack.c.b16 %v5072, %v5068
    %v5133 = vpack.c.b16 %v5073, %v5069
    %v5134 = vpack.c.b16 %v5074, %v5070
    %v5135 = vpack.c.b16 %v5075, %v5071
    %v5136 = vpack.c.b16 %v5080, %v5076
    %v5137 = vpack.c.b16 %v5081, %v5077
    %v5138 = vpack.c.b16 %v5082, %v5078
    %v5139 = vpack.c.b16 %v5083, %v5079
    %v5140 = vpack.c.b16 %v5088, %v5084
    %v5141 = vpack.c.b16 %v5089, %v5085
    %v5142 = vpack.c.b16 %v5090, %v5086
    %v5143 = vpack.c.b16 %v5091, %v5087
    %v5144 = vpack.c.b16 %v5096, %v5092
    %v5145 = vpack.c.b16 %v5097, %v5093
    %v5146 = vpack.c.b16 %v5098, %v5094
    %v5147 = vpack.c.b16 %v5099, %v5095
    %v5148 = vpack.c.b16 %v5104, %v5100
    %v5149 = vpack.c.b16 %v5105, %v5101
    %v5150 = vpack.c.b16 %v5106, %v5102
    %v5151 = vpack.c.b16 %v5107, %v5103
    %v5152 = vpack.c.b16 %v5112, %v5108
    %v5153 = vpack.c.b16 %v5113, %v5109
    %v5154 = vpack.c.b16 %v5114, %v5110
    %v5155 = vpack.c.b16 %v5115, %v5111
    %v5156 = vpack.c.b16 %v5120, %v5116
    %v5157 = vpack.c.b16 %v5121, %v5117
    %v5158 = vpack.c.b16 %v5122, %v5118
    %v5159 = vpack.c.b16 %v5123, %v5119
    %v5160 = vpack.c.b16 %v5128, %v5124
    %v5161 = vpack.c.b16 %v5129, %v5125
    %v5162 = vpack.c.b16 %v5130, %v5126
    %v5163 = vpack.c.b16 %v5131, %v5127
    %5196 = vmatpush.bf16.msra.mxu0 %v5160
    %5197 = vmatpush.bf16.msra.mxu0 %v5156
    %5198 = vmatpush.bf16.msra.mxu0 %v5152
    %5199 = vmatpush.bf16.msra.mxu0 %v5148
    %5200 = vmatpush.bf16.msra.mxu0 %v5144
    %5201 = vmatpush.bf16.msra.mxu0 %v5140
    %5202 = vmatpush.bf16.msra.mxu0 %v5136
    %5203 = vmatpush.bf16.msra.mxu0 %v5132
    %5204 = vmatmul.bf16.gmra.mxu0 0
    %v5205 = vpop.f32.mrf.mxu0
    %v5206 = vadd.f32 0.0, %v5205
    %v5207 = vpop.f32.mrf.mxu0
    %5208 = vdwg.mxu0
    %5209 = vmatpush.bf16.msra.mxu0 %v5161
    %5210 = vmatpush.bf16.msra.mxu0 %v5157
    %5211 = vmatpush.bf16.msra.mxu0 %v5153
    %5212 = vmatpush.bf16.msra.mxu0 %v5149
    %5213 = vmatpush.bf16.msra.mxu0 %v5145
    %5214 = vmatpush.bf16.msra.mxu0 %v5141
    %5215 = vmatpush.bf16.msra.mxu0 %v5137
    %5216 = vmatpush.bf16.msra.mxu0 %v5133
    %5217 = vmatmul.bf16.gmra.mxu0 0
    %v5218 = vpop.f32.mrf.mxu0
    %v5219 = vadd.f32 0.0, %v5218
    %v5220 = vpop.f32.mrf.mxu0
    %5221 = vdwg.mxu0
    %5222 = vmatpush.bf16.msra.mxu0 %v5162
    %5223 = vmatpush.bf16.msra.mxu0 %v5158
    %5224 = vmatpush.bf16.msra.mxu0 %v5154
    %5225 = vmatpush.bf16.msra.mxu0 %v5150
    %5226 = vmatpush.bf16.msra.mxu0 %v5146
    %5227 = vmatpush.bf16.msra.mxu0 %v5142
    %5228 = vmatpush.bf16.msra.mxu0 %v5138
    %5229 = vmatpush.bf16.msra.mxu0 %v5134
    %5230 = vmatmul.bf16.gmra.mxu0 0
    %v5231 = vpop.f32.mrf.mxu0
    %v5232 = vadd.f32 0.0, %v5231
    %v5233 = vpop.f32.mrf.mxu0
    %5234 = vdwg.mxu0
    %5235 = vmatpush.bf16.msra.mxu0 %v5163
    %5236 = vmatpush.bf16.msra.mxu0 %v5159
    %5237 = vmatpush.bf16.msra.mxu0 %v5155
    %5238 = vmatpush.bf16.msra.mxu0 %v5151
    %5239 = vmatpush.bf16.msra.mxu0 %v5147
    %5240 = vmatpush.bf16.msra.mxu0 %v5143
    %5241 = vmatpush.bf16.msra.mxu0 %v5139
    %5242 = vmatpush.bf16.msra.mxu0 %v5135
    %5243 = vmatmul.bf16.gmra.mxu0 0
    %v5244 = vpop.f32.mrf.mxu0
    %v5245 = vadd.f32 0.0, %v5244
    %v5246 = vpop.f32.mrf.mxu0
    %5247 = vdwg.mxu0
    %v5248 = vadd.f32 %v5000, %v5206
    %v5249 = vadd.f32 %v5001, %v5219
    %v5250 = vadd.f32 %v5002, %v5232
    %v5251 = vadd.f32 %v5003, %v5245
    %v5252 = vxor.u32 %v5248, 2147483648
    %v5253 = vmul.f32 %v5252, 1.442695
    %v5254 = vpow.pop %v5253
    %v5255 = vadd.f32 %v5254, 1.0
    %v5256 = vrcp.pop %v5255
    %v5257 = vmul.f32 %v5255, %v5256
    %v5258 = vsub.f32 1.0, %v5257
    %v5259 = vmul.f32 %v5256, %v5258
    %v5260 = vadd.f32 %v5256, %v5259
    %vm5261 = vweird.f32 %v5255
    %vm5262 = vweird.f32 %v5256
    %vm5263 = vmor %vm5261, %vm5262
    %v5264 = vsel %vm5263, %v5256, %v5260
    %v5265 = vand.u32 2147483647, %v5255
    %vm5266 = vcmp.eq.f32.partialorder %v5265, 8.507059e+37
    %v5267 = vand.u32 %v5255, 2147483648
    %v5268 = vor.u32 1.1754944e-38, %v5267
    %v5269 = vsel %vm5266, %v5268, %v5264
    %v5270 = vmul.f32 1.0, %v5269
    %v5271 = vxor.u32 %v5249, 2147483648
    %v5272 = vmul.f32 %v5271, 1.442695
    %v5273 = vpow.pop %v5272
    %v5274 = vadd.f32 %v5273, 1.0
    %v5275 = vrcp.pop %v5274
    %v5276 = vmul.f32 %v5274, %v5275
    %v5277 = vsub.f32 1.0, %v5276
    %v5278 = vmul.f32 %v5275, %v5277
    %v5279 = vadd.f32 %v5275, %v5278
    %vm5280 = vweird.f32 %v5274
    %vm5281 = vweird.f32 %v5275
    %vm5282 = vmor %vm5280, %vm5281
    %v5283 = vsel %vm5282, %v5275, %v5279
    %v5284 = vand.u32 2147483647, %v5274
    %vm5285 = vcmp.eq.f32.partialorder %v5284, 8.507059e+37
    %v5286 = vand.u32 %v5274, 2147483648
    %v5287 = vor.u32 1.1754944e-38, %v5286
    %v5288 = vsel %vm5285, %v5287, %v5283
    %v5289 = vmul.f32 1.0, %v5288
    %v5290 = vtanh.pop %v5250
    %v5291 = vxor.u32 %v5251, 2147483648
    %v5292 = vmul.f32 %v5291, 1.442695
    %v5293 = vpow.pop %v5292
    %v5294 = vadd.f32 %v5293, 1.0
    %v5295 = vrcp.pop %v5294
    %v5296 = vmul.f32 %v5294, %v5295
    %v5297 = vsub.f32 1.0, %v5296
    %v5298 = vmul.f32 %v5295, %v5297
    %v5299 = vadd.f32 %v5295, %v5298
    %vm5300 = vweird.f32 %v5294
    %vm5301 = vweird.f32 %v5295
    %vm5302 = vmor %vm5300, %vm5301
    %v5303 = vsel %vm5302, %v5295, %v5299
    %v5304 = vand.u32 2147483647, %v5294
    %vm5305 = vcmp.eq.f32.partialorder %v5304, 8.507059e+37
    %v5306 = vand.u32 %v5294, 2147483648
    %v5307 = vor.u32 1.1754944e-38, %v5306
    %v5308 = vsel %vm5305, %v5307, %v5303
    %v5309 = vmul.f32 1.0, %v5308
    %v5310 = vmul.f32 %v5289, 0.0
    %v5311 = vmul.f32 %v5270, %v5290
    %v5312 = vadd.f32 %v5310, %v5311
    %v5313 = vtanh.pop %v5312
    %v5314 = vmul.f32 %v5309, %v5313
    %v5315 = vld [vmem:[#allocation3 + $0x20] sm:$0xff]
    %v5316 = vld [vmem:[#allocation3 + $0x28] sm:$0xff]
    %v5317 = vld [vmem:[#allocation3 + $0x30] sm:$0xff]
    %v5318 = vld [vmem:[#allocation3 + $0x38] sm:$0xff]
    %v5319 = vpack.c.bf16 %v5314, %v5314
    %5320 = vmatpush.bf16.msra.mxu0 %v5160
    %5321 = vmatpush.bf16.msra.mxu0 %v5156
    %5322 = vmatpush.bf16.msra.mxu0 %v5152
    %5323 = vmatpush.bf16.msra.mxu0 %v5148
    %5324 = vmatpush.bf16.msra.mxu0 %v5144
    %5325 = vmatpush.bf16.msra.mxu0 %v5140
    %5326 = vmatpush.bf16.msra.mxu0 %v5136
    %5327 = vmatpush.bf16.msra.mxu0 %v5132
    %5328 = vmatmul.bf16.gmra.mxu0 %v5319
    %v5329 = vpop.f32.mrf.mxu0
    %v5330 = vadd.f32 0.0, %v5329
    %v5331 = vpop.f32.mrf.mxu0
    %5332 = vdwg.mxu0
    %5333 = vmatpush.bf16.msra.mxu0 %v5161
    %5334 = vmatpush.bf16.msra.mxu0 %v5157
    %5335 = vmatpush.bf16.msra.mxu0 %v5153
    %5336 = vmatpush.bf16.msra.mxu0 %v5149
    %5337 = vmatpush.bf16.msra.mxu0 %v5145
    %5338 = vmatpush.bf16.msra.mxu0 %v5141
    %5339 = vmatpush.bf16.msra.mxu0 %v5137
    %5340 = vmatpush.bf16.msra.mxu0 %v5133
    %5341 = vmatmul.bf16.gmra.mxu0 %v5319
    %v5342 = vpop.f32.mrf.mxu0
    %v5343 = vadd.f32 0.0, %v5342
    %v5344 = vpop.f32.mrf.mxu0
    %5345 = vdwg.mxu0
    %5346 = vmatpush.bf16.msra.mxu0 %v5162
    %5347 = vmatpush.bf16.msra.mxu0 %v5158
    %5348 = vmatpush.bf16.msra.mxu0 %v5154
    %5349 = vmatpush.bf16.msra.mxu0 %v5150
    %5350 = vmatpush.bf16.msra.mxu0 %v5146
    %5351 = vmatpush.bf16.msra.mxu0 %v5142
    %5352 = vmatpush.bf16.msra.mxu0 %v5138
    %5353 = vmatpush.bf16.msra.mxu0 %v5134
    %5354 = vmatmul.bf16.gmra.mxu0 %v5319
    %v5355 = vpop.f32.mrf.mxu0
    %v5356 = vadd.f32 0.0, %v5355
    %v5357 = vpop.f32.mrf.mxu0
    %5358 = vdwg.mxu0
    %5359 = vmatpush.bf16.msra.mxu0 %v5163
    %5360 = vmatpush.bf16.msra.mxu0 %v5159
    %5361 = vmatpush.bf16.msra.mxu0 %v5155
    %5362 = vmatpush.bf16.msra.mxu0 %v5151
    %5363 = vmatpush.bf16.msra.mxu0 %v5147
    %5364 = vmatpush.bf16.msra.mxu0 %v5143
    %5365 = vmatpush.bf16.msra.mxu0 %v5139
    %5366 = vmatpush.bf16.msra.mxu0 %v5135
    %5367 = vmatmul.bf16.gmra.mxu0 %v5319
    %v5368 = vpop.f32.mrf.mxu0
    %v5369 = vadd.f32 0.0, %v5368
    %v5370 = vpop.f32.mrf.mxu0
    %5371 = vdwg.mxu0
    %v5372 = vadd.f32 %v5315, %v5330
    %v5373 = vadd.f32 %v5316, %v5343
    %v5374 = vadd.f32 %v5317, %v5356
    %v5375 = vadd.f32 %v5318, %v5369
    %v5376 = vxor.u32 %v5372, 2147483648
    %v5377 = vmul.f32 %v5376, 1.442695
    %v5378 = vpow.pop %v5377
    %v5379 = vadd.f32 %v5378, 1.0
    %v5380 = vrcp.pop %v5379
    %v5381 = vmul.f32 %v5379, %v5380
    %v5382 = vsub.f32 1.0, %v5381
    %v5383 = vmul.f32 %v5380, %v5382
    %v5384 = vadd.f32 %v5380, %v5383
    %vm5385 = vweird.f32 %v5379
    %vm5386 = vweird.f32 %v5380
    %vm5387 = vmor %vm5385, %vm5386
    %v5388 = vsel %vm5387, %v5380, %v5384
    %v5389 = vand.u32 2147483647, %v5379
    %vm5390 = vcmp.eq.f32.partialorder %v5389, 8.507059e+37
    %v5391 = vand.u32 %v5379, 2147483648
    %v5392 = vor.u32 1.1754944e-38, %v5391
    %v5393 = vsel %vm5390, %v5392, %v5388
    %v5394 = vmul.f32 1.0, %v5393
    %v5395 = vxor.u32 %v5373, 2147483648
    %v5396 = vmul.f32 %v5395, 1.442695
    %v5397 = vpow.pop %v5396
    %v5398 = vadd.f32 %v5397, 1.0
    %v5399 = vrcp.pop %v5398
    %v5400 = vmul.f32 %v5398, %v5399
    %v5401 = vsub.f32 1.0, %v5400
    %v5402 = vmul.f32 %v5399, %v5401
    %v5403 = vadd.f32 %v5399, %v5402
    %vm5404 = vweird.f32 %v5398
    %vm5405 = vweird.f32 %v5399
    %vm5406 = vmor %vm5404, %vm5405
    %v5407 = vsel %vm5406, %v5399, %v5403
    %v5408 = vand.u32 2147483647, %v5398
    %vm5409 = vcmp.eq.f32.partialorder %v5408, 8.507059e+37
    %v5410 = vand.u32 %v5398, 2147483648
    %v5411 = vor.u32 1.1754944e-38, %v5410
    %v5412 = vsel %vm5409, %v5411, %v5407
    %v5413 = vmul.f32 1.0, %v5412
    %v5414 = vtanh.pop %v5374
    %v5415 = vxor.u32 %v5375, 2147483648
    %v5416 = vmul.f32 %v5415, 1.442695
    %v5417 = vpow.pop %v5416
    %v5418 = vadd.f32 %v5417, 1.0
    %v5419 = vrcp.pop %v5418
    %v5420 = vmul.f32 %v5418, %v5419
    %v5421 = vsub.f32 1.0, %v5420
    %v5422 = vmul.f32 %v5419, %v5421
    %v5423 = vadd.f32 %v5419, %v5422
    %vm5424 = vweird.f32 %v5418
    %vm5425 = vweird.f32 %v5419
    %vm5426 = vmor %vm5424, %vm5425
    %v5427 = vsel %vm5426, %v5419, %v5423
    %v5428 = vand.u32 2147483647, %v5418
    %vm5429 = vcmp.eq.f32.partialorder %v5428, 8.507059e+37
    %v5430 = vand.u32 %v5418, 2147483648
    %v5431 = vor.u32 1.1754944e-38, %v5430
    %v5432 = vsel %vm5429, %v5431, %v5427
    %v5433 = vmul.f32 1.0, %v5432
    %v5434 = vmul.f32 %v5413, %v5312
    %v5435 = vmul.f32 %v5394, %v5414
    %v5436 = vadd.f32 %v5434, %v5435
    %v5437 = vtanh.pop %v5436
    %v5438 = vmul.f32 %v5433, %v5437
    %v5439 = vld [vmem:[#allocation3 + $0x40] sm:$0xff]
    %v5440 = vld [vmem:[#allocation3 + $0x48] sm:$0xff]
    %v5441 = vld [vmem:[#allocation3 + $0x50] sm:$0xff]
    %v5442 = vld [vmem:[#allocation3 + $0x58] sm:$0xff]
    %v5443 = vpack.c.bf16 %v5438, %v5438
    %5444 = vmatpush.bf16.msra.mxu0 %v5160
    %5445 = vmatpush.bf16.msra.mxu0 %v5156
    %5446 = vmatpush.bf16.msra.mxu0 %v5152
    %5447 = vmatpush.bf16.msra.mxu0 %v5148
    %5448 = vmatpush.bf16.msra.mxu0 %v5144
    %5449 = vmatpush.bf16.msra.mxu0 %v5140
    %5450 = vmatpush.bf16.msra.mxu0 %v5136
    %5451 = vmatpush.bf16.msra.mxu0 %v5132
    %5452 = vmatmul.bf16.gmra.mxu0 %v5443
    %v5453 = vpop.f32.mrf.mxu0
    %v5454 = vadd.f32 0.0, %v5453
    %v5455 = vpop.f32.mrf.mxu0
    %5456 = vdwg.mxu0
    %5457 = vmatpush.bf16.msra.mxu0 %v5161
    %5458 = vmatpush.bf16.msra.mxu0 %v5157
    %5459 = vmatpush.bf16.msra.mxu0 %v5153
    %5460 = vmatpush.bf16.msra.mxu0 %v5149
    %5461 = vmatpush.bf16.msra.mxu0 %v5145
    %5462 = vmatpush.bf16.msra.mxu0 %v5141
    %5463 = vmatpush.bf16.msra.mxu0 %v5137
    %5464 = vmatpush.bf16.msra.mxu0 %v5133
    %5465 = vmatmul.bf16.gmra.mxu0 %v5443
    %v5466 = vpop.f32.mrf.mxu0
    %v5467 = vadd.f32 0.0, %v5466
    %v5468 = vpop.f32.mrf.mxu0
    %5469 = vdwg.mxu0
    %5470 = vmatpush.bf16.msra.mxu0 %v5162
    %5471 = vmatpush.bf16.msra.mxu0 %v5158
    %5472 = vmatpush.bf16.msra.mxu0 %v5154
    %5473 = vmatpush.bf16.msra.mxu0 %v5150
    %5474 = vmatpush.bf16.msra.mxu0 %v5146
    %5475 = vmatpush.bf16.msra.mxu0 %v5142
    %5476 = vmatpush.bf16.msra.mxu0 %v5138
    %5477 = vmatpush.bf16.msra.mxu0 %v5134
    %5478 = vmatmul.bf16.gmra.mxu0 %v5443
    %v5479 = vpop.f32.mrf.mxu0
    %v5480 = vadd.f32 0.0, %v5479
    %v5481 = vpop.f32.mrf.mxu0
    %5482 = vdwg.mxu0
    %5483 = vmatpush.bf16.msra.mxu0 %v5163
    %5484 = vmatpush.bf16.msra.mxu0 %v5159
    %5485 = vmatpush.bf16.msra.mxu0 %v5155
    %5486 = vmatpush.bf16.msra.mxu0 %v5151
    %5487 = vmatpush.bf16.msra.mxu0 %v5147
    %5488 = vmatpush.bf16.msra.mxu0 %v5143
    %5489 = vmatpush.bf16.msra.mxu0 %v5139
    %5490 = vmatpush.bf16.msra.mxu0 %v5135
    %5491 = vmatmul.bf16.gmra.mxu0 %v5443
    %v5492 = vpop.f32.mrf.mxu0
    %v5493 = vadd.f32 0.0, %v5492
    %v5494 = vpop.f32.mrf.mxu0
    %5495 = vdwg.mxu0
    %v5496 = vadd.f32 %v5439, %v5454
    %v5497 = vadd.f32 %v5440, %v5467
    %v5498 = vadd.f32 %v5441, %v5480
    %v5499 = vadd.f32 %v5442, %v5493
    %v5500 = vxor.u32 %v5496, 2147483648
    %v5501 = vmul.f32 %v5500, 1.442695
    %v5502 = vpow.pop %v5501
    %v5503 = vadd.f32 %v5502, 1.0
    %v5504 = vrcp.pop %v5503
    %v5505 = vmul.f32 %v5503, %v5504
    %v5506 = vsub.f32 1.0, %v5505
    %v5507 = vmul.f32 %v5504, %v5506
    %v5508 = vadd.f32 %v5504, %v5507
    %vm5509 = vweird.f32 %v5503
    %vm5510 = vweird.f32 %v5504
    %vm5511 = vmor %vm5509, %vm5510
    %v5512 = vsel %vm5511, %v5504, %v5508
    %v5513 = vand.u32 2147483647, %v5503
    %vm5514 = vcmp.eq.f32.partialorder %v5513, 8.507059e+37
    %v5515 = vand.u32 %v5503, 2147483648
    %v5516 = vor.u32 1.1754944e-38, %v5515
    %v5517 = vsel %vm5514, %v5516, %v5512
    %v5518 = vmul.f32 1.0, %v5517
    %v5519 = vxor.u32 %v5497, 2147483648
    %v5520 = vmul.f32 %v5519, 1.442695
    %v5521 = vpow.pop %v5520
    %v5522 = vadd.f32 %v5521, 1.0
    %v5523 = vrcp.pop %v5522
    %v5524 = vmul.f32 %v5522, %v5523
    %v5525 = vsub.f32 1.0, %v5524
    %v5526 = vmul.f32 %v5523, %v5525
    %v5527 = vadd.f32 %v5523, %v5526
    %vm5528 = vweird.f32 %v5522
    %vm5529 = vweird.f32 %v5523
    %vm5530 = vmor %vm5528, %vm5529
    %v5531 = vsel %vm5530, %v5523, %v5527
    %v5532 = vand.u32 2147483647, %v5522
    %vm5533 = vcmp.eq.f32.partialorder %v5532, 8.507059e+37
    %v5534 = vand.u32 %v5522, 2147483648
    %v5535 = vor.u32 1.1754944e-38, %v5534
    %v5536 = vsel %vm5533, %v5535, %v5531
    %v5537 = vmul.f32 1.0, %v5536
    %v5538 = vtanh.pop %v5498
    %v5539 = vxor.u32 %v5499, 2147483648
    %v5540 = vmul.f32 %v5539, 1.442695
    %v5541 = vpow.pop %v5540
    %v5542 = vadd.f32 %v5541, 1.0
    %v5543 = vrcp.pop %v5542
    %v5544 = vmul.f32 %v5542, %v5543
    %v5545 = vsub.f32 1.0, %v5544
    %v5546 = vmul.f32 %v5543, %v5545
    %v5547 = vadd.f32 %v5543, %v5546
    %vm5548 = vweird.f32 %v5542
    %vm5549 = vweird.f32 %v5543
    %vm5550 = vmor %vm5548, %vm5549
    %v5551 = vsel %vm5550, %v5543, %v5547
    %v5552 = vand.u32 2147483647, %v5542
    %vm5553 = vcmp.eq.f32.partialorder %v5552, 8.507059e+37
    %v5554 = vand.u32 %v5542, 2147483648
    %v5555 = vor.u32 1.1754944e-38, %v5554
    %v5556 = vsel %vm5553, %v5555, %v5551
    %v5557 = vmul.f32 1.0, %v5556
    %v5558 = vmul.f32 %v5537, %v5436
    %v5559 = vmul.f32 %v5518, %v5538
    %v5560 = vadd.f32 %v5558, %v5559
    %v5561 = vtanh.pop %v5560
    %v5562 = vmul.f32 %v5557, %v5561
    %v5563 = vld [vmem:[#allocation3 + $0x60] sm:$0xff]
    %v5564 = vld [vmem:[#allocation3 + $0x68] sm:$0xff]
    %v5565 = vld [vmem:[#allocation3 + $0x70] sm:$0xff]
    %v5566 = vld [vmem:[#allocation3 + $0x78] sm:$0xff]
    %v5567 = vpack.c.bf16 %v5562, %v5562
    %5568 = vmatpush.bf16.msra.mxu0 %v5160
    %5569 = vmatpush.bf16.msra.mxu0 %v5156
    %5570 = vmatpush.bf16.msra.mxu0 %v5152
    %5571 = vmatpush.bf16.msra.mxu0 %v5148
    %5572 = vmatpush.bf16.msra.mxu0 %v5144
    %5573 = vmatpush.bf16.msra.mxu0 %v5140
    %5574 = vmatpush.bf16.msra.mxu0 %v5136
    %5575 = vmatpush.bf16.msra.mxu0 %v5132
    %5576 = vmatmul.bf16.gmra.mxu0 %v5567
    %v5577 = vpop.f32.mrf.mxu0
    %v5578 = vadd.f32 0.0, %v5577
    %v5579 = vpop.f32.mrf.mxu0
    %5580 = vdwg.mxu0
    %5581 = vmatpush.bf16.msra.mxu0 %v5161
    %5582 = vmatpush.bf16.msra.mxu0 %v5157
    %5583 = vmatpush.bf16.msra.mxu0 %v5153
    %5584 = vmatpush.bf16.msra.mxu0 %v5149
    %5585 = vmatpush.bf16.msra.mxu0 %v5145
    %5586 = vmatpush.bf16.msra.mxu0 %v5141
    %5587 = vmatpush.bf16.msra.mxu0 %v5137
    %5588 = vmatpush.bf16.msra.mxu0 %v5133
    %5589 = vmatmul.bf16.gmra.mxu0 %v5567
    %v5590 = vpop.f32.mrf.mxu0
    %v5591 = vadd.f32 0.0, %v5590
    %v5592 = vpop.f32.mrf.mxu0
    %5593 = vdwg.mxu0
    %5594 = vmatpush.bf16.msra.mxu0 %v5162
    %5595 = vmatpush.bf16.msra.mxu0 %v5158
    %5596 = vmatpush.bf16.msra.mxu0 %v5154
    %5597 = vmatpush.bf16.msra.mxu0 %v5150
    %5598 = vmatpush.bf16.msra.mxu0 %v5146
    %5599 = vmatpush.bf16.msra.mxu0 %v5142
    %5600 = vmatpush.bf16.msra.mxu0 %v5138
    %5601 = vmatpush.bf16.msra.mxu0 %v5134
    %5602 = vmatmul.bf16.gmra.mxu0 %v5567
    %v5603 = vpop.f32.mrf.mxu0
    %v5604 = vadd.f32 0.0, %v5603
    %v5605 = vpop.f32.mrf.mxu0
    %5606 = vdwg.mxu0
    %5607 = vmatpush.bf16.msra.mxu0 %v5163
    %5608 = vmatpush.bf16.msra.mxu0 %v5159
    %5609 = vmatpush.bf16.msra.mxu0 %v5155
    %5610 = vmatpush.bf16.msra.mxu0 %v5151
    %5611 = vmatpush.bf16.msra.mxu0 %v5147
    %5612 = vmatpush.bf16.msra.mxu0 %v5143
    %5613 = vmatpush.bf16.msra.mxu0 %v5139
    %5614 = vmatpush.bf16.msra.mxu0 %v5135
    %5615 = vmatmul.bf16.gmra.mxu0 %v5567
    %v5616 = vpop.f32.mrf.mxu0
    %v5617 = vadd.f32 0.0, %v5616
    %v5618 = vpop.f32.mrf.mxu0
    %5619 = vdwg.mxu0
    %v5620 = vadd.f32 %v5563, %v5578
    %v5621 = vadd.f32 %v5564, %v5591
    %v5622 = vadd.f32 %v5565, %v5604
    %v5623 = vadd.f32 %v5566, %v5617
    %v5624 = vxor.u32 %v5620, 2147483648
    %v5625 = vmul.f32 %v5624, 1.442695
    %v5626 = vpow.pop %v5625
    %v5627 = vadd.f32 %v5626, 1.0
    %v5628 = vrcp.pop %v5627
    %v5629 = vmul.f32 %v5627, %v5628
    %v5630 = vsub.f32 1.0, %v5629
    %v5631 = vmul.f32 %v5628, %v5630
    %v5632 = vadd.f32 %v5628, %v5631
    %vm5633 = vweird.f32 %v5627
    %vm5634 = vweird.f32 %v5628
    %vm5635 = vmor %vm5633, %vm5634
    %v5636 = vsel %vm5635, %v5628, %v5632
    %v5637 = vand.u32 2147483647, %v5627
    %vm5638 = vcmp.eq.f32.partialorder %v5637, 8.507059e+37
    %v5639 = vand.u32 %v5627, 2147483648
    %v5640 = vor.u32 1.1754944e-38, %v5639
    %v5641 = vsel %vm5638, %v5640, %v5636
    %v5642 = vmul.f32 1.0, %v5641
    %v5643 = vxor.u32 %v5621, 2147483648
    %v5644 = vmul.f32 %v5643, 1.442695
    %v5645 = vpow.pop %v5644
    %v5646 = vadd.f32 %v5645, 1.0
    %v5647 = vrcp.pop %v5646
    %v5648 = vmul.f32 %v5646, %v5647
    %v5649 = vsub.f32 1.0, %v5648
    %v5650 = vmul.f32 %v5647, %v5649
    %v5651 = vadd.f32 %v5647, %v5650
    %vm5652 = vweird.f32 %v5646
    %vm5653 = vweird.f32 %v5647
    %vm5654 = vmor %vm5652, %vm5653
    %v5655 = vsel %vm5654, %v5647, %v5651
    %v5656 = vand.u32 2147483647, %v5646
    %vm5657 = vcmp.eq.f32.partialorder %v5656, 8.507059e+37
    %v5658 = vand.u32 %v5646, 2147483648
    %v5659 = vor.u32 1.1754944e-38, %v5658
    %v5660 = vsel %vm5657, %v5659, %v5655
    %v5661 = vmul.f32 1.0, %v5660
    %v5662 = vtanh.pop %v5622
    %v5663 = vxor.u32 %v5623, 2147483648
    %v5664 = vmul.f32 %v5663, 1.442695
    %v5665 = vpow.pop %v5664
    %v5666 = vadd.f32 %v5665, 1.0
    %v5667 = vrcp.pop %v5666
    %v5668 = vmul.f32 %v5666, %v5667
    %v5669 = vsub.f32 1.0, %v5668
    %v5670 = vmul.f32 %v5667, %v5669
    %v5671 = vadd.f32 %v5667, %v5670
    %vm5672 = vweird.f32 %v5666
    %vm5673 = vweird.f32 %v5667
    %vm5674 = vmor %vm5672, %vm5673
    %v5675 = vsel %vm5674, %v5667, %v5671
    %v5676 = vand.u32 2147483647, %v5666
    %vm5677 = vcmp.eq.f32.partialorder %v5676, 8.507059e+37
    %v5678 = vand.u32 %v5666, 2147483648
    %v5679 = vor.u32 1.1754944e-38, %v5678
    %v5680 = vsel %vm5677, %v5679, %v5675
    %v5681 = vmul.f32 1.0, %v5680
    %v5682 = vmul.f32 %v5661, %v5560
    %v5683 = vmul.f32 %v5642, %v5662
    %v5684 = vadd.f32 %v5682, %v5683
    %v5685 = vtanh.pop %v5684
    %v5686 = vmul.f32 %v5681, %v5685
    %v5687 = vld [vmem:[#allocation3 + $0x80] sm:$0xff]
    %v5688 = vld [vmem:[#allocation3 + $0x88] sm:$0xff]
    %v5689 = vld [vmem:[#allocation3 + $0x90] sm:$0xff]
    %v5690 = vld [vmem:[#allocation3 + $0x98] sm:$0xff]
    %v5691 = vpack.c.bf16 %v5686, %v5686
    %5692 = vmatpush.bf16.msra.mxu0 %v5160
    %5693 = vmatpush.bf16.msra.mxu0 %v5156
    %5694 = vmatpush.bf16.msra.mxu0 %v5152
    %5695 = vmatpush.bf16.msra.mxu0 %v5148
    %5696 = vmatpush.bf16.msra.mxu0 %v5144
    %5697 = vmatpush.bf16.msra.mxu0 %v5140
    %5698 = vmatpush.bf16.msra.mxu0 %v5136
    %5699 = vmatpush.bf16.msra.mxu0 %v5132
    %5700 = vmatmul.bf16.gmra.mxu0 %v5691
    %v5701 = vpop.f32.mrf.mxu0
    %v5702 = vadd.f32 0.0, %v5701
    %v5703 = vpop.f32.mrf.mxu0
    %5704 = vdwg.mxu0
    %5705 = vmatpush.bf16.msra.mxu0 %v5161
    %5706 = vmatpush.bf16.msra.mxu0 %v5157
    %5707 = vmatpush.bf16.msra.mxu0 %v5153
    %5708 = vmatpush.bf16.msra.mxu0 %v5149
    %5709 = vmatpush.bf16.msra.mxu0 %v5145
    %5710 = vmatpush.bf16.msra.mxu0 %v5141
    %5711 = vmatpush.bf16.msra.mxu0 %v5137
    %5712 = vmatpush.bf16.msra.mxu0 %v5133
    %5713 = vmatmul.bf16.gmra.mxu0 %v5691
    %v5714 = vpop.f32.mrf.mxu0
    %v5715 = vadd.f32 0.0, %v5714
    %v5716 = vpop.f32.mrf.mxu0
    %5717 = vdwg.mxu0
    %5718 = vmatpush.bf16.msra.mxu0 %v5162
    %5719 = vmatpush.bf16.msra.mxu0 %v5158
    %5720 = vmatpush.bf16.msra.mxu0 %v5154
    %5721 = vmatpush.bf16.msra.mxu0 %v5150
    %5722 = vmatpush.bf16.msra.mxu0 %v5146
    %5723 = vmatpush.bf16.msra.mxu0 %v5142
    %5724 = vmatpush.bf16.msra.mxu0 %v5138
    %5725 = vmatpush.bf16.msra.mxu0 %v5134
    %5726 = vmatmul.bf16.gmra.mxu0 %v5691
    %v5727 = vpop.f32.mrf.mxu0
    %v5728 = vadd.f32 0.0, %v5727
    %v5729 = vpop.f32.mrf.mxu0
    %5730 = vdwg.mxu0
    %5731 = vmatpush.bf16.msra.mxu0 %v5163
    %5732 = vmatpush.bf16.msra.mxu0 %v5159
    %5733 = vmatpush.bf16.msra.mxu0 %v5155
    %5734 = vmatpush.bf16.msra.mxu0 %v5151
    %5735 = vmatpush.bf16.msra.mxu0 %v5147
    %5736 = vmatpush.bf16.msra.mxu0 %v5143
    %5737 = vmatpush.bf16.msra.mxu0 %v5139
    %5738 = vmatpush.bf16.msra.mxu0 %v5135
    %5739 = vmatmul.bf16.gmra.mxu0 %v5691
    %v5740 = vpop.f32.mrf.mxu0
    %v5741 = vadd.f32 0.0, %v5740
    %v5742 = vpop.f32.mrf.mxu0
    %5743 = vdwg.mxu0
    %v5744 = vadd.f32 %v5687, %v5702
    %v5745 = vadd.f32 %v5688, %v5715
    %v5746 = vadd.f32 %v5689, %v5728
    %v5747 = vadd.f32 %v5690, %v5741
    %v5748 = vxor.u32 %v5744, 2147483648
    %v5749 = vmul.f32 %v5748, 1.442695
    %v5750 = vpow.pop %v5749
    %v5751 = vadd.f32 %v5750, 1.0
    %v5752 = vrcp.pop %v5751
    %v5753 = vmul.f32 %v5751, %v5752
    %v5754 = vsub.f32 1.0, %v5753
    %v5755 = vmul.f32 %v5752, %v5754
    %v5756 = vadd.f32 %v5752, %v5755
    %vm5757 = vweird.f32 %v5751
    %vm5758 = vweird.f32 %v5752
    %vm5759 = vmor %vm5757, %vm5758
    %v5760 = vsel %vm5759, %v5752, %v5756
    %v5761 = vand.u32 2147483647, %v5751
    %vm5762 = vcmp.eq.f32.partialorder %v5761, 8.507059e+37
    %v5763 = vand.u32 %v5751, 2147483648
    %v5764 = vor.u32 1.1754944e-38, %v5763
    %v5765 = vsel %vm5762, %v5764, %v5760
    %v5766 = vmul.f32 1.0, %v5765
    %v5767 = vxor.u32 %v5745, 2147483648
    %v5768 = vmul.f32 %v5767, 1.442695
    %v5769 = vpow.pop %v5768
    %v5770 = vadd.f32 %v5769, 1.0
    %v5771 = vrcp.pop %v5770
    %v5772 = vmul.f32 %v5770, %v5771
    %v5773 = vsub.f32 1.0, %v5772
    %v5774 = vmul.f32 %v5771, %v5773
    %v5775 = vadd.f32 %v5771, %v5774
    %vm5776 = vweird.f32 %v5770
    %vm5777 = vweird.f32 %v5771
    %vm5778 = vmor %vm5776, %vm5777
    %v5779 = vsel %vm5778, %v5771, %v5775
    %v5780 = vand.u32 2147483647, %v5770
    %vm5781 = vcmp.eq.f32.partialorder %v5780, 8.507059e+37
    %v5782 = vand.u32 %v5770, 2147483648
    %v5783 = vor.u32 1.1754944e-38, %v5782
    %v5784 = vsel %vm5781, %v5783, %v5779
    %v5785 = vmul.f32 1.0, %v5784
    %v5786 = vtanh.pop %v5746
    %v5787 = vxor.u32 %v5747, 2147483648
    %v5788 = vmul.f32 %v5787, 1.442695
    %v5789 = vpow.pop %v5788
    %v5790 = vadd.f32 %v5789, 1.0
    %v5791 = vrcp.pop %v5790
    %v5792 = vmul.f32 %v5790, %v5791
    %v5793 = vsub.f32 1.0, %v5792
    %v5794 = vmul.f32 %v5791, %v5793
    %v5795 = vadd.f32 %v5791, %v5794
    %vm5796 = vweird.f32 %v5790
    %vm5797 = vweird.f32 %v5791
    %vm5798 = vmor %vm5796, %vm5797
    %v5799 = vsel %vm5798, %v5791, %v5795
    %v5800 = vand.u32 2147483647, %v5790
    %vm5801 = vcmp.eq.f32.partialorder %v5800, 8.507059e+37
    %v5802 = vand.u32 %v5790, 2147483648
    %v5803 = vor.u32 1.1754944e-38, %v5802
    %v5804 = vsel %vm5801, %v5803, %v5799
    %v5805 = vmul.f32 1.0, %v5804
    %v5806 = vmul.f32 %v5785, %v5684
    %v5807 = vmul.f32 %v5766, %v5786
    %v5808 = vadd.f32 %v5806, %v5807
    %v5809 = vtanh.pop %v5808
    %v5810 = vmul.f32 %v5805, %v5809
    %v5811 = vld [vmem:[#allocation3 + $0xa0] sm:$0xff]
    %v5812 = vld [vmem:[#allocation3 + $0xa8] sm:$0xff]
    %v5813 = vld [vmem:[#allocation3 + $0xb0] sm:$0xff]
    %v5814 = vld [vmem:[#allocation3 + $0xb8] sm:$0xff]
    %v5815 = vpack.c.bf16 %v5810, %v5810
    %5816 = vmatpush.bf16.msra.mxu0 %v5160
    %5817 = vmatpush.bf16.msra.mxu0 %v5156
    %5818 = vmatpush.bf16.msra.mxu0 %v5152
    %5819 = vmatpush.bf16.msra.mxu0 %v5148
    %5820 = vmatpush.bf16.msra.mxu0 %v5144
    %5821 = vmatpush.bf16.msra.mxu0 %v5140
    %5822 = vmatpush.bf16.msra.mxu0 %v5136
    %5823 = vmatpush.bf16.msra.mxu0 %v5132
    %5824 = vmatmul.bf16.gmra.mxu0 %v5815
    %v5825 = vpop.f32.mrf.mxu0
    %v5826 = vadd.f32 0.0, %v5825
    %v5827 = vpop.f32.mrf.mxu0
    %5828 = vdwg.mxu0
    %5829 = vmatpush.bf16.msra.mxu0 %v5161
    %5830 = vmatpush.bf16.msra.mxu0 %v5157
    %5831 = vmatpush.bf16.msra.mxu0 %v5153
    %5832 = vmatpush.bf16.msra.mxu0 %v5149
    %5833 = vmatpush.bf16.msra.mxu0 %v5145
    %5834 = vmatpush.bf16.msra.mxu0 %v5141
    %5835 = vmatpush.bf16.msra.mxu0 %v5137
    %5836 = vmatpush.bf16.msra.mxu0 %v5133
    %5837 = vmatmul.bf16.gmra.mxu0 %v5815
    %v5838 = vpop.f32.mrf.mxu0
    %v5839 = vadd.f32 0.0, %v5838
    %v5840 = vpop.f32.mrf.mxu0
    %5841 = vdwg.mxu0
    %5842 = vmatpush.bf16.msra.mxu0 %v5162
    %5843 = vmatpush.bf16.msra.mxu0 %v5158
    %5844 = vmatpush.bf16.msra.mxu0 %v5154
    %5845 = vmatpush.bf16.msra.mxu0 %v5150
    %5846 = vmatpush.bf16.msra.mxu0 %v5146
    %5847 = vmatpush.bf16.msra.mxu0 %v5142
    %5848 = vmatpush.bf16.msra.mxu0 %v5138
    %5849 = vmatpush.bf16.msra.mxu0 %v5134
    %5850 = vmatmul.bf16.gmra.mxu0 %v5815
    %v5851 = vpop.f32.mrf.mxu0
    %v5852 = vadd.f32 0.0, %v5851
    %v5853 = vpop.f32.mrf.mxu0
    %5854 = vdwg.mxu0
    %5855 = vmatpush.bf16.msra.mxu0 %v5163
    %5856 = vmatpush.bf16.msra.mxu0 %v5159
    %5857 = vmatpush.bf16.msra.mxu0 %v5155
    %5858 = vmatpush.bf16.msra.mxu0 %v5151
    %5859 = vmatpush.bf16.msra.mxu0 %v5147
    %5860 = vmatpush.bf16.msra.mxu0 %v5143
    %5861 = vmatpush.bf16.msra.mxu0 %v5139
    %5862 = vmatpush.bf16.msra.mxu0 %v5135
    %5863 = vmatmul.bf16.gmra.mxu0 %v5815
    %v5864 = vpop.f32.mrf.mxu0
    %v5865 = vadd.f32 0.0, %v5864
    %v5866 = vpop.f32.mrf.mxu0
    %5867 = vdwg.mxu0
    %v5868 = vadd.f32 %v5811, %v5826
    %v5869 = vadd.f32 %v5812, %v5839
    %v5870 = vadd.f32 %v5813, %v5852
    %v5871 = vadd.f32 %v5814, %v5865
    %v5872 = vxor.u32 %v5868, 2147483648
    %v5873 = vmul.f32 %v5872, 1.442695
    %v5874 = vpow.pop %v5873
    %v5875 = vadd.f32 %v5874, 1.0
    %v5876 = vrcp.pop %v5875
    %v5877 = vmul.f32 %v5875, %v5876
    %v5878 = vsub.f32 1.0, %v5877
    %v5879 = vmul.f32 %v5876, %v5878
    %v5880 = vadd.f32 %v5876, %v5879
    %vm5881 = vweird.f32 %v5875
    %vm5882 = vweird.f32 %v5876
    %vm5883 = vmor %vm5881, %vm5882
    %v5884 = vsel %vm5883, %v5876, %v5880
    %v5885 = vand.u32 2147483647, %v5875
    %vm5886 = vcmp.eq.f32.partialorder %v5885, 8.507059e+37
    %v5887 = vand.u32 %v5875, 2147483648
    %v5888 = vor.u32 1.1754944e-38, %v5887
    %v5889 = vsel %vm5886, %v5888, %v5884
    %v5890 = vmul.f32 1.0, %v5889
    %v5891 = vxor.u32 %v5869, 2147483648
    %v5892 = vmul.f32 %v5891, 1.442695
    %v5893 = vpow.pop %v5892
    %v5894 = vadd.f32 %v5893, 1.0
    %v5895 = vrcp.pop %v5894
    %v5896 = vmul.f32 %v5894, %v5895
    %v5897 = vsub.f32 1.0, %v5896
    %v5898 = vmul.f32 %v5895, %v5897
    %v5899 = vadd.f32 %v5895, %v5898
    %vm5900 = vweird.f32 %v5894
    %vm5901 = vweird.f32 %v5895
    %vm5902 = vmor %vm5900, %vm5901
    %v5903 = vsel %vm5902, %v5895, %v5899
    %v5904 = vand.u32 2147483647, %v5894
    %vm5905 = vcmp.eq.f32.partialorder %v5904, 8.507059e+37
    %v5906 = vand.u32 %v5894, 2147483648
    %v5907 = vor.u32 1.1754944e-38, %v5906
    %v5908 = vsel %vm5905, %v5907, %v5903
    %v5909 = vmul.f32 1.0, %v5908
    %v5910 = vtanh.pop %v5870
    %v5911 = vxor.u32 %v5871, 2147483648
    %v5912 = vmul.f32 %v5911, 1.442695
    %v5913 = vpow.pop %v5912
    %v5914 = vadd.f32 %v5913, 1.0
    %v5915 = vrcp.pop %v5914
    %v5916 = vmul.f32 %v5914, %v5915
    %v5917 = vsub.f32 1.0, %v5916
    %v5918 = vmul.f32 %v5915, %v5917
    %v5919 = vadd.f32 %v5915, %v5918
    %vm5920 = vweird.f32 %v5914
    %vm5921 = vweird.f32 %v5915
    %vm5922 = vmor %vm5920, %vm5921
    %v5923 = vsel %vm5922, %v5915, %v5919
    %v5924 = vand.u32 2147483647, %v5914
    %vm5925 = vcmp.eq.f32.partialorder %v5924, 8.507059e+37
    %v5926 = vand.u32 %v5914, 2147483648
    %v5927 = vor.u32 1.1754944e-38, %v5926
    %v5928 = vsel %vm5925, %v5927, %v5923
    %v5929 = vmul.f32 1.0, %v5928
    %v5930 = vmul.f32 %v5909, %v5808
    %v5931 = vmul.f32 %v5890, %v5910
    %v5932 = vadd.f32 %v5930, %v5931
    %v5933 = vtanh.pop %v5932
    %v5934 = vmul.f32 %v5929, %v5933
    %v5935 = vld [vmem:[#allocation3 + $0xc0] sm:$0xff]
    %v5936 = vld [vmem:[#allocation3 + $0xc8] sm:$0xff]
    %v5937 = vld [vmem:[#allocation3 + $0xd0] sm:$0xff]
    %v5938 = vld [vmem:[#allocation3 + $0xd8] sm:$0xff]
    %v5939 = vpack.c.bf16 %v5934, %v5934
    %5940 = vmatpush.bf16.msra.mxu0 %v5160
    %5941 = vmatpush.bf16.msra.mxu0 %v5156
    %5942 = vmatpush.bf16.msra.mxu0 %v5152
    %5943 = vmatpush.bf16.msra.mxu0 %v5148
    %5944 = vmatpush.bf16.msra.mxu0 %v5144
    %5945 = vmatpush.bf16.msra.mxu0 %v5140
    %5946 = vmatpush.bf16.msra.mxu0 %v5136
    %5947 = vmatpush.bf16.msra.mxu0 %v5132
    %5948 = vmatmul.bf16.gmra.mxu0 %v5939
    %v5949 = vpop.f32.mrf.mxu0
    %v5950 = vadd.f32 0.0, %v5949
    %v5951 = vpop.f32.mrf.mxu0
    %5952 = vdwg.mxu0
    %5953 = vmatpush.bf16.msra.mxu0 %v5161
    %5954 = vmatpush.bf16.msra.mxu0 %v5157
    %5955 = vmatpush.bf16.msra.mxu0 %v5153
    %5956 = vmatpush.bf16.msra.mxu0 %v5149
    %5957 = vmatpush.bf16.msra.mxu0 %v5145
    %5958 = vmatpush.bf16.msra.mxu0 %v5141
    %5959 = vmatpush.bf16.msra.mxu0 %v5137
    %5960 = vmatpush.bf16.msra.mxu0 %v5133
    %5961 = vmatmul.bf16.gmra.mxu0 %v5939
    %v5962 = vpop.f32.mrf.mxu0
    %v5963 = vadd.f32 0.0, %v5962
    %v5964 = vpop.f32.mrf.mxu0
    %5965 = vdwg.mxu0
    %5966 = vmatpush.bf16.msra.mxu0 %v5162
    %5967 = vmatpush.bf16.msra.mxu0 %v5158
    %5968 = vmatpush.bf16.msra.mxu0 %v5154
    %5969 = vmatpush.bf16.msra.mxu0 %v5150
    %5970 = vmatpush.bf16.msra.mxu0 %v5146
    %5971 = vmatpush.bf16.msra.mxu0 %v5142
    %5972 = vmatpush.bf16.msra.mxu0 %v5138
    %5973 = vmatpush.bf16.msra.mxu0 %v5134
    %5974 = vmatmul.bf16.gmra.mxu0 %v5939
    %v5975 = vpop.f32.mrf.mxu0
    %v5976 = vadd.f32 0.0, %v5975
    %v5977 = vpop.f32.mrf.mxu0
    %5978 = vdwg.mxu0
    %5979 = vmatpush.bf16.msra.mxu0 %v5163
    %5980 = vmatpush.bf16.msra.mxu0 %v5159
    %5981 = vmatpush.bf16.msra.mxu0 %v5155
    %5982 = vmatpush.bf16.msra.mxu0 %v5151
    %5983 = vmatpush.bf16.msra.mxu0 %v5147
    %5984 = vmatpush.bf16.msra.mxu0 %v5143
    %5985 = vmatpush.bf16.msra.mxu0 %v5139
    %5986 = vmatpush.bf16.msra.mxu0 %v5135
    %5987 = vmatmul.bf16.gmra.mxu0 %v5939
    %v5988 = vpop.f32.mrf.mxu0
    %v5989 = vadd.f32 0.0, %v5988
    %v5990 = vpop.f32.mrf.mxu0
    %5991 = vdwg.mxu0
    %v5992 = vadd.f32 %v5935, %v5950
    %v5993 = vadd.f32 %v5936, %v5963
    %v5994 = vadd.f32 %v5937, %v5976
    %v5995 = vadd.f32 %v5938, %v5989
    %v5996 = vxor.u32 %v5992, 2147483648
    %v5997 = vmul.f32 %v5996, 1.442695
    %v5998 = vpow.pop %v5997
    %v5999 = vadd.f32 %v5998, 1.0
    %v6000 = vrcp.pop %v5999
    %v6001 = vmul.f32 %v5999, %v6000
    %v6002 = vsub.f32 1.0, %v6001
    %v6003 = vmul.f32 %v6000, %v6002
    %v6004 = vadd.f32 %v6000, %v6003
    %vm6005 = vweird.f32 %v5999
    %vm6006 = vweird.f32 %v6000
    %vm6007 = vmor %vm6005, %vm6006
    %v6008 = vsel %vm6007, %v6000, %v6004
    %v6009 = vand.u32 2147483647, %v5999
    %vm6010 = vcmp.eq.f32.partialorder %v6009, 8.507059e+37
    %v6011 = vand.u32 %v5999, 2147483648
    %v6012 = vor.u32 1.1754944e-38, %v6011
    %v6013 = vsel %vm6010, %v6012, %v6008
    %v6014 = vmul.f32 1.0, %v6013
    %v6015 = vxor.u32 %v5993, 2147483648
    %v6016 = vmul.f32 %v6015, 1.442695
    %v6017 = vpow.pop %v6016
    %v6018 = vadd.f32 %v6017, 1.0
    %v6019 = vrcp.pop %v6018
    %v6020 = vmul.f32 %v6018, %v6019
    %v6021 = vsub.f32 1.0, %v6020
    %v6022 = vmul.f32 %v6019, %v6021
    %v6023 = vadd.f32 %v6019, %v6022
    %vm6024 = vweird.f32 %v6018
    %vm6025 = vweird.f32 %v6019
    %vm6026 = vmor %vm6024, %vm6025
    %v6027 = vsel %vm6026, %v6019, %v6023
    %v6028 = vand.u32 2147483647, %v6018
    %vm6029 = vcmp.eq.f32.partialorder %v6028, 8.507059e+37
    %v6030 = vand.u32 %v6018, 2147483648
    %v6031 = vor.u32 1.1754944e-38, %v6030
    %v6032 = vsel %vm6029, %v6031, %v6027
    %v6033 = vmul.f32 1.0, %v6032
    %v6034 = vtanh.pop %v5994
    %v6035 = vxor.u32 %v5995, 2147483648
    %v6036 = vmul.f32 %v6035, 1.442695
    %v6037 = vpow.pop %v6036
    %v6038 = vadd.f32 %v6037, 1.0
    %v6039 = vrcp.pop %v6038
    %v6040 = vmul.f32 %v6038, %v6039
    %v6041 = vsub.f32 1.0, %v6040
    %v6042 = vmul.f32 %v6039, %v6041
    %v6043 = vadd.f32 %v6039, %v6042
    %vm6044 = vweird.f32 %v6038
    %vm6045 = vweird.f32 %v6039
    %vm6046 = vmor %vm6044, %vm6045
    %v6047 = vsel %vm6046, %v6039, %v6043
    %v6048 = vand.u32 2147483647, %v6038
    %vm6049 = vcmp.eq.f32.partialorder %v6048, 8.507059e+37
    %v6050 = vand.u32 %v6038, 2147483648
    %v6051 = vor.u32 1.1754944e-38, %v6050
    %v6052 = vsel %vm6049, %v6051, %v6047
    %v6053 = vmul.f32 1.0, %v6052
    %v6054 = vmul.f32 %v6033, %v5932
    %v6055 = vmul.f32 %v6014, %v6034
    %v6056 = vadd.f32 %v6054, %v6055
    %v6057 = vtanh.pop %v6056
    %v6058 = vmul.f32 %v6053, %v6057
    %v6059 = vld [vmem:[#allocation3 + $0xe0] sm:$0xff]
    %v6060 = vld [vmem:[#allocation3 + $0xe8] sm:$0xff]
    %v6061 = vld [vmem:[#allocation3 + $0xf0] sm:$0xff]
    %v6062 = vld [vmem:[#allocation3 + $0xf8] sm:$0xff]
    %v6063 = vpack.c.bf16 %v6058, %v6058
    %6064 = vmatpush.bf16.msra.mxu0 %v5160
    %6065 = vmatpush.bf16.msra.mxu0 %v5156
    %6066 = vmatpush.bf16.msra.mxu0 %v5152
    %6067 = vmatpush.bf16.msra.mxu0 %v5148
    %6068 = vmatpush.bf16.msra.mxu0 %v5144
    %6069 = vmatpush.bf16.msra.mxu0 %v5140
    %6070 = vmatpush.bf16.msra.mxu0 %v5136
    %6071 = vmatpush.bf16.msra.mxu0 %v5132
    %6072 = vmatmul.bf16.gmra.mxu0 %v6063
    %v6073 = vpop.f32.mrf.mxu0
    %v6074 = vadd.f32 0.0, %v6073
    %v6075 = vpop.f32.mrf.mxu0
    %6076 = vdwg.mxu0
    %6077 = vmatpush.bf16.msra.mxu0 %v5161
    %6078 = vmatpush.bf16.msra.mxu0 %v5157
    %6079 = vmatpush.bf16.msra.mxu0 %v5153
    %6080 = vmatpush.bf16.msra.mxu0 %v5149
    %6081 = vmatpush.bf16.msra.mxu0 %v5145
    %6082 = vmatpush.bf16.msra.mxu0 %v5141
    %6083 = vmatpush.bf16.msra.mxu0 %v5137
    %6084 = vmatpush.bf16.msra.mxu0 %v5133
    %6085 = vmatmul.bf16.gmra.mxu0 %v6063
    %v6086 = vpop.f32.mrf.mxu0
    %v6087 = vadd.f32 0.0, %v6086
    %v6088 = vpop.f32.mrf.mxu0
    %6089 = vdwg.mxu0
    %6090 = vmatpush.bf16.msra.mxu0 %v5162
    %6091 = vmatpush.bf16.msra.mxu0 %v5158
    %6092 = vmatpush.bf16.msra.mxu0 %v5154
    %6093 = vmatpush.bf16.msra.mxu0 %v5150
    %6094 = vmatpush.bf16.msra.mxu0 %v5146
    %6095 = vmatpush.bf16.msra.mxu0 %v5142
    %6096 = vmatpush.bf16.msra.mxu0 %v5138
    %6097 = vmatpush.bf16.msra.mxu0 %v5134
    %6098 = vmatmul.bf16.gmra.mxu0 %v6063
    %v6099 = vpop.f32.mrf.mxu0
    %v6100 = vadd.f32 0.0, %v6099
    %v6101 = vpop.f32.mrf.mxu0
    %6102 = vdwg.mxu0
    %6103 = vmatpush.bf16.msra.mxu0 %v5163
    %6104 = vmatpush.bf16.msra.mxu0 %v5159
    %6105 = vmatpush.bf16.msra.mxu0 %v5155
    %6106 = vmatpush.bf16.msra.mxu0 %v5151
    %6107 = vmatpush.bf16.msra.mxu0 %v5147
    %6108 = vmatpush.bf16.msra.mxu0 %v5143
    %6109 = vmatpush.bf16.msra.mxu0 %v5139
    %6110 = vmatpush.bf16.msra.mxu0 %v5135
    %6111 = vmatmul.bf16.gmra.mxu0 %v6063
    %v6112 = vpop.f32.mrf.mxu0
    %v6113 = vadd.f32 0.0, %v6112
    %v6114 = vpop.f32.mrf.mxu0
    %6115 = vdwg.mxu0
    %v6116 = vadd.f32 %v6059, %v6074
    %v6117 = vadd.f32 %v6060, %v6087
    %v6118 = vadd.f32 %v6061, %v6100
    %v6119 = vadd.f32 %v6062, %v6113
    %v6120 = vxor.u32 %v6116, 2147483648
    %v6121 = vmul.f32 %v6120, 1.442695
    %v6122 = vpow.pop %v6121
    %v6123 = vadd.f32 %v6122, 1.0
    %v6124 = vrcp.pop %v6123
    %v6125 = vmul.f32 %v6123, %v6124
    %v6126 = vsub.f32 1.0, %v6125
    %v6127 = vmul.f32 %v6124, %v6126
    %v6128 = vadd.f32 %v6124, %v6127
    %vm6129 = vweird.f32 %v6123
    %vm6130 = vweird.f32 %v6124
    %vm6131 = vmor %vm6129, %vm6130
    %v6132 = vsel %vm6131, %v6124, %v6128
    %v6133 = vand.u32 2147483647, %v6123
    %vm6134 = vcmp.eq.f32.partialorder %v6133, 8.507059e+37
    %v6135 = vand.u32 %v6123, 2147483648
    %v6136 = vor.u32 1.1754944e-38, %v6135
    %v6137 = vsel %vm6134, %v6136, %v6132
    %v6138 = vmul.f32 1.0, %v6137
    %v6139 = vxor.u32 %v6117, 2147483648
    %v6140 = vmul.f32 %v6139, 1.442695
    %v6141 = vpow.pop %v6140
    %v6142 = vadd.f32 %v6141, 1.0
    %v6143 = vrcp.pop %v6142
    %v6144 = vmul.f32 %v6142, %v6143
    %v6145 = vsub.f32 1.0, %v6144
    %v6146 = vmul.f32 %v6143, %v6145
    %v6147 = vadd.f32 %v6143, %v6146
    %vm6148 = vweird.f32 %v6142
    %vm6149 = vweird.f32 %v6143
    %vm6150 = vmor %vm6148, %vm6149
    %v6151 = vsel %vm6150, %v6143, %v6147
    %v6152 = vand.u32 2147483647, %v6142
    %vm6153 = vcmp.eq.f32.partialorder %v6152, 8.507059e+37
    %v6154 = vand.u32 %v6142, 2147483648
    %v6155 = vor.u32 1.1754944e-38, %v6154
    %v6156 = vsel %vm6153, %v6155, %v6151
    %v6157 = vmul.f32 1.0, %v6156
    %v6158 = vtanh.pop %v6118
    %v6159 = vxor.u32 %v6119, 2147483648
    %v6160 = vmul.f32 %v6159, 1.442695
    %v6161 = vpow.pop %v6160
    %v6162 = vadd.f32 %v6161, 1.0
    %v6163 = vrcp.pop %v6162
    %v6164 = vmul.f32 %v6162, %v6163
    %v6165 = vsub.f32 1.0, %v6164
    %v6166 = vmul.f32 %v6163, %v6165
    %v6167 = vadd.f32 %v6163, %v6166
    %vm6168 = vweird.f32 %v6162
    %vm6169 = vweird.f32 %v6163
    %vm6170 = vmor %vm6168, %vm6169
    %v6171 = vsel %vm6170, %v6163, %v6167
    %v6172 = vand.u32 2147483647, %v6162
    %vm6173 = vcmp.eq.f32.partialorder %v6172, 8.507059e+37
    %v6174 = vand.u32 %v6162, 2147483648
    %v6175 = vor.u32 1.1754944e-38, %v6174
    %v6176 = vsel %vm6173, %v6175, %v6171
    %v6177 = vmul.f32 1.0, %v6176
    %v6178 = vmul.f32 %v6157, %v6056
    %v6179 = vmul.f32 %v6138, %v6158
    %v6180 = vadd.f32 %v6178, %v6179
    %v6181 = vtanh.pop %v6180
    %v6182 = vmul.f32 %v6177, %v6181
    %v6183 = vpack.c.bf16 %v6182, %v6182
    %v6184 = vld [vmem:[%s7] sm:$0xf]
    %v6185 = vld [vmem:[%s7 + $0x4] sm:$0xf]
    %v6186 = vld [vmem:[%s7 + $0x8] sm:$0xf]
    %v6187 = vld [vmem:[%s7 + $0xc] sm:$0xf]
    %v6188 = vld [vmem:[%s7 + $0x10] sm:$0xf]
    %v6189 = vld [vmem:[%s7 + $0x14] sm:$0xf]
    %v6190 = vld [vmem:[%s7 + $0x18] sm:$0xf]
    %v6191 = vld [vmem:[%s7 + $0x1c] sm:$0xf]
    %v6192 = vld [vmem:[%s7 + $0x20] sm:$0xf]
    %v6193 = vld [vmem:[%s7 + $0x24] sm:$0xf]
    %v6194 = vld [vmem:[%s7 + $0x28] sm:$0xf]
    %v6195 = vld [vmem:[%s7 + $0x2c] sm:$0xf]
    %v6196 = vld [vmem:[%s7 + $0x30] sm:$0xf]
    %v6197 = vld [vmem:[%s7 + $0x34] sm:$0xf]
    %v6198 = vld [vmem:[%s7 + $0x38] sm:$0xf]
    %v6199 = vld [vmem:[%s7 + $0x3c] sm:$0xf]
    %v6200 = vld [vmem:[%s8] sm:$0x1]
    %v6202 = vperm.slane %v6200, 0
    %v6220 = vunpack.c.l.b16 %v6184
    %v6221 = vunpack.c.l.b16 %v6185
    %v6222 = vunpack.c.l.b16 %v6186
    %v6223 = vunpack.c.l.b16 %v6187
    %v6224 = vunpack.c.l.b16 %v6188
    %v6225 = vunpack.c.l.b16 %v6189
    %v6226 = vunpack.c.l.b16 %v6190
    %v6227 = vunpack.c.l.b16 %v6191
    %v6228 = vunpack.c.l.b16 %v6192
    %v6229 = vunpack.c.l.b16 %v6193
    %v6230 = vunpack.c.l.b16 %v6194
    %v6231 = vunpack.c.l.b16 %v6195
    %v6232 = vunpack.c.l.b16 %v6196
    %v6233 = vunpack.c.l.b16 %v6197
    %v6234 = vunpack.c.l.b16 %v6198
    %v6235 = vunpack.c.l.b16 %v6199
    %v6236 = vpack.c.b16 %v6221, %v6220
    %v6237 = vpack.c.b16 %v6223, %v6222
    %v6238 = vpack.c.b16 %v6225, %v6224
    %v6239 = vpack.c.b16 %v6227, %v6226
    %v6240 = vpack.c.b16 %v6229, %v6228
    %v6241 = vpack.c.b16 %v6231, %v6230
    %v6242 = vpack.c.b16 %v6233, %v6232
    %v6243 = vpack.c.b16 %v6235, %v6234
    %6252 = vmatpush.bf16.msra.mxu0 %v6243
    %6253 = vmatpush.bf16.msra.mxu0 %v6242
    %6254 = vmatpush.bf16.msra.mxu0 %v6241
    %6255 = vmatpush.bf16.msra.mxu0 %v6240
    %6256 = vmatpush.bf16.msra.mxu0 %v6239
    %6257 = vmatpush.bf16.msra.mxu0 %v6238
    %6258 = vmatpush.bf16.msra.mxu0 %v6237
    %6259 = vmatpush.bf16.msra.mxu0 %v6236
    %6260 = vmatmul.bf16.gmra.mxu0 %v6183
    %v6261 = vpop.f32.mrf.mxu0
    %v6262 = vadd.f32 %v6202, %v6261
    %v6263 = vpop.f32.mrf.mxu0
    %6264 = vdwg.mxu0
    %6265 = vst [vmem:[%s9] sm:$0xff] %v6262
    // Predicated region
    $region54: #{price_net_forward.1} parent=1 // pred_check
      _
    $region55: #{price_net_forward.1} parent=1 // pred_check_branch
      %6267 = sbr.rel (0) target = $region57
    $region56: #{price_net_forward.1} parent=1 // pred_region
      _
    $region57: #{price_net_forward.1} parent=1 // pred_fallthru
      _
    // Predicated region
    $region58: #{price_net_forward.1} parent=1 // pred_check
      _
    $region59: #{price_net_forward.1} parent=1 // pred_check_branch
      %6269 = sbr.rel (0) target = $region61
    $region60: #{price_net_forward.1} parent=1 // pred_region
      _
    $region61: #{price_net_forward.1} parent=1 // pred_fallthru
      _
    %6270 = vsyncpa [#allocation5], 1
    %6271 = vsyncpa [#allocation7], 1
    %6272 = vsyncpa [#allocation10], 1

</llo_original>
